<compile_context>
chip_gen: v5e
topology: v5e:2x2
jax: 0.10.0
libtpu: 0.0.40
codegen_flags: <defaults>
</compile_context>

<pallas_src>
import functools

import jax
import jax.numpy as jnp
from jax.experimental import pallas as pl
from jax.experimental.pallas import tpu as pltpu


def _round_up(x, m):
    return (x + m - 1) // m * m


# ----------------------------------------------------------------------------
# Pallas kernel 1: out = relu(A @ B + bias), bf16 in / bf16 out, f32 accumulate.
# Used by all three conv layers (after im2col).
# ----------------------------------------------------------------------------
def _matmul_bias_kernel(a_ref, b_ref, bias_ref, o_ref, *, relu):
    acc = jnp.dot(a_ref[...].astype(jnp.bfloat16), b_ref[...],
                  preferred_element_type=jnp.float32)
    acc = acc + bias_ref[...]
    if relu:
        acc = jnp.maximum(acc, 0.0)
    o_ref[...] = acc.astype(o_ref.dtype)


def matmul_bias_act(a, b, bias, *, relu, out_dtype):
    """a: (M, K) bf16 activations, b: (K, N) bf16 pre-laid-out weight,
    bias: (1, N) f32 -> (M, N) out_dtype.  K and N use full-extent blocks
    (weights are never tiled/padded); M uses cdiv tiling with partial last
    block (no explicit zero-pad copy of A)."""
    M, K = a.shape
    K2, N = b.shape
    assert K == K2 and bias.shape == (1, N)

    # M tile: multiple of 16 (bf16 sublane packing); "parallel" so v7x's two
    # TensorCores split the row tiles (no-op on single-TC v5e/v6e).
    tm = min(512, _round_up(M, 16))
    grid_m = pl.cdiv(M, tm)

    out = pl.pallas_call(
        functools.partial(_matmul_bias_kernel, relu=relu),
        out_shape=jax.ShapeDtypeStruct((M, N), out_dtype),
        grid=(grid_m,),
        in_specs=[
            pl.BlockSpec((tm, K), lambda i: (i, 0)),
            pl.BlockSpec((K, N), lambda i: (0, 0)),
            pl.BlockSpec((1, N), lambda i: (0, 0)),
        ],
        out_specs=pl.BlockSpec((tm, N), lambda i: (i, 0)),
        compiler_params=pltpu.CompilerParams(
            dimension_semantics=("parallel",)),
    )(a, b, bias)
    return out


# ----------------------------------------------------------------------------
# Pallas kernel 2: fused fc1 + head.
#   h    = relu(A @ W1 + b1)           (emitted as bf16 "features" output)
#   head = h @ Whead + bhead           (f32, columns = [fc2 | fc3 | zero-pad])
# Whead is only 512x128 bf16 (~128 KB) so it stays resident in VMEM; fusing
# removes a pallas_call launch and the HBM writeback+re-read of the fc1
# activation.  K = 4608 is NOT tiled (single grid step; bf16 W1 block 4.7 MiB).
# ----------------------------------------------------------------------------
def _fc1_head_kernel(a_ref, w1_ref, b1_ref, wh_ref, bh_ref, act_ref, head_ref):
    h = jnp.dot(a_ref[...].astype(jnp.bfloat16), w1_ref[...],
                preferred_element_type=jnp.float32)
    h = jnp.maximum(h + b1_ref[...], 0.0)
    act_ref[...] = h.astype(act_ref.dtype)
    head_ref[...] = jnp.dot(h.astype(jnp.bfloat16), wh_ref[...],
                            preferred_element_type=jnp.float32) + bh_ref[...]


def fc1_head(a, w1, b1, wh, bh):
    M, K = a.shape
    K1, N1 = w1.shape        # (4608, 512)
    N12, Nh = wh.shape       # (512, 128)  head padded to a full lane width
    assert K == K1 and N1 == N12

    tm = min(256, _round_up(M, 16))
    grid_m = pl.cdiv(M, tm)

    act, head = pl.pallas_call(
        _fc1_head_kernel,
        out_shape=(jax.ShapeDtypeStruct((M, N1), jnp.bfloat16),
                   jax.ShapeDtypeStruct((M, Nh), jnp.float32)),
        grid=(grid_m,),
        in_specs=[
            pl.BlockSpec((tm, K), lambda i: (i, 0)),
            pl.BlockSpec((K, N1), lambda i: (0, 0)),
            pl.BlockSpec((1, N1), lambda i: (0, 0)),
            pl.BlockSpec((N1, Nh), lambda i: (0, 0)),
            pl.BlockSpec((1, Nh), lambda i: (0, 0)),
        ],
        out_specs=[
            pl.BlockSpec((tm, N1), lambda i: (i, 0)),
            pl.BlockSpec((tm, Nh), lambda i: (i, 0)),
        ],
        compiler_params=pltpu.CompilerParams(
            dimension_semantics=("parallel",),
            # untiled 4.7 MiB bf16 fc1 weight is double-buffered; raise the
            # scoped-VMEM limit above v5e's 16 MiB default (still well under
            # every chip's physical VMEM, incl. v7x's 64 MiB).
            vmem_limit_bytes=48 * 1024 * 1024),
    )(a, w1, b1, wh, bh)
    # TODO(synk): on v7x an N-"parallel" split would feed the 2nd TensorCore when
    #             grid_m==1, but the head needs the FULL fc1 row, and N=128/64 tiles
    #             would violate the 128-lane block rule — left unsplit.
    return act, head


# ----------------------------------------------------------------------------
# Conv2d (valid padding, 3x3, arbitrary stride) = channels-last im2col + matmul
# ----------------------------------------------------------------------------
def _im2col_nonoverlap(x, ksize):
    # stride == ksize: patches do not overlap -> im2col is a pure reshape.
    B, H, W, C = x.shape
    Ho, Wo = (H - ksize) // ksize + 1, (W - ksize) // ksize + 1
    p = x[:, :Ho * ksize, :Wo * ksize, :]
    p = p.reshape(B, Ho, ksize, Wo, ksize, C).transpose(0, 1, 3, 2, 4, 5)
    return p.reshape(B * Ho * Wo, ksize * ksize * C), (B, Ho, Wo)


def _im2col_nhwc(x, ksize, stride):
    # x: (B, H, W, C) bf16 -> (B*Ho*Wo, k*k*C), patch layout (kh, kw, C)
    B, H, W, C = x.shape
    Ho = (H - ksize) // stride + 1
    Wo = (W - ksize) // stride + 1
    taps = []
    for kh in range(ksize):
        for kw in range(ksize):
            taps.append(x[:, kh:kh + stride * Ho:stride, kw:kw + stride * Wo:stride, :])
    p = jnp.stack(taps, axis=3)                      # (B, Ho, Wo, k*k, C)
    # TODO(synk): for training-scale (t*b) batches, fuse this gather into the Pallas
    #             kernel (loop over the 9 taps on a resident NHWC block) to avoid the
    #             duplicated im2col HBM traffic; at inference batch it is tiny (bf16).
    return p.reshape(B * Ho * Wo, ksize * ksize * C), (B, Ho, Wo)


def conv2d_relu_nhwc(x, w2, b2, ksize, stride):
    # w2: (k*k*C, O) bf16 pre-transposed at init, b2: (1, O) f32
    if stride == ksize:
        cols, (B, Ho, Wo) = _im2col_nonoverlap(x, ksize)
    else:
        cols, (B, Ho, Wo) = _im2col_nhwc(x, ksize, stride)
    out = matmul_bias_act(cols, w2, b2, relu=True, out_dtype=jnp.bfloat16)
    return out.reshape(B, Ho, Wo, w2.shape[1])       # stay channels-last, bf16


# ----------------------------------------------------------------------------
# Parameters: PyTorch-layout init + one-time preprocessing to kernel layout
# ----------------------------------------------------------------------------
def init_params_torch_layout(key, actions_count, frames_stacked, feature_out_layer_size):
    ks = jax.random.split(key, 6)
    p = {}
    p["conv1_w"] = 0.05 * jax.random.normal(ks[0], (64, frames_stacked, 3, 3), jnp.float32)
    p["conv1_b"] = jnp.zeros((64,), jnp.float32)
    p["conv2_w"] = 0.05 * jax.random.normal(ks[1], (64, 64, 3, 3), jnp.float32)
    p["conv2_b"] = jnp.zeros((64,), jnp.float32)
    p["conv3_w"] = 0.05 * jax.random.normal(ks[2], (128, 64, 3, 3), jnp.float32)
    p["conv3_b"] = jnp.zeros((128,), jnp.float32)
    p["fc1_w"] = 0.02 * jax.random.normal(ks[3], (feature_out_layer_size, 128 * 6 * 6), jnp.float32)
    p["fc1_b"] = jnp.zeros((feature_out_layer_size,), jnp.float32)
    # fc2 / fc3: normalized-columns-style init, zero bias (as in the reference)
    w2 = jax.random.normal(ks[4], (actions_count, feature_out_layer_size), jnp.float32)
    p["fc2_w"] = 0.001 * w2 / jnp.sqrt(jnp.sum(w2 * w2, axis=1, keepdims=True))
    p["fc2_b"] = jnp.zeros((actions_count,), jnp.float32)
    # NOTE: the reference module hard-codes nn.Linear(512, 1) for fc3; it only
    # type-checks when feature_out_layer_size == 512, so tie its width explicitly.
    w3 = jax.random.normal(ks[5], (1, feature_out_layer_size), jnp.float32)
    p["fc3_w"] = 1.0 * w3 / jnp.sqrt(jnp.sum(w3 * w3, axis=1, keepdims=True))
    p["fc3_b"] = jnp.zeros((1,), jnp.float32)
    return p


def preprocess_params(p):
    """One-time (outside the forward path) conversion of PyTorch-layout params:
    conv weights -> (kh*kw*C, O) matching the (kh,kw,C) im2col patch order,
    fc1 input columns permuted from NCHW-flatten to NHWC-flatten order,
    fc2/fc3 fused into one head matrix zero-padded to 128 lane-dense columns;
    all weight matrices cast to bf16 (biases kept f32).  Same function as the
    module up to bf16 matmul precision."""
    def conv_w(w):
        O, C, kh, kw = w.shape
        return jnp.transpose(w, (2, 3, 1, 0)).reshape(kh * kw * C, O).astype(jnp.bfloat16)

    def bias_row(b):
        return b.reshape(1, -1).astype(jnp.float32)

    q = {}
    q["conv1_w"] = conv_w(p["conv1_w"]); q["conv1_b"] = bias_row(p["conv1_b"])
    q["conv2_w"] = conv_w(p["conv2_w"]); q["conv2_b"] = bias_row(p["conv2_b"])
    q["conv3_w"] = conv_w(p["conv3_w"]); q["conv3_b"] = bias_row(p["conv3_b"])

    # fc1: PyTorch consumes the NCHW flatten (C,H,W); we flatten NHWC (H,W,C),
    # so permute fc1's input columns accordingly.
    n_out, k_in = p["fc1_w"].shape                   # k_in = 128 * 6 * 6
    w1 = p["fc1_w"].reshape(n_out, 128, 6, 6)
    w1 = jnp.transpose(w1, (0, 2, 3, 1)).reshape(n_out, k_in)
    q["fc1_w"] = w1.T.astype(jnp.bfloat16)
    q["fc1_b"] = bias_row(p["fc1_b"])

    # Fused head [fc2 | fc3], zero-padded to a full 128-lane width so the head
    # store is unmasked; wrapper slices the first (actions+1) columns back out.
    head_w = jnp.concatenate([p["fc2_w"].T, p["fc3_w"].T], axis=1)      # (512, actions+1)
    head_b = jnp.concatenate([p["fc2_b"], p["fc3_b"]]).reshape(1, -1)   # (1, actions+1)
    n_head = head_w.shape[1]
    n_pad = _round_up(n_head, 128)
    q["head_w"] = jnp.zeros((head_w.shape[0], n_pad), jnp.float32).at[:, :n_head].set(head_w).astype(jnp.bfloat16)
    q["head_b"] = jnp.zeros((1, n_pad), jnp.float32).at[:, :n_head].set(head_b)
    return q


# ----------------------------------------------------------------------------
# ModelNetwork forward (use_additional_scaling_FC_layer=False path)
# ----------------------------------------------------------------------------
def model_forward(params, inputs, actions_count, features=False):
    time_dim = inputs.ndim == 5
    if time_dim:
        t_dim, batch_dim = inputs.shape[:2]
        x = inputs.reshape((t_dim * batch_dim,) + inputs.shape[2:])
    else:
        x = inputs

    # NCHW (PyTorch convention) -> NHWC once, cast to bf16 once; all activations
    # stay channels-last bf16 until the head (accumulation in f32 inside kernels).
    x = jnp.transpose(x, (0, 2, 3, 1)).astype(jnp.bfloat16)

    x = conv2d_relu_nhwc(x, params["conv1_w"], params["conv1_b"], 3, 3)   # (B,28,28,64)
    x = conv2d_relu_nhwc(x, params["conv2_w"], params["conv2_b"], 3, 2)   # (B,13,13,64)
    x = conv2d_relu_nhwc(x, params["conv3_w"], params["conv3_b"], 3, 2)   # (B,6,6,128)

    B = x.shape[0]
    x = x.reshape(B, -1)                              # NHWC flatten; fc1_w pre-permuted to match

    # Fused fc1 (ReLU) + head in one pallas_call.
    act, head = fc1_head(x, params["fc1_w"], params["fc1_b"],
                         params["head_w"], params["head_b"])              # (B,512) bf16, (B,128) f32
    logits = head[:, :actions_count]
    value = head[:, actions_count:actions_count + 1]

    feature_vec = jnp.array([0], dtype=jnp.int32)
    if features:
        feature_vec = act.astype(jnp.float32)  # non-additional-scaling branch returns fc1 activations
    # TODO(synk): `self.features` Linear(512, feature_out) only fires when
    #             use_additional_scaling_FC_layer=True; not exercised here.
    # TODO(synk): at inference batch the whole network fits VMEM — a single
    #             deep-fused pallas_call would drop the remaining launches/HBM hops.

    if time_dim:
        logits = logits.reshape(t_dim, batch_dim, actions_count)
        value = value.reshape(t_dim, batch_dim)        # matches PyTorch .view(t, b)
        if features:
            feature_vec = feature_vec.reshape(t_dim, batch_dim, -1)
    return logits, value, feature_vec


if __name__ == "__main__":
    ACTIONS = 6
    FRAMES = 4
    FEATURE_OUT = 512   # fc3 consumes fc1's output => must be 512 (as in the reference module)
    BATCH = 2
    # 84x84 is the spatial size implied by fc1 = Linear(128*6*6, ...)
    key = jax.random.PRNGKey(0)
    k_par, k_in = jax.random.split(key)
    torch_params = init_params_torch_layout(k_par, ACTIONS, FRAMES, FEATURE_OUT)
    params = preprocess_params(torch_params)          # one-time weight prep, outside forward
    x = jax.random.normal(k_in, (BATCH, FRAMES, 84, 84), jnp.float32)

    fwd = jax.jit(functools.partial(model_forward, actions_count=ACTIONS, features=False))
    logits, value, feature_vec = fwd(params, x)
    jax.block_until_ready((logits, value, feature_vec))

    assert logits.shape == (BATCH, ACTIONS), logits.shape
    assert value.shape == (BATCH, 1), value.shape
    assert jnp.all(jnp.isfinite(logits)) and jnp.all(jnp.isfinite(value))
    print("KERNEL_OK")
</pallas_src>

<mosaic_0001>
module attributes {stable_mosaic.version = 11 : i64} {
  func.func @_matmul_bias_kernel(%arg0: i32, %arg1: memref<512x36xbf16, #tpu.memory_space<vmem>>, %arg2: memref<36x64xbf16, #tpu.memory_space<vmem>>, %arg3: memref<1x64xf32, #tpu.memory_space<vmem>>, %arg4: memref<512x64xbf16, #tpu.memory_space<vmem>>) attributes {dimension_semantics = [#tpu.dimension_semantics<parallel>], iteration_bounds = array<i64: 4>, scalar_prefetch = 0 : i64, scratch_operands = 0 : i64, tpu.core_type = #tpu.core_type<tc>, window_params = [{transform_indices = @transform_0, window_bounds = array<i64: 512, 36>}, {pipeline_mode = #tpu.pipeline_mode<synchronous>, transform_indices = @transform_1, window_bounds = array<i64: 36, 64>}, {pipeline_mode = #tpu.pipeline_mode<synchronous>, transform_indices = @transform_2, window_bounds = array<i64: 1, 64>}, {transform_indices = @transform_3, window_bounds = array<i64: 512, 64>}]} {
    %c0 = arith.constant 0 : index
    %c0_0 = arith.constant 0 : index
    %0 = vector.load %arg1[%c0, %c0_0] : memref<512x36xbf16, #tpu.memory_space<vmem>>, vector<512x36xbf16>
    %c0_1 = arith.constant 0 : index
    %c0_2 = arith.constant 0 : index
    %1 = vector.load %arg2[%c0_1, %c0_2] : memref<36x64xbf16, #tpu.memory_space<vmem>>, vector<36x64xbf16>
    %cst = arith.constant dense<0.000000e+00> : vector<512x64xf32>
    %2 = tpu.matmul %0, %1, %cst {dimension_numbers = #tpu.dot_dimension_numbers<[1], [0], [0], [1], [0, 0, 1, 1], [], []>} : vector<512x36xbf16>, vector<36x64xbf16>, vector<512x64xf32> -> vector<512x64xf32>
    %c0_3 = arith.constant 0 : index
    %c0_4 = arith.constant 0 : index
    %3 = vector.load %arg3[%c0_3, %c0_4] : memref<1x64xf32, #tpu.memory_space<vmem>>, vector<1x64xf32>
    %4 = vector.broadcast %3 : vector<1x64xf32> to vector<512x64xf32>
    %5 = arith.addf %2, %4 : vector<512x64xf32>
    %cst_5 = arith.constant 0.000000e+00 : f32
    %6 = vector.broadcast %cst_5 : f32 to vector<512x64xf32>
    %7 = arith.maximumf %5, %6 : vector<512x64xf32>
    %8 = arith.truncf %7 : vector<512x64xf32> to vector<512x64xbf16>
    %c0_6 = arith.constant 0 : index
    %c0_7 = arith.constant 0 : index
    %9 = vector.load %arg4[%c0_6, %c0_7] : memref<512x64xbf16, #tpu.memory_space<vmem>>, vector<512x64xbf16>
    tpu.vector_store %arg4[%c0_6, %c0_7], %8 {strides = array<i32>} : memref<512x64xbf16, #tpu.memory_space<vmem>>, vector<512x64xbf16>,
    return
  }
  func.func @transform_0(%arg0: i32) -> (i32, i32) {
    %c0_i32 = arith.constant 0 : i32
    %c0_i32_0 = arith.constant 0 : i32
    return %arg0, %c0_i32 : i32, i32
  }
  func.func @transform_1(%arg0: i32) -> (i32, i32) {
    %c0_i32 = arith.constant 0 : i32
    %c0_i32_0 = arith.constant 0 : i32
    %c0_i32_1 = arith.constant 0 : i32
    return %c0_i32, %c0_i32_0 : i32, i32
  }
  func.func @transform_2(%arg0: i32) -> (i32, i32) {
    %c0_i32 = arith.constant 0 : i32
    %c0_i32_0 = arith.constant 0 : i32
    %c0_i32_1 = arith.constant 0 : i32
    return %c0_i32, %c0_i32_0 : i32, i32
  }
  func.func @transform_3(%arg0: i32) -> (i32, i32) {
    %c0_i32 = arith.constant 0 : i32
    %c0_i32_0 = arith.constant 0 : i32
    return %arg0, %c0_i32 : i32, i32
  }
}

module attributes {stable_mosaic.version = 11 : i64} {
  func.func @_matmul_bias_kernel(%arg0: i32, %arg1: memref<352x576xbf16, #tpu.memory_space<vmem>>, %arg2: memref<576x64xbf16, #tpu.memory_space<vmem>>, %arg3: memref<1x64xf32, #tpu.memory_space<vmem>>, %arg4: memref<352x64xbf16, #tpu.memory_space<vmem>>) attributes {dimension_semantics = [#tpu.dimension_semantics<parallel>], iteration_bounds = array<i64: 1>, scalar_prefetch = 0 : i64, scratch_operands = 0 : i64, tpu.core_type = #tpu.core_type<tc>, window_params = [{transform_indices = @transform_0, window_bounds = array<i64: 352, 576>}, {pipeline_mode = #tpu.pipeline_mode<synchronous>, transform_indices = @transform_1, window_bounds = array<i64: 576, 64>}, {pipeline_mode = #tpu.pipeline_mode<synchronous>, transform_indices = @transform_2, window_bounds = array<i64: 1, 64>}, {transform_indices = @transform_3, window_bounds = array<i64: 352, 64>}]} {
    %c0 = arith.constant 0 : index
    %c0_0 = arith.constant 0 : index
    %0 = vector.load %arg1[%c0, %c0_0] : memref<352x576xbf16, #tpu.memory_space<vmem>>, vector<352x576xbf16>
    %c0_1 = arith.constant 0 : index
    %c0_2 = arith.constant 0 : index
    %1 = vector.load %arg2[%c0_1, %c0_2] : memref<576x64xbf16, #tpu.memory_space<vmem>>, vector<576x64xbf16>
    %cst = arith.constant dense<0.000000e+00> : vector<352x64xf32>
    %2 = tpu.matmul %0, %1, %cst {dimension_numbers = #tpu.dot_dimension_numbers<[1], [0], [0], [1], [0, 0, 1, 1], [], []>} : vector<352x576xbf16>, vector<576x64xbf16>, vector<352x64xf32> -> vector<352x64xf32>
    %c0_3 = arith.constant 0 : index
    %c0_4 = arith.constant 0 : index
    %3 = vector.load %arg3[%c0_3, %c0_4] : memref<1x64xf32, #tpu.memory_space<vmem>>, vector<1x64xf32>
    %4 = vector.broadcast %3 : vector<1x64xf32> to vector<352x64xf32>
    %5 = arith.addf %2, %4 : vector<352x64xf32>
    %cst_5 = arith.constant 0.000000e+00 : f32
    %6 = vector.broadcast %cst_5 : f32 to vector<352x64xf32>
    %7 = arith.maximumf %5, %6 : vector<352x64xf32>
    %8 = arith.truncf %7 : vector<352x64xf32> to vector<352x64xbf16>
    %c0_6 = arith.constant 0 : index
    %c0_7 = arith.constant 0 : index
    %9 = vector.load %arg4[%c0_6, %c0_7] : memref<352x64xbf16, #tpu.memory_space<vmem>>, vector<352x64xbf16>
    tpu.vector_store %arg4[%c0_6, %c0_7], %8 {strides = array<i32>} : memref<352x64xbf16, #tpu.memory_space<vmem>>, vector<352x64xbf16>,
    return
  }
  func.func @transform_0(%arg0: i32) -> (i32, i32) {
    %c0_i32 = arith.constant 0 : i32
    %c0_i32_0 = arith.constant 0 : i32
    return %arg0, %c0_i32 : i32, i32
  }
  func.func @transform_1(%arg0: i32) -> (i32, i32) {
    %c0_i32 = arith.constant 0 : i32
    %c0_i32_0 = arith.constant 0 : i32
    %c0_i32_1 = arith.constant 0 : i32
    return %c0_i32, %c0_i32_0 : i32, i32
  }
  func.func @transform_2(%arg0: i32) -> (i32, i32) {
    %c0_i32 = arith.constant 0 : i32
    %c0_i32_0 = arith.constant 0 : i32
    %c0_i32_1 = arith.constant 0 : i32
    return %c0_i32, %c0_i32_0 : i32, i32
  }
  func.func @transform_3(%arg0: i32) -> (i32, i32) {
    %c0_i32 = arith.constant 0 : i32
    %c0_i32_0 = arith.constant 0 : i32
    return %arg0, %c0_i32 : i32, i32
  }
}

module attributes {stable_mosaic.version = 11 : i64} {
  func.func @_matmul_bias_kernel(%arg0: i32, %arg1: memref<80x576xbf16, #tpu.memory_space<vmem>>, %arg2: memref<576x128xbf16, #tpu.memory_space<vmem>>, %arg3: memref<1x128xf32, #tpu.memory_space<vmem>>, %arg4: memref<80x128xbf16, #tpu.memory_space<vmem>>) attributes {dimension_semantics = [#tpu.dimension_semantics<parallel>], iteration_bounds = array<i64: 1>, scalar_prefetch = 0 : i64, scratch_operands = 0 : i64, tpu.core_type = #tpu.core_type<tc>, window_params = [{transform_indices = @transform_0, window_bounds = array<i64: 80, 576>}, {pipeline_mode = #tpu.pipeline_mode<synchronous>, transform_indices = @transform_1, window_bounds = array<i64: 576, 128>}, {pipeline_mode = #tpu.pipeline_mode<synchronous>, transform_indices = @transform_2, window_bounds = array<i64: 1, 128>}, {transform_indices = @transform_3, window_bounds = array<i64: 80, 128>}]} {
    %c0 = arith.constant 0 : index
    %c0_0 = arith.constant 0 : index
    %0 = vector.load %arg1[%c0, %c0_0] : memref<80x576xbf16, #tpu.memory_space<vmem>>, vector<80x576xbf16>
    %c0_1 = arith.constant 0 : index
    %c0_2 = arith.constant 0 : index
    %1 = vector.load %arg2[%c0_1, %c0_2] : memref<576x128xbf16, #tpu.memory_space<vmem>>, vector<576x128xbf16>
    %cst = arith.constant dense<0.000000e+00> : vector<80x128xf32>
    %2 = tpu.matmul %0, %1, %cst {dimension_numbers = #tpu.dot_dimension_numbers<[1], [0], [0], [1], [0, 0, 1, 1], [], []>} : vector<80x576xbf16>, vector<576x128xbf16>, vector<80x128xf32> -> vector<80x128xf32>
    %c0_3 = arith.constant 0 : index
    %c0_4 = arith.constant 0 : index
    %3 = vector.load %arg3[%c0_3, %c0_4] : memref<1x128xf32, #tpu.memory_space<vmem>>, vector<1x128xf32>
    %4 = vector.broadcast %3 : vector<1x128xf32> to vector<80x128xf32>
    %5 = arith.addf %2, %4 : vector<80x128xf32>
    %cst_5 = arith.constant 0.000000e+00 : f32
    %6 = vector.broadcast %cst_5 : f32 to vector<80x128xf32>
    %7 = arith.maximumf %5, %6 : vector<80x128xf32>
    %8 = arith.truncf %7 : vector<80x128xf32> to vector<80x128xbf16>
    %c0_6 = arith.constant 0 : index
    %c0_7 = arith.constant 0 : index
    %9 = vector.load %arg4[%c0_6, %c0_7] : memref<80x128xbf16, #tpu.memory_space<vmem>>, vector<80x128xbf16>
    tpu.vector_store %arg4[%c0_6, %c0_7], %8 {strides = array<i32>} : memref<80x128xbf16, #tpu.memory_space<vmem>>, vector<80x128xbf16>,
    return
  }
  func.func @transform_0(%arg0: i32) -> (i32, i32) {
    %c0_i32 = arith.constant 0 : i32
    %c0_i32_0 = arith.constant 0 : i32
    return %arg0, %c0_i32 : i32, i32
  }
  func.func @transform_1(%arg0: i32) -> (i32, i32) {
    %c0_i32 = arith.constant 0 : i32
    %c0_i32_0 = arith.constant 0 : i32
    %c0_i32_1 = arith.constant 0 : i32
    return %c0_i32, %c0_i32_0 : i32, i32
  }
  func.func @transform_2(%arg0: i32) -> (i32, i32) {
    %c0_i32 = arith.constant 0 : i32
    %c0_i32_0 = arith.constant 0 : i32
    %c0_i32_1 = arith.constant 0 : i32
    return %c0_i32, %c0_i32_0 : i32, i32
  }
  func.func @transform_3(%arg0: i32) -> (i32, i32) {
    %c0_i32 = arith.constant 0 : i32
    %c0_i32_0 = arith.constant 0 : i32
    return %arg0, %c0_i32 : i32, i32
  }
}

module attributes {stable_mosaic.version = 11 : i64} {
  func.func @_fc1_head_kernel(%arg0: i32, %arg1: memref<16x4608xbf16, #tpu.memory_space<vmem>>, %arg2: memref<4608x512xbf16, #tpu.memory_space<vmem>>, %arg3: memref<1x512xf32, #tpu.memory_space<vmem>>, %arg4: memref<512x128xbf16, #tpu.memory_space<vmem>>, %arg5: memref<1x128xf32, #tpu.memory_space<vmem>>, %arg6: memref<16x512xbf16, #tpu.memory_space<vmem>>, %arg7: memref<16x128xf32, #tpu.memory_space<vmem>>) attributes {dimension_semantics = [#tpu.dimension_semantics<parallel>], iteration_bounds = array<i64: 1>, scalar_prefetch = 0 : i64, scratch_operands = 0 : i64, tpu.core_type = #tpu.core_type<tc>, window_params = [{transform_indices = @transform_0, window_bounds = array<i64: 16, 4608>}, {pipeline_mode = #tpu.pipeline_mode<synchronous>, transform_indices = @transform_1, window_bounds = array<i64: 4608, 512>}, {pipeline_mode = #tpu.pipeline_mode<synchronous>, transform_indices = @transform_2, window_bounds = array<i64: 1, 512>}, {pipeline_mode = #tpu.pipeline_mode<synchronous>, transform_indices = @transform_3, window_bounds = array<i64: 512, 128>}, {pipeline_mode = #tpu.pipeline_mode<synchronous>, transform_indices = @transform_4, window_bounds = array<i64: 1, 128>}, {transform_indices = @transform_5, window_bounds = array<i64: 16, 512>}, {transform_indices = @transform_6, window_bounds = array<i64: 16, 128>}]} {
    %c0 = arith.constant 0 : index
    %c0_0 = arith.constant 0 : index
    %0 = vector.load %arg1[%c0, %c0_0] : memref<16x4608xbf16, #tpu.memory_space<vmem>>, vector<16x4608xbf16>
    %c0_1 = arith.constant 0 : index
    %c0_2 = arith.constant 0 : index
    %1 = vector.load %arg2[%c0_1, %c0_2] : memref<4608x512xbf16, #tpu.memory_space<vmem>>, vector<4608x512xbf16>
    %cst = arith.constant dense<0.000000e+00> : vector<16x512xf32>
    %2 = tpu.matmul %0, %1, %cst {dimension_numbers = #tpu.dot_dimension_numbers<[1], [0], [0], [1], [0, 0, 1, 1], [], []>} : vector<16x4608xbf16>, vector<4608x512xbf16>, vector<16x512xf32> -> vector<16x512xf32>
    %c0_3 = arith.constant 0 : index
    %c0_4 = arith.constant 0 : index
    %3 = vector.load %arg3[%c0_3, %c0_4] : memref<1x512xf32, #tpu.memory_space<vmem>>, vector<1x512xf32>
    %4 = vector.broadcast %3 : vector<1x512xf32> to vector<16x512xf32>
    %5 = arith.addf %2, %4 : vector<16x512xf32>
    %cst_5 = arith.constant 0.000000e+00 : f32
    %6 = vector.broadcast %cst_5 : f32 to vector<16x512xf32>
    %7 = arith.maximumf %5, %6 : vector<16x512xf32>
    %8 = arith.truncf %7 : vector<16x512xf32> to vector<16x512xbf16>
    %c0_6 = arith.constant 0 : index
    %c0_7 = arith.constant 0 : index
    %9 = vector.load %arg6[%c0_6, %c0_7] : memref<16x512xbf16, #tpu.memory_space<vmem>>, vector<16x512xbf16>
    tpu.vector_store %arg6[%c0_6, %c0_7], %8 {strides = array<i32>} : memref<16x512xbf16, #tpu.memory_space<vmem>>, vector<16x512xbf16>,
    %10 = arith.truncf %7 : vector<16x512xf32> to vector<16x512xbf16>
    %c0_8 = arith.constant 0 : index
    %c0_9 = arith.constant 0 : index
    %11 = vector.load %arg4[%c0_8, %c0_9] : memref<512x128xbf16, #tpu.memory_space<vmem>>, vector<512x128xbf16>
    %cst_10 = arith.constant dense<0.000000e+00> : vector<16x128xf32>
    %12 = tpu.matmul %10, %11, %cst_10 {dimension_numbers = #tpu.dot_dimension_numbers<[1], [0], [0], [1], [0, 0, 1, 1], [], []>} : vector<16x512xbf16>, vector<512x128xbf16>, vector<16x128xf32> -> vector<16x128xf32>
    %c0_11 = arith.constant 0 : index
    %c0_12 = arith.constant 0 : index
    %13 = vector.load %arg5[%c0_11, %c0_12] : memref<1x128xf32, #tpu.memory_space<vmem>>, vector<1x128xf32>
    %14 = vector.broadcast %13 : vector<1x128xf32> to vector<16x128xf32>
    %15 = arith.addf %12, %14 : vector<16x128xf32>
    %c0_13 = arith.constant 0 : index
    %c0_14 = arith.constant 0 : index
    %16 = vector.load %arg7[%c0_13, %c0_14] : memref<16x128xf32, #tpu.memory_space<vmem>>, vector<16x128xf32>
    tpu.vector_store %arg7[%c0_13, %c0_14], %15 {strides = array<i32>} : memref<16x128xf32, #tpu.memory_space<vmem>>, vector<16x128xf32>,
    return
  }
  func.func @transform_0(%arg0: i32) -> (i32, i32) {
    %c0_i32 = arith.constant 0 : i32
    %c0_i32_0 = arith.constant 0 : i32
    return %arg0, %c0_i32 : i32, i32
  }
  func.func @transform_1(%arg0: i32) -> (i32, i32) {
    %c0_i32 = arith.constant 0 : i32
    %c0_i32_0 = arith.constant 0 : i32
    %c0_i32_1 = arith.constant 0 : i32
    return %c0_i32, %c0_i32_0 : i32, i32
  }
  func.func @transform_2(%arg0: i32) -> (i32, i32) {
    %c0_i32 = arith.constant 0 : i32
    %c0_i32_0 = arith.constant 0 : i32
    %c0_i32_1 = arith.constant 0 : i32
    return %c0_i32, %c0_i32_0 : i32, i32
  }
  func.func @transform_3(%arg0: i32) -> (i32, i32) {
    %c0_i32 = arith.constant 0 : i32
    %c0_i32_0 = arith.constant 0 : i32
    %c0_i32_1 = arith.constant 0 : i32
    return %c0_i32, %c0_i32_0 : i32, i32
  }
  func.func @transform_4(%arg0: i32) -> (i32, i32) {
    %c0_i32 = arith.constant 0 : i32
    %c0_i32_0 = arith.constant 0 : i32
    %c0_i32_1 = arith.constant 0 : i32
    return %c0_i32, %c0_i32_0 : i32, i32
  }
  func.func @transform_5(%arg0: i32) -> (i32, i32) {
    %c0_i32 = arith.constant 0 : i32
    %c0_i32_0 = arith.constant 0 : i32
    return %arg0, %c0_i32 : i32, i32
  }
  func.func @transform_6(%arg0: i32) -> (i32, i32) {
    %c0_i32 = arith.constant 0 : i32
    %c0_i32_0 = arith.constant 0 : i32
    return %arg0, %c0_i32 : i32, i32
  }
}

</mosaic_0001>

<llo_original>
// kernel: model_forward.4
$region0: #{model_forward.4}
  #allocation0 [shape = 'u32[]', space=smem, size = 0x4, offset = 0x4, fixed_abs, tag = 'smem constant byte address 0x4 - core index']
  #allocation1 [shape = 'u32[72,128]{1,0:T(1,128)}', space=vmem, size = 0x9000, scoped, tag = 'internal scratch']
  %s0 = inlined_call_operand.vmem [shape: bf16[1568,36], index: 0, kind: input, shape index: {}]
  %s1 = inlined_call_operand.vmem [shape: bf16[36,64], index: 1, kind: input, shape index: {}]
  %s2 = inlined_call_operand.vmem [shape: f32[1,64], index: 2, kind: input, shape index: {}]
  %s3 = inlined_call_operand.vmem [shape: bf16[1568,64], index: 3, kind: output, shape index: {}]
  %s4 = sld [smem:[#allocation0]]
  $region89: #{model_forward.4} parent=0
    _
  %s6 = ssub.s32 1, %s4
  %s7 = scalar_select 0, %s6, %s4
  $region1: #{model_forward.4} parent=0
    #allocation2 [shape = 'u8[262144]{0}', space=vmem, size = 0x40000, scoped, tag = 'output window, operand 0']
    loop: start=0, step=1, limit=6
    $region2: #{model_forward.4} parent=1 // loop_pre_header
      _
    $region3: #{model_forward.4} parent=1 // loop_header
      %s9 = sphi 0, %s13
      %p10 = scmp.ge.s32.totalorder %s9, 6
      %s19 = sphi 0, %s21
      %s22 = sphi 0, %s19
      %s23 = sphi 0, %s22
      %s39 = sphi 0, %s23
      %s43 = sphi 0, %s43
      %s45 = sphi 0, %s43
      %s46 = sphi 0, %s45
      %s60 = sphi 0, %s46
      %s64 = sphi 0, %s64
      %s66 = sphi 0, %s64
      %s67 = sphi 0, %s66
      %s81 = sphi 0, %s67
      %s87 = sphi 0, %s89
      %s90 = sphi 0, %s87
      %s91 = sphi 0, %s90
      %s107 = sphi 0, %s91
    $region4: #{model_forward.4} parent=1 // loop_header_branch
      %12 = sbr.rel (%p10) target = $region8
    $region5: #{model_forward.4} parent=1 // loop_body
      %s14 = ssub.s32 %s9, 1
      %s15 = ssub.s32 %s9, 2
      %s16 = sadd.s32 %s9, 1
      %s17 = ssub.s32 %s9, %s16
      %p18 = scmp.eq.s32.totalorder %s17, 0
      %s20 = sadd.s32 %s19, 1
      %s21 = scalar_select %p18, %s19, %s20
      %p24 = pneg %p18
      %p25 = scmp.eq.s32.totalorder %s9, 3
      %p26 = por %p24, %p25
      %p27 = scmp.ne.s32.totalorder %s19, %s22
      %p28 = scmp.eq.s32.totalorder %s9, 0
      %p29 = por %p27, %p28
      %p30 = scmp.ne.s32.totalorder %s19, %s22
      %p31 = scmp.eq.s32.totalorder %s14, 3
      %p32 = por %p30, %p31
      %p33 = scmp.ne.s32.totalorder %s22, %s23
      %p34 = scmp.eq.s32.totalorder %s14, 0
      %p35 = por %p33, %p34
      %p36 = scmp.ne.s32.totalorder %s22, %s23
      %p37 = scmp.eq.s32.totalorder %s15, 3
      %p38 = por %p36, %p37
      %p40 = scmp.ne.s32.totalorder %s23, %s39
      %p41 = scmp.eq.s32.totalorder %s15, 0
      %p42 = por %p40, %p41
      %s44 = sadd.s32 %s43, 1
      %p47 = scmp.eq.s32.totalorder %s9, 3
      %p48 = scmp.ne.s32.totalorder %s43, %s45
      %p49 = scmp.eq.s32.totalorder %s9, 0
      %p50 = por %p48, %p49
      %p51 = scmp.ne.s32.totalorder %s43, %s45
      %p52 = scmp.eq.s32.totalorder %s14, 3
      %p53 = por %p51, %p52
      %p54 = scmp.ne.s32.totalorder %s45, %s46
      %p55 = scmp.eq.s32.totalorder %s14, 0
      %p56 = por %p54, %p55
      %p57 = scmp.ne.s32.totalorder %s45, %s46
      %p58 = scmp.eq.s32.totalorder %s15, 3
      %p59 = por %p57, %p58
      %p61 = scmp.ne.s32.totalorder %s46, %s60
      %p62 = scmp.eq.s32.totalorder %s15, 0
      %p63 = por %p61, %p62
      %s65 = sadd.s32 %s64, 1
      %p68 = scmp.eq.s32.totalorder %s9, 3
      %p69 = scmp.ne.s32.totalorder %s64, %s66
      %p70 = scmp.eq.s32.totalorder %s9, 0
      %p71 = por %p69, %p70
      %p72 = scmp.ne.s32.totalorder %s64, %s66
      %p73 = scmp.eq.s32.totalorder %s14, 3
      %p74 = por %p72, %p73
      %p75 = scmp.ne.s32.totalorder %s66, %s67
      %p76 = scmp.eq.s32.totalorder %s14, 0
      %p77 = por %p75, %p76
      %p78 = scmp.ne.s32.totalorder %s66, %s67
      %p79 = scmp.eq.s32.totalorder %s15, 3
      %p80 = por %p78, %p79
      %p82 = scmp.ne.s32.totalorder %s67, %s81
      %p83 = scmp.eq.s32.totalorder %s15, 0
      %p84 = por %p82, %p83
      %s85 = ssub.s32 %s9, %s16
      %p86 = scmp.eq.s32.totalorder %s85, 0
      %s88 = sadd.s32 %s87, 1
      %s89 = scalar_select %p86, %s87, %s88
      %p92 = pneg %p86
      %p93 = scmp.eq.s32.totalorder %s9, 3
      %p94 = por %p92, %p93
      %p95 = scmp.ne.s32.totalorder %s87, %s90
      %p96 = scmp.eq.s32.totalorder %s9, 0
      %p97 = por %p95, %p96
      %p98 = scmp.ne.s32.totalorder %s87, %s90
      %p99 = scmp.eq.s32.totalorder %s14, 3
      %p100 = por %p98, %p99
      %p101 = scmp.ne.s32.totalorder %s90, %s91
      %p102 = scmp.eq.s32.totalorder %s14, 0
      %p103 = por %p101, %p102
      %p104 = scmp.ne.s32.totalorder %s90, %s91
      %p105 = scmp.eq.s32.totalorder %s15, 3
      %p106 = por %p104, %p105
      %p108 = scmp.ne.s32.totalorder %s91, %s107
      %p109 = scmp.eq.s32.totalorder %s15, 0
      %p110 = por %p108, %p109
      %p111 = scmp.le.s32.totalorder 1, %s9
      %p112 = scmp.lt.s32.totalorder %s9, 5
      %p113 = pnand %p111, %p112
      %p114 = pneg %p113
      // Predicated region
      $region9: #{model_forward.4} parent=5 // pred_check
        _
      $region10: #{model_forward.4} parent=5 // pred_check_branch
        %116 = sbr.rel (%p113) target = $region12
      $region11: #{model_forward.4} parent=5 // pred_region
        %s117 = ssub.s32 %s9, 1
        // Predicated region
        $region13: #{model_forward.4} parent=11 // pred_check
          %p118 = pneg %p56
        $region14: #{model_forward.4} parent=11 // pred_check_branch
          %120 = sbr.rel (%p118) target = $region16
        $region15: #{model_forward.4} parent=11 // pred_region
          _
        $region16: #{model_forward.4} parent=11 // pred_fallthru
          _
        // Predicated region
        $region17: #{model_forward.4} parent=11 // pred_check
          %p121 = pneg %p77
        $region18: #{model_forward.4} parent=11 // pred_check_branch
          %123 = sbr.rel (%p121) target = $region20
        $region19: #{model_forward.4} parent=11 // pred_region
          _
        $region20: #{model_forward.4} parent=11 // pred_fallthru
          _
      $region12: #{model_forward.4} parent=5 // pred_fallthru
        _
      %p124 = scmp.lt.s32.totalorder %s9, 4
      // Predicated region
      $region21: #{model_forward.4} parent=5 // pred_check
        %p125 = pneg %p124
      $region22: #{model_forward.4} parent=5 // pred_check_branch
        %127 = sbr.rel (%p125) target = $region24
      $region23: #{model_forward.4} parent=5 // pred_region
        // Predicated region
        $region25: #{model_forward.4} parent=23 // pred_check
          %p128 = pneg %p29
        $region26: #{model_forward.4} parent=23 // pred_check_branch
          %130 = sbr.rel (%p128) target = $region28
        $region27: #{model_forward.4} parent=23 // pred_region
          %s131 = smul.u32 64, %s9
          %s132 = ssub.s32 196, %s131
          %p133 = scmp.lt.s32.totalorder %s132, 64
          %s134 = scalar_select %p133, %s132, 64
          %s135 = smul.u32 4, %s134
          %p136 = scmp.lt.s32.totalorder %s131, 195
          %s137 = scalar_select %p136, %s131, 195
          %s138 = smul.addr %s137, 4
          %s139 = scalar_lea.vmem %s0, %s138
          %s140 = smul.u32 64, %s9
          %s141 = ssub.s32 196, %s140
          %p142 = scmp.lt.s32.totalorder %s141, 64
          %s143 = scalar_select %p142, %s141, 64
          %s144 = smul.u32 4, %s143
        $region28: #{model_forward.4} parent=23 // pred_fallthru
          _
      $region24: #{model_forward.4} parent=5 // pred_fallthru
        _
      %p145 = scmp.le.s32.totalorder 1, %s9
      %p146 = scmp.lt.s32.totalorder %s9, 5
      %p147 = pnand %p145, %p146
      %p148 = pneg %p147
      // Predicated region
      $region29: #{model_forward.4} parent=5 // pred_check
        _
      $region30: #{model_forward.4} parent=5 // pred_check_branch
        %150 = sbr.rel (%p147) target = $region32
      $region31: #{model_forward.4} parent=5 // pred_region
        %s151 = ssub.s32 %s9, 1
        %s152 = smul.u32 64, %s14
        %s153 = ssub.s32 196, %s152
        %p154 = scmp.lt.s32.totalorder %s153, 64
        %s155 = scalar_select %p154, %s153, 64
        %s156 = smul.u32 4, %s155
        %p157 = scmp.lt.s32.totalorder %s152, 195
        %s158 = scalar_select %p157, %s152, 195
        %s159 = smul.addr %s158, 4
        %s160 = scalar_lea.vmem %s0, %s159
        %p161 = pneg %p35
        %p162 = pneg %p32
        %p163 = pneg %p56
        %p164 = pneg %p53
        %p165 = pneg %p77
        %p166 = pneg %p74
        %p167 = pneg %p103
        %p168 = pneg %p100
        %s169 = sand.u32 %s90, 1
        %s170 = sand.u32 %s90, 1
        %s171 = smul.addr %s170, 256
        %s172 = scalar_lea.vmem [#allocation2], %s171
        %s173 = smul.u32 64, %s14
        %s174 = ssub.s32 196, %s173
        %p175 = scmp.lt.s32.totalorder %s174, 64
        %s176 = scalar_select %p175, %s174, 64
        %s177 = smul.u32 4, %s176
        %p178 = scmp.lt.s32.totalorder %s173, 195
        %s179 = scalar_select %p178, %s173, 195
        %s180 = smul.addr %s179, 4
        %s181 = scalar_lea.vmem %s0, %s180
        %s182 = smul.u32 64, %s14
        %s183 = ssub.s32 196, %s182
        %p184 = scmp.lt.s32.totalorder %s183, 64
        %s185 = scalar_select %p184, %s183, 64
        %s186 = smul.u32 4, %s185
        %s187 = smul.u32 64, %s14
        %s188 = ssub.s32 196, %s187
        %p189 = scmp.lt.s32.totalorder %s188, 64
        %s190 = scalar_select %p189, %s188, 64
        %s191 = smul.u32 4, %s190
        %v193 = vld [vmem:[%s181] sm:$0xf]
        %v194 = vld [vmem:[%s181 + $0x4] sm:$0xf]
        %v195 = vld [vmem:[%s181 + $0x8] sm:$0xf]
        %v196 = vld [vmem:[%s181 + $0xc] sm:$0xf]
        %v197 = vld [vmem:[%s181 + $0x10] sm:$0xf]
        %v198 = vld [vmem:[%s181 + $0x14] sm:$0xf]
        %v199 = vld [vmem:[%s181 + $0x18] sm:$0xf]
        %v200 = vld [vmem:[%s181 + $0x1c] sm:$0xf]
        %v201 = vld [vmem:[%s181 + $0x20] sm:$0xf]
        %v202 = vld [vmem:[%s181 + $0x24] sm:$0xf]
        %v203 = vld [vmem:[%s181 + $0x28] sm:$0xf]
        %v204 = vld [vmem:[%s181 + $0x2c] sm:$0xf]
        %v205 = vld [vmem:[%s181 + $0x30] sm:$0xf]
        %v206 = vld [vmem:[%s181 + $0x34] sm:$0xf]
        %v207 = vld [vmem:[%s181 + $0x38] sm:$0xf]
        %v208 = vld [vmem:[%s181 + $0x3c] sm:$0xf]
        %v209 = vld [vmem:[%s181 + $0x40] sm:$0xf]
        %v210 = vld [vmem:[%s181 + $0x44] sm:$0xf]
        %v211 = vld [vmem:[%s181 + $0x48] sm:$0xf]
        %v212 = vld [vmem:[%s181 + $0x4c] sm:$0xf]
        %v213 = vld [vmem:[%s181 + $0x50] sm:$0xf]
        %v214 = vld [vmem:[%s181 + $0x54] sm:$0xf]
        %v215 = vld [vmem:[%s181 + $0x58] sm:$0xf]
        %v216 = vld [vmem:[%s181 + $0x5c] sm:$0xf]
        %v217 = vld [vmem:[%s181 + $0x60] sm:$0xf]
        %v218 = vld [vmem:[%s181 + $0x64] sm:$0xf]
        %v219 = vld [vmem:[%s181 + $0x68] sm:$0xf]
        %v220 = vld [vmem:[%s181 + $0x6c] sm:$0xf]
        %v221 = vld [vmem:[%s181 + $0x70] sm:$0xf]
        %v222 = vld [vmem:[%s181 + $0x74] sm:$0xf]
        %v223 = vld [vmem:[%s181 + $0x78] sm:$0xf]
        %v224 = vld [vmem:[%s181 + $0x7c] sm:$0xf]
        %v225 = vld [vmem:[%s181 + $0x80] sm:$0xf]
        %v226 = vld [vmem:[%s181 + $0x84] sm:$0xf]
        %v227 = vld [vmem:[%s181 + $0x88] sm:$0xf]
        %v228 = vld [vmem:[%s181 + $0x8c] sm:$0xf]
        %v229 = vld [vmem:[%s181 + $0x90] sm:$0xf]
        %v230 = vld [vmem:[%s181 + $0x94] sm:$0xf]
        %v231 = vld [vmem:[%s181 + $0x98] sm:$0xf]
        %v232 = vld [vmem:[%s181 + $0x9c] sm:$0xf]
        %v233 = vld [vmem:[%s181 + $0xa0] sm:$0xf]
        %v234 = vld [vmem:[%s181 + $0xa4] sm:$0xf]
        %v235 = vld [vmem:[%s181 + $0xa8] sm:$0xf]
        %v236 = vld [vmem:[%s181 + $0xac] sm:$0xf]
        %v237 = vld [vmem:[%s181 + $0xb0] sm:$0xf]
        %v238 = vld [vmem:[%s181 + $0xb4] sm:$0xf]
        %v239 = vld [vmem:[%s181 + $0xb8] sm:$0xf]
        %v240 = vld [vmem:[%s181 + $0xbc] sm:$0xf]
        %v241 = vld [vmem:[%s181 + $0xc0] sm:$0xf]
        %v242 = vld [vmem:[%s181 + $0xc4] sm:$0xf]
        %v243 = vld [vmem:[%s181 + $0xc8] sm:$0xf]
        %v244 = vld [vmem:[%s181 + $0xcc] sm:$0xf]
        %v245 = vld [vmem:[%s181 + $0xd0] sm:$0xf]
        %v246 = vld [vmem:[%s181 + $0xd4] sm:$0xf]
        %v247 = vld [vmem:[%s181 + $0xd8] sm:$0xf]
        %v248 = vld [vmem:[%s181 + $0xdc] sm:$0xf]
        %v249 = vld [vmem:[%s181 + $0xe0] sm:$0xf]
        %v250 = vld [vmem:[%s181 + $0xe4] sm:$0xf]
        %v251 = vld [vmem:[%s181 + $0xe8] sm:$0xf]
        %v252 = vld [vmem:[%s181 + $0xec] sm:$0xf]
        %v253 = vld [vmem:[%s181 + $0xf0] sm:$0xf]
        %v254 = vld [vmem:[%s181 + $0xf4] sm:$0xf]
        %v255 = vld [vmem:[%s181 + $0xf8] sm:$0xf]
        %v256 = vld [vmem:[%s181 + $0xfc] sm:$0xf]
        %v257 = vld [vmem:[%s1] sm:$0xf]
        %v258 = vld [vmem:[%s1 + $0x4] sm:$0xf]
        %v259 = vld [vmem:[%s1 + $0x8] sm:$0xf]
        %v260 = vld [vmem:[%s1 + $0xc] sm:$0xf]
        %v261 = vld [vmem:[%s1 + $0x10] sm:$0x3]
        %v262 = vld [vmem:[%s2] sm:$0x1]
        %v264 = vperm.slane %v262, 0
        %v330 = vunpack.c.l.b16 %v193
        %v331 = vunpack.c.l.b16 %v194
        %v332 = vunpack.c.l.b16 %v195
        %v333 = vunpack.c.l.b16 %v196
        %v334 = vunpack.c.l.b16 %v197
        %v335 = vunpack.c.l.b16 %v198
        %v336 = vunpack.c.l.b16 %v199
        %v337 = vunpack.c.l.b16 %v200
        %v338 = vunpack.c.l.b16 %v201
        %v339 = vunpack.c.l.b16 %v202
        %v340 = vunpack.c.l.b16 %v203
        %v341 = vunpack.c.l.b16 %v204
        %v342 = vunpack.c.l.b16 %v205
        %v343 = vunpack.c.l.b16 %v206
        %v344 = vunpack.c.l.b16 %v207
        %v345 = vunpack.c.l.b16 %v208
        %v346 = vunpack.c.l.b16 %v209
        %v347 = vunpack.c.l.b16 %v210
        %v348 = vunpack.c.l.b16 %v211
        %v349 = vunpack.c.l.b16 %v212
        %v350 = vunpack.c.l.b16 %v213
        %v351 = vunpack.c.l.b16 %v214
        %v352 = vunpack.c.l.b16 %v215
        %v353 = vunpack.c.l.b16 %v216
        %v354 = vunpack.c.l.b16 %v217
        %v355 = vunpack.c.l.b16 %v218
        %v356 = vunpack.c.l.b16 %v219
        %v357 = vunpack.c.l.b16 %v220
        %v358 = vunpack.c.l.b16 %v221
        %v359 = vunpack.c.l.b16 %v222
        %v360 = vunpack.c.l.b16 %v223
        %v361 = vunpack.c.l.b16 %v224
        %v362 = vunpack.c.l.b16 %v225
        %v363 = vunpack.c.l.b16 %v226
        %v364 = vunpack.c.l.b16 %v227
        %v365 = vunpack.c.l.b16 %v228
        %v366 = vunpack.c.l.b16 %v229
        %v367 = vunpack.c.l.b16 %v230
        %v368 = vunpack.c.l.b16 %v231
        %v369 = vunpack.c.l.b16 %v232
        %v370 = vunpack.c.l.b16 %v233
        %v371 = vunpack.c.l.b16 %v234
        %v372 = vunpack.c.l.b16 %v235
        %v373 = vunpack.c.l.b16 %v236
        %v374 = vunpack.c.l.b16 %v237
        %v375 = vunpack.c.l.b16 %v238
        %v376 = vunpack.c.l.b16 %v239
        %v377 = vunpack.c.l.b16 %v240
        %v378 = vunpack.c.l.b16 %v241
        %v379 = vunpack.c.l.b16 %v242
        %v380 = vunpack.c.l.b16 %v243
        %v381 = vunpack.c.l.b16 %v244
        %v382 = vunpack.c.l.b16 %v245
        %v383 = vunpack.c.l.b16 %v246
        %v384 = vunpack.c.l.b16 %v247
        %v385 = vunpack.c.l.b16 %v248
        %v386 = vunpack.c.l.b16 %v249
        %v387 = vunpack.c.l.b16 %v250
        %v388 = vunpack.c.l.b16 %v251
        %v389 = vunpack.c.l.b16 %v252
        %v390 = vunpack.c.l.b16 %v253
        %v391 = vunpack.c.l.b16 %v254
        %v392 = vunpack.c.l.b16 %v255
        %v393 = vunpack.c.l.b16 %v256
        %v394 = vpack.c.b16 %v331, %v330
        %v395 = vpack.c.b16 %v333, %v332
        %v396 = vpack.c.b16 %v335, %v334
        %v397 = vpack.c.b16 %v337, %v336
        %v398 = vpack.c.b16 %v339, %v338
        %v399 = vpack.c.b16 %v341, %v340
        %v400 = vpack.c.b16 %v343, %v342
        %v401 = vpack.c.b16 %v345, %v344
        %v402 = vpack.c.b16 %v347, %v346
        %v403 = vpack.c.b16 %v349, %v348
        %v404 = vpack.c.b16 %v351, %v350
        %v405 = vpack.c.b16 %v353, %v352
        %v406 = vpack.c.b16 %v355, %v354
        %v407 = vpack.c.b16 %v357, %v356
        %v408 = vpack.c.b16 %v359, %v358
        %v409 = vpack.c.b16 %v361, %v360
        %v410 = vpack.c.b16 %v363, %v362
        %v411 = vpack.c.b16 %v365, %v364
        %v412 = vpack.c.b16 %v367, %v366
        %v413 = vpack.c.b16 %v369, %v368
        %v414 = vpack.c.b16 %v371, %v370
        %v415 = vpack.c.b16 %v373, %v372
        %v416 = vpack.c.b16 %v375, %v374
        %v417 = vpack.c.b16 %v377, %v376
        %v418 = vpack.c.b16 %v379, %v378
        %v419 = vpack.c.b16 %v381, %v380
        %v420 = vpack.c.b16 %v383, %v382
        %v421 = vpack.c.b16 %v385, %v384
        %v422 = vpack.c.b16 %v387, %v386
        %v423 = vpack.c.b16 %v389, %v388
        %v424 = vpack.c.b16 %v391, %v390
        %v425 = vpack.c.b16 %v393, %v392
        %v431 = vunpack.c.l.b16 %v257
        %v432 = vunpack.c.l.b16 %v258
        %v433 = vunpack.c.l.b16 %v259
        %v434 = vunpack.c.l.b16 %v260
        %v435 = vunpack.c.l.b16 %v261
        %v436 = vpack.c.b16 %v432, %v431
        %v437 = vpack.c.b16 %v434, %v433
        %v438 = vpack.c.b16 %v435, %v435
        %vm441 = vcmask 293888
        %v443 = vsel %vm441, %v394, 0
        %v446 = vsel %vm441, %v395, 0
        %v449 = vsel %vm441, %v396, 0
        %v452 = vsel %vm441, %v397, 0
        %v455 = vsel %vm441, %v398, 0
        %v458 = vsel %vm441, %v399, 0
        %v461 = vsel %vm441, %v400, 0
        %v464 = vsel %vm441, %v401, 0
        %v467 = vsel %vm441, %v402, 0
        %v470 = vsel %vm441, %v403, 0
        %v473 = vsel %vm441, %v404, 0
        %v476 = vsel %vm441, %v405, 0
        %v479 = vsel %vm441, %v406, 0
        %v482 = vsel %vm441, %v407, 0
        %v485 = vsel %vm441, %v408, 0
        %v488 = vsel %vm441, %v409, 0
        %v491 = vsel %vm441, %v410, 0
        %v494 = vsel %vm441, %v411, 0
        %v497 = vsel %vm441, %v412, 0
        %v500 = vsel %vm441, %v413, 0
        %v503 = vsel %vm441, %v414, 0
        %v506 = vsel %vm441, %v415, 0
        %v509 = vsel %vm441, %v416, 0
        %v512 = vsel %vm441, %v417, 0
        %v515 = vsel %vm441, %v418, 0
        %v518 = vsel %vm441, %v419, 0
        %v521 = vsel %vm441, %v420, 0
        %v524 = vsel %vm441, %v421, 0
        %v527 = vsel %vm441, %v422, 0
        %v530 = vsel %vm441, %v423, 0
        %v533 = vsel %vm441, %v424, 0
        %v536 = vsel %vm441, %v425, 0
        %vm538 = vcmask 1041408
        %v540 = vsel %vm538, %v438, 0
        %542 = vmatpush.bf16.msra.mxu0 0
        %543 = vmatpush.bf16.msra.mxu0 0
        %544 = vmatpush.bf16.msra.mxu0 0
        %545 = vmatpush.bf16.msra.mxu0 0
        %546 = vmatpush.bf16.msra.mxu0 0
        %547 = vmatpush.bf16.msra.mxu0 %v540
        %548 = vmatpush.bf16.msra.mxu0 %v437
        %549 = vmatpush.bf16.msra.mxu0 %v436
        %550 = vmatmul.bf16.gmra.mxu0 %v443
        %v551 = vpop.f32.mrf.mxu0
        %v552 = vadd.f32 %v264, %v551
        %v553 = vpop.f32.mrf.mxu0
        %v554 = vadd.f32 %v264, %v553
        %555 = vmatmul.bf16.gmra.mxu0 %v446
        %v556 = vpop.f32.mrf.mxu0
        %v557 = vadd.f32 %v264, %v556
        %v558 = vpop.f32.mrf.mxu0
        %v559 = vadd.f32 %v264, %v558
        %560 = vmatmul.bf16.gmra.mxu0 %v449
        %v561 = vpop.f32.mrf.mxu0
        %v562 = vadd.f32 %v264, %v561
        %v563 = vpop.f32.mrf.mxu0
        %v564 = vadd.f32 %v264, %v563
        %565 = vmatmul.bf16.gmra.mxu0 %v452
        %v566 = vpop.f32.mrf.mxu0
        %v567 = vadd.f32 %v264, %v566
        %v568 = vpop.f32.mrf.mxu0
        %v569 = vadd.f32 %v264, %v568
        %570 = vmatmul.bf16.gmra.mxu0 %v455
        %v571 = vpop.f32.mrf.mxu0
        %v572 = vadd.f32 %v264, %v571
        %v573 = vpop.f32.mrf.mxu0
        %v574 = vadd.f32 %v264, %v573
        %575 = vmatmul.bf16.gmra.mxu0 %v458
        %v576 = vpop.f32.mrf.mxu0
        %v577 = vadd.f32 %v264, %v576
        %v578 = vpop.f32.mrf.mxu0
        %v579 = vadd.f32 %v264, %v578
        %580 = vmatmul.bf16.gmra.mxu0 %v461
        %v581 = vpop.f32.mrf.mxu0
        %v582 = vadd.f32 %v264, %v581
        %v583 = vpop.f32.mrf.mxu0
        %v584 = vadd.f32 %v264, %v583
        %585 = vmatmul.bf16.gmra.mxu0 %v464
        %v586 = vpop.f32.mrf.mxu0
        %v587 = vadd.f32 %v264, %v586
        %v588 = vpop.f32.mrf.mxu0
        %v589 = vadd.f32 %v264, %v588
        %590 = vmatmul.bf16.gmra.mxu0 %v467
        %v591 = vpop.f32.mrf.mxu0
        %v592 = vadd.f32 %v264, %v591
        %v593 = vpop.f32.mrf.mxu0
        %v594 = vadd.f32 %v264, %v593
        %595 = vmatmul.bf16.gmra.mxu0 %v470
        %v596 = vpop.f32.mrf.mxu0
        %v597 = vadd.f32 %v264, %v596
        %v598 = vpop.f32.mrf.mxu0
        %v599 = vadd.f32 %v264, %v598
        %600 = vmatmul.bf16.gmra.mxu0 %v473
        %v601 = vpop.f32.mrf.mxu0
        %v602 = vadd.f32 %v264, %v601
        %v603 = vpop.f32.mrf.mxu0
        %v604 = vadd.f32 %v264, %v603
        %605 = vmatmul.bf16.gmra.mxu0 %v476
        %v606 = vpop.f32.mrf.mxu0
        %v607 = vadd.f32 %v264, %v606
        %v608 = vpop.f32.mrf.mxu0
        %v609 = vadd.f32 %v264, %v608
        %610 = vmatmul.bf16.gmra.mxu0 %v479
        %v611 = vpop.f32.mrf.mxu0
        %v612 = vadd.f32 %v264, %v611
        %v613 = vpop.f32.mrf.mxu0
        %v614 = vadd.f32 %v264, %v613
        %615 = vmatmul.bf16.gmra.mxu0 %v482
        %v616 = vpop.f32.mrf.mxu0
        %v617 = vadd.f32 %v264, %v616
        %v618 = vpop.f32.mrf.mxu0
        %v619 = vadd.f32 %v264, %v618
        %620 = vmatmul.bf16.gmra.mxu0 %v485
        %v621 = vpop.f32.mrf.mxu0
        %v622 = vadd.f32 %v264, %v621
        %v623 = vpop.f32.mrf.mxu0
        %v624 = vadd.f32 %v264, %v623
        %625 = vmatmul.bf16.gmra.mxu0 %v488
        %v626 = vpop.f32.mrf.mxu0
        %v627 = vadd.f32 %v264, %v626
        %v628 = vpop.f32.mrf.mxu0
        %v629 = vadd.f32 %v264, %v628
        %630 = vmatmul.bf16.gmra.mxu0 %v491
        %v631 = vpop.f32.mrf.mxu0
        %v632 = vadd.f32 %v264, %v631
        %v633 = vpop.f32.mrf.mxu0
        %v634 = vadd.f32 %v264, %v633
        %635 = vmatmul.bf16.gmra.mxu0 %v494
        %v636 = vpop.f32.mrf.mxu0
        %v637 = vadd.f32 %v264, %v636
        %v638 = vpop.f32.mrf.mxu0
        %v639 = vadd.f32 %v264, %v638
        %640 = vmatmul.bf16.gmra.mxu0 %v497
        %v641 = vpop.f32.mrf.mxu0
        %v642 = vadd.f32 %v264, %v641
        %v643 = vpop.f32.mrf.mxu0
        %v644 = vadd.f32 %v264, %v643
        %645 = vmatmul.bf16.gmra.mxu0 %v500
        %v646 = vpop.f32.mrf.mxu0
        %v647 = vadd.f32 %v264, %v646
        %v648 = vpop.f32.mrf.mxu0
        %v649 = vadd.f32 %v264, %v648
        %650 = vmatmul.bf16.gmra.mxu0 %v503
        %v651 = vpop.f32.mrf.mxu0
        %v652 = vadd.f32 %v264, %v651
        %v653 = vpop.f32.mrf.mxu0
        %v654 = vadd.f32 %v264, %v653
        %655 = vmatmul.bf16.gmra.mxu0 %v506
        %v656 = vpop.f32.mrf.mxu0
        %v657 = vadd.f32 %v264, %v656
        %v658 = vpop.f32.mrf.mxu0
        %v659 = vadd.f32 %v264, %v658
        %660 = vmatmul.bf16.gmra.mxu0 %v509
        %v661 = vpop.f32.mrf.mxu0
        %v662 = vadd.f32 %v264, %v661
        %v663 = vpop.f32.mrf.mxu0
        %v664 = vadd.f32 %v264, %v663
        %665 = vmatmul.bf16.gmra.mxu0 %v512
        %v666 = vpop.f32.mrf.mxu0
        %v667 = vadd.f32 %v264, %v666
        %v668 = vpop.f32.mrf.mxu0
        %v669 = vadd.f32 %v264, %v668
        %670 = vmatmul.bf16.gmra.mxu0 %v515
        %v671 = vpop.f32.mrf.mxu0
        %v672 = vadd.f32 %v264, %v671
        %v673 = vpop.f32.mrf.mxu0
        %v674 = vadd.f32 %v264, %v673
        %675 = vmatmul.bf16.gmra.mxu0 %v518
        %v676 = vpop.f32.mrf.mxu0
        %v677 = vadd.f32 %v264, %v676
        %v678 = vpop.f32.mrf.mxu0
        %v679 = vadd.f32 %v264, %v678
        %680 = vmatmul.bf16.gmra.mxu0 %v521
        %v681 = vpop.f32.mrf.mxu0
        %v682 = vadd.f32 %v264, %v681
        %v683 = vpop.f32.mrf.mxu0
        %v684 = vadd.f32 %v264, %v683
        %685 = vmatmul.bf16.gmra.mxu0 %v524
        %v686 = vpop.f32.mrf.mxu0
        %v687 = vadd.f32 %v264, %v686
        %v688 = vpop.f32.mrf.mxu0
        %v689 = vadd.f32 %v264, %v688
        %690 = vmatmul.bf16.gmra.mxu0 %v527
        %v691 = vpop.f32.mrf.mxu0
        %v692 = vadd.f32 %v264, %v691
        %v693 = vpop.f32.mrf.mxu0
        %v694 = vadd.f32 %v264, %v693
        %695 = vmatmul.bf16.gmra.mxu0 %v530
        %v696 = vpop.f32.mrf.mxu0
        %v697 = vadd.f32 %v264, %v696
        %v698 = vpop.f32.mrf.mxu0
        %v699 = vadd.f32 %v264, %v698
        %700 = vmatmul.bf16.gmra.mxu0 %v533
        %v701 = vpop.f32.mrf.mxu0
        %v702 = vadd.f32 %v264, %v701
        %v703 = vpop.f32.mrf.mxu0
        %v704 = vadd.f32 %v264, %v703
        %705 = vmatmul.bf16.gmra.mxu0 %v536
        %v706 = vpop.f32.mrf.mxu0
        %v707 = vadd.f32 %v264, %v706
        %v708 = vpop.f32.mrf.mxu0
        %v709 = vadd.f32 %v264, %v708
        %710 = vdwg.mxu0
        %v711 = vmax.f32 %v552, 0.0
        %v712 = vmax.f32 %v554, 0.0
        %v713 = vmax.f32 %v557, 0.0
        %v714 = vmax.f32 %v559, 0.0
        %v715 = vmax.f32 %v562, 0.0
        %v716 = vmax.f32 %v564, 0.0
        %v717 = vmax.f32 %v567, 0.0
        %v718 = vmax.f32 %v569, 0.0
        %v719 = vmax.f32 %v572, 0.0
        %v720 = vmax.f32 %v574, 0.0
        %v721 = vmax.f32 %v577, 0.0
        %v722 = vmax.f32 %v579, 0.0
        %v723 = vmax.f32 %v582, 0.0
        %v724 = vmax.f32 %v584, 0.0
        %v725 = vmax.f32 %v587, 0.0
        %v726 = vmax.f32 %v589, 0.0
        %v727 = vmax.f32 %v592, 0.0
        %v728 = vmax.f32 %v594, 0.0
        %v729 = vmax.f32 %v597, 0.0
        %v730 = vmax.f32 %v599, 0.0
        %v731 = vmax.f32 %v602, 0.0
        %v732 = vmax.f32 %v604, 0.0
        %v733 = vmax.f32 %v607, 0.0
        %v734 = vmax.f32 %v609, 0.0
        %v735 = vmax.f32 %v612, 0.0
        %v736 = vmax.f32 %v614, 0.0
        %v737 = vmax.f32 %v617, 0.0
        %v738 = vmax.f32 %v619, 0.0
        %v739 = vmax.f32 %v622, 0.0
        %v740 = vmax.f32 %v624, 0.0
        %v741 = vmax.f32 %v627, 0.0
        %v742 = vmax.f32 %v629, 0.0
        %v743 = vmax.f32 %v632, 0.0
        %v744 = vmax.f32 %v634, 0.0
        %v745 = vmax.f32 %v637, 0.0
        %v746 = vmax.f32 %v639, 0.0
        %v747 = vmax.f32 %v642, 0.0
        %v748 = vmax.f32 %v644, 0.0
        %v749 = vmax.f32 %v647, 0.0
        %v750 = vmax.f32 %v649, 0.0
        %v751 = vmax.f32 %v652, 0.0
        %v752 = vmax.f32 %v654, 0.0
        %v753 = vmax.f32 %v657, 0.0
        %v754 = vmax.f32 %v659, 0.0
        %v755 = vmax.f32 %v662, 0.0
        %v756 = vmax.f32 %v664, 0.0
        %v757 = vmax.f32 %v667, 0.0
        %v758 = vmax.f32 %v669, 0.0
        %v759 = vmax.f32 %v672, 0.0
        %v760 = vmax.f32 %v674, 0.0
        %v761 = vmax.f32 %v677, 0.0
        %v762 = vmax.f32 %v679, 0.0
        %v763 = vmax.f32 %v682, 0.0
        %v764 = vmax.f32 %v684, 0.0
        %v765 = vmax.f32 %v687, 0.0
        %v766 = vmax.f32 %v689, 0.0
        %v767 = vmax.f32 %v692, 0.0
        %v768 = vmax.f32 %v694, 0.0
        %v769 = vmax.f32 %v697, 0.0
        %v770 = vmax.f32 %v699, 0.0
        %v771 = vmax.f32 %v702, 0.0
        %v772 = vmax.f32 %v704, 0.0
        %v773 = vmax.f32 %v707, 0.0
        %v774 = vmax.f32 %v709, 0.0
        %v775 = vpack.c.bf16 %v711, %v711
        %v776 = vpack.c.bf16 %v712, %v712
        %v777 = vpack.c.bf16 %v713, %v713
        %v778 = vpack.c.bf16 %v714, %v714
        %v779 = vpack.c.bf16 %v715, %v715
        %v780 = vpack.c.bf16 %v716, %v716
        %v781 = vpack.c.bf16 %v717, %v717
        %v782 = vpack.c.bf16 %v718, %v718
        %v783 = vpack.c.bf16 %v719, %v719
        %v784 = vpack.c.bf16 %v720, %v720
        %v785 = vpack.c.bf16 %v721, %v721
        %v786 = vpack.c.bf16 %v722, %v722
        %v787 = vpack.c.bf16 %v723, %v723
        %v788 = vpack.c.bf16 %v724, %v724
        %v789 = vpack.c.bf16 %v725, %v725
        %v790 = vpack.c.bf16 %v726, %v726
        %v791 = vpack.c.bf16 %v727, %v727
        %v792 = vpack.c.bf16 %v728, %v728
        %v793 = vpack.c.bf16 %v729, %v729
        %v794 = vpack.c.bf16 %v730, %v730
        %v795 = vpack.c.bf16 %v731, %v731
        %v796 = vpack.c.bf16 %v732, %v732
        %v797 = vpack.c.bf16 %v733, %v733
        %v798 = vpack.c.bf16 %v734, %v734
        %v799 = vpack.c.bf16 %v735, %v735
        %v800 = vpack.c.bf16 %v736, %v736
        %v801 = vpack.c.bf16 %v737, %v737
        %v802 = vpack.c.bf16 %v738, %v738
        %v803 = vpack.c.bf16 %v739, %v739
        %v804 = vpack.c.bf16 %v740, %v740
        %v805 = vpack.c.bf16 %v741, %v741
        %v806 = vpack.c.bf16 %v742, %v742
        %v807 = vpack.c.bf16 %v743, %v743
        %v808 = vpack.c.bf16 %v744, %v744
        %v809 = vpack.c.bf16 %v745, %v745
        %v810 = vpack.c.bf16 %v746, %v746
        %v811 = vpack.c.bf16 %v747, %v747
        %v812 = vpack.c.bf16 %v748, %v748
        %v813 = vpack.c.bf16 %v749, %v749
        %v814 = vpack.c.bf16 %v750, %v750
        %v815 = vpack.c.bf16 %v751, %v751
        %v816 = vpack.c.bf16 %v752, %v752
        %v817 = vpack.c.bf16 %v753, %v753
        %v818 = vpack.c.bf16 %v754, %v754
        %v819 = vpack.c.bf16 %v755, %v755
        %v820 = vpack.c.bf16 %v756, %v756
        %v821 = vpack.c.bf16 %v757, %v757
        %v822 = vpack.c.bf16 %v758, %v758
        %v823 = vpack.c.bf16 %v759, %v759
        %v824 = vpack.c.bf16 %v760, %v760
        %v825 = vpack.c.bf16 %v761, %v761
        %v826 = vpack.c.bf16 %v762, %v762
        %v827 = vpack.c.bf16 %v763, %v763
        %v828 = vpack.c.bf16 %v764, %v764
        %v829 = vpack.c.bf16 %v765, %v765
        %v830 = vpack.c.bf16 %v766, %v766
        %v831 = vpack.c.bf16 %v767, %v767
        %v832 = vpack.c.bf16 %v768, %v768
        %v833 = vpack.c.bf16 %v769, %v769
        %v834 = vpack.c.bf16 %v770, %v770
        %v835 = vpack.c.bf16 %v771, %v771
        %v836 = vpack.c.bf16 %v772, %v772
        %v837 = vpack.c.bf16 %v773, %v773
        %v838 = vpack.c.bf16 %v774, %v774
        %vm839 = vcmask 519168
        %840 = vst.msk [vmem:[%s172] sm:$0xf] %vm839, %v775
        %841 = vst.msk [vmem:[%s172 + $0x4] sm:$0xf] %vm839, %v776
        %842 = vst.msk [vmem:[%s172 + $0x8] sm:$0xf] %vm839, %v777
        %843 = vst.msk [vmem:[%s172 + $0xc] sm:$0xf] %vm839, %v778
        %844 = vst.msk [vmem:[%s172 + $0x10] sm:$0xf] %vm839, %v779
        %845 = vst.msk [vmem:[%s172 + $0x14] sm:$0xf] %vm839, %v780
        %846 = vst.msk [vmem:[%s172 + $0x18] sm:$0xf] %vm839, %v781
        %847 = vst.msk [vmem:[%s172 + $0x1c] sm:$0xf] %vm839, %v782
        %848 = vst.msk [vmem:[%s172 + $0x20] sm:$0xf] %vm839, %v783
        %849 = vst.msk [vmem:[%s172 + $0x24] sm:$0xf] %vm839, %v784
        %850 = vst.msk [vmem:[%s172 + $0x28] sm:$0xf] %vm839, %v785
        %851 = vst.msk [vmem:[%s172 + $0x2c] sm:$0xf] %vm839, %v786
        %852 = vst.msk [vmem:[%s172 + $0x30] sm:$0xf] %vm839, %v787
        %853 = vst.msk [vmem:[%s172 + $0x34] sm:$0xf] %vm839, %v788
        %854 = vst.msk [vmem:[%s172 + $0x38] sm:$0xf] %vm839, %v789
        %855 = vst.msk [vmem:[%s172 + $0x3c] sm:$0xf] %vm839, %v790
        %856 = vst.msk [vmem:[%s172 + $0x40] sm:$0xf] %vm839, %v791
        %857 = vst.msk [vmem:[%s172 + $0x44] sm:$0xf] %vm839, %v792
        %858 = vst.msk [vmem:[%s172 + $0x48] sm:$0xf] %vm839, %v793
        %859 = vst.msk [vmem:[%s172 + $0x4c] sm:$0xf] %vm839, %v794
        %860 = vst.msk [vmem:[%s172 + $0x50] sm:$0xf] %vm839, %v795
        %861 = vst.msk [vmem:[%s172 + $0x54] sm:$0xf] %vm839, %v796
        %862 = vst.msk [vmem:[%s172 + $0x58] sm:$0xf] %vm839, %v797
        %863 = vst.msk [vmem:[%s172 + $0x5c] sm:$0xf] %vm839, %v798
        %864 = vst.msk [vmem:[%s172 + $0x60] sm:$0xf] %vm839, %v799
        %865 = vst.msk [vmem:[%s172 + $0x64] sm:$0xf] %vm839, %v800
        %866 = vst.msk [vmem:[%s172 + $0x68] sm:$0xf] %vm839, %v801
        %867 = vst.msk [vmem:[%s172 + $0x6c] sm:$0xf] %vm839, %v802
        %868 = vst.msk [vmem:[%s172 + $0x70] sm:$0xf] %vm839, %v803
        %869 = vst.msk [vmem:[%s172 + $0x74] sm:$0xf] %vm839, %v804
        %870 = vst.msk [vmem:[%s172 + $0x78] sm:$0xf] %vm839, %v805
        %871 = vst.msk [vmem:[%s172 + $0x7c] sm:$0xf] %vm839, %v806
        %872 = vst.msk [vmem:[%s172 + $0x80] sm:$0xf] %vm839, %v807
        %873 = vst.msk [vmem:[%s172 + $0x84] sm:$0xf] %vm839, %v808
        %874 = vst.msk [vmem:[%s172 + $0x88] sm:$0xf] %vm839, %v809
        %875 = vst.msk [vmem:[%s172 + $0x8c] sm:$0xf] %vm839, %v810
        %876 = vst.msk [vmem:[%s172 + $0x90] sm:$0xf] %vm839, %v811
        %877 = vst.msk [vmem:[%s172 + $0x94] sm:$0xf] %vm839, %v812
        %878 = vst.msk [vmem:[%s172 + $0x98] sm:$0xf] %vm839, %v813
        %879 = vst.msk [vmem:[%s172 + $0x9c] sm:$0xf] %vm839, %v814
        %880 = vst.msk [vmem:[%s172 + $0xa0] sm:$0xf] %vm839, %v815
        %881 = vst.msk [vmem:[%s172 + $0xa4] sm:$0xf] %vm839, %v816
        %882 = vst.msk [vmem:[%s172 + $0xa8] sm:$0xf] %vm839, %v817
        %883 = vst.msk [vmem:[%s172 + $0xac] sm:$0xf] %vm839, %v818
        %884 = vst.msk [vmem:[%s172 + $0xb0] sm:$0xf] %vm839, %v819
        %885 = vst.msk [vmem:[%s172 + $0xb4] sm:$0xf] %vm839, %v820
        %886 = vst.msk [vmem:[%s172 + $0xb8] sm:$0xf] %vm839, %v821
        %887 = vst.msk [vmem:[%s172 + $0xbc] sm:$0xf] %vm839, %v822
        %888 = vst.msk [vmem:[%s172 + $0xc0] sm:$0xf] %vm839, %v823
        %889 = vst.msk [vmem:[%s172 + $0xc4] sm:$0xf] %vm839, %v824
        %890 = vst.msk [vmem:[%s172 + $0xc8] sm:$0xf] %vm839, %v825
        %891 = vst.msk [vmem:[%s172 + $0xcc] sm:$0xf] %vm839, %v826
        %892 = vst.msk [vmem:[%s172 + $0xd0] sm:$0xf] %vm839, %v827
        %893 = vst.msk [vmem:[%s172 + $0xd4] sm:$0xf] %vm839, %v828
        %894 = vst.msk [vmem:[%s172 + $0xd8] sm:$0xf] %vm839, %v829
        %895 = vst.msk [vmem:[%s172 + $0xdc] sm:$0xf] %vm839, %v830
        %896 = vst.msk [vmem:[%s172 + $0xe0] sm:$0xf] %vm839, %v831
        %897 = vst.msk [vmem:[%s172 + $0xe4] sm:$0xf] %vm839, %v832
        %898 = vst.msk [vmem:[%s172 + $0xe8] sm:$0xf] %vm839, %v833
        %899 = vst.msk [vmem:[%s172 + $0xec] sm:$0xf] %vm839, %v834
        %900 = vst.msk [vmem:[%s172 + $0xf0] sm:$0xf] %vm839, %v835
        %901 = vst.msk [vmem:[%s172 + $0xf4] sm:$0xf] %vm839, %v836
        %902 = vst.msk [vmem:[%s172 + $0xf8] sm:$0xf] %vm839, %v837
        %903 = vst.msk [vmem:[%s172 + $0xfc] sm:$0xf] %vm839, %v838
        %s904 = sand.u32 %s90, 1
        %s905 = sand.u32 %s90, 1
        %s906 = smul.addr %s905, 256
        %s907 = scalar_lea.vmem [#allocation2], %s906
        // Predicated region
        $region33: #{model_forward.4} parent=31 // pred_check
          %p908 = pneg %p100
        $region34: #{model_forward.4} parent=31 // pred_check_branch
          %910 = sbr.rel (%p908) target = $region36
        $region35: #{model_forward.4} parent=31 // pred_region
          %s911 = smul.u32 64, %s14
          %s912 = ssub.s32 196, %s911
          %p913 = scmp.lt.s32.totalorder %s912, 64
          %s914 = scalar_select %p913, %s912, 64
          %s915 = smul.u32 4, %s914
          %p916 = scmp.ne.s32.totalorder 0, %s915
          %s917 = smul.addr %s911, 4
          %s918 = scalar_lea.vmem %s3, %s917
          // Predicated region
          $region37: #{model_forward.4} parent=35 // pred_check
            %p919 = pneg %p916
          $region38: #{model_forward.4} parent=35 // pred_check_branch
            %921 = sbr.rel (%p919) target = $region40
          $region39: #{model_forward.4} parent=35 // pred_region
            // Predicated region
            $region41: #{model_forward.4} parent=39 // pred_check
              _
            $region42: #{model_forward.4} parent=39 // pred_check_branch
              %923 = sbr.rel target = $region44
            $region43: #{model_forward.4} parent=39 // pred_region
              // Predicated region
              $region63: #{model_forward.4} parent=43 // pred_check
                _
              $region64: #{model_forward.4} parent=43 // pred_check_branch
                %1035 = sbr.rel (0) target = $region66
              $region65: #{model_forward.4} parent=43 // pred_region
                %s1037 = ssub.s32 16, 1
                %s1038 = sshrl.u32 %s914, 5
                // While loop
                $region67: #{model_forward.4} parent=65 // loop_pre_header
                  _
                $region68: #{model_forward.4} parent=65 // loop_header
                  %s1040 = sphi 0, %s1042
                  %p1041 = scmp.ge.s32.totalorder %s1040, %s1038
                  %s1045 = sphi 0, %s1114
                  %s1046 = sphi %s907, %s1117
                  %s1047 = sphi %s918, %s1118
                $region69: #{model_forward.4} parent=65 // loop_header_branch
                  %1044 = sbr.rel (%p1041) target = $region73
                $region70: #{model_forward.4} parent=65 // loop_body
                  %v1048 = vld [vmem:[%s1046] sm:%s1037]
                  %1049 = vst [vmem:[%s1047] sm:%s1037] %v1048
                  %v1050 = vld [vmem:[%s1046 + $0x4] sm:%s1037]
                  %1051 = vst [vmem:[%s1047 + $0x4] sm:%s1037] %v1050
                  %v1052 = vld [vmem:[%s1046 + $0x8] sm:%s1037]
                  %1053 = vst [vmem:[%s1047 + $0x8] sm:%s1037] %v1052
                  %v1054 = vld [vmem:[%s1046 + $0xc] sm:%s1037]
                  %1055 = vst [vmem:[%s1047 + $0xc] sm:%s1037] %v1054
                  %v1056 = vld [vmem:[%s1046 + $0x10] sm:%s1037]
                  %1057 = vst [vmem:[%s1047 + $0x10] sm:%s1037] %v1056
                  %v1058 = vld [vmem:[%s1046 + $0x14] sm:%s1037]
                  %1059 = vst [vmem:[%s1047 + $0x14] sm:%s1037] %v1058
                  %v1060 = vld [vmem:[%s1046 + $0x18] sm:%s1037]
                  %1061 = vst [vmem:[%s1047 + $0x18] sm:%s1037] %v1060
                  %v1062 = vld [vmem:[%s1046 + $0x1c] sm:%s1037]
                  %1063 = vst [vmem:[%s1047 + $0x1c] sm:%s1037] %v1062
                  %v1064 = vld [vmem:[%s1046 + $0x20] sm:%s1037]
                  %1065 = vst [vmem:[%s1047 + $0x20] sm:%s1037] %v1064
                  %v1066 = vld [vmem:[%s1046 + $0x24] sm:%s1037]
                  %1067 = vst [vmem:[%s1047 + $0x24] sm:%s1037] %v1066
                  %v1068 = vld [vmem:[%s1046 + $0x28] sm:%s1037]
                  %1069 = vst [vmem:[%s1047 + $0x28] sm:%s1037] %v1068
                  %v1070 = vld [vmem:[%s1046 + $0x2c] sm:%s1037]
                  %1071 = vst [vmem:[%s1047 + $0x2c] sm:%s1037] %v1070
                  %v1072 = vld [vmem:[%s1046 + $0x30] sm:%s1037]
                  %1073 = vst [vmem:[%s1047 + $0x30] sm:%s1037] %v1072
                  %v1074 = vld [vmem:[%s1046 + $0x34] sm:%s1037]
                  %1075 = vst [vmem:[%s1047 + $0x34] sm:%s1037] %v1074
                  %v1076 = vld [vmem:[%s1046 + $0x38] sm:%s1037]
                  %1077 = vst [vmem:[%s1047 + $0x38] sm:%s1037] %v1076
                  %v1078 = vld [vmem:[%s1046 + $0x3c] sm:%s1037]
                  %1079 = vst [vmem:[%s1047 + $0x3c] sm:%s1037] %v1078
                  %v1080 = vld [vmem:[%s1046 + $0x40] sm:%s1037]
                  %1081 = vst [vmem:[%s1047 + $0x40] sm:%s1037] %v1080
                  %v1082 = vld [vmem:[%s1046 + $0x44] sm:%s1037]
                  %1083 = vst [vmem:[%s1047 + $0x44] sm:%s1037] %v1082
                  %v1084 = vld [vmem:[%s1046 + $0x48] sm:%s1037]
                  %1085 = vst [vmem:[%s1047 + $0x48] sm:%s1037] %v1084
                  %v1086 = vld [vmem:[%s1046 + $0x4c] sm:%s1037]
                  %1087 = vst [vmem:[%s1047 + $0x4c] sm:%s1037] %v1086
                  %v1088 = vld [vmem:[%s1046 + $0x50] sm:%s1037]
                  %1089 = vst [vmem:[%s1047 + $0x50] sm:%s1037] %v1088
                  %v1090 = vld [vmem:[%s1046 + $0x54] sm:%s1037]
                  %1091 = vst [vmem:[%s1047 + $0x54] sm:%s1037] %v1090
                  %v1092 = vld [vmem:[%s1046 + $0x58] sm:%s1037]
                  %1093 = vst [vmem:[%s1047 + $0x58] sm:%s1037] %v1092
                  %v1094 = vld [vmem:[%s1046 + $0x5c] sm:%s1037]
                  %1095 = vst [vmem:[%s1047 + $0x5c] sm:%s1037] %v1094
                  %v1096 = vld [vmem:[%s1046 + $0x60] sm:%s1037]
                  %1097 = vst [vmem:[%s1047 + $0x60] sm:%s1037] %v1096
                  %v1098 = vld [vmem:[%s1046 + $0x64] sm:%s1037]
                  %1099 = vst [vmem:[%s1047 + $0x64] sm:%s1037] %v1098
                  %v1100 = vld [vmem:[%s1046 + $0x68] sm:%s1037]
                  %1101 = vst [vmem:[%s1047 + $0x68] sm:%s1037] %v1100
                  %v1102 = vld [vmem:[%s1046 + $0x6c] sm:%s1037]
                  %1103 = vst [vmem:[%s1047 + $0x6c] sm:%s1037] %v1102
                  %v1104 = vld [vmem:[%s1046 + $0x70] sm:%s1037]
                  %1105 = vst [vmem:[%s1047 + $0x70] sm:%s1037] %v1104
                  %v1106 = vld [vmem:[%s1046 + $0x74] sm:%s1037]
                  %1107 = vst [vmem:[%s1047 + $0x74] sm:%s1037] %v1106
                  %v1108 = vld [vmem:[%s1046 + $0x78] sm:%s1037]
                  %1109 = vst [vmem:[%s1047 + $0x78] sm:%s1037] %v1108
                  %v1110 = vld [vmem:[%s1046 + $0x7c] sm:%s1037]
                  %1111 = vst [vmem:[%s1047 + $0x7c] sm:%s1037] %v1110
                  %s1112 = sadd.s32 1, %s1045
                  %p1113 = scmp.ge.s32.totalorder %s1112, %s1038
                  %s1114 = scalar_select %p1113, 0, %s1112
                  %s1115 = smul.u32 %s1114, 128
                  %s1116 = smul.u32 %s1114, 128
                  %s1117 = scalar_lea.vmem %s907, %s1115 [#allocation2]
                  %s1118 = scalar_lea.vmem %s918, %s1116
                $region71: #{model_forward.4} parent=65 // loop_footer
                  %s1042 = sadd.s32 %s1040, 1
                $region72: #{model_forward.4} parent=65 // loop_footer_branch
                  %1039 = sbr.rel target = $region68
                $region73: #{model_forward.4} parent=65 // loop_exit
                  _
                %s1119 = sshrl.u32 %s914, 5
                %s1120 = sand.u32 %s914, 31
                %s1121 = smul.u32 %s1119, 32
                %s1122 = smul.u32 4, %s1121
                %s1123 = scalar_lea.vmem %s907, %s1122 [#allocation2]
                %s1124 = smul.u32 4, %s1121
                %s1125 = scalar_lea.vmem %s918, %s1124
                // While loop
                $region74: #{model_forward.4} parent=65 // loop_pre_header
                  _
                $region75: #{model_forward.4} parent=65 // loop_header
                  %s1127 = sphi 0, %s1129
                  %p1128 = scmp.ge.s32.totalorder %s1127, %s1120
                  %s1132 = sphi 0, %s1139
                  %s1133 = sphi %s1123, %s1142
                  %s1134 = sphi %s1125, %s1143
                $region76: #{model_forward.4} parent=65 // loop_header_branch
                  %1131 = sbr.rel (%p1128) target = $region80
                $region77: #{model_forward.4} parent=65 // loop_body
                  %v1135 = vld [vmem:[%s1133] sm:%s1037]
                  %1136 = vst [vmem:[%s1134] sm:%s1037] %v1135
                  %s1137 = sadd.s32 1, %s1132
                  %p1138 = scmp.ge.s32.totalorder %s1137, %s1120
                  %s1139 = scalar_select %p1138, 0, %s1137
                  %s1140 = smul.u32 %s1139, 4
                  %s1141 = smul.u32 %s1139, 4
                  %s1142 = scalar_lea.vmem %s1123, %s1140 [#allocation2]
                  %s1143 = scalar_lea.vmem %s1125, %s1141
                $region78: #{model_forward.4} parent=65 // loop_footer
                  %s1129 = sadd.s32 %s1127, 1
                $region79: #{model_forward.4} parent=65 // loop_footer_branch
                  %1126 = sbr.rel target = $region75
                $region80: #{model_forward.4} parent=65 // loop_exit
                  _
              $region66: #{model_forward.4} parent=43 // pred_fallthru
                _
            $region44: #{model_forward.4} parent=39 // pred_fallthru
              _
            // Predicated region
            $region45: #{model_forward.4} parent=39 // pred_check
              _
            $region46: #{model_forward.4} parent=39 // pred_check_branch
              %925 = sbr.rel (0) target = $region48
            $region47: #{model_forward.4} parent=39 // pred_region
              %s927 = ssub.s32 16, 1
              %s928 = sshrl.u32 %s914, 5
              // While loop
              $region49: #{model_forward.4} parent=47 // loop_pre_header
                _
              $region50: #{model_forward.4} parent=47 // loop_header
                %s930 = sphi 0, %s932
                %p931 = scmp.ge.s32.totalorder %s930, %s928
                %s935 = sphi 0, %s1004
                %s936 = sphi %s907, %s1007
                %s937 = sphi %s918, %s1008
              $region51: #{model_forward.4} parent=47 // loop_header_branch
                %934 = sbr.rel (%p931) target = $region55
              $region52: #{model_forward.4} parent=47 // loop_body
                %v938 = vld [vmem:[%s936] sm:%s927]
                %939 = vst [vmem:[%s937] sm:%s927] %v938
                %v940 = vld [vmem:[%s936 + $0x4] sm:%s927]
                %941 = vst [vmem:[%s937 + $0x4] sm:%s927] %v940
                %v942 = vld [vmem:[%s936 + $0x8] sm:%s927]
                %943 = vst [vmem:[%s937 + $0x8] sm:%s927] %v942
                %v944 = vld [vmem:[%s936 + $0xc] sm:%s927]
                %945 = vst [vmem:[%s937 + $0xc] sm:%s927] %v944
                %v946 = vld [vmem:[%s936 + $0x10] sm:%s927]
                %947 = vst [vmem:[%s937 + $0x10] sm:%s927] %v946
                %v948 = vld [vmem:[%s936 + $0x14] sm:%s927]
                %949 = vst [vmem:[%s937 + $0x14] sm:%s927] %v948
                %v950 = vld [vmem:[%s936 + $0x18] sm:%s927]
                %951 = vst [vmem:[%s937 + $0x18] sm:%s927] %v950
                %v952 = vld [vmem:[%s936 + $0x1c] sm:%s927]
                %953 = vst [vmem:[%s937 + $0x1c] sm:%s927] %v952
                %v954 = vld [vmem:[%s936 + $0x20] sm:%s927]
                %955 = vst [vmem:[%s937 + $0x20] sm:%s927] %v954
                %v956 = vld [vmem:[%s936 + $0x24] sm:%s927]
                %957 = vst [vmem:[%s937 + $0x24] sm:%s927] %v956
                %v958 = vld [vmem:[%s936 + $0x28] sm:%s927]
                %959 = vst [vmem:[%s937 + $0x28] sm:%s927] %v958
                %v960 = vld [vmem:[%s936 + $0x2c] sm:%s927]
                %961 = vst [vmem:[%s937 + $0x2c] sm:%s927] %v960
                %v962 = vld [vmem:[%s936 + $0x30] sm:%s927]
                %963 = vst [vmem:[%s937 + $0x30] sm:%s927] %v962
                %v964 = vld [vmem:[%s936 + $0x34] sm:%s927]
                %965 = vst [vmem:[%s937 + $0x34] sm:%s927] %v964
                %v966 = vld [vmem:[%s936 + $0x38] sm:%s927]
                %967 = vst [vmem:[%s937 + $0x38] sm:%s927] %v966
                %v968 = vld [vmem:[%s936 + $0x3c] sm:%s927]
                %969 = vst [vmem:[%s937 + $0x3c] sm:%s927] %v968
                %v970 = vld [vmem:[%s936 + $0x40] sm:%s927]
                %971 = vst [vmem:[%s937 + $0x40] sm:%s927] %v970
                %v972 = vld [vmem:[%s936 + $0x44] sm:%s927]
                %973 = vst [vmem:[%s937 + $0x44] sm:%s927] %v972
                %v974 = vld [vmem:[%s936 + $0x48] sm:%s927]
                %975 = vst [vmem:[%s937 + $0x48] sm:%s927] %v974
                %v976 = vld [vmem:[%s936 + $0x4c] sm:%s927]
                %977 = vst [vmem:[%s937 + $0x4c] sm:%s927] %v976
                %v978 = vld [vmem:[%s936 + $0x50] sm:%s927]
                %979 = vst [vmem:[%s937 + $0x50] sm:%s927] %v978
                %v980 = vld [vmem:[%s936 + $0x54] sm:%s927]
                %981 = vst [vmem:[%s937 + $0x54] sm:%s927] %v980
                %v982 = vld [vmem:[%s936 + $0x58] sm:%s927]
                %983 = vst [vmem:[%s937 + $0x58] sm:%s927] %v982
                %v984 = vld [vmem:[%s936 + $0x5c] sm:%s927]
                %985 = vst [vmem:[%s937 + $0x5c] sm:%s927] %v984
                %v986 = vld [vmem:[%s936 + $0x60] sm:%s927]
                %987 = vst [vmem:[%s937 + $0x60] sm:%s927] %v986
                %v988 = vld [vmem:[%s936 + $0x64] sm:%s927]
                %989 = vst [vmem:[%s937 + $0x64] sm:%s927] %v988
                %v990 = vld [vmem:[%s936 + $0x68] sm:%s927]
                %991 = vst [vmem:[%s937 + $0x68] sm:%s927] %v990
                %v992 = vld [vmem:[%s936 + $0x6c] sm:%s927]
                %993 = vst [vmem:[%s937 + $0x6c] sm:%s927] %v992
                %v994 = vld [vmem:[%s936 + $0x70] sm:%s927]
                %995 = vst [vmem:[%s937 + $0x70] sm:%s927] %v994
                %v996 = vld [vmem:[%s936 + $0x74] sm:%s927]
                %997 = vst [vmem:[%s937 + $0x74] sm:%s927] %v996
                %v998 = vld [vmem:[%s936 + $0x78] sm:%s927]
                %999 = vst [vmem:[%s937 + $0x78] sm:%s927] %v998
                %v1000 = vld [vmem:[%s936 + $0x7c] sm:%s927]
                %1001 = vst [vmem:[%s937 + $0x7c] sm:%s927] %v1000
                %s1002 = sadd.s32 1, %s935
                %p1003 = scmp.ge.s32.totalorder %s1002, %s928
                %s1004 = scalar_select %p1003, 0, %s1002
                %s1005 = smul.u32 %s1004, 128
                %s1006 = smul.u32 %s1004, 128
                %s1007 = scalar_lea.vmem %s907, %s1005 [#allocation2]
                %s1008 = scalar_lea.vmem %s918, %s1006
              $region53: #{model_forward.4} parent=47 // loop_footer
                %s932 = sadd.s32 %s930, 1
              $region54: #{model_forward.4} parent=47 // loop_footer_branch
                %929 = sbr.rel target = $region50
              $region55: #{model_forward.4} parent=47 // loop_exit
                _
              %s1009 = sshrl.u32 %s914, 5
              %s1010 = sand.u32 %s914, 31
              %s1011 = smul.u32 %s1009, 32
              %s1012 = smul.u32 4, %s1011
              %s1013 = scalar_lea.vmem %s907, %s1012 [#allocation2]
              %s1014 = smul.u32 4, %s1011
              %s1015 = scalar_lea.vmem %s918, %s1014
              // While loop
              $region56: #{model_forward.4} parent=47 // loop_pre_header
                _
              $region57: #{model_forward.4} parent=47 // loop_header
                %s1017 = sphi 0, %s1019
                %p1018 = scmp.ge.s32.totalorder %s1017, %s1010
                %s1022 = sphi 0, %s1029
                %s1023 = sphi %s1013, %s1032
                %s1024 = sphi %s1015, %s1033
              $region58: #{model_forward.4} parent=47 // loop_header_branch
                %1021 = sbr.rel (%p1018) target = $region62
              $region59: #{model_forward.4} parent=47 // loop_body
                %v1025 = vld [vmem:[%s1023] sm:%s927]
                %1026 = vst [vmem:[%s1024] sm:%s927] %v1025
                %s1027 = sadd.s32 1, %s1022
                %p1028 = scmp.ge.s32.totalorder %s1027, %s1010
                %s1029 = scalar_select %p1028, 0, %s1027
                %s1030 = smul.u32 %s1029, 4
                %s1031 = smul.u32 %s1029, 4
                %s1032 = scalar_lea.vmem %s1013, %s1030 [#allocation2]
                %s1033 = scalar_lea.vmem %s1015, %s1031
              $region60: #{model_forward.4} parent=47 // loop_footer
                %s1019 = sadd.s32 %s1017, 1
              $region61: #{model_forward.4} parent=47 // loop_footer_branch
                %1016 = sbr.rel target = $region57
              $region62: #{model_forward.4} parent=47 // loop_exit
                _
            $region48: #{model_forward.4} parent=39 // pred_fallthru
              _
          $region40: #{model_forward.4} parent=35 // pred_fallthru
            _
          %1144 = vnop
        $region36: #{model_forward.4} parent=31 // pred_fallthru
          _
      $region32: #{model_forward.4} parent=5 // pred_fallthru
        _
      %p1145 = scmp.le.s32.totalorder 2, %s9
      // Predicated region
      $region81: #{model_forward.4} parent=5 // pred_check
        %p1146 = pneg %p1145
      $region82: #{model_forward.4} parent=5 // pred_check_branch
        %1148 = sbr.rel (%p1146) target = $region84
      $region83: #{model_forward.4} parent=5 // pred_region
        %s1149 = ssub.s32 %s9, 2
        // Predicated region
        $region85: #{model_forward.4} parent=83 // pred_check
          %p1150 = pneg %p106
        $region86: #{model_forward.4} parent=83 // pred_check_branch
          %1152 = sbr.rel (%p1150) target = $region88
        $region87: #{model_forward.4} parent=83 // pred_region
          %s1153 = sand.u32 %s91, 1
          %s1154 = sand.u32 %s91, 1
          %s1155 = smul.addr %s1154, 256
          %s1156 = scalar_lea.vmem [#allocation2], %s1155
        $region88: #{model_forward.4} parent=83 // pred_fallthru
          _
      $region84: #{model_forward.4} parent=5 // pred_fallthru
        _
    $region6: #{model_forward.4} parent=1 // loop_footer
      %s13 = sadd.s32 1, %s9
    $region7: #{model_forward.4} parent=1 // loop_footer_branch
      %8 = sbr.rel target = $region3
    $region8: #{model_forward.4} parent=1 // loop_exit
      _

// kernel: model_forward.5
$region0: #{model_forward.5}
  #allocation0 [shape = 'u32[]', space=smem, size = 0x4, offset = 0x4, fixed_abs, tag = 'smem constant byte address 0x4 - core index']
  #allocation1 [shape = 'u32[72,128]{1,0:T(1,128)}', space=vmem, size = 0x9000, scoped, tag = 'internal scratch']
  %s0 = inlined_call_operand.vmem [shape: bf16[338,576], index: 0, kind: input, shape index: {}]
  %s1 = inlined_call_operand.vmem [shape: bf16[576,64], index: 1, kind: input, shape index: {}]
  %s2 = inlined_call_operand.vmem [shape: f32[1,64], index: 2, kind: input, shape index: {}]
  %s3 = inlined_call_operand.vmem [shape: bf16[338,64], index: 3, kind: output, shape index: {}]
  %s4 = sld [smem:[#allocation0]]
  $region59: #{model_forward.5} parent=0
    _
  %s6 = ssub.s32 1, %s4
  %s7 = scalar_select 0, %s6, %s4
  $region1: #{model_forward.5} parent=0
    #allocation2 [shape = 'u8[90112]{0}', space=vmem, size = 0x16000, scoped, tag = 'output window, operand 0, single buffered']
    // Predicated region
    $region2: #{model_forward.5} parent=1 // pred_check
      _
    $region3: #{model_forward.5} parent=1 // pred_check_branch
      %9 = sbr.rel (0) target = $region5
    $region4: #{model_forward.5} parent=1 // pred_region
      _
    $region5: #{model_forward.5} parent=1 // pred_fallthru
      _
    // Predicated region
    $region6: #{model_forward.5} parent=1 // pred_check
      _
    $region7: #{model_forward.5} parent=1 // pred_check_branch
      %11 = sbr.rel (0) target = $region9
    $region8: #{model_forward.5} parent=1 // pred_region
      _
    $region9: #{model_forward.5} parent=1 // pred_fallthru
      _
    // Predicated region
    $region10: #{model_forward.5} parent=1 // pred_check
      _
    $region11: #{model_forward.5} parent=1 // pred_check_branch
      %13 = sbr.rel (0) target = $region13
    $region12: #{model_forward.5} parent=1 // pred_region
      _
    $region13: #{model_forward.5} parent=1 // pred_fallthru
      _
    %v15 = vld [vmem:[%s0] sm:$0xff]
    %v16 = vld [vmem:[%s0 + $0x8] sm:$0xff]
    %v17 = vld [vmem:[%s0 + $0x10] sm:$0xf]
    %v18 = vld [vmem:[%s0 + $0x14] sm:$0xff]
    %v19 = vld [vmem:[%s0 + $0x1c] sm:$0xff]
    %v20 = vld [vmem:[%s0 + $0x24] sm:$0xf]
    %v21 = vld [vmem:[%s0 + $0x28] sm:$0xff]
    %v22 = vld [vmem:[%s0 + $0x30] sm:$0xff]
    %v23 = vld [vmem:[%s0 + $0x38] sm:$0xf]
    %v24 = vld [vmem:[%s0 + $0x3c] sm:$0xff]
    %v25 = vld [vmem:[%s0 + $0x44] sm:$0xff]
    %v26 = vld [vmem:[%s0 + $0x4c] sm:$0xf]
    %v27 = vld [vmem:[%s0 + $0x50] sm:$0xff]
    %v28 = vld [vmem:[%s0 + $0x58] sm:$0xff]
    %v29 = vld [vmem:[%s0 + $0x60] sm:$0xf]
    %v30 = vld [vmem:[%s0 + $0x64] sm:$0xff]
    %v31 = vld [vmem:[%s0 + $0x6c] sm:$0xff]
    %v32 = vld [vmem:[%s0 + $0x74] sm:$0xf]
    %v33 = vld [vmem:[%s0 + $0x78] sm:$0xff]
    %v34 = vld [vmem:[%s0 + $0x80] sm:$0xff]
    %v35 = vld [vmem:[%s0 + $0x88] sm:$0xf]
    %v36 = vld [vmem:[%s0 + $0x8c] sm:$0xff]
    %v37 = vld [vmem:[%s0 + $0x94] sm:$0xff]
    %v38 = vld [vmem:[%s0 + $0x9c] sm:$0xf]
    %v39 = vld [vmem:[%s0 + $0xa0] sm:$0xff]
    %v40 = vld [vmem:[%s0 + $0xa8] sm:$0xff]
    %v41 = vld [vmem:[%s0 + $0xb0] sm:$0xf]
    %v42 = vld [vmem:[%s0 + $0xb4] sm:$0xff]
    %v43 = vld [vmem:[%s0 + $0xbc] sm:$0xff]
    %v44 = vld [vmem:[%s0 + $0xc4] sm:$0xf]
    %v45 = vld [vmem:[%s0 + $0xc8] sm:$0xff]
    %v46 = vld [vmem:[%s0 + $0xd0] sm:$0xff]
    %v47 = vld [vmem:[%s0 + $0xd8] sm:$0xf]
    %v48 = vld [vmem:[%s0 + $0xdc] sm:$0xff]
    %v49 = vld [vmem:[%s0 + $0xe4] sm:$0xff]
    %v50 = vld [vmem:[%s0 + $0xec] sm:$0xf]
    %v51 = vld [vmem:[%s0 + $0xf0] sm:$0xff]
    %v52 = vld [vmem:[%s0 + $0xf8] sm:$0xff]
    %v53 = vld [vmem:[%s0 + $0x100] sm:$0xf]
    %v54 = vld [vmem:[%s0 + $0x104] sm:$0xff]
    %v55 = vld [vmem:[%s0 + $0x10c] sm:$0xff]
    %v56 = vld [vmem:[%s0 + $0x114] sm:$0xf]
    %v57 = vld [vmem:[%s0 + $0x118] sm:$0xff]
    %v58 = vld [vmem:[%s0 + $0x120] sm:$0xff]
    %v59 = vld [vmem:[%s0 + $0x128] sm:$0xf]
    %v60 = vld [vmem:[%s0 + $0x12c] sm:$0xff]
    %v61 = vld [vmem:[%s0 + $0x134] sm:$0xff]
    %v62 = vld [vmem:[%s0 + $0x13c] sm:$0xf]
    %v63 = vld [vmem:[%s0 + $0x140] sm:$0xff]
    %v64 = vld [vmem:[%s0 + $0x148] sm:$0xff]
    %v65 = vld [vmem:[%s0 + $0x150] sm:$0xf]
    %v66 = vld [vmem:[%s0 + $0x154] sm:$0xff]
    %v67 = vld [vmem:[%s0 + $0x15c] sm:$0xff]
    %v68 = vld [vmem:[%s0 + $0x164] sm:$0xf]
    %v69 = vld [vmem:[%s0 + $0x168] sm:$0xff]
    %v70 = vld [vmem:[%s0 + $0x170] sm:$0xff]
    %v71 = vld [vmem:[%s0 + $0x178] sm:$0xf]
    %v72 = vld [vmem:[%s0 + $0x17c] sm:$0xff]
    %v73 = vld [vmem:[%s0 + $0x184] sm:$0xff]
    %v74 = vld [vmem:[%s0 + $0x18c] sm:$0xf]
    %v75 = vld [vmem:[%s0 + $0x190] sm:$0xff]
    %v76 = vld [vmem:[%s0 + $0x198] sm:$0xff]
    %v77 = vld [vmem:[%s0 + $0x1a0] sm:$0xf]
    %v78 = vld [vmem:[%s0 + $0x1a4] sm:$0xff]
    %v79 = vld [vmem:[%s0 + $0x1ac] sm:$0xff]
    %v80 = vld [vmem:[%s0 + $0x1b4] sm:$0xf]
    %v81 = vld [vmem:[%s0 + $0x1b8] sm:$0xff]
    %v82 = vld [vmem:[%s0 + $0x1c0] sm:$0xff]
    %v83 = vld [vmem:[%s0 + $0x1c8] sm:$0xf]
    %v84 = vld [vmem:[%s0 + $0x1cc] sm:$0xff]
    %v85 = vld [vmem:[%s0 + $0x1d4] sm:$0xff]
    %v86 = vld [vmem:[%s0 + $0x1dc] sm:$0xf]
    %v87 = vld [vmem:[%s0 + $0x1e0] sm:$0xff]
    %v88 = vld [vmem:[%s0 + $0x1e8] sm:$0xff]
    %v89 = vld [vmem:[%s0 + $0x1f0] sm:$0xf]
    %v90 = vld [vmem:[%s0 + $0x1f4] sm:$0xff]
    %v91 = vld [vmem:[%s0 + $0x1fc] sm:$0xff]
    %v92 = vld [vmem:[%s0 + $0x204] sm:$0xf]
    %v93 = vld [vmem:[%s0 + $0x208] sm:$0xff]
    %v94 = vld [vmem:[%s0 + $0x210] sm:$0xff]
    %v95 = vld [vmem:[%s0 + $0x218] sm:$0xf]
    %v96 = vld [vmem:[%s0 + $0x21c] sm:$0xff]
    %v97 = vld [vmem:[%s0 + $0x224] sm:$0xff]
    %v98 = vld [vmem:[%s0 + $0x22c] sm:$0xf]
    %v99 = vld [vmem:[%s0 + $0x230] sm:$0xff]
    %v100 = vld [vmem:[%s0 + $0x238] sm:$0xff]
    %v101 = vld [vmem:[%s0 + $0x240] sm:$0xf]
    %v102 = vld [vmem:[%s0 + $0x244] sm:$0xff]
    %v103 = vld [vmem:[%s0 + $0x24c] sm:$0xff]
    %v104 = vld [vmem:[%s0 + $0x254] sm:$0xf]
    %v105 = vld [vmem:[%s0 + $0x258] sm:$0xff]
    %v106 = vld [vmem:[%s0 + $0x260] sm:$0xff]
    %v107 = vld [vmem:[%s0 + $0x268] sm:$0xf]
    %v108 = vld [vmem:[%s0 + $0x26c] sm:$0xff]
    %v109 = vld [vmem:[%s0 + $0x274] sm:$0xff]
    %v110 = vld [vmem:[%s0 + $0x27c] sm:$0xf]
    %v111 = vld [vmem:[%s0 + $0x280] sm:$0xff]
    %v112 = vld [vmem:[%s0 + $0x288] sm:$0xff]
    %v113 = vld [vmem:[%s0 + $0x290] sm:$0xf]
    %v114 = vld [vmem:[%s0 + $0x294] sm:$0xff]
    %v115 = vld [vmem:[%s0 + $0x29c] sm:$0xff]
    %v116 = vld [vmem:[%s0 + $0x2a4] sm:$0xf]
    %v117 = vld [vmem:[%s0 + $0x2a8] sm:$0xff]
    %v118 = vld [vmem:[%s0 + $0x2b0] sm:$0xff]
    %v119 = vld [vmem:[%s0 + $0x2b8] sm:$0xf]
    %v120 = vld [vmem:[%s0 + $0x2bc] sm:$0xff]
    %v121 = vld [vmem:[%s0 + $0x2c4] sm:$0xff]
    %v122 = vld [vmem:[%s0 + $0x2cc] sm:$0xf]
    %v123 = vld [vmem:[%s0 + $0x2d0] sm:$0xff]
    %v124 = vld [vmem:[%s0 + $0x2d8] sm:$0xff]
    %v125 = vld [vmem:[%s0 + $0x2e0] sm:$0xf]
    %v126 = vld [vmem:[%s0 + $0x2e4] sm:$0xff]
    %v127 = vld [vmem:[%s0 + $0x2ec] sm:$0xff]
    %v128 = vld [vmem:[%s0 + $0x2f4] sm:$0xf]
    %v129 = vld [vmem:[%s0 + $0x2f8] sm:$0xff]
    %v130 = vld [vmem:[%s0 + $0x300] sm:$0xff]
    %v131 = vld [vmem:[%s0 + $0x308] sm:$0xf]
    %v132 = vld [vmem:[%s0 + $0x30c] sm:$0xff]
    %v133 = vld [vmem:[%s0 + $0x314] sm:$0xff]
    %v134 = vld [vmem:[%s0 + $0x31c] sm:$0xf]
    %v135 = vld [vmem:[%s0 + $0x320] sm:$0xff]
    %v136 = vld [vmem:[%s0 + $0x328] sm:$0xff]
    %v137 = vld [vmem:[%s0 + $0x330] sm:$0xf]
    %v138 = vld [vmem:[%s0 + $0x334] sm:$0xff]
    %v139 = vld [vmem:[%s0 + $0x33c] sm:$0xff]
    %v140 = vld [vmem:[%s0 + $0x344] sm:$0xf]
    %v141 = vld [vmem:[%s0 + $0x348] sm:$0xff]
    %v142 = vld [vmem:[%s0 + $0x350] sm:$0xff]
    %v143 = vld [vmem:[%s0 + $0x358] sm:$0xf]
    %v144 = vld [vmem:[%s0 + $0x35c] sm:$0xff]
    %v145 = vld [vmem:[%s0 + $0x364] sm:$0xff]
    %v146 = vld [vmem:[%s0 + $0x36c] sm:$0xf]
    %v147 = vld [vmem:[%s1] sm:$0xf]
    %v148 = vld [vmem:[%s1 + $0x4] sm:$0xf]
    %v149 = vld [vmem:[%s1 + $0x8] sm:$0xf]
    %v150 = vld [vmem:[%s1 + $0xc] sm:$0xf]
    %v151 = vld [vmem:[%s1 + $0x10] sm:$0xf]
    %v152 = vld [vmem:[%s1 + $0x14] sm:$0xf]
    %v153 = vld [vmem:[%s1 + $0x18] sm:$0xf]
    %v154 = vld [vmem:[%s1 + $0x1c] sm:$0xf]
    %v155 = vld [vmem:[%s1 + $0x20] sm:$0xf]
    %v156 = vld [vmem:[%s1 + $0x24] sm:$0xf]
    %v157 = vld [vmem:[%s1 + $0x28] sm:$0xf]
    %v158 = vld [vmem:[%s1 + $0x2c] sm:$0xf]
    %v159 = vld [vmem:[%s1 + $0x30] sm:$0xf]
    %v160 = vld [vmem:[%s1 + $0x34] sm:$0xf]
    %v161 = vld [vmem:[%s1 + $0x38] sm:$0xf]
    %v162 = vld [vmem:[%s1 + $0x3c] sm:$0xf]
    %v163 = vld [vmem:[%s1 + $0x40] sm:$0xf]
    %v164 = vld [vmem:[%s1 + $0x44] sm:$0xf]
    %v165 = vld [vmem:[%s1 + $0x48] sm:$0xf]
    %v166 = vld [vmem:[%s1 + $0x4c] sm:$0xf]
    %v167 = vld [vmem:[%s1 + $0x50] sm:$0xf]
    %v168 = vld [vmem:[%s1 + $0x54] sm:$0xf]
    %v169 = vld [vmem:[%s1 + $0x58] sm:$0xf]
    %v170 = vld [vmem:[%s1 + $0x5c] sm:$0xf]
    %v171 = vld [vmem:[%s1 + $0x60] sm:$0xf]
    %v172 = vld [vmem:[%s1 + $0x64] sm:$0xf]
    %v173 = vld [vmem:[%s1 + $0x68] sm:$0xf]
    %v174 = vld [vmem:[%s1 + $0x6c] sm:$0xf]
    %v175 = vld [vmem:[%s1 + $0x70] sm:$0xf]
    %v176 = vld [vmem:[%s1 + $0x74] sm:$0xf]
    %v177 = vld [vmem:[%s1 + $0x78] sm:$0xf]
    %v178 = vld [vmem:[%s1 + $0x7c] sm:$0xf]
    %v179 = vld [vmem:[%s1 + $0x80] sm:$0xf]
    %v180 = vld [vmem:[%s1 + $0x84] sm:$0xf]
    %v181 = vld [vmem:[%s1 + $0x88] sm:$0xf]
    %v182 = vld [vmem:[%s1 + $0x8c] sm:$0xf]
    %v183 = vld [vmem:[%s1 + $0x90] sm:$0xf]
    %v184 = vld [vmem:[%s1 + $0x94] sm:$0xf]
    %v185 = vld [vmem:[%s1 + $0x98] sm:$0xf]
    %v186 = vld [vmem:[%s1 + $0x9c] sm:$0xf]
    %v187 = vld [vmem:[%s1 + $0xa0] sm:$0xf]
    %v188 = vld [vmem:[%s1 + $0xa4] sm:$0xf]
    %v189 = vld [vmem:[%s1 + $0xa8] sm:$0xf]
    %v190 = vld [vmem:[%s1 + $0xac] sm:$0xf]
    %v191 = vld [vmem:[%s1 + $0xb0] sm:$0xf]
    %v192 = vld [vmem:[%s1 + $0xb4] sm:$0xf]
    %v193 = vld [vmem:[%s1 + $0xb8] sm:$0xf]
    %v194 = vld [vmem:[%s1 + $0xbc] sm:$0xf]
    %v195 = vld [vmem:[%s1 + $0xc0] sm:$0xf]
    %v196 = vld [vmem:[%s1 + $0xc4] sm:$0xf]
    %v197 = vld [vmem:[%s1 + $0xc8] sm:$0xf]
    %v198 = vld [vmem:[%s1 + $0xcc] sm:$0xf]
    %v199 = vld [vmem:[%s1 + $0xd0] sm:$0xf]
    %v200 = vld [vmem:[%s1 + $0xd4] sm:$0xf]
    %v201 = vld [vmem:[%s1 + $0xd8] sm:$0xf]
    %v202 = vld [vmem:[%s1 + $0xdc] sm:$0xf]
    %v203 = vld [vmem:[%s1 + $0xe0] sm:$0xf]
    %v204 = vld [vmem:[%s1 + $0xe4] sm:$0xf]
    %v205 = vld [vmem:[%s1 + $0xe8] sm:$0xf]
    %v206 = vld [vmem:[%s1 + $0xec] sm:$0xf]
    %v207 = vld [vmem:[%s1 + $0xf0] sm:$0xf]
    %v208 = vld [vmem:[%s1 + $0xf4] sm:$0xf]
    %v209 = vld [vmem:[%s1 + $0xf8] sm:$0xf]
    %v210 = vld [vmem:[%s1 + $0xfc] sm:$0xf]
    %v211 = vld [vmem:[%s1 + $0x100] sm:$0xf]
    %v212 = vld [vmem:[%s1 + $0x104] sm:$0xf]
    %v213 = vld [vmem:[%s1 + $0x108] sm:$0xf]
    %v214 = vld [vmem:[%s1 + $0x10c] sm:$0xf]
    %v215 = vld [vmem:[%s1 + $0x110] sm:$0xf]
    %v216 = vld [vmem:[%s1 + $0x114] sm:$0xf]
    %v217 = vld [vmem:[%s1 + $0x118] sm:$0xf]
    %v218 = vld [vmem:[%s1 + $0x11c] sm:$0xf]
    %v219 = vld [vmem:[%s2] sm:$0x1]
    %v221 = vperm.slane %v219, 0
    %v355 = vunpack.c.l.b16 %v15
    %v356 = vunpack.c.h.b16 %v15
    %v357 = vunpack.c.l.b16 %v16
    %v358 = vunpack.c.h.b16 %v16
    %v359 = vunpack.c.l.b16 %v17
    %v360 = vunpack.c.l.b16 %v18
    %v361 = vunpack.c.h.b16 %v18
    %v362 = vunpack.c.l.b16 %v19
    %v363 = vunpack.c.h.b16 %v19
    %v364 = vunpack.c.l.b16 %v20
    %v365 = vunpack.c.l.b16 %v21
    %v366 = vunpack.c.h.b16 %v21
    %v367 = vunpack.c.l.b16 %v22
    %v368 = vunpack.c.h.b16 %v22
    %v369 = vunpack.c.l.b16 %v23
    %v370 = vunpack.c.l.b16 %v24
    %v371 = vunpack.c.h.b16 %v24
    %v372 = vunpack.c.l.b16 %v25
    %v373 = vunpack.c.h.b16 %v25
    %v374 = vunpack.c.l.b16 %v26
    %v375 = vunpack.c.l.b16 %v27
    %v376 = vunpack.c.h.b16 %v27
    %v377 = vunpack.c.l.b16 %v28
    %v378 = vunpack.c.h.b16 %v28
    %v379 = vunpack.c.l.b16 %v29
    %v380 = vunpack.c.l.b16 %v30
    %v381 = vunpack.c.h.b16 %v30
    %v382 = vunpack.c.l.b16 %v31
    %v383 = vunpack.c.h.b16 %v31
    %v384 = vunpack.c.l.b16 %v32
    %v385 = vunpack.c.l.b16 %v33
    %v386 = vunpack.c.h.b16 %v33
    %v387 = vunpack.c.l.b16 %v34
    %v388 = vunpack.c.h.b16 %v34
    %v389 = vunpack.c.l.b16 %v35
    %v390 = vunpack.c.l.b16 %v36
    %v391 = vunpack.c.h.b16 %v36
    %v392 = vunpack.c.l.b16 %v37
    %v393 = vunpack.c.h.b16 %v37
    %v394 = vunpack.c.l.b16 %v38
    %v395 = vunpack.c.l.b16 %v39
    %v396 = vunpack.c.h.b16 %v39
    %v397 = vunpack.c.l.b16 %v40
    %v398 = vunpack.c.h.b16 %v40
    %v399 = vunpack.c.l.b16 %v41
    %v400 = vunpack.c.l.b16 %v42
    %v401 = vunpack.c.h.b16 %v42
    %v402 = vunpack.c.l.b16 %v43
    %v403 = vunpack.c.h.b16 %v43
    %v404 = vunpack.c.l.b16 %v44
    %v405 = vunpack.c.l.b16 %v45
    %v406 = vunpack.c.h.b16 %v45
    %v407 = vunpack.c.l.b16 %v46
    %v408 = vunpack.c.h.b16 %v46
    %v409 = vunpack.c.l.b16 %v47
    %v410 = vunpack.c.l.b16 %v48
    %v411 = vunpack.c.h.b16 %v48
    %v412 = vunpack.c.l.b16 %v49
    %v413 = vunpack.c.h.b16 %v49
    %v414 = vunpack.c.l.b16 %v50
    %v415 = vunpack.c.l.b16 %v51
    %v416 = vunpack.c.h.b16 %v51
    %v417 = vunpack.c.l.b16 %v52
    %v418 = vunpack.c.h.b16 %v52
    %v419 = vunpack.c.l.b16 %v53
    %v420 = vunpack.c.l.b16 %v54
    %v421 = vunpack.c.h.b16 %v54
    %v422 = vunpack.c.l.b16 %v55
    %v423 = vunpack.c.h.b16 %v55
    %v424 = vunpack.c.l.b16 %v56
    %v425 = vunpack.c.l.b16 %v57
    %v426 = vunpack.c.h.b16 %v57
    %v427 = vunpack.c.l.b16 %v58
    %v428 = vunpack.c.h.b16 %v58
    %v429 = vunpack.c.l.b16 %v59
    %v430 = vunpack.c.l.b16 %v60
    %v431 = vunpack.c.h.b16 %v60
    %v432 = vunpack.c.l.b16 %v61
    %v433 = vunpack.c.h.b16 %v61
    %v434 = vunpack.c.l.b16 %v62
    %v435 = vunpack.c.l.b16 %v63
    %v436 = vunpack.c.h.b16 %v63
    %v437 = vunpack.c.l.b16 %v64
    %v438 = vunpack.c.h.b16 %v64
    %v439 = vunpack.c.l.b16 %v65
    %v440 = vunpack.c.l.b16 %v66
    %v441 = vunpack.c.h.b16 %v66
    %v442 = vunpack.c.l.b16 %v67
    %v443 = vunpack.c.h.b16 %v67
    %v444 = vunpack.c.l.b16 %v68
    %v445 = vunpack.c.l.b16 %v69
    %v446 = vunpack.c.h.b16 %v69
    %v447 = vunpack.c.l.b16 %v70
    %v448 = vunpack.c.h.b16 %v70
    %v449 = vunpack.c.l.b16 %v71
    %v450 = vunpack.c.l.b16 %v72
    %v451 = vunpack.c.h.b16 %v72
    %v452 = vunpack.c.l.b16 %v73
    %v453 = vunpack.c.h.b16 %v73
    %v454 = vunpack.c.l.b16 %v74
    %v455 = vunpack.c.l.b16 %v75
    %v456 = vunpack.c.h.b16 %v75
    %v457 = vunpack.c.l.b16 %v76
    %v458 = vunpack.c.h.b16 %v76
    %v459 = vunpack.c.l.b16 %v77
    %v460 = vunpack.c.l.b16 %v78
    %v461 = vunpack.c.h.b16 %v78
    %v462 = vunpack.c.l.b16 %v79
    %v463 = vunpack.c.h.b16 %v79
    %v464 = vunpack.c.l.b16 %v80
    %v465 = vunpack.c.l.b16 %v81
    %v466 = vunpack.c.h.b16 %v81
    %v467 = vunpack.c.l.b16 %v82
    %v468 = vunpack.c.h.b16 %v82
    %v469 = vunpack.c.l.b16 %v83
    %v470 = vunpack.c.l.b16 %v84
    %v471 = vunpack.c.h.b16 %v84
    %v472 = vunpack.c.l.b16 %v85
    %v473 = vunpack.c.h.b16 %v85
    %v474 = vunpack.c.l.b16 %v86
    %v475 = vunpack.c.l.b16 %v87
    %v476 = vunpack.c.h.b16 %v87
    %v477 = vunpack.c.l.b16 %v88
    %v478 = vunpack.c.h.b16 %v88
    %v479 = vunpack.c.l.b16 %v89
    %v480 = vunpack.c.l.b16 %v90
    %v481 = vunpack.c.h.b16 %v90
    %v482 = vunpack.c.l.b16 %v91
    %v483 = vunpack.c.h.b16 %v91
    %v484 = vunpack.c.l.b16 %v92
    %v485 = vunpack.c.l.b16 %v93
    %v486 = vunpack.c.h.b16 %v93
    %v487 = vunpack.c.l.b16 %v94
    %v488 = vunpack.c.h.b16 %v94
    %v489 = vunpack.c.l.b16 %v95
    %v490 = vunpack.c.l.b16 %v96
    %v491 = vunpack.c.h.b16 %v96
    %v492 = vunpack.c.l.b16 %v97
    %v493 = vunpack.c.h.b16 %v97
    %v494 = vunpack.c.l.b16 %v98
    %v495 = vunpack.c.l.b16 %v99
    %v496 = vunpack.c.h.b16 %v99
    %v497 = vunpack.c.l.b16 %v100
    %v498 = vunpack.c.h.b16 %v100
    %v499 = vunpack.c.l.b16 %v101
    %v500 = vunpack.c.l.b16 %v102
    %v501 = vunpack.c.h.b16 %v102
    %v502 = vunpack.c.l.b16 %v103
    %v503 = vunpack.c.h.b16 %v103
    %v504 = vunpack.c.l.b16 %v104
    %v505 = vunpack.c.l.b16 %v105
    %v506 = vunpack.c.h.b16 %v105
    %v507 = vunpack.c.l.b16 %v106
    %v508 = vunpack.c.h.b16 %v106
    %v509 = vunpack.c.l.b16 %v107
    %v510 = vunpack.c.l.b16 %v108
    %v511 = vunpack.c.h.b16 %v108
    %v512 = vunpack.c.l.b16 %v109
    %v513 = vunpack.c.h.b16 %v109
    %v514 = vunpack.c.l.b16 %v110
    %v515 = vunpack.c.l.b16 %v111
    %v516 = vunpack.c.h.b16 %v111
    %v517 = vunpack.c.l.b16 %v112
    %v518 = vunpack.c.h.b16 %v112
    %v519 = vunpack.c.l.b16 %v113
    %v520 = vunpack.c.l.b16 %v114
    %v521 = vunpack.c.h.b16 %v114
    %v522 = vunpack.c.l.b16 %v115
    %v523 = vunpack.c.h.b16 %v115
    %v524 = vunpack.c.l.b16 %v116
    %v525 = vunpack.c.l.b16 %v117
    %v526 = vunpack.c.h.b16 %v117
    %v527 = vunpack.c.l.b16 %v118
    %v528 = vunpack.c.h.b16 %v118
    %v529 = vunpack.c.l.b16 %v119
    %v530 = vunpack.c.l.b16 %v120
    %v531 = vunpack.c.h.b16 %v120
    %v532 = vunpack.c.l.b16 %v121
    %v533 = vunpack.c.h.b16 %v121
    %v534 = vunpack.c.l.b16 %v122
    %v535 = vunpack.c.l.b16 %v123
    %v536 = vunpack.c.h.b16 %v123
    %v537 = vunpack.c.l.b16 %v124
    %v538 = vunpack.c.h.b16 %v124
    %v539 = vunpack.c.l.b16 %v125
    %v540 = vunpack.c.l.b16 %v126
    %v541 = vunpack.c.h.b16 %v126
    %v542 = vunpack.c.l.b16 %v127
    %v543 = vunpack.c.h.b16 %v127
    %v544 = vunpack.c.l.b16 %v128
    %v545 = vunpack.c.l.b16 %v129
    %v546 = vunpack.c.h.b16 %v129
    %v547 = vunpack.c.l.b16 %v130
    %v548 = vunpack.c.h.b16 %v130
    %v549 = vunpack.c.l.b16 %v131
    %v550 = vunpack.c.l.b16 %v132
    %v551 = vunpack.c.h.b16 %v132
    %v552 = vunpack.c.l.b16 %v133
    %v553 = vunpack.c.h.b16 %v133
    %v554 = vunpack.c.l.b16 %v134
    %v555 = vunpack.c.l.b16 %v135
    %v556 = vunpack.c.h.b16 %v135
    %v557 = vunpack.c.l.b16 %v136
    %v558 = vunpack.c.h.b16 %v136
    %v559 = vunpack.c.l.b16 %v137
    %v560 = vunpack.c.l.b16 %v138
    %v561 = vunpack.c.h.b16 %v138
    %v562 = vunpack.c.l.b16 %v139
    %v563 = vunpack.c.h.b16 %v139
    %v564 = vunpack.c.l.b16 %v140
    %v565 = vunpack.c.l.b16 %v141
    %v566 = vunpack.c.h.b16 %v141
    %v567 = vunpack.c.l.b16 %v142
    %v568 = vunpack.c.h.b16 %v142
    %v569 = vunpack.c.l.b16 %v143
    %v570 = vunpack.c.l.b16 %v144
    %v571 = vunpack.c.h.b16 %v144
    %v572 = vunpack.c.l.b16 %v145
    %v573 = vunpack.c.h.b16 %v145
    %v574 = vunpack.c.l.b16 %v146
    %v575 = vpack.c.b16 %v360, %v355
    %v576 = vpack.c.b16 %v361, %v356
    %v577 = vpack.c.b16 %v362, %v357
    %v578 = vpack.c.b16 %v363, %v358
    %v579 = vpack.c.b16 %v364, %v359
    %v580 = vpack.c.b16 %v370, %v365
    %v581 = vpack.c.b16 %v371, %v366
    %v582 = vpack.c.b16 %v372, %v367
    %v583 = vpack.c.b16 %v373, %v368
    %v584 = vpack.c.b16 %v374, %v369
    %v585 = vpack.c.b16 %v380, %v375
    %v586 = vpack.c.b16 %v381, %v376
    %v587 = vpack.c.b16 %v382, %v377
    %v588 = vpack.c.b16 %v383, %v378
    %v589 = vpack.c.b16 %v384, %v379
    %v590 = vpack.c.b16 %v390, %v385
    %v591 = vpack.c.b16 %v391, %v386
    %v592 = vpack.c.b16 %v392, %v387
    %v593 = vpack.c.b16 %v393, %v388
    %v594 = vpack.c.b16 %v394, %v389
    %v595 = vpack.c.b16 %v400, %v395
    %v596 = vpack.c.b16 %v401, %v396
    %v597 = vpack.c.b16 %v402, %v397
    %v598 = vpack.c.b16 %v403, %v398
    %v599 = vpack.c.b16 %v404, %v399
    %v600 = vpack.c.b16 %v410, %v405
    %v601 = vpack.c.b16 %v411, %v406
    %v602 = vpack.c.b16 %v412, %v407
    %v603 = vpack.c.b16 %v413, %v408
    %v604 = vpack.c.b16 %v414, %v409
    %v605 = vpack.c.b16 %v420, %v415
    %v606 = vpack.c.b16 %v421, %v416
    %v607 = vpack.c.b16 %v422, %v417
    %v608 = vpack.c.b16 %v423, %v418
    %v609 = vpack.c.b16 %v424, %v419
    %v610 = vpack.c.b16 %v430, %v425
    %v611 = vpack.c.b16 %v431, %v426
    %v612 = vpack.c.b16 %v432, %v427
    %v613 = vpack.c.b16 %v433, %v428
    %v614 = vpack.c.b16 %v434, %v429
    %v615 = vpack.c.b16 %v440, %v435
    %v616 = vpack.c.b16 %v441, %v436
    %v617 = vpack.c.b16 %v442, %v437
    %v618 = vpack.c.b16 %v443, %v438
    %v619 = vpack.c.b16 %v444, %v439
    %v620 = vpack.c.b16 %v450, %v445
    %v621 = vpack.c.b16 %v451, %v446
    %v622 = vpack.c.b16 %v452, %v447
    %v623 = vpack.c.b16 %v453, %v448
    %v624 = vpack.c.b16 %v454, %v449
    %v625 = vpack.c.b16 %v460, %v455
    %v626 = vpack.c.b16 %v461, %v456
    %v627 = vpack.c.b16 %v462, %v457
    %v628 = vpack.c.b16 %v463, %v458
    %v629 = vpack.c.b16 %v464, %v459
    %v630 = vpack.c.b16 %v470, %v465
    %v631 = vpack.c.b16 %v471, %v466
    %v632 = vpack.c.b16 %v472, %v467
    %v633 = vpack.c.b16 %v473, %v468
    %v634 = vpack.c.b16 %v474, %v469
    %v635 = vpack.c.b16 %v480, %v475
    %v636 = vpack.c.b16 %v481, %v476
    %v637 = vpack.c.b16 %v482, %v477
    %v638 = vpack.c.b16 %v483, %v478
    %v639 = vpack.c.b16 %v484, %v479
    %v640 = vpack.c.b16 %v490, %v485
    %v641 = vpack.c.b16 %v491, %v486
    %v642 = vpack.c.b16 %v492, %v487
    %v643 = vpack.c.b16 %v493, %v488
    %v644 = vpack.c.b16 %v494, %v489
    %v645 = vpack.c.b16 %v500, %v495
    %v646 = vpack.c.b16 %v501, %v496
    %v647 = vpack.c.b16 %v502, %v497
    %v648 = vpack.c.b16 %v503, %v498
    %v649 = vpack.c.b16 %v504, %v499
    %v650 = vpack.c.b16 %v510, %v505
    %v651 = vpack.c.b16 %v511, %v506
    %v652 = vpack.c.b16 %v512, %v507
    %v653 = vpack.c.b16 %v513, %v508
    %v654 = vpack.c.b16 %v514, %v509
    %v655 = vpack.c.b16 %v520, %v515
    %v656 = vpack.c.b16 %v521, %v516
    %v657 = vpack.c.b16 %v522, %v517
    %v658 = vpack.c.b16 %v523, %v518
    %v659 = vpack.c.b16 %v524, %v519
    %v660 = vpack.c.b16 %v530, %v525
    %v661 = vpack.c.b16 %v531, %v526
    %v662 = vpack.c.b16 %v532, %v527
    %v663 = vpack.c.b16 %v533, %v528
    %v664 = vpack.c.b16 %v534, %v529
    %v665 = vpack.c.b16 %v540, %v535
    %v666 = vpack.c.b16 %v541, %v536
    %v667 = vpack.c.b16 %v542, %v537
    %v668 = vpack.c.b16 %v543, %v538
    %v669 = vpack.c.b16 %v544, %v539
    %v670 = vpack.c.b16 %v550, %v545
    %v671 = vpack.c.b16 %v551, %v546
    %v672 = vpack.c.b16 %v552, %v547
    %v673 = vpack.c.b16 %v553, %v548
    %v674 = vpack.c.b16 %v554, %v549
    %v675 = vpack.c.b16 %v560, %v555
    %v676 = vpack.c.b16 %v561, %v556
    %v677 = vpack.c.b16 %v562, %v557
    %v678 = vpack.c.b16 %v563, %v558
    %v679 = vpack.c.b16 %v564, %v559
    %v680 = vpack.c.b16 %v570, %v565
    %v681 = vpack.c.b16 %v571, %v566
    %v682 = vpack.c.b16 %v572, %v567
    %v683 = vpack.c.b16 %v573, %v568
    %v684 = vpack.c.b16 %v574, %v569
    %v845 = vunpack.c.l.b16 %v147
    %v846 = vunpack.c.l.b16 %v148
    %v847 = vunpack.c.l.b16 %v149
    %v848 = vunpack.c.l.b16 %v150
    %v849 = vunpack.c.l.b16 %v151
    %v850 = vunpack.c.l.b16 %v152
    %v851 = vunpack.c.l.b16 %v153
    %v852 = vunpack.c.l.b16 %v154
    %v853 = vunpack.c.l.b16 %v155
    %v854 = vunpack.c.l.b16 %v156
    %v855 = vunpack.c.l.b16 %v157
    %v856 = vunpack.c.l.b16 %v158
    %v857 = vunpack.c.l.b16 %v159
    %v858 = vunpack.c.l.b16 %v160
    %v859 = vunpack.c.l.b16 %v161
    %v860 = vunpack.c.l.b16 %v162
    %v861 = vunpack.c.l.b16 %v163
    %v862 = vunpack.c.l.b16 %v164
    %v863 = vunpack.c.l.b16 %v165
    %v864 = vunpack.c.l.b16 %v166
    %v865 = vunpack.c.l.b16 %v167
    %v866 = vunpack.c.l.b16 %v168
    %v867 = vunpack.c.l.b16 %v169
    %v868 = vunpack.c.l.b16 %v170
    %v869 = vunpack.c.l.b16 %v171
    %v870 = vunpack.c.l.b16 %v172
    %v871 = vunpack.c.l.b16 %v173
    %v872 = vunpack.c.l.b16 %v174
    %v873 = vunpack.c.l.b16 %v175
    %v874 = vunpack.c.l.b16 %v176
    %v875 = vunpack.c.l.b16 %v177
    %v876 = vunpack.c.l.b16 %v178
    %v877 = vunpack.c.l.b16 %v179
    %v878 = vunpack.c.l.b16 %v180
    %v879 = vunpack.c.l.b16 %v181
    %v880 = vunpack.c.l.b16 %v182
    %v881 = vunpack.c.l.b16 %v183
    %v882 = vunpack.c.l.b16 %v184
    %v883 = vunpack.c.l.b16 %v185
    %v884 = vunpack.c.l.b16 %v186
    %v885 = vunpack.c.l.b16 %v187
    %v886 = vunpack.c.l.b16 %v188
    %v887 = vunpack.c.l.b16 %v189
    %v888 = vunpack.c.l.b16 %v190
    %v889 = vunpack.c.l.b16 %v191
    %v890 = vunpack.c.l.b16 %v192
    %v891 = vunpack.c.l.b16 %v193
    %v892 = vunpack.c.l.b16 %v194
    %v893 = vunpack.c.l.b16 %v195
    %v894 = vunpack.c.l.b16 %v196
    %v895 = vunpack.c.l.b16 %v197
    %v896 = vunpack.c.l.b16 %v198
    %v897 = vunpack.c.l.b16 %v199
    %v898 = vunpack.c.l.b16 %v200
    %v899 = vunpack.c.l.b16 %v201
    %v900 = vunpack.c.l.b16 %v202
    %v901 = vunpack.c.l.b16 %v203
    %v902 = vunpack.c.l.b16 %v204
    %v903 = vunpack.c.l.b16 %v205
    %v904 = vunpack.c.l.b16 %v206
    %v905 = vunpack.c.l.b16 %v207
    %v906 = vunpack.c.l.b16 %v208
    %v907 = vunpack.c.l.b16 %v209
    %v908 = vunpack.c.l.b16 %v210
    %v909 = vunpack.c.l.b16 %v211
    %v910 = vunpack.c.l.b16 %v212
    %v911 = vunpack.c.l.b16 %v213
    %v912 = vunpack.c.l.b16 %v214
    %v913 = vunpack.c.l.b16 %v215
    %v914 = vunpack.c.l.b16 %v216
    %v915 = vunpack.c.l.b16 %v217
    %v916 = vunpack.c.l.b16 %v218
    %v917 = vpack.c.b16 %v846, %v845
    %v918 = vpack.c.b16 %v848, %v847
    %v919 = vpack.c.b16 %v850, %v849
    %v920 = vpack.c.b16 %v852, %v851
    %v921 = vpack.c.b16 %v854, %v853
    %v922 = vpack.c.b16 %v856, %v855
    %v923 = vpack.c.b16 %v858, %v857
    %v924 = vpack.c.b16 %v860, %v859
    %v925 = vpack.c.b16 %v862, %v861
    %v926 = vpack.c.b16 %v864, %v863
    %v927 = vpack.c.b16 %v866, %v865
    %v928 = vpack.c.b16 %v868, %v867
    %v929 = vpack.c.b16 %v870, %v869
    %v930 = vpack.c.b16 %v872, %v871
    %v931 = vpack.c.b16 %v874, %v873
    %v932 = vpack.c.b16 %v876, %v875
    %v933 = vpack.c.b16 %v878, %v877
    %v934 = vpack.c.b16 %v880, %v879
    %v935 = vpack.c.b16 %v882, %v881
    %v936 = vpack.c.b16 %v884, %v883
    %v937 = vpack.c.b16 %v886, %v885
    %v938 = vpack.c.b16 %v888, %v887
    %v939 = vpack.c.b16 %v890, %v889
    %v940 = vpack.c.b16 %v892, %v891
    %v941 = vpack.c.b16 %v894, %v893
    %v942 = vpack.c.b16 %v896, %v895
    %v943 = vpack.c.b16 %v898, %v897
    %v944 = vpack.c.b16 %v900, %v899
    %v945 = vpack.c.b16 %v902, %v901
    %v946 = vpack.c.b16 %v904, %v903
    %v947 = vpack.c.b16 %v906, %v905
    %v948 = vpack.c.b16 %v908, %v907
    %v949 = vpack.c.b16 %v910, %v909
    %v950 = vpack.c.b16 %v912, %v911
    %v951 = vpack.c.b16 %v914, %v913
    %v952 = vpack.c.b16 %v916, %v915
    %vm989 = vcmask 523264
    %v991 = vsel %vm989, %v579, 0
    %v994 = vsel %vm989, %v584, 0
    %v997 = vsel %vm989, %v589, 0
    %v1000 = vsel %vm989, %v594, 0
    %v1003 = vsel %vm989, %v599, 0
    %v1006 = vsel %vm989, %v604, 0
    %v1009 = vsel %vm989, %v609, 0
    %v1012 = vsel %vm989, %v614, 0
    %v1015 = vsel %vm989, %v619, 0
    %v1018 = vsel %vm989, %v624, 0
    %v1021 = vsel %vm989, %v629, 0
    %v1024 = vsel %vm989, %v634, 0
    %v1027 = vsel %vm989, %v639, 0
    %v1030 = vsel %vm989, %v644, 0
    %v1033 = vsel %vm989, %v649, 0
    %v1036 = vsel %vm989, %v654, 0
    %v1039 = vsel %vm989, %v659, 0
    %v1042 = vsel %vm989, %v664, 0
    %v1045 = vsel %vm989, %v669, 0
    %v1048 = vsel %vm989, %v674, 0
    %v1051 = vsel %vm989, %v679, 0
    %v1054 = vsel %vm989, %v684, 0
    %1056 = vmatpush.bf16.msra.mxu0 %v924
    %1057 = vmatpush.bf16.msra.mxu0 %v923
    %1058 = vmatpush.bf16.msra.mxu0 %v922
    %1059 = vmatpush.bf16.msra.mxu0 %v921
    %1060 = vmatpush.bf16.msra.mxu0 %v920
    %1061 = vmatpush.bf16.msra.mxu0 %v919
    %1062 = vmatpush.bf16.msra.mxu0 %v918
    %1063 = vmatpush.bf16.msra.mxu0 %v917
    %1064 = vmatmul.bf16.gmra.mxu0 %v575
    %v1065 = vpop.f32.mrf.mxu0
    %v1066 = vadd.f32 %v221, %v1065
    %v1067 = vpop.f32.mrf.mxu0
    %v1068 = vadd.f32 %v221, %v1067
    %1069 = vmatmul.bf16.gmra.mxu0 %v580
    %v1070 = vpop.f32.mrf.mxu0
    %v1071 = vadd.f32 %v221, %v1070
    %v1072 = vpop.f32.mrf.mxu0
    %v1073 = vadd.f32 %v221, %v1072
    %1074 = vmatmul.bf16.gmra.mxu0 %v585
    %v1075 = vpop.f32.mrf.mxu0
    %v1076 = vadd.f32 %v221, %v1075
    %v1077 = vpop.f32.mrf.mxu0
    %v1078 = vadd.f32 %v221, %v1077
    %1079 = vmatmul.bf16.gmra.mxu0 %v590
    %v1080 = vpop.f32.mrf.mxu0
    %v1081 = vadd.f32 %v221, %v1080
    %v1082 = vpop.f32.mrf.mxu0
    %v1083 = vadd.f32 %v221, %v1082
    %1084 = vmatmul.bf16.gmra.mxu0 %v595
    %v1085 = vpop.f32.mrf.mxu0
    %v1086 = vadd.f32 %v221, %v1085
    %v1087 = vpop.f32.mrf.mxu0
    %v1088 = vadd.f32 %v221, %v1087
    %1089 = vmatmul.bf16.gmra.mxu0 %v600
    %v1090 = vpop.f32.mrf.mxu0
    %v1091 = vadd.f32 %v221, %v1090
    %v1092 = vpop.f32.mrf.mxu0
    %v1093 = vadd.f32 %v221, %v1092
    %1094 = vmatmul.bf16.gmra.mxu0 %v605
    %v1095 = vpop.f32.mrf.mxu0
    %v1096 = vadd.f32 %v221, %v1095
    %v1097 = vpop.f32.mrf.mxu0
    %v1098 = vadd.f32 %v221, %v1097
    %1099 = vmatmul.bf16.gmra.mxu0 %v610
    %v1100 = vpop.f32.mrf.mxu0
    %v1101 = vadd.f32 %v221, %v1100
    %v1102 = vpop.f32.mrf.mxu0
    %v1103 = vadd.f32 %v221, %v1102
    %1104 = vmatmul.bf16.gmra.mxu0 %v615
    %v1105 = vpop.f32.mrf.mxu0
    %v1106 = vadd.f32 %v221, %v1105
    %v1107 = vpop.f32.mrf.mxu0
    %v1108 = vadd.f32 %v221, %v1107
    %1109 = vmatmul.bf16.gmra.mxu0 %v620
    %v1110 = vpop.f32.mrf.mxu0
    %v1111 = vadd.f32 %v221, %v1110
    %v1112 = vpop.f32.mrf.mxu0
    %v1113 = vadd.f32 %v221, %v1112
    %1114 = vmatmul.bf16.gmra.mxu0 %v625
    %v1115 = vpop.f32.mrf.mxu0
    %v1116 = vadd.f32 %v221, %v1115
    %v1117 = vpop.f32.mrf.mxu0
    %v1118 = vadd.f32 %v221, %v1117
    %1119 = vmatmul.bf16.gmra.mxu0 %v630
    %v1120 = vpop.f32.mrf.mxu0
    %v1121 = vadd.f32 %v221, %v1120
    %v1122 = vpop.f32.mrf.mxu0
    %v1123 = vadd.f32 %v221, %v1122
    %1124 = vmatmul.bf16.gmra.mxu0 %v635
    %v1125 = vpop.f32.mrf.mxu0
    %v1126 = vadd.f32 %v221, %v1125
    %v1127 = vpop.f32.mrf.mxu0
    %v1128 = vadd.f32 %v221, %v1127
    %1129 = vmatmul.bf16.gmra.mxu0 %v640
    %v1130 = vpop.f32.mrf.mxu0
    %v1131 = vadd.f32 %v221, %v1130
    %v1132 = vpop.f32.mrf.mxu0
    %v1133 = vadd.f32 %v221, %v1132
    %1134 = vmatmul.bf16.gmra.mxu0 %v645
    %v1135 = vpop.f32.mrf.mxu0
    %v1136 = vadd.f32 %v221, %v1135
    %v1137 = vpop.f32.mrf.mxu0
    %v1138 = vadd.f32 %v221, %v1137
    %1139 = vmatmul.bf16.gmra.mxu0 %v650
    %v1140 = vpop.f32.mrf.mxu0
    %v1141 = vadd.f32 %v221, %v1140
    %v1142 = vpop.f32.mrf.mxu0
    %v1143 = vadd.f32 %v221, %v1142
    %1144 = vmatmul.bf16.gmra.mxu0 %v655
    %v1145 = vpop.f32.mrf.mxu0
    %v1146 = vadd.f32 %v221, %v1145
    %v1147 = vpop.f32.mrf.mxu0
    %v1148 = vadd.f32 %v221, %v1147
    %1149 = vmatmul.bf16.gmra.mxu0 %v660
    %v1150 = vpop.f32.mrf.mxu0
    %v1151 = vadd.f32 %v221, %v1150
    %v1152 = vpop.f32.mrf.mxu0
    %v1153 = vadd.f32 %v221, %v1152
    %1154 = vmatmul.bf16.gmra.mxu0 %v665
    %v1155 = vpop.f32.mrf.mxu0
    %v1156 = vadd.f32 %v221, %v1155
    %v1157 = vpop.f32.mrf.mxu0
    %v1158 = vadd.f32 %v221, %v1157
    %1159 = vmatmul.bf16.gmra.mxu0 %v670
    %v1160 = vpop.f32.mrf.mxu0
    %v1161 = vadd.f32 %v221, %v1160
    %v1162 = vpop.f32.mrf.mxu0
    %v1163 = vadd.f32 %v221, %v1162
    %1164 = vmatmul.bf16.gmra.mxu0 %v675
    %v1165 = vpop.f32.mrf.mxu0
    %v1166 = vadd.f32 %v221, %v1165
    %v1167 = vpop.f32.mrf.mxu0
    %v1168 = vadd.f32 %v221, %v1167
    %1169 = vmatmul.bf16.gmra.mxu0 %v680
    %v1170 = vpop.f32.mrf.mxu0
    %v1171 = vadd.f32 %v221, %v1170
    %v1172 = vpop.f32.mrf.mxu0
    %v1173 = vadd.f32 %v221, %v1172
    %1174 = vdwg.mxu0
    %1175 = vmatpush.bf16.msra.mxu0 %v932
    %1176 = vmatpush.bf16.msra.mxu0 %v931
    %1177 = vmatpush.bf16.msra.mxu0 %v930
    %1178 = vmatpush.bf16.msra.mxu0 %v929
    %1179 = vmatpush.bf16.msra.mxu0 %v928
    %1180 = vmatpush.bf16.msra.mxu0 %v927
    %1181 = vmatpush.bf16.msra.mxu0 %v926
    %1182 = vmatpush.bf16.msra.mxu0 %v925
    %1183 = vmatmul.bf16.gmra.mxu0 %v576
    %v1184 = vpop.f32.mrf.mxu0
    %v1185 = vadd.f32 %v1066, %v1184
    %v1186 = vpop.f32.mrf.mxu0
    %v1187 = vadd.f32 %v1068, %v1186
    %1188 = vmatmul.bf16.gmra.mxu0 %v581
    %v1189 = vpop.f32.mrf.mxu0
    %v1190 = vadd.f32 %v1071, %v1189
    %v1191 = vpop.f32.mrf.mxu0
    %v1192 = vadd.f32 %v1073, %v1191
    %1193 = vmatmul.bf16.gmra.mxu0 %v586
    %v1194 = vpop.f32.mrf.mxu0
    %v1195 = vadd.f32 %v1076, %v1194
    %v1196 = vpop.f32.mrf.mxu0
    %v1197 = vadd.f32 %v1078, %v1196
    %1198 = vmatmul.bf16.gmra.mxu0 %v591
    %v1199 = vpop.f32.mrf.mxu0
    %v1200 = vadd.f32 %v1081, %v1199
    %v1201 = vpop.f32.mrf.mxu0
    %v1202 = vadd.f32 %v1083, %v1201
    %1203 = vmatmul.bf16.gmra.mxu0 %v596
    %v1204 = vpop.f32.mrf.mxu0
    %v1205 = vadd.f32 %v1086, %v1204
    %v1206 = vpop.f32.mrf.mxu0
    %v1207 = vadd.f32 %v1088, %v1206
    %1208 = vmatmul.bf16.gmra.mxu0 %v601
    %v1209 = vpop.f32.mrf.mxu0
    %v1210 = vadd.f32 %v1091, %v1209
    %v1211 = vpop.f32.mrf.mxu0
    %v1212 = vadd.f32 %v1093, %v1211
    %1213 = vmatmul.bf16.gmra.mxu0 %v606
    %v1214 = vpop.f32.mrf.mxu0
    %v1215 = vadd.f32 %v1096, %v1214
    %v1216 = vpop.f32.mrf.mxu0
    %v1217 = vadd.f32 %v1098, %v1216
    %1218 = vmatmul.bf16.gmra.mxu0 %v611
    %v1219 = vpop.f32.mrf.mxu0
    %v1220 = vadd.f32 %v1101, %v1219
    %v1221 = vpop.f32.mrf.mxu0
    %v1222 = vadd.f32 %v1103, %v1221
    %1223 = vmatmul.bf16.gmra.mxu0 %v616
    %v1224 = vpop.f32.mrf.mxu0
    %v1225 = vadd.f32 %v1106, %v1224
    %v1226 = vpop.f32.mrf.mxu0
    %v1227 = vadd.f32 %v1108, %v1226
    %1228 = vmatmul.bf16.gmra.mxu0 %v621
    %v1229 = vpop.f32.mrf.mxu0
    %v1230 = vadd.f32 %v1111, %v1229
    %v1231 = vpop.f32.mrf.mxu0
    %v1232 = vadd.f32 %v1113, %v1231
    %1233 = vmatmul.bf16.gmra.mxu0 %v626
    %v1234 = vpop.f32.mrf.mxu0
    %v1235 = vadd.f32 %v1116, %v1234
    %v1236 = vpop.f32.mrf.mxu0
    %v1237 = vadd.f32 %v1118, %v1236
    %1238 = vmatmul.bf16.gmra.mxu0 %v631
    %v1239 = vpop.f32.mrf.mxu0
    %v1240 = vadd.f32 %v1121, %v1239
    %v1241 = vpop.f32.mrf.mxu0
    %v1242 = vadd.f32 %v1123, %v1241
    %1243 = vmatmul.bf16.gmra.mxu0 %v636
    %v1244 = vpop.f32.mrf.mxu0
    %v1245 = vadd.f32 %v1126, %v1244
    %v1246 = vpop.f32.mrf.mxu0
    %v1247 = vadd.f32 %v1128, %v1246
    %1248 = vmatmul.bf16.gmra.mxu0 %v641
    %v1249 = vpop.f32.mrf.mxu0
    %v1250 = vadd.f32 %v1131, %v1249
    %v1251 = vpop.f32.mrf.mxu0
    %v1252 = vadd.f32 %v1133, %v1251
    %1253 = vmatmul.bf16.gmra.mxu0 %v646
    %v1254 = vpop.f32.mrf.mxu0
    %v1255 = vadd.f32 %v1136, %v1254
    %v1256 = vpop.f32.mrf.mxu0
    %v1257 = vadd.f32 %v1138, %v1256
    %1258 = vmatmul.bf16.gmra.mxu0 %v651
    %v1259 = vpop.f32.mrf.mxu0
    %v1260 = vadd.f32 %v1141, %v1259
    %v1261 = vpop.f32.mrf.mxu0
    %v1262 = vadd.f32 %v1143, %v1261
    %1263 = vmatmul.bf16.gmra.mxu0 %v656
    %v1264 = vpop.f32.mrf.mxu0
    %v1265 = vadd.f32 %v1146, %v1264
    %v1266 = vpop.f32.mrf.mxu0
    %v1267 = vadd.f32 %v1148, %v1266
    %1268 = vmatmul.bf16.gmra.mxu0 %v661
    %v1269 = vpop.f32.mrf.mxu0
    %v1270 = vadd.f32 %v1151, %v1269
    %v1271 = vpop.f32.mrf.mxu0
    %v1272 = vadd.f32 %v1153, %v1271
    %1273 = vmatmul.bf16.gmra.mxu0 %v666
    %v1274 = vpop.f32.mrf.mxu0
    %v1275 = vadd.f32 %v1156, %v1274
    %v1276 = vpop.f32.mrf.mxu0
    %v1277 = vadd.f32 %v1158, %v1276
    %1278 = vmatmul.bf16.gmra.mxu0 %v671
    %v1279 = vpop.f32.mrf.mxu0
    %v1280 = vadd.f32 %v1161, %v1279
    %v1281 = vpop.f32.mrf.mxu0
    %v1282 = vadd.f32 %v1163, %v1281
    %1283 = vmatmul.bf16.gmra.mxu0 %v676
    %v1284 = vpop.f32.mrf.mxu0
    %v1285 = vadd.f32 %v1166, %v1284
    %v1286 = vpop.f32.mrf.mxu0
    %v1287 = vadd.f32 %v1168, %v1286
    %1288 = vmatmul.bf16.gmra.mxu0 %v681
    %v1289 = vpop.f32.mrf.mxu0
    %v1290 = vadd.f32 %v1171, %v1289
    %v1291 = vpop.f32.mrf.mxu0
    %v1292 = vadd.f32 %v1173, %v1291
    %1293 = vdwg.mxu0
    %1294 = vmatpush.bf16.msra.mxu0 %v940
    %1295 = vmatpush.bf16.msra.mxu0 %v939
    %1296 = vmatpush.bf16.msra.mxu0 %v938
    %1297 = vmatpush.bf16.msra.mxu0 %v937
    %1298 = vmatpush.bf16.msra.mxu0 %v936
    %1299 = vmatpush.bf16.msra.mxu0 %v935
    %1300 = vmatpush.bf16.msra.mxu0 %v934
    %1301 = vmatpush.bf16.msra.mxu0 %v933
    %1302 = vmatmul.bf16.gmra.mxu0 %v577
    %v1303 = vpop.f32.mrf.mxu0
    %v1304 = vadd.f32 %v1185, %v1303
    %v1305 = vpop.f32.mrf.mxu0
    %v1306 = vadd.f32 %v1187, %v1305
    %1307 = vmatmul.bf16.gmra.mxu0 %v582
    %v1308 = vpop.f32.mrf.mxu0
    %v1309 = vadd.f32 %v1190, %v1308
    %v1310 = vpop.f32.mrf.mxu0
    %v1311 = vadd.f32 %v1192, %v1310
    %1312 = vmatmul.bf16.gmra.mxu0 %v587
    %v1313 = vpop.f32.mrf.mxu0
    %v1314 = vadd.f32 %v1195, %v1313
    %v1315 = vpop.f32.mrf.mxu0
    %v1316 = vadd.f32 %v1197, %v1315
    %1317 = vmatmul.bf16.gmra.mxu0 %v592
    %v1318 = vpop.f32.mrf.mxu0
    %v1319 = vadd.f32 %v1200, %v1318
    %v1320 = vpop.f32.mrf.mxu0
    %v1321 = vadd.f32 %v1202, %v1320
    %1322 = vmatmul.bf16.gmra.mxu0 %v597
    %v1323 = vpop.f32.mrf.mxu0
    %v1324 = vadd.f32 %v1205, %v1323
    %v1325 = vpop.f32.mrf.mxu0
    %v1326 = vadd.f32 %v1207, %v1325
    %1327 = vmatmul.bf16.gmra.mxu0 %v602
    %v1328 = vpop.f32.mrf.mxu0
    %v1329 = vadd.f32 %v1210, %v1328
    %v1330 = vpop.f32.mrf.mxu0
    %v1331 = vadd.f32 %v1212, %v1330
    %1332 = vmatmul.bf16.gmra.mxu0 %v607
    %v1333 = vpop.f32.mrf.mxu0
    %v1334 = vadd.f32 %v1215, %v1333
    %v1335 = vpop.f32.mrf.mxu0
    %v1336 = vadd.f32 %v1217, %v1335
    %1337 = vmatmul.bf16.gmra.mxu0 %v612
    %v1338 = vpop.f32.mrf.mxu0
    %v1339 = vadd.f32 %v1220, %v1338
    %v1340 = vpop.f32.mrf.mxu0
    %v1341 = vadd.f32 %v1222, %v1340
    %1342 = vmatmul.bf16.gmra.mxu0 %v617
    %v1343 = vpop.f32.mrf.mxu0
    %v1344 = vadd.f32 %v1225, %v1343
    %v1345 = vpop.f32.mrf.mxu0
    %v1346 = vadd.f32 %v1227, %v1345
    %1347 = vmatmul.bf16.gmra.mxu0 %v622
    %v1348 = vpop.f32.mrf.mxu0
    %v1349 = vadd.f32 %v1230, %v1348
    %v1350 = vpop.f32.mrf.mxu0
    %v1351 = vadd.f32 %v1232, %v1350
    %1352 = vmatmul.bf16.gmra.mxu0 %v627
    %v1353 = vpop.f32.mrf.mxu0
    %v1354 = vadd.f32 %v1235, %v1353
    %v1355 = vpop.f32.mrf.mxu0
    %v1356 = vadd.f32 %v1237, %v1355
    %1357 = vmatmul.bf16.gmra.mxu0 %v632
    %v1358 = vpop.f32.mrf.mxu0
    %v1359 = vadd.f32 %v1240, %v1358
    %v1360 = vpop.f32.mrf.mxu0
    %v1361 = vadd.f32 %v1242, %v1360
    %1362 = vmatmul.bf16.gmra.mxu0 %v637
    %v1363 = vpop.f32.mrf.mxu0
    %v1364 = vadd.f32 %v1245, %v1363
    %v1365 = vpop.f32.mrf.mxu0
    %v1366 = vadd.f32 %v1247, %v1365
    %1367 = vmatmul.bf16.gmra.mxu0 %v642
    %v1368 = vpop.f32.mrf.mxu0
    %v1369 = vadd.f32 %v1250, %v1368
    %v1370 = vpop.f32.mrf.mxu0
    %v1371 = vadd.f32 %v1252, %v1370
    %1372 = vmatmul.bf16.gmra.mxu0 %v647
    %v1373 = vpop.f32.mrf.mxu0
    %v1374 = vadd.f32 %v1255, %v1373
    %v1375 = vpop.f32.mrf.mxu0
    %v1376 = vadd.f32 %v1257, %v1375
    %1377 = vmatmul.bf16.gmra.mxu0 %v652
    %v1378 = vpop.f32.mrf.mxu0
    %v1379 = vadd.f32 %v1260, %v1378
    %v1380 = vpop.f32.mrf.mxu0
    %v1381 = vadd.f32 %v1262, %v1380
    %1382 = vmatmul.bf16.gmra.mxu0 %v657
    %v1383 = vpop.f32.mrf.mxu0
    %v1384 = vadd.f32 %v1265, %v1383
    %v1385 = vpop.f32.mrf.mxu0
    %v1386 = vadd.f32 %v1267, %v1385
    %1387 = vmatmul.bf16.gmra.mxu0 %v662
    %v1388 = vpop.f32.mrf.mxu0
    %v1389 = vadd.f32 %v1270, %v1388
    %v1390 = vpop.f32.mrf.mxu0
    %v1391 = vadd.f32 %v1272, %v1390
    %1392 = vmatmul.bf16.gmra.mxu0 %v667
    %v1393 = vpop.f32.mrf.mxu0
    %v1394 = vadd.f32 %v1275, %v1393
    %v1395 = vpop.f32.mrf.mxu0
    %v1396 = vadd.f32 %v1277, %v1395
    %1397 = vmatmul.bf16.gmra.mxu0 %v672
    %v1398 = vpop.f32.mrf.mxu0
    %v1399 = vadd.f32 %v1280, %v1398
    %v1400 = vpop.f32.mrf.mxu0
    %v1401 = vadd.f32 %v1282, %v1400
    %1402 = vmatmul.bf16.gmra.mxu0 %v677
    %v1403 = vpop.f32.mrf.mxu0
    %v1404 = vadd.f32 %v1285, %v1403
    %v1405 = vpop.f32.mrf.mxu0
    %v1406 = vadd.f32 %v1287, %v1405
    %1407 = vmatmul.bf16.gmra.mxu0 %v682
    %v1408 = vpop.f32.mrf.mxu0
    %v1409 = vadd.f32 %v1290, %v1408
    %v1410 = vpop.f32.mrf.mxu0
    %v1411 = vadd.f32 %v1292, %v1410
    %1412 = vdwg.mxu0
    %1413 = vmatpush.bf16.msra.mxu0 %v948
    %1414 = vmatpush.bf16.msra.mxu0 %v947
    %1415 = vmatpush.bf16.msra.mxu0 %v946
    %1416 = vmatpush.bf16.msra.mxu0 %v945
    %1417 = vmatpush.bf16.msra.mxu0 %v944
    %1418 = vmatpush.bf16.msra.mxu0 %v943
    %1419 = vmatpush.bf16.msra.mxu0 %v942
    %1420 = vmatpush.bf16.msra.mxu0 %v941
    %1421 = vmatmul.bf16.gmra.mxu0 %v578
    %v1422 = vpop.f32.mrf.mxu0
    %v1423 = vadd.f32 %v1304, %v1422
    %v1424 = vpop.f32.mrf.mxu0
    %v1425 = vadd.f32 %v1306, %v1424
    %1426 = vmatmul.bf16.gmra.mxu0 %v583
    %v1427 = vpop.f32.mrf.mxu0
    %v1428 = vadd.f32 %v1309, %v1427
    %v1429 = vpop.f32.mrf.mxu0
    %v1430 = vadd.f32 %v1311, %v1429
    %1431 = vmatmul.bf16.gmra.mxu0 %v588
    %v1432 = vpop.f32.mrf.mxu0
    %v1433 = vadd.f32 %v1314, %v1432
    %v1434 = vpop.f32.mrf.mxu0
    %v1435 = vadd.f32 %v1316, %v1434
    %1436 = vmatmul.bf16.gmra.mxu0 %v593
    %v1437 = vpop.f32.mrf.mxu0
    %v1438 = vadd.f32 %v1319, %v1437
    %v1439 = vpop.f32.mrf.mxu0
    %v1440 = vadd.f32 %v1321, %v1439
    %1441 = vmatmul.bf16.gmra.mxu0 %v598
    %v1442 = vpop.f32.mrf.mxu0
    %v1443 = vadd.f32 %v1324, %v1442
    %v1444 = vpop.f32.mrf.mxu0
    %v1445 = vadd.f32 %v1326, %v1444
    %1446 = vmatmul.bf16.gmra.mxu0 %v603
    %v1447 = vpop.f32.mrf.mxu0
    %v1448 = vadd.f32 %v1329, %v1447
    %v1449 = vpop.f32.mrf.mxu0
    %v1450 = vadd.f32 %v1331, %v1449
    %1451 = vmatmul.bf16.gmra.mxu0 %v608
    %v1452 = vpop.f32.mrf.mxu0
    %v1453 = vadd.f32 %v1334, %v1452
    %v1454 = vpop.f32.mrf.mxu0
    %v1455 = vadd.f32 %v1336, %v1454
    %1456 = vmatmul.bf16.gmra.mxu0 %v613
    %v1457 = vpop.f32.mrf.mxu0
    %v1458 = vadd.f32 %v1339, %v1457
    %v1459 = vpop.f32.mrf.mxu0
    %v1460 = vadd.f32 %v1341, %v1459
    %1461 = vmatmul.bf16.gmra.mxu0 %v618
    %v1462 = vpop.f32.mrf.mxu0
    %v1463 = vadd.f32 %v1344, %v1462
    %v1464 = vpop.f32.mrf.mxu0
    %v1465 = vadd.f32 %v1346, %v1464
    %1466 = vmatmul.bf16.gmra.mxu0 %v623
    %v1467 = vpop.f32.mrf.mxu0
    %v1468 = vadd.f32 %v1349, %v1467
    %v1469 = vpop.f32.mrf.mxu0
    %v1470 = vadd.f32 %v1351, %v1469
    %1471 = vmatmul.bf16.gmra.mxu0 %v628
    %v1472 = vpop.f32.mrf.mxu0
    %v1473 = vadd.f32 %v1354, %v1472
    %v1474 = vpop.f32.mrf.mxu0
    %v1475 = vadd.f32 %v1356, %v1474
    %1476 = vmatmul.bf16.gmra.mxu0 %v633
    %v1477 = vpop.f32.mrf.mxu0
    %v1478 = vadd.f32 %v1359, %v1477
    %v1479 = vpop.f32.mrf.mxu0
    %v1480 = vadd.f32 %v1361, %v1479
    %1481 = vmatmul.bf16.gmra.mxu0 %v638
    %v1482 = vpop.f32.mrf.mxu0
    %v1483 = vadd.f32 %v1364, %v1482
    %v1484 = vpop.f32.mrf.mxu0
    %v1485 = vadd.f32 %v1366, %v1484
    %1486 = vmatmul.bf16.gmra.mxu0 %v643
    %v1487 = vpop.f32.mrf.mxu0
    %v1488 = vadd.f32 %v1369, %v1487
    %v1489 = vpop.f32.mrf.mxu0
    %v1490 = vadd.f32 %v1371, %v1489
    %1491 = vmatmul.bf16.gmra.mxu0 %v648
    %v1492 = vpop.f32.mrf.mxu0
    %v1493 = vadd.f32 %v1374, %v1492
    %v1494 = vpop.f32.mrf.mxu0
    %v1495 = vadd.f32 %v1376, %v1494
    %1496 = vmatmul.bf16.gmra.mxu0 %v653
    %v1497 = vpop.f32.mrf.mxu0
    %v1498 = vadd.f32 %v1379, %v1497
    %v1499 = vpop.f32.mrf.mxu0
    %v1500 = vadd.f32 %v1381, %v1499
    %1501 = vmatmul.bf16.gmra.mxu0 %v658
    %v1502 = vpop.f32.mrf.mxu0
    %v1503 = vadd.f32 %v1384, %v1502
    %v1504 = vpop.f32.mrf.mxu0
    %v1505 = vadd.f32 %v1386, %v1504
    %1506 = vmatmul.bf16.gmra.mxu0 %v663
    %v1507 = vpop.f32.mrf.mxu0
    %v1508 = vadd.f32 %v1389, %v1507
    %v1509 = vpop.f32.mrf.mxu0
    %v1510 = vadd.f32 %v1391, %v1509
    %1511 = vmatmul.bf16.gmra.mxu0 %v668
    %v1512 = vpop.f32.mrf.mxu0
    %v1513 = vadd.f32 %v1394, %v1512
    %v1514 = vpop.f32.mrf.mxu0
    %v1515 = vadd.f32 %v1396, %v1514
    %1516 = vmatmul.bf16.gmra.mxu0 %v673
    %v1517 = vpop.f32.mrf.mxu0
    %v1518 = vadd.f32 %v1399, %v1517
    %v1519 = vpop.f32.mrf.mxu0
    %v1520 = vadd.f32 %v1401, %v1519
    %1521 = vmatmul.bf16.gmra.mxu0 %v678
    %v1522 = vpop.f32.mrf.mxu0
    %v1523 = vadd.f32 %v1404, %v1522
    %v1524 = vpop.f32.mrf.mxu0
    %v1525 = vadd.f32 %v1406, %v1524
    %1526 = vmatmul.bf16.gmra.mxu0 %v683
    %v1527 = vpop.f32.mrf.mxu0
    %v1528 = vadd.f32 %v1409, %v1527
    %v1529 = vpop.f32.mrf.mxu0
    %v1530 = vadd.f32 %v1411, %v1529
    %1531 = vdwg.mxu0
    %1532 = vmatpush.bf16.msra.mxu0 0
    %1533 = vmatpush.bf16.msra.mxu0 0
    %1534 = vmatpush.bf16.msra.mxu0 0
    %1535 = vmatpush.bf16.msra.mxu0 0
    %1536 = vmatpush.bf16.msra.mxu0 %v952
    %1537 = vmatpush.bf16.msra.mxu0 %v951
    %1538 = vmatpush.bf16.msra.mxu0 %v950
    %1539 = vmatpush.bf16.msra.mxu0 %v949
    %1540 = vmatmul.bf16.gmra.mxu0 %v991
    %v1541 = vpop.f32.mrf.mxu0
    %v1542 = vadd.f32 %v1423, %v1541
    %v1543 = vpop.f32.mrf.mxu0
    %v1544 = vadd.f32 %v1425, %v1543
    %1545 = vmatmul.bf16.gmra.mxu0 %v994
    %v1546 = vpop.f32.mrf.mxu0
    %v1547 = vadd.f32 %v1428, %v1546
    %v1548 = vpop.f32.mrf.mxu0
    %v1549 = vadd.f32 %v1430, %v1548
    %1550 = vmatmul.bf16.gmra.mxu0 %v997
    %v1551 = vpop.f32.mrf.mxu0
    %v1552 = vadd.f32 %v1433, %v1551
    %v1553 = vpop.f32.mrf.mxu0
    %v1554 = vadd.f32 %v1435, %v1553
    %1555 = vmatmul.bf16.gmra.mxu0 %v1000
    %v1556 = vpop.f32.mrf.mxu0
    %v1557 = vadd.f32 %v1438, %v1556
    %v1558 = vpop.f32.mrf.mxu0
    %v1559 = vadd.f32 %v1440, %v1558
    %1560 = vmatmul.bf16.gmra.mxu0 %v1003
    %v1561 = vpop.f32.mrf.mxu0
    %v1562 = vadd.f32 %v1443, %v1561
    %v1563 = vpop.f32.mrf.mxu0
    %v1564 = vadd.f32 %v1445, %v1563
    %1565 = vmatmul.bf16.gmra.mxu0 %v1006
    %v1566 = vpop.f32.mrf.mxu0
    %v1567 = vadd.f32 %v1448, %v1566
    %v1568 = vpop.f32.mrf.mxu0
    %v1569 = vadd.f32 %v1450, %v1568
    %1570 = vmatmul.bf16.gmra.mxu0 %v1009
    %v1571 = vpop.f32.mrf.mxu0
    %v1572 = vadd.f32 %v1453, %v1571
    %v1573 = vpop.f32.mrf.mxu0
    %v1574 = vadd.f32 %v1455, %v1573
    %1575 = vmatmul.bf16.gmra.mxu0 %v1012
    %v1576 = vpop.f32.mrf.mxu0
    %v1577 = vadd.f32 %v1458, %v1576
    %v1578 = vpop.f32.mrf.mxu0
    %v1579 = vadd.f32 %v1460, %v1578
    %1580 = vmatmul.bf16.gmra.mxu0 %v1015
    %v1581 = vpop.f32.mrf.mxu0
    %v1582 = vadd.f32 %v1463, %v1581
    %v1583 = vpop.f32.mrf.mxu0
    %v1584 = vadd.f32 %v1465, %v1583
    %1585 = vmatmul.bf16.gmra.mxu0 %v1018
    %v1586 = vpop.f32.mrf.mxu0
    %v1587 = vadd.f32 %v1468, %v1586
    %v1588 = vpop.f32.mrf.mxu0
    %v1589 = vadd.f32 %v1470, %v1588
    %1590 = vmatmul.bf16.gmra.mxu0 %v1021
    %v1591 = vpop.f32.mrf.mxu0
    %v1592 = vadd.f32 %v1473, %v1591
    %v1593 = vpop.f32.mrf.mxu0
    %v1594 = vadd.f32 %v1475, %v1593
    %1595 = vmatmul.bf16.gmra.mxu0 %v1024
    %v1596 = vpop.f32.mrf.mxu0
    %v1597 = vadd.f32 %v1478, %v1596
    %v1598 = vpop.f32.mrf.mxu0
    %v1599 = vadd.f32 %v1480, %v1598
    %1600 = vmatmul.bf16.gmra.mxu0 %v1027
    %v1601 = vpop.f32.mrf.mxu0
    %v1602 = vadd.f32 %v1483, %v1601
    %v1603 = vpop.f32.mrf.mxu0
    %v1604 = vadd.f32 %v1485, %v1603
    %1605 = vmatmul.bf16.gmra.mxu0 %v1030
    %v1606 = vpop.f32.mrf.mxu0
    %v1607 = vadd.f32 %v1488, %v1606
    %v1608 = vpop.f32.mrf.mxu0
    %v1609 = vadd.f32 %v1490, %v1608
    %1610 = vmatmul.bf16.gmra.mxu0 %v1033
    %v1611 = vpop.f32.mrf.mxu0
    %v1612 = vadd.f32 %v1493, %v1611
    %v1613 = vpop.f32.mrf.mxu0
    %v1614 = vadd.f32 %v1495, %v1613
    %1615 = vmatmul.bf16.gmra.mxu0 %v1036
    %v1616 = vpop.f32.mrf.mxu0
    %v1617 = vadd.f32 %v1498, %v1616
    %v1618 = vpop.f32.mrf.mxu0
    %v1619 = vadd.f32 %v1500, %v1618
    %1620 = vmatmul.bf16.gmra.mxu0 %v1039
    %v1621 = vpop.f32.mrf.mxu0
    %v1622 = vadd.f32 %v1503, %v1621
    %v1623 = vpop.f32.mrf.mxu0
    %v1624 = vadd.f32 %v1505, %v1623
    %1625 = vmatmul.bf16.gmra.mxu0 %v1042
    %v1626 = vpop.f32.mrf.mxu0
    %v1627 = vadd.f32 %v1508, %v1626
    %v1628 = vpop.f32.mrf.mxu0
    %v1629 = vadd.f32 %v1510, %v1628
    %1630 = vmatmul.bf16.gmra.mxu0 %v1045
    %v1631 = vpop.f32.mrf.mxu0
    %v1632 = vadd.f32 %v1513, %v1631
    %v1633 = vpop.f32.mrf.mxu0
    %v1634 = vadd.f32 %v1515, %v1633
    %1635 = vmatmul.bf16.gmra.mxu0 %v1048
    %v1636 = vpop.f32.mrf.mxu0
    %v1637 = vadd.f32 %v1518, %v1636
    %v1638 = vpop.f32.mrf.mxu0
    %v1639 = vadd.f32 %v1520, %v1638
    %1640 = vmatmul.bf16.gmra.mxu0 %v1051
    %v1641 = vpop.f32.mrf.mxu0
    %v1642 = vadd.f32 %v1523, %v1641
    %v1643 = vpop.f32.mrf.mxu0
    %v1644 = vadd.f32 %v1525, %v1643
    %1645 = vmatmul.bf16.gmra.mxu0 %v1054
    %v1646 = vpop.f32.mrf.mxu0
    %v1647 = vadd.f32 %v1528, %v1646
    %v1648 = vpop.f32.mrf.mxu0
    %v1649 = vadd.f32 %v1530, %v1648
    %1650 = vdwg.mxu0
    %v1651 = vmax.f32 %v1542, 0.0
    %v1652 = vmax.f32 %v1544, 0.0
    %v1653 = vmax.f32 %v1547, 0.0
    %v1654 = vmax.f32 %v1549, 0.0
    %v1655 = vmax.f32 %v1552, 0.0
    %v1656 = vmax.f32 %v1554, 0.0
    %v1657 = vmax.f32 %v1557, 0.0
    %v1658 = vmax.f32 %v1559, 0.0
    %v1659 = vmax.f32 %v1562, 0.0
    %v1660 = vmax.f32 %v1564, 0.0
    %v1661 = vmax.f32 %v1567, 0.0
    %v1662 = vmax.f32 %v1569, 0.0
    %v1663 = vmax.f32 %v1572, 0.0
    %v1664 = vmax.f32 %v1574, 0.0
    %v1665 = vmax.f32 %v1577, 0.0
    %v1666 = vmax.f32 %v1579, 0.0
    %v1667 = vmax.f32 %v1582, 0.0
    %v1668 = vmax.f32 %v1584, 0.0
    %v1669 = vmax.f32 %v1587, 0.0
    %v1670 = vmax.f32 %v1589, 0.0
    %v1671 = vmax.f32 %v1592, 0.0
    %v1672 = vmax.f32 %v1594, 0.0
    %v1673 = vmax.f32 %v1597, 0.0
    %v1674 = vmax.f32 %v1599, 0.0
    %v1675 = vmax.f32 %v1602, 0.0
    %v1676 = vmax.f32 %v1604, 0.0
    %v1677 = vmax.f32 %v1607, 0.0
    %v1678 = vmax.f32 %v1609, 0.0
    %v1679 = vmax.f32 %v1612, 0.0
    %v1680 = vmax.f32 %v1614, 0.0
    %v1681 = vmax.f32 %v1617, 0.0
    %v1682 = vmax.f32 %v1619, 0.0
    %v1683 = vmax.f32 %v1622, 0.0
    %v1684 = vmax.f32 %v1624, 0.0
    %v1685 = vmax.f32 %v1627, 0.0
    %v1686 = vmax.f32 %v1629, 0.0
    %v1687 = vmax.f32 %v1632, 0.0
    %v1688 = vmax.f32 %v1634, 0.0
    %v1689 = vmax.f32 %v1637, 0.0
    %v1690 = vmax.f32 %v1639, 0.0
    %v1691 = vmax.f32 %v1642, 0.0
    %v1692 = vmax.f32 %v1644, 0.0
    %v1693 = vmax.f32 %v1647, 0.0
    %v1694 = vmax.f32 %v1649, 0.0
    %v1695 = vpack.c.bf16 %v1651, %v1651
    %v1696 = vpack.c.bf16 %v1652, %v1652
    %v1697 = vpack.c.bf16 %v1653, %v1653
    %v1698 = vpack.c.bf16 %v1654, %v1654
    %v1699 = vpack.c.bf16 %v1655, %v1655
    %v1700 = vpack.c.bf16 %v1656, %v1656
    %v1701 = vpack.c.bf16 %v1657, %v1657
    %v1702 = vpack.c.bf16 %v1658, %v1658
    %v1703 = vpack.c.bf16 %v1659, %v1659
    %v1704 = vpack.c.bf16 %v1660, %v1660
    %v1705 = vpack.c.bf16 %v1661, %v1661
    %v1706 = vpack.c.bf16 %v1662, %v1662
    %v1707 = vpack.c.bf16 %v1663, %v1663
    %v1708 = vpack.c.bf16 %v1664, %v1664
    %v1709 = vpack.c.bf16 %v1665, %v1665
    %v1710 = vpack.c.bf16 %v1666, %v1666
    %v1711 = vpack.c.bf16 %v1667, %v1667
    %v1712 = vpack.c.bf16 %v1668, %v1668
    %v1713 = vpack.c.bf16 %v1669, %v1669
    %v1714 = vpack.c.bf16 %v1670, %v1670
    %v1715 = vpack.c.bf16 %v1671, %v1671
    %v1716 = vpack.c.bf16 %v1672, %v1672
    %v1717 = vpack.c.bf16 %v1673, %v1673
    %v1718 = vpack.c.bf16 %v1674, %v1674
    %v1719 = vpack.c.bf16 %v1675, %v1675
    %v1720 = vpack.c.bf16 %v1676, %v1676
    %v1721 = vpack.c.bf16 %v1677, %v1677
    %v1722 = vpack.c.bf16 %v1678, %v1678
    %v1723 = vpack.c.bf16 %v1679, %v1679
    %v1724 = vpack.c.bf16 %v1680, %v1680
    %v1725 = vpack.c.bf16 %v1681, %v1681
    %v1726 = vpack.c.bf16 %v1682, %v1682
    %v1727 = vpack.c.bf16 %v1683, %v1683
    %v1728 = vpack.c.bf16 %v1684, %v1684
    %v1729 = vpack.c.bf16 %v1685, %v1685
    %v1730 = vpack.c.bf16 %v1686, %v1686
    %v1731 = vpack.c.bf16 %v1687, %v1687
    %v1732 = vpack.c.bf16 %v1688, %v1688
    %v1733 = vpack.c.bf16 %v1689, %v1689
    %v1734 = vpack.c.bf16 %v1690, %v1690
    %v1735 = vpack.c.bf16 %v1691, %v1691
    %v1736 = vpack.c.bf16 %v1692, %v1692
    %v1737 = vpack.c.bf16 %v1693, %v1693
    %v1738 = vpack.c.bf16 %v1694, %v1694
    %vm1739 = vcmask 519168
    %1740 = vst.msk [vmem:[#allocation2] sm:$0xf] %vm1739, %v1695
    %1741 = vst.msk [vmem:[#allocation2 + $0x4] sm:$0xf] %vm1739, %v1696
    %1742 = vst.msk [vmem:[#allocation2 + $0x8] sm:$0xf] %vm1739, %v1697
    %1743 = vst.msk [vmem:[#allocation2 + $0xc] sm:$0xf] %vm1739, %v1698
    %1744 = vst.msk [vmem:[#allocation2 + $0x10] sm:$0xf] %vm1739, %v1699
    %1745 = vst.msk [vmem:[#allocation2 + $0x14] sm:$0xf] %vm1739, %v1700
    %1746 = vst.msk [vmem:[#allocation2 + $0x18] sm:$0xf] %vm1739, %v1701
    %1747 = vst.msk [vmem:[#allocation2 + $0x1c] sm:$0xf] %vm1739, %v1702
    %1748 = vst.msk [vmem:[#allocation2 + $0x20] sm:$0xf] %vm1739, %v1703
    %1749 = vst.msk [vmem:[#allocation2 + $0x24] sm:$0xf] %vm1739, %v1704
    %1750 = vst.msk [vmem:[#allocation2 + $0x28] sm:$0xf] %vm1739, %v1705
    %1751 = vst.msk [vmem:[#allocation2 + $0x2c] sm:$0xf] %vm1739, %v1706
    %1752 = vst.msk [vmem:[#allocation2 + $0x30] sm:$0xf] %vm1739, %v1707
    %1753 = vst.msk [vmem:[#allocation2 + $0x34] sm:$0xf] %vm1739, %v1708
    %1754 = vst.msk [vmem:[#allocation2 + $0x38] sm:$0xf] %vm1739, %v1709
    %1755 = vst.msk [vmem:[#allocation2 + $0x3c] sm:$0xf] %vm1739, %v1710
    %1756 = vst.msk [vmem:[#allocation2 + $0x40] sm:$0xf] %vm1739, %v1711
    %1757 = vst.msk [vmem:[#allocation2 + $0x44] sm:$0xf] %vm1739, %v1712
    %1758 = vst.msk [vmem:[#allocation2 + $0x48] sm:$0xf] %vm1739, %v1713
    %1759 = vst.msk [vmem:[#allocation2 + $0x4c] sm:$0xf] %vm1739, %v1714
    %1760 = vst.msk [vmem:[#allocation2 + $0x50] sm:$0xf] %vm1739, %v1715
    %1761 = vst.msk [vmem:[#allocation2 + $0x54] sm:$0xf] %vm1739, %v1716
    %1762 = vst.msk [vmem:[#allocation2 + $0x58] sm:$0xf] %vm1739, %v1717
    %1763 = vst.msk [vmem:[#allocation2 + $0x5c] sm:$0xf] %vm1739, %v1718
    %1764 = vst.msk [vmem:[#allocation2 + $0x60] sm:$0xf] %vm1739, %v1719
    %1765 = vst.msk [vmem:[#allocation2 + $0x64] sm:$0xf] %vm1739, %v1720
    %1766 = vst.msk [vmem:[#allocation2 + $0x68] sm:$0xf] %vm1739, %v1721
    %1767 = vst.msk [vmem:[#allocation2 + $0x6c] sm:$0xf] %vm1739, %v1722
    %1768 = vst.msk [vmem:[#allocation2 + $0x70] sm:$0xf] %vm1739, %v1723
    %1769 = vst.msk [vmem:[#allocation2 + $0x74] sm:$0xf] %vm1739, %v1724
    %1770 = vst.msk [vmem:[#allocation2 + $0x78] sm:$0xf] %vm1739, %v1725
    %1771 = vst.msk [vmem:[#allocation2 + $0x7c] sm:$0xf] %vm1739, %v1726
    %1772 = vst.msk [vmem:[#allocation2 + $0x80] sm:$0xf] %vm1739, %v1727
    %1773 = vst.msk [vmem:[#allocation2 + $0x84] sm:$0xf] %vm1739, %v1728
    %1774 = vst.msk [vmem:[#allocation2 + $0x88] sm:$0xf] %vm1739, %v1729
    %1775 = vst.msk [vmem:[#allocation2 + $0x8c] sm:$0xf] %vm1739, %v1730
    %1776 = vst.msk [vmem:[#allocation2 + $0x90] sm:$0xf] %vm1739, %v1731
    %1777 = vst.msk [vmem:[#allocation2 + $0x94] sm:$0xf] %vm1739, %v1732
    %1778 = vst.msk [vmem:[#allocation2 + $0x98] sm:$0xf] %vm1739, %v1733
    %1779 = vst.msk [vmem:[#allocation2 + $0x9c] sm:$0xf] %vm1739, %v1734
    %1780 = vst.msk [vmem:[#allocation2 + $0xa0] sm:$0xf] %vm1739, %v1735
    %1781 = vst.msk [vmem:[#allocation2 + $0xa4] sm:$0xf] %vm1739, %v1736
    %1782 = vst.msk [vmem:[#allocation2 + $0xa8] sm:$0xf] %vm1739, %v1737
    %1783 = vst.msk [vmem:[#allocation2 + $0xac] sm:$0xf] %vm1739, %v1738
    // Predicated region
    $region14: #{model_forward.5} parent=1 // pred_check
      _
    $region15: #{model_forward.5} parent=1 // pred_check_branch
      %1785 = sbr.rel (0) target = $region17
    $region16: #{model_forward.5} parent=1 // pred_region
      // Predicated region
      $region18: #{model_forward.5} parent=16 // pred_check
        _
      $region19: #{model_forward.5} parent=16 // pred_check_branch
        %1787 = sbr.rel (0) target = $region21
      $region20: #{model_forward.5} parent=16 // pred_region
        // Predicated region
        $region22: #{model_forward.5} parent=20 // pred_check
          _
        $region23: #{model_forward.5} parent=20 // pred_check_branch
          %1789 = sbr.rel target = $region25
        $region24: #{model_forward.5} parent=20 // pred_region
          // Predicated region
          $region37: #{model_forward.5} parent=24 // pred_check
            _
          $region38: #{model_forward.5} parent=24 // pred_check_branch
            %1889 = sbr.rel (0) target = $region40
          $region39: #{model_forward.5} parent=24 // pred_region
            loop: start=0, step=1, limit=1
            $region41: #{model_forward.5} parent=39 // loop_pre_header
              _
            $region42: #{model_forward.5} parent=39 // loop_header
              %s1891 = sphi 0, %s1895
              %p1892 = scmp.ge.s32.totalorder %s1891, 1
              %s1896 = sphi [#allocation2], [#allocation2]
              %s1897 = sphi %s3, %s3
            $region43: #{model_forward.5} parent=39 // loop_header_branch
              %1894 = sbr.rel (%p1892) target = $region47
            $region44: #{model_forward.5} parent=39 // loop_body
              _
            $region45: #{model_forward.5} parent=39 // loop_footer
              %s1895 = sadd.s32 1, %s1891
            $region46: #{model_forward.5} parent=39 // loop_footer_branch
              %1890 = sbr.rel target = $region42
            $region47: #{model_forward.5} parent=39 // loop_exit
              _
            %s1899 = ssub.s32 16, 1
            loop: start=0, step=1, limit=1
            $region48: #{model_forward.5} parent=39 // loop_pre_header
              _
            $region49: #{model_forward.5} parent=39 // loop_header
              %s1901 = sphi 0, %s1905
              %p1902 = scmp.ge.s32.totalorder %s1901, 1
              %s1906 = sphi [#allocation2], [#allocation2]
              %s1907 = sphi %s3, %s3
            $region50: #{model_forward.5} parent=39 // loop_header_branch
              %1904 = sbr.rel (%p1902) target = $region54
            $region51: #{model_forward.5} parent=39 // loop_body
              %v1908 = vld [vmem:[%s1906] sm:%s1899]
              %1909 = vst [vmem:[%s1907] sm:%s1899] %v1908
              %v1910 = vld [vmem:[%s1906 + $0x4] sm:%s1899]
              %1911 = vst [vmem:[%s1907 + $0x4] sm:%s1899] %v1910
              %v1912 = vld [vmem:[%s1906 + $0x8] sm:%s1899]
              %1913 = vst [vmem:[%s1907 + $0x8] sm:%s1899] %v1912
              %v1914 = vld [vmem:[%s1906 + $0xc] sm:%s1899]
              %1915 = vst [vmem:[%s1907 + $0xc] sm:%s1899] %v1914
              %v1916 = vld [vmem:[%s1906 + $0x10] sm:%s1899]
              %1917 = vst [vmem:[%s1907 + $0x10] sm:%s1899] %v1916
              %v1918 = vld [vmem:[%s1906 + $0x14] sm:%s1899]
              %1919 = vst [vmem:[%s1907 + $0x14] sm:%s1899] %v1918
              %v1920 = vld [vmem:[%s1906 + $0x18] sm:%s1899]
              %1921 = vst [vmem:[%s1907 + $0x18] sm:%s1899] %v1920
              %v1922 = vld [vmem:[%s1906 + $0x1c] sm:%s1899]
              %1923 = vst [vmem:[%s1907 + $0x1c] sm:%s1899] %v1922
              %v1924 = vld [vmem:[%s1906 + $0x20] sm:%s1899]
              %1925 = vst [vmem:[%s1907 + $0x20] sm:%s1899] %v1924
              %v1926 = vld [vmem:[%s1906 + $0x24] sm:%s1899]
              %1927 = vst [vmem:[%s1907 + $0x24] sm:%s1899] %v1926
              %v1928 = vld [vmem:[%s1906 + $0x28] sm:%s1899]
              %1929 = vst [vmem:[%s1907 + $0x28] sm:%s1899] %v1928
              %v1930 = vld [vmem:[%s1906 + $0x2c] sm:%s1899]
              %1931 = vst [vmem:[%s1907 + $0x2c] sm:%s1899] %v1930
              %v1932 = vld [vmem:[%s1906 + $0x30] sm:%s1899]
              %1933 = vst [vmem:[%s1907 + $0x30] sm:%s1899] %v1932
              %v1934 = vld [vmem:[%s1906 + $0x34] sm:%s1899]
              %1935 = vst [vmem:[%s1907 + $0x34] sm:%s1899] %v1934
              %v1936 = vld [vmem:[%s1906 + $0x38] sm:%s1899]
              %1937 = vst [vmem:[%s1907 + $0x38] sm:%s1899] %v1936
              %v1938 = vld [vmem:[%s1906 + $0x3c] sm:%s1899]
              %1939 = vst [vmem:[%s1907 + $0x3c] sm:%s1899] %v1938
              %v1940 = vld [vmem:[%s1906 + $0x40] sm:%s1899]
              %1941 = vst [vmem:[%s1907 + $0x40] sm:%s1899] %v1940
              %v1942 = vld [vmem:[%s1906 + $0x44] sm:%s1899]
              %1943 = vst [vmem:[%s1907 + $0x44] sm:%s1899] %v1942
              %v1944 = vld [vmem:[%s1906 + $0x48] sm:%s1899]
              %1945 = vst [vmem:[%s1907 + $0x48] sm:%s1899] %v1944
              %v1946 = vld [vmem:[%s1906 + $0x4c] sm:%s1899]
              %1947 = vst [vmem:[%s1907 + $0x4c] sm:%s1899] %v1946
              %v1948 = vld [vmem:[%s1906 + $0x50] sm:%s1899]
              %1949 = vst [vmem:[%s1907 + $0x50] sm:%s1899] %v1948
              %v1950 = vld [vmem:[%s1906 + $0x54] sm:%s1899]
              %1951 = vst [vmem:[%s1907 + $0x54] sm:%s1899] %v1950
              %v1952 = vld [vmem:[%s1906 + $0x58] sm:%s1899]
              %1953 = vst [vmem:[%s1907 + $0x58] sm:%s1899] %v1952
              %v1954 = vld [vmem:[%s1906 + $0x5c] sm:%s1899]
              %1955 = vst [vmem:[%s1907 + $0x5c] sm:%s1899] %v1954
              %v1956 = vld [vmem:[%s1906 + $0x60] sm:%s1899]
              %1957 = vst [vmem:[%s1907 + $0x60] sm:%s1899] %v1956
              %v1958 = vld [vmem:[%s1906 + $0x64] sm:%s1899]
              %1959 = vst [vmem:[%s1907 + $0x64] sm:%s1899] %v1958
              %v1960 = vld [vmem:[%s1906 + $0x68] sm:%s1899]
              %1961 = vst [vmem:[%s1907 + $0x68] sm:%s1899] %v1960
              %v1962 = vld [vmem:[%s1906 + $0x6c] sm:%s1899]
              %1963 = vst [vmem:[%s1907 + $0x6c] sm:%s1899] %v1962
              %v1964 = vld [vmem:[%s1906 + $0x70] sm:%s1899]
              %1965 = vst [vmem:[%s1907 + $0x70] sm:%s1899] %v1964
              %v1966 = vld [vmem:[%s1906 + $0x74] sm:%s1899]
              %1967 = vst [vmem:[%s1907 + $0x74] sm:%s1899] %v1966
              %v1968 = vld [vmem:[%s1906 + $0x78] sm:%s1899]
              %1969 = vst [vmem:[%s1907 + $0x78] sm:%s1899] %v1968
              %v1970 = vld [vmem:[%s1906 + $0x7c] sm:%s1899]
              %1971 = vst [vmem:[%s1907 + $0x7c] sm:%s1899] %v1970
              %v1972 = vld [vmem:[%s1906 + $0x80] sm:%s1899]
              %1973 = vst [vmem:[%s1907 + $0x80] sm:%s1899] %v1972
              %v1974 = vld [vmem:[%s1906 + $0x84] sm:%s1899]
              %1975 = vst [vmem:[%s1907 + $0x84] sm:%s1899] %v1974
              %v1976 = vld [vmem:[%s1906 + $0x88] sm:%s1899]
              %1977 = vst [vmem:[%s1907 + $0x88] sm:%s1899] %v1976
              %v1978 = vld [vmem:[%s1906 + $0x8c] sm:%s1899]
              %1979 = vst [vmem:[%s1907 + $0x8c] sm:%s1899] %v1978
              %v1980 = vld [vmem:[%s1906 + $0x90] sm:%s1899]
              %1981 = vst [vmem:[%s1907 + $0x90] sm:%s1899] %v1980
              %v1982 = vld [vmem:[%s1906 + $0x94] sm:%s1899]
              %1983 = vst [vmem:[%s1907 + $0x94] sm:%s1899] %v1982
              %v1984 = vld [vmem:[%s1906 + $0x98] sm:%s1899]
              %1985 = vst [vmem:[%s1907 + $0x98] sm:%s1899] %v1984
              %v1986 = vld [vmem:[%s1906 + $0x9c] sm:%s1899]
              %1987 = vst [vmem:[%s1907 + $0x9c] sm:%s1899] %v1986
              %v1988 = vld [vmem:[%s1906 + $0xa0] sm:%s1899]
              %1989 = vst [vmem:[%s1907 + $0xa0] sm:%s1899] %v1988
              %v1990 = vld [vmem:[%s1906 + $0xa4] sm:%s1899]
              %1991 = vst [vmem:[%s1907 + $0xa4] sm:%s1899] %v1990
              %v1992 = vld [vmem:[%s1906 + $0xa8] sm:%s1899]
              %1993 = vst [vmem:[%s1907 + $0xa8] sm:%s1899] %v1992
            $region52: #{model_forward.5} parent=39 // loop_footer
              %s1905 = sadd.s32 1, %s1901
            $region53: #{model_forward.5} parent=39 // loop_footer_branch
              %1900 = sbr.rel target = $region49
            $region54: #{model_forward.5} parent=39 // loop_exit
              _
          $region40: #{model_forward.5} parent=24 // pred_fallthru
            _
        $region25: #{model_forward.5} parent=20 // pred_fallthru
          _
        // Predicated region
        $region26: #{model_forward.5} parent=20 // pred_check
          _
        $region27: #{model_forward.5} parent=20 // pred_check_branch
          %1791 = sbr.rel (0) target = $region29
        $region28: #{model_forward.5} parent=20 // pred_region
          %s1793 = ssub.s32 16, 1
          loop: start=0, step=1, limit=1
          $region30: #{model_forward.5} parent=28 // loop_pre_header
            _
          $region31: #{model_forward.5} parent=28 // loop_header
            %s1795 = sphi 0, %s1799
            %p1796 = scmp.ge.s32.totalorder %s1795, 1
            %s1800 = sphi [#allocation2], [#allocation2]
            %s1801 = sphi %s3, %s3
          $region32: #{model_forward.5} parent=28 // loop_header_branch
            %1798 = sbr.rel (%p1796) target = $region36
          $region33: #{model_forward.5} parent=28 // loop_body
            %v1802 = vld [vmem:[%s1800] sm:%s1793]
            %1803 = vst [vmem:[%s1801] sm:%s1793] %v1802
            %v1804 = vld [vmem:[%s1800 + $0x4] sm:%s1793]
            %1805 = vst [vmem:[%s1801 + $0x4] sm:%s1793] %v1804
            %v1806 = vld [vmem:[%s1800 + $0x8] sm:%s1793]
            %1807 = vst [vmem:[%s1801 + $0x8] sm:%s1793] %v1806
            %v1808 = vld [vmem:[%s1800 + $0xc] sm:%s1793]
            %1809 = vst [vmem:[%s1801 + $0xc] sm:%s1793] %v1808
            %v1810 = vld [vmem:[%s1800 + $0x10] sm:%s1793]
            %1811 = vst [vmem:[%s1801 + $0x10] sm:%s1793] %v1810
            %v1812 = vld [vmem:[%s1800 + $0x14] sm:%s1793]
            %1813 = vst [vmem:[%s1801 + $0x14] sm:%s1793] %v1812
            %v1814 = vld [vmem:[%s1800 + $0x18] sm:%s1793]
            %1815 = vst [vmem:[%s1801 + $0x18] sm:%s1793] %v1814
            %v1816 = vld [vmem:[%s1800 + $0x1c] sm:%s1793]
            %1817 = vst [vmem:[%s1801 + $0x1c] sm:%s1793] %v1816
            %v1818 = vld [vmem:[%s1800 + $0x20] sm:%s1793]
            %1819 = vst [vmem:[%s1801 + $0x20] sm:%s1793] %v1818
            %v1820 = vld [vmem:[%s1800 + $0x24] sm:%s1793]
            %1821 = vst [vmem:[%s1801 + $0x24] sm:%s1793] %v1820
            %v1822 = vld [vmem:[%s1800 + $0x28] sm:%s1793]
            %1823 = vst [vmem:[%s1801 + $0x28] sm:%s1793] %v1822
            %v1824 = vld [vmem:[%s1800 + $0x2c] sm:%s1793]
            %1825 = vst [vmem:[%s1801 + $0x2c] sm:%s1793] %v1824
            %v1826 = vld [vmem:[%s1800 + $0x30] sm:%s1793]
            %1827 = vst [vmem:[%s1801 + $0x30] sm:%s1793] %v1826
            %v1828 = vld [vmem:[%s1800 + $0x34] sm:%s1793]
            %1829 = vst [vmem:[%s1801 + $0x34] sm:%s1793] %v1828
            %v1830 = vld [vmem:[%s1800 + $0x38] sm:%s1793]
            %1831 = vst [vmem:[%s1801 + $0x38] sm:%s1793] %v1830
            %v1832 = vld [vmem:[%s1800 + $0x3c] sm:%s1793]
            %1833 = vst [vmem:[%s1801 + $0x3c] sm:%s1793] %v1832
            %v1834 = vld [vmem:[%s1800 + $0x40] sm:%s1793]
            %1835 = vst [vmem:[%s1801 + $0x40] sm:%s1793] %v1834
            %v1836 = vld [vmem:[%s1800 + $0x44] sm:%s1793]
            %1837 = vst [vmem:[%s1801 + $0x44] sm:%s1793] %v1836
            %v1838 = vld [vmem:[%s1800 + $0x48] sm:%s1793]
            %1839 = vst [vmem:[%s1801 + $0x48] sm:%s1793] %v1838
            %v1840 = vld [vmem:[%s1800 + $0x4c] sm:%s1793]
            %1841 = vst [vmem:[%s1801 + $0x4c] sm:%s1793] %v1840
            %v1842 = vld [vmem:[%s1800 + $0x50] sm:%s1793]
            %1843 = vst [vmem:[%s1801 + $0x50] sm:%s1793] %v1842
            %v1844 = vld [vmem:[%s1800 + $0x54] sm:%s1793]
            %1845 = vst [vmem:[%s1801 + $0x54] sm:%s1793] %v1844
            %v1846 = vld [vmem:[%s1800 + $0x58] sm:%s1793]
            %1847 = vst [vmem:[%s1801 + $0x58] sm:%s1793] %v1846
            %v1848 = vld [vmem:[%s1800 + $0x5c] sm:%s1793]
            %1849 = vst [vmem:[%s1801 + $0x5c] sm:%s1793] %v1848
            %v1850 = vld [vmem:[%s1800 + $0x60] sm:%s1793]
            %1851 = vst [vmem:[%s1801 + $0x60] sm:%s1793] %v1850
            %v1852 = vld [vmem:[%s1800 + $0x64] sm:%s1793]
            %1853 = vst [vmem:[%s1801 + $0x64] sm:%s1793] %v1852
            %v1854 = vld [vmem:[%s1800 + $0x68] sm:%s1793]
            %1855 = vst [vmem:[%s1801 + $0x68] sm:%s1793] %v1854
            %v1856 = vld [vmem:[%s1800 + $0x6c] sm:%s1793]
            %1857 = vst [vmem:[%s1801 + $0x6c] sm:%s1793] %v1856
            %v1858 = vld [vmem:[%s1800 + $0x70] sm:%s1793]
            %1859 = vst [vmem:[%s1801 + $0x70] sm:%s1793] %v1858
            %v1860 = vld [vmem:[%s1800 + $0x74] sm:%s1793]
            %1861 = vst [vmem:[%s1801 + $0x74] sm:%s1793] %v1860
            %v1862 = vld [vmem:[%s1800 + $0x78] sm:%s1793]
            %1863 = vst [vmem:[%s1801 + $0x78] sm:%s1793] %v1862
            %v1864 = vld [vmem:[%s1800 + $0x7c] sm:%s1793]
            %1865 = vst [vmem:[%s1801 + $0x7c] sm:%s1793] %v1864
            %v1866 = vld [vmem:[%s1800 + $0x80] sm:%s1793]
            %1867 = vst [vmem:[%s1801 + $0x80] sm:%s1793] %v1866
            %v1868 = vld [vmem:[%s1800 + $0x84] sm:%s1793]
            %1869 = vst [vmem:[%s1801 + $0x84] sm:%s1793] %v1868
            %v1870 = vld [vmem:[%s1800 + $0x88] sm:%s1793]
            %1871 = vst [vmem:[%s1801 + $0x88] sm:%s1793] %v1870
            %v1872 = vld [vmem:[%s1800 + $0x8c] sm:%s1793]
            %1873 = vst [vmem:[%s1801 + $0x8c] sm:%s1793] %v1872
            %v1874 = vld [vmem:[%s1800 + $0x90] sm:%s1793]
            %1875 = vst [vmem:[%s1801 + $0x90] sm:%s1793] %v1874
            %v1876 = vld [vmem:[%s1800 + $0x94] sm:%s1793]
            %1877 = vst [vmem:[%s1801 + $0x94] sm:%s1793] %v1876
            %v1878 = vld [vmem:[%s1800 + $0x98] sm:%s1793]
            %1879 = vst [vmem:[%s1801 + $0x98] sm:%s1793] %v1878
            %v1880 = vld [vmem:[%s1800 + $0x9c] sm:%s1793]
            %1881 = vst [vmem:[%s1801 + $0x9c] sm:%s1793] %v1880
            %v1882 = vld [vmem:[%s1800 + $0xa0] sm:%s1793]
            %1883 = vst [vmem:[%s1801 + $0xa0] sm:%s1793] %v1882
            %v1884 = vld [vmem:[%s1800 + $0xa4] sm:%s1793]
            %1885 = vst [vmem:[%s1801 + $0xa4] sm:%s1793] %v1884
            %v1886 = vld [vmem:[%s1800 + $0xa8] sm:%s1793]
            %1887 = vst [vmem:[%s1801 + $0xa8] sm:%s1793] %v1886
          $region34: #{model_forward.5} parent=28 // loop_footer
            %s1799 = sadd.s32 1, %s1795
          $region35: #{model_forward.5} parent=28 // loop_footer_branch
            %1794 = sbr.rel target = $region31
          $region36: #{model_forward.5} parent=28 // loop_exit
            _
        $region29: #{model_forward.5} parent=20 // pred_fallthru
          _
      $region21: #{model_forward.5} parent=16 // pred_fallthru
        _
      %1994 = vnop
    $region17: #{model_forward.5} parent=1 // pred_fallthru
      _
    // Predicated region
    $region55: #{model_forward.5} parent=1 // pred_check
      _
    $region56: #{model_forward.5} parent=1 // pred_check_branch
      %1996 = sbr.rel (0) target = $region58
    $region57: #{model_forward.5} parent=1 // pred_region
      _
    $region58: #{model_forward.5} parent=1 // pred_fallthru
      _

// kernel: model_forward.6
$region0: #{model_forward.6}
  #allocation0 [shape = 'u32[]', space=smem, size = 0x4, offset = 0x4, fixed_abs, tag = 'smem constant byte address 0x4 - core index']
  #allocation1 [shape = 'u32[72,128]{1,0:T(1,128)}', space=vmem, size = 0x9000, scoped, tag = 'internal scratch']
  %s0 = inlined_call_operand.vmem [shape: bf16[72,576], index: 0, kind: input, shape index: {}]
  %s1 = inlined_call_operand.vmem [shape: bf16[576,128], index: 1, kind: input, shape index: {}]
  %s2 = inlined_call_operand.vmem [shape: f32[1,128], index: 2, kind: input, shape index: {}]
  %s3 = inlined_call_operand.vmem [shape: bf16[72,128], index: 3, kind: output, shape index: {}]
  %s4 = sld [smem:[#allocation0]]
  $region59: #{model_forward.6} parent=0
    _
  %s6 = ssub.s32 1, %s4
  %s7 = scalar_select 0, %s6, %s4
  $region1: #{model_forward.6} parent=0
    #allocation2 [shape = 'u8[20480]{0}', space=vmem, size = 0x5000, scoped, tag = 'output window, operand 0, single buffered']
    // Predicated region
    $region2: #{model_forward.6} parent=1 // pred_check
      _
    $region3: #{model_forward.6} parent=1 // pred_check_branch
      %9 = sbr.rel (0) target = $region5
    $region4: #{model_forward.6} parent=1 // pred_region
      _
    $region5: #{model_forward.6} parent=1 // pred_fallthru
      _
    // Predicated region
    $region6: #{model_forward.6} parent=1 // pred_check
      _
    $region7: #{model_forward.6} parent=1 // pred_check_branch
      %11 = sbr.rel (0) target = $region9
    $region8: #{model_forward.6} parent=1 // pred_region
      _
    $region9: #{model_forward.6} parent=1 // pred_fallthru
      _
    // Predicated region
    $region10: #{model_forward.6} parent=1 // pred_check
      _
    $region11: #{model_forward.6} parent=1 // pred_check_branch
      %13 = sbr.rel (0) target = $region13
    $region12: #{model_forward.6} parent=1 // pred_region
      _
    $region13: #{model_forward.6} parent=1 // pred_fallthru
      _
    %v15 = vld [vmem:[%s0] sm:$0xff]
    %v16 = vld [vmem:[%s0 + $0x8] sm:$0xff]
    %v17 = vld [vmem:[%s0 + $0x10] sm:$0xf]
    %v18 = vld [vmem:[%s0 + $0x14] sm:$0xff]
    %v19 = vld [vmem:[%s0 + $0x1c] sm:$0xff]
    %v20 = vld [vmem:[%s0 + $0x24] sm:$0xf]
    %v21 = vld [vmem:[%s0 + $0x28] sm:$0xff]
    %v22 = vld [vmem:[%s0 + $0x30] sm:$0xff]
    %v23 = vld [vmem:[%s0 + $0x38] sm:$0xf]
    %v24 = vld [vmem:[%s0 + $0x3c] sm:$0xff]
    %v25 = vld [vmem:[%s0 + $0x44] sm:$0xff]
    %v26 = vld [vmem:[%s0 + $0x4c] sm:$0xf]
    %v27 = vld [vmem:[%s0 + $0x50] sm:$0xff]
    %v28 = vld [vmem:[%s0 + $0x58] sm:$0xff]
    %v29 = vld [vmem:[%s0 + $0x60] sm:$0xf]
    %v30 = vld [vmem:[%s0 + $0x64] sm:$0xff]
    %v31 = vld [vmem:[%s0 + $0x6c] sm:$0xff]
    %v32 = vld [vmem:[%s0 + $0x74] sm:$0xf]
    %v33 = vld [vmem:[%s0 + $0x78] sm:$0xff]
    %v34 = vld [vmem:[%s0 + $0x80] sm:$0xff]
    %v35 = vld [vmem:[%s0 + $0x88] sm:$0xf]
    %v36 = vld [vmem:[%s0 + $0x8c] sm:$0xff]
    %v37 = vld [vmem:[%s0 + $0x94] sm:$0xff]
    %v38 = vld [vmem:[%s0 + $0x9c] sm:$0xf]
    %v39 = vld [vmem:[%s0 + $0xa0] sm:$0xff]
    %v40 = vld [vmem:[%s0 + $0xa8] sm:$0xff]
    %v41 = vld [vmem:[%s0 + $0xb0] sm:$0xf]
    %v42 = vld [vmem:[%s0 + $0xb4] sm:$0xff]
    %v43 = vld [vmem:[%s0 + $0xbc] sm:$0xff]
    %v44 = vld [vmem:[%s0 + $0xc4] sm:$0xf]
    %v45 = vld [vmem:[%s1] sm:$0xf]
    %v46 = vld [vmem:[%s1 + $0x4] sm:$0xf]
    %v47 = vld [vmem:[%s1 + $0x8] sm:$0xf]
    %v48 = vld [vmem:[%s1 + $0xc] sm:$0xf]
    %v49 = vld [vmem:[%s1 + $0x10] sm:$0xf]
    %v50 = vld [vmem:[%s1 + $0x14] sm:$0xf]
    %v51 = vld [vmem:[%s1 + $0x18] sm:$0xf]
    %v52 = vld [vmem:[%s1 + $0x1c] sm:$0xf]
    %v53 = vld [vmem:[%s1 + $0x20] sm:$0xf]
    %v54 = vld [vmem:[%s1 + $0x24] sm:$0xf]
    %v55 = vld [vmem:[%s1 + $0x28] sm:$0xf]
    %v56 = vld [vmem:[%s1 + $0x2c] sm:$0xf]
    %v57 = vld [vmem:[%s1 + $0x30] sm:$0xf]
    %v58 = vld [vmem:[%s1 + $0x34] sm:$0xf]
    %v59 = vld [vmem:[%s1 + $0x38] sm:$0xf]
    %v60 = vld [vmem:[%s1 + $0x3c] sm:$0xf]
    %v61 = vld [vmem:[%s1 + $0x40] sm:$0xf]
    %v62 = vld [vmem:[%s1 + $0x44] sm:$0xf]
    %v63 = vld [vmem:[%s1 + $0x48] sm:$0xf]
    %v64 = vld [vmem:[%s1 + $0x4c] sm:$0xf]
    %v65 = vld [vmem:[%s1 + $0x50] sm:$0xf]
    %v66 = vld [vmem:[%s1 + $0x54] sm:$0xf]
    %v67 = vld [vmem:[%s1 + $0x58] sm:$0xf]
    %v68 = vld [vmem:[%s1 + $0x5c] sm:$0xf]
    %v69 = vld [vmem:[%s1 + $0x60] sm:$0xf]
    %v70 = vld [vmem:[%s1 + $0x64] sm:$0xf]
    %v71 = vld [vmem:[%s1 + $0x68] sm:$0xf]
    %v72 = vld [vmem:[%s1 + $0x6c] sm:$0xf]
    %v73 = vld [vmem:[%s1 + $0x70] sm:$0xf]
    %v74 = vld [vmem:[%s1 + $0x74] sm:$0xf]
    %v75 = vld [vmem:[%s1 + $0x78] sm:$0xf]
    %v76 = vld [vmem:[%s1 + $0x7c] sm:$0xf]
    %v77 = vld [vmem:[%s1 + $0x80] sm:$0xf]
    %v78 = vld [vmem:[%s1 + $0x84] sm:$0xf]
    %v79 = vld [vmem:[%s1 + $0x88] sm:$0xf]
    %v80 = vld [vmem:[%s1 + $0x8c] sm:$0xf]
    %v81 = vld [vmem:[%s1 + $0x90] sm:$0xf]
    %v82 = vld [vmem:[%s1 + $0x94] sm:$0xf]
    %v83 = vld [vmem:[%s1 + $0x98] sm:$0xf]
    %v84 = vld [vmem:[%s1 + $0x9c] sm:$0xf]
    %v85 = vld [vmem:[%s1 + $0xa0] sm:$0xf]
    %v86 = vld [vmem:[%s1 + $0xa4] sm:$0xf]
    %v87 = vld [vmem:[%s1 + $0xa8] sm:$0xf]
    %v88 = vld [vmem:[%s1 + $0xac] sm:$0xf]
    %v89 = vld [vmem:[%s1 + $0xb0] sm:$0xf]
    %v90 = vld [vmem:[%s1 + $0xb4] sm:$0xf]
    %v91 = vld [vmem:[%s1 + $0xb8] sm:$0xf]
    %v92 = vld [vmem:[%s1 + $0xbc] sm:$0xf]
    %v93 = vld [vmem:[%s1 + $0xc0] sm:$0xf]
    %v94 = vld [vmem:[%s1 + $0xc4] sm:$0xf]
    %v95 = vld [vmem:[%s1 + $0xc8] sm:$0xf]
    %v96 = vld [vmem:[%s1 + $0xcc] sm:$0xf]
    %v97 = vld [vmem:[%s1 + $0xd0] sm:$0xf]
    %v98 = vld [vmem:[%s1 + $0xd4] sm:$0xf]
    %v99 = vld [vmem:[%s1 + $0xd8] sm:$0xf]
    %v100 = vld [vmem:[%s1 + $0xdc] sm:$0xf]
    %v101 = vld [vmem:[%s1 + $0xe0] sm:$0xf]
    %v102 = vld [vmem:[%s1 + $0xe4] sm:$0xf]
    %v103 = vld [vmem:[%s1 + $0xe8] sm:$0xf]
    %v104 = vld [vmem:[%s1 + $0xec] sm:$0xf]
    %v105 = vld [vmem:[%s1 + $0xf0] sm:$0xf]
    %v106 = vld [vmem:[%s1 + $0xf4] sm:$0xf]
    %v107 = vld [vmem:[%s1 + $0xf8] sm:$0xf]
    %v108 = vld [vmem:[%s1 + $0xfc] sm:$0xf]
    %v109 = vld [vmem:[%s1 + $0x100] sm:$0xf]
    %v110 = vld [vmem:[%s1 + $0x104] sm:$0xf]
    %v111 = vld [vmem:[%s1 + $0x108] sm:$0xf]
    %v112 = vld [vmem:[%s1 + $0x10c] sm:$0xf]
    %v113 = vld [vmem:[%s1 + $0x110] sm:$0xf]
    %v114 = vld [vmem:[%s1 + $0x114] sm:$0xf]
    %v115 = vld [vmem:[%s1 + $0x118] sm:$0xf]
    %v116 = vld [vmem:[%s1 + $0x11c] sm:$0xf]
    %v117 = vld [vmem:[%s2] sm:$0x1]
    %v119 = vperm.slane %v117, 0
    %v151 = vunpack.c.l.b16 %v15
    %v152 = vunpack.c.h.b16 %v15
    %v153 = vunpack.c.l.b16 %v16
    %v154 = vunpack.c.h.b16 %v16
    %v155 = vunpack.c.l.b16 %v17
    %v156 = vunpack.c.l.b16 %v18
    %v157 = vunpack.c.h.b16 %v18
    %v158 = vunpack.c.l.b16 %v19
    %v159 = vunpack.c.h.b16 %v19
    %v160 = vunpack.c.l.b16 %v20
    %v161 = vunpack.c.l.b16 %v21
    %v162 = vunpack.c.h.b16 %v21
    %v163 = vunpack.c.l.b16 %v22
    %v164 = vunpack.c.h.b16 %v22
    %v165 = vunpack.c.l.b16 %v23
    %v166 = vunpack.c.l.b16 %v24
    %v167 = vunpack.c.h.b16 %v24
    %v168 = vunpack.c.l.b16 %v25
    %v169 = vunpack.c.h.b16 %v25
    %v170 = vunpack.c.l.b16 %v26
    %v171 = vunpack.c.l.b16 %v27
    %v172 = vunpack.c.h.b16 %v27
    %v173 = vunpack.c.l.b16 %v28
    %v174 = vunpack.c.h.b16 %v28
    %v175 = vunpack.c.l.b16 %v29
    %v176 = vunpack.c.l.b16 %v30
    %v177 = vunpack.c.h.b16 %v30
    %v178 = vunpack.c.l.b16 %v31
    %v179 = vunpack.c.h.b16 %v31
    %v180 = vunpack.c.l.b16 %v32
    %v181 = vunpack.c.l.b16 %v33
    %v182 = vunpack.c.h.b16 %v33
    %v183 = vunpack.c.l.b16 %v34
    %v184 = vunpack.c.h.b16 %v34
    %v185 = vunpack.c.l.b16 %v35
    %v186 = vunpack.c.l.b16 %v36
    %v187 = vunpack.c.h.b16 %v36
    %v188 = vunpack.c.l.b16 %v37
    %v189 = vunpack.c.h.b16 %v37
    %v190 = vunpack.c.l.b16 %v38
    %v191 = vunpack.c.l.b16 %v39
    %v192 = vunpack.c.h.b16 %v39
    %v193 = vunpack.c.l.b16 %v40
    %v194 = vunpack.c.h.b16 %v40
    %v195 = vunpack.c.l.b16 %v41
    %v196 = vunpack.c.l.b16 %v42
    %v197 = vunpack.c.h.b16 %v42
    %v198 = vunpack.c.l.b16 %v43
    %v199 = vunpack.c.h.b16 %v43
    %v200 = vunpack.c.l.b16 %v44
    %v201 = vpack.c.b16 %v156, %v151
    %v202 = vpack.c.b16 %v157, %v152
    %v203 = vpack.c.b16 %v158, %v153
    %v204 = vpack.c.b16 %v159, %v154
    %v205 = vpack.c.b16 %v160, %v155
    %v206 = vpack.c.b16 %v166, %v161
    %v207 = vpack.c.b16 %v167, %v162
    %v208 = vpack.c.b16 %v168, %v163
    %v209 = vpack.c.b16 %v169, %v164
    %v210 = vpack.c.b16 %v170, %v165
    %v211 = vpack.c.b16 %v176, %v171
    %v212 = vpack.c.b16 %v177, %v172
    %v213 = vpack.c.b16 %v178, %v173
    %v214 = vpack.c.b16 %v179, %v174
    %v215 = vpack.c.b16 %v180, %v175
    %v216 = vpack.c.b16 %v186, %v181
    %v217 = vpack.c.b16 %v187, %v182
    %v218 = vpack.c.b16 %v188, %v183
    %v219 = vpack.c.b16 %v189, %v184
    %v220 = vpack.c.b16 %v190, %v185
    %v221 = vpack.c.b16 %v196, %v191
    %v222 = vpack.c.b16 %v197, %v192
    %v223 = vpack.c.b16 %v198, %v193
    %v224 = vpack.c.b16 %v199, %v194
    %v225 = vpack.c.b16 %v200, %v195
    %v318 = vunpack.c.l.b16 %v45
    %v319 = vunpack.c.l.b16 %v46
    %v320 = vunpack.c.l.b16 %v47
    %v321 = vunpack.c.l.b16 %v48
    %v322 = vunpack.c.l.b16 %v49
    %v323 = vunpack.c.l.b16 %v50
    %v324 = vunpack.c.l.b16 %v51
    %v325 = vunpack.c.l.b16 %v52
    %v326 = vunpack.c.l.b16 %v53
    %v327 = vunpack.c.l.b16 %v54
    %v328 = vunpack.c.l.b16 %v55
    %v329 = vunpack.c.l.b16 %v56
    %v330 = vunpack.c.l.b16 %v57
    %v331 = vunpack.c.l.b16 %v58
    %v332 = vunpack.c.l.b16 %v59
    %v333 = vunpack.c.l.b16 %v60
    %v334 = vunpack.c.l.b16 %v61
    %v335 = vunpack.c.l.b16 %v62
    %v336 = vunpack.c.l.b16 %v63
    %v337 = vunpack.c.l.b16 %v64
    %v338 = vunpack.c.l.b16 %v65
    %v339 = vunpack.c.l.b16 %v66
    %v340 = vunpack.c.l.b16 %v67
    %v341 = vunpack.c.l.b16 %v68
    %v342 = vunpack.c.l.b16 %v69
    %v343 = vunpack.c.l.b16 %v70
    %v344 = vunpack.c.l.b16 %v71
    %v345 = vunpack.c.l.b16 %v72
    %v346 = vunpack.c.l.b16 %v73
    %v347 = vunpack.c.l.b16 %v74
    %v348 = vunpack.c.l.b16 %v75
    %v349 = vunpack.c.l.b16 %v76
    %v350 = vunpack.c.l.b16 %v77
    %v351 = vunpack.c.l.b16 %v78
    %v352 = vunpack.c.l.b16 %v79
    %v353 = vunpack.c.l.b16 %v80
    %v354 = vunpack.c.l.b16 %v81
    %v355 = vunpack.c.l.b16 %v82
    %v356 = vunpack.c.l.b16 %v83
    %v357 = vunpack.c.l.b16 %v84
    %v358 = vunpack.c.l.b16 %v85
    %v359 = vunpack.c.l.b16 %v86
    %v360 = vunpack.c.l.b16 %v87
    %v361 = vunpack.c.l.b16 %v88
    %v362 = vunpack.c.l.b16 %v89
    %v363 = vunpack.c.l.b16 %v90
    %v364 = vunpack.c.l.b16 %v91
    %v365 = vunpack.c.l.b16 %v92
    %v366 = vunpack.c.l.b16 %v93
    %v367 = vunpack.c.l.b16 %v94
    %v368 = vunpack.c.l.b16 %v95
    %v369 = vunpack.c.l.b16 %v96
    %v370 = vunpack.c.l.b16 %v97
    %v371 = vunpack.c.l.b16 %v98
    %v372 = vunpack.c.l.b16 %v99
    %v373 = vunpack.c.l.b16 %v100
    %v374 = vunpack.c.l.b16 %v101
    %v375 = vunpack.c.l.b16 %v102
    %v376 = vunpack.c.l.b16 %v103
    %v377 = vunpack.c.l.b16 %v104
    %v378 = vunpack.c.l.b16 %v105
    %v379 = vunpack.c.l.b16 %v106
    %v380 = vunpack.c.l.b16 %v107
    %v381 = vunpack.c.l.b16 %v108
    %v382 = vunpack.c.l.b16 %v109
    %v383 = vunpack.c.l.b16 %v110
    %v384 = vunpack.c.l.b16 %v111
    %v385 = vunpack.c.l.b16 %v112
    %v386 = vunpack.c.l.b16 %v113
    %v387 = vunpack.c.l.b16 %v114
    %v388 = vunpack.c.l.b16 %v115
    %v389 = vunpack.c.l.b16 %v116
    %v390 = vpack.c.b16 %v319, %v318
    %v391 = vpack.c.b16 %v321, %v320
    %v392 = vpack.c.b16 %v323, %v322
    %v393 = vpack.c.b16 %v325, %v324
    %v394 = vpack.c.b16 %v327, %v326
    %v395 = vpack.c.b16 %v329, %v328
    %v396 = vpack.c.b16 %v331, %v330
    %v397 = vpack.c.b16 %v333, %v332
    %v398 = vpack.c.b16 %v335, %v334
    %v399 = vpack.c.b16 %v337, %v336
    %v400 = vpack.c.b16 %v339, %v338
    %v401 = vpack.c.b16 %v341, %v340
    %v402 = vpack.c.b16 %v343, %v342
    %v403 = vpack.c.b16 %v345, %v344
    %v404 = vpack.c.b16 %v347, %v346
    %v405 = vpack.c.b16 %v349, %v348
    %v406 = vpack.c.b16 %v351, %v350
    %v407 = vpack.c.b16 %v353, %v352
    %v408 = vpack.c.b16 %v355, %v354
    %v409 = vpack.c.b16 %v357, %v356
    %v410 = vpack.c.b16 %v359, %v358
    %v411 = vpack.c.b16 %v361, %v360
    %v412 = vpack.c.b16 %v363, %v362
    %v413 = vpack.c.b16 %v365, %v364
    %v414 = vpack.c.b16 %v367, %v366
    %v415 = vpack.c.b16 %v369, %v368
    %v416 = vpack.c.b16 %v371, %v370
    %v417 = vpack.c.b16 %v373, %v372
    %v418 = vpack.c.b16 %v375, %v374
    %v419 = vpack.c.b16 %v377, %v376
    %v420 = vpack.c.b16 %v379, %v378
    %v421 = vpack.c.b16 %v381, %v380
    %v422 = vpack.c.b16 %v383, %v382
    %v423 = vpack.c.b16 %v385, %v384
    %v424 = vpack.c.b16 %v387, %v386
    %v425 = vpack.c.b16 %v389, %v388
    %vm462 = vcmask 523264
    %v464 = vsel %vm462, %v205, 0
    %v467 = vsel %vm462, %v210, 0
    %v470 = vsel %vm462, %v215, 0
    %v473 = vsel %vm462, %v220, 0
    %v476 = vsel %vm462, %v225, 0
    %478 = vmatpush.bf16.msra.mxu0 %v397
    %479 = vmatpush.bf16.msra.mxu0 %v396
    %480 = vmatpush.bf16.msra.mxu0 %v395
    %481 = vmatpush.bf16.msra.mxu0 %v394
    %482 = vmatpush.bf16.msra.mxu0 %v393
    %483 = vmatpush.bf16.msra.mxu0 %v392
    %484 = vmatpush.bf16.msra.mxu0 %v391
    %485 = vmatpush.bf16.msra.mxu0 %v390
    %486 = vmatmul.bf16.gmra.mxu0 %v201
    %v487 = vpop.f32.mrf.mxu0
    %v488 = vadd.f32 %v119, %v487
    %v489 = vpop.f32.mrf.mxu0
    %v490 = vadd.f32 %v119, %v489
    %491 = vmatmul.bf16.gmra.mxu0 %v206
    %v492 = vpop.f32.mrf.mxu0
    %v493 = vadd.f32 %v119, %v492
    %v494 = vpop.f32.mrf.mxu0
    %v495 = vadd.f32 %v119, %v494
    %496 = vmatmul.bf16.gmra.mxu0 %v211
    %v497 = vpop.f32.mrf.mxu0
    %v498 = vadd.f32 %v119, %v497
    %v499 = vpop.f32.mrf.mxu0
    %v500 = vadd.f32 %v119, %v499
    %501 = vmatmul.bf16.gmra.mxu0 %v216
    %v502 = vpop.f32.mrf.mxu0
    %v503 = vadd.f32 %v119, %v502
    %v504 = vpop.f32.mrf.mxu0
    %v505 = vadd.f32 %v119, %v504
    %506 = vmatmul.bf16.gmra.mxu0 %v221
    %v507 = vpop.f32.mrf.mxu0
    %v508 = vadd.f32 %v119, %v507
    %v509 = vpop.f32.mrf.mxu0
    %v510 = vadd.f32 %v119, %v509
    %511 = vdwg.mxu0
    %512 = vmatpush.bf16.msra.mxu0 %v405
    %513 = vmatpush.bf16.msra.mxu0 %v404
    %514 = vmatpush.bf16.msra.mxu0 %v403
    %515 = vmatpush.bf16.msra.mxu0 %v402
    %516 = vmatpush.bf16.msra.mxu0 %v401
    %517 = vmatpush.bf16.msra.mxu0 %v400
    %518 = vmatpush.bf16.msra.mxu0 %v399
    %519 = vmatpush.bf16.msra.mxu0 %v398
    %520 = vmatmul.bf16.gmra.mxu0 %v202
    %v521 = vpop.f32.mrf.mxu0
    %v522 = vadd.f32 %v488, %v521
    %v523 = vpop.f32.mrf.mxu0
    %v524 = vadd.f32 %v490, %v523
    %525 = vmatmul.bf16.gmra.mxu0 %v207
    %v526 = vpop.f32.mrf.mxu0
    %v527 = vadd.f32 %v493, %v526
    %v528 = vpop.f32.mrf.mxu0
    %v529 = vadd.f32 %v495, %v528
    %530 = vmatmul.bf16.gmra.mxu0 %v212
    %v531 = vpop.f32.mrf.mxu0
    %v532 = vadd.f32 %v498, %v531
    %v533 = vpop.f32.mrf.mxu0
    %v534 = vadd.f32 %v500, %v533
    %535 = vmatmul.bf16.gmra.mxu0 %v217
    %v536 = vpop.f32.mrf.mxu0
    %v537 = vadd.f32 %v503, %v536
    %v538 = vpop.f32.mrf.mxu0
    %v539 = vadd.f32 %v505, %v538
    %540 = vmatmul.bf16.gmra.mxu0 %v222
    %v541 = vpop.f32.mrf.mxu0
    %v542 = vadd.f32 %v508, %v541
    %v543 = vpop.f32.mrf.mxu0
    %v544 = vadd.f32 %v510, %v543
    %545 = vdwg.mxu0
    %546 = vmatpush.bf16.msra.mxu0 %v413
    %547 = vmatpush.bf16.msra.mxu0 %v412
    %548 = vmatpush.bf16.msra.mxu0 %v411
    %549 = vmatpush.bf16.msra.mxu0 %v410
    %550 = vmatpush.bf16.msra.mxu0 %v409
    %551 = vmatpush.bf16.msra.mxu0 %v408
    %552 = vmatpush.bf16.msra.mxu0 %v407
    %553 = vmatpush.bf16.msra.mxu0 %v406
    %554 = vmatmul.bf16.gmra.mxu0 %v203
    %v555 = vpop.f32.mrf.mxu0
    %v556 = vadd.f32 %v522, %v555
    %v557 = vpop.f32.mrf.mxu0
    %v558 = vadd.f32 %v524, %v557
    %559 = vmatmul.bf16.gmra.mxu0 %v208
    %v560 = vpop.f32.mrf.mxu0
    %v561 = vadd.f32 %v527, %v560
    %v562 = vpop.f32.mrf.mxu0
    %v563 = vadd.f32 %v529, %v562
    %564 = vmatmul.bf16.gmra.mxu0 %v213
    %v565 = vpop.f32.mrf.mxu0
    %v566 = vadd.f32 %v532, %v565
    %v567 = vpop.f32.mrf.mxu0
    %v568 = vadd.f32 %v534, %v567
    %569 = vmatmul.bf16.gmra.mxu0 %v218
    %v570 = vpop.f32.mrf.mxu0
    %v571 = vadd.f32 %v537, %v570
    %v572 = vpop.f32.mrf.mxu0
    %v573 = vadd.f32 %v539, %v572
    %574 = vmatmul.bf16.gmra.mxu0 %v223
    %v575 = vpop.f32.mrf.mxu0
    %v576 = vadd.f32 %v542, %v575
    %v577 = vpop.f32.mrf.mxu0
    %v578 = vadd.f32 %v544, %v577
    %579 = vdwg.mxu0
    %580 = vmatpush.bf16.msra.mxu0 %v421
    %581 = vmatpush.bf16.msra.mxu0 %v420
    %582 = vmatpush.bf16.msra.mxu0 %v419
    %583 = vmatpush.bf16.msra.mxu0 %v418
    %584 = vmatpush.bf16.msra.mxu0 %v417
    %585 = vmatpush.bf16.msra.mxu0 %v416
    %586 = vmatpush.bf16.msra.mxu0 %v415
    %587 = vmatpush.bf16.msra.mxu0 %v414
    %588 = vmatmul.bf16.gmra.mxu0 %v204
    %v589 = vpop.f32.mrf.mxu0
    %v590 = vadd.f32 %v556, %v589
    %v591 = vpop.f32.mrf.mxu0
    %v592 = vadd.f32 %v558, %v591
    %593 = vmatmul.bf16.gmra.mxu0 %v209
    %v594 = vpop.f32.mrf.mxu0
    %v595 = vadd.f32 %v561, %v594
    %v596 = vpop.f32.mrf.mxu0
    %v597 = vadd.f32 %v563, %v596
    %598 = vmatmul.bf16.gmra.mxu0 %v214
    %v599 = vpop.f32.mrf.mxu0
    %v600 = vadd.f32 %v566, %v599
    %v601 = vpop.f32.mrf.mxu0
    %v602 = vadd.f32 %v568, %v601
    %603 = vmatmul.bf16.gmra.mxu0 %v219
    %v604 = vpop.f32.mrf.mxu0
    %v605 = vadd.f32 %v571, %v604
    %v606 = vpop.f32.mrf.mxu0
    %v607 = vadd.f32 %v573, %v606
    %608 = vmatmul.bf16.gmra.mxu0 %v224
    %v609 = vpop.f32.mrf.mxu0
    %v610 = vadd.f32 %v576, %v609
    %v611 = vpop.f32.mrf.mxu0
    %v612 = vadd.f32 %v578, %v611
    %613 = vdwg.mxu0
    %614 = vmatpush.bf16.msra.mxu0 0
    %615 = vmatpush.bf16.msra.mxu0 0
    %616 = vmatpush.bf16.msra.mxu0 0
    %617 = vmatpush.bf16.msra.mxu0 0
    %618 = vmatpush.bf16.msra.mxu0 %v425
    %619 = vmatpush.bf16.msra.mxu0 %v424
    %620 = vmatpush.bf16.msra.mxu0 %v423
    %621 = vmatpush.bf16.msra.mxu0 %v422
    %622 = vmatmul.bf16.gmra.mxu0 %v464
    %v623 = vpop.f32.mrf.mxu0
    %v624 = vadd.f32 %v590, %v623
    %v625 = vpop.f32.mrf.mxu0
    %v626 = vadd.f32 %v592, %v625
    %627 = vmatmul.bf16.gmra.mxu0 %v467
    %v628 = vpop.f32.mrf.mxu0
    %v629 = vadd.f32 %v595, %v628
    %v630 = vpop.f32.mrf.mxu0
    %v631 = vadd.f32 %v597, %v630
    %632 = vmatmul.bf16.gmra.mxu0 %v470
    %v633 = vpop.f32.mrf.mxu0
    %v634 = vadd.f32 %v600, %v633
    %v635 = vpop.f32.mrf.mxu0
    %v636 = vadd.f32 %v602, %v635
    %637 = vmatmul.bf16.gmra.mxu0 %v473
    %v638 = vpop.f32.mrf.mxu0
    %v639 = vadd.f32 %v605, %v638
    %v640 = vpop.f32.mrf.mxu0
    %v641 = vadd.f32 %v607, %v640
    %642 = vmatmul.bf16.gmra.mxu0 %v476
    %v643 = vpop.f32.mrf.mxu0
    %v644 = vadd.f32 %v610, %v643
    %v645 = vpop.f32.mrf.mxu0
    %v646 = vadd.f32 %v612, %v645
    %647 = vdwg.mxu0
    %v648 = vmax.f32 %v624, 0.0
    %v649 = vmax.f32 %v626, 0.0
    %v650 = vmax.f32 %v629, 0.0
    %v651 = vmax.f32 %v631, 0.0
    %v652 = vmax.f32 %v634, 0.0
    %v653 = vmax.f32 %v636, 0.0
    %v654 = vmax.f32 %v639, 0.0
    %v655 = vmax.f32 %v641, 0.0
    %v656 = vmax.f32 %v644, 0.0
    %v657 = vmax.f32 %v646, 0.0
    %v658 = vpack.c.bf16 %v648, %v648
    %v659 = vpack.c.bf16 %v649, %v649
    %v660 = vpack.c.bf16 %v650, %v650
    %v661 = vpack.c.bf16 %v651, %v651
    %v662 = vpack.c.bf16 %v652, %v652
    %v663 = vpack.c.bf16 %v653, %v653
    %v664 = vpack.c.bf16 %v654, %v654
    %v665 = vpack.c.bf16 %v655, %v655
    %v666 = vpack.c.bf16 %v656, %v656
    %v667 = vpack.c.bf16 %v657, %v657
    %668 = vst [vmem:[#allocation2] sm:$0xf] %v658
    %669 = vst [vmem:[#allocation2 + $0x4] sm:$0xf] %v659
    %670 = vst [vmem:[#allocation2 + $0x8] sm:$0xf] %v660
    %671 = vst [vmem:[#allocation2 + $0xc] sm:$0xf] %v661
    %672 = vst [vmem:[#allocation2 + $0x10] sm:$0xf] %v662
    %673 = vst [vmem:[#allocation2 + $0x14] sm:$0xf] %v663
    %674 = vst [vmem:[#allocation2 + $0x18] sm:$0xf] %v664
    %675 = vst [vmem:[#allocation2 + $0x1c] sm:$0xf] %v665
    %676 = vst [vmem:[#allocation2 + $0x20] sm:$0xf] %v666
    %677 = vst [vmem:[#allocation2 + $0x24] sm:$0xf] %v667
    // Predicated region
    $region14: #{model_forward.6} parent=1 // pred_check
      _
    $region15: #{model_forward.6} parent=1 // pred_check_branch
      %679 = sbr.rel (0) target = $region17
    $region16: #{model_forward.6} parent=1 // pred_region
      // Predicated region
      $region18: #{model_forward.6} parent=16 // pred_check
        _
      $region19: #{model_forward.6} parent=16 // pred_check_branch
        %681 = sbr.rel (0) target = $region21
      $region20: #{model_forward.6} parent=16 // pred_region
        // Predicated region
        $region22: #{model_forward.6} parent=20 // pred_check
          _
        $region23: #{model_forward.6} parent=20 // pred_check_branch
          %683 = sbr.rel target = $region25
        $region24: #{model_forward.6} parent=20 // pred_region
          // Predicated region
          $region37: #{model_forward.6} parent=24 // pred_check
            _
          $region38: #{model_forward.6} parent=24 // pred_check_branch
            %715 = sbr.rel (0) target = $region40
          $region39: #{model_forward.6} parent=24 // pred_region
            loop: start=0, step=1, limit=1
            $region41: #{model_forward.6} parent=39 // loop_pre_header
              _
            $region42: #{model_forward.6} parent=39 // loop_header
              %s717 = sphi 0, %s721
              %p718 = scmp.ge.s32.totalorder %s717, 1
              %s722 = sphi [#allocation2], [#allocation2]
              %s723 = sphi %s3, %s3
            $region43: #{model_forward.6} parent=39 // loop_header_branch
              %720 = sbr.rel (%p718) target = $region47
            $region44: #{model_forward.6} parent=39 // loop_body
              _
            $region45: #{model_forward.6} parent=39 // loop_footer
              %s721 = sadd.s32 1, %s717
            $region46: #{model_forward.6} parent=39 // loop_footer_branch
              %716 = sbr.rel target = $region42
            $region47: #{model_forward.6} parent=39 // loop_exit
              _
            %s725 = ssub.s32 16, 1
            loop: start=0, step=1, limit=1
            $region48: #{model_forward.6} parent=39 // loop_pre_header
              _
            $region49: #{model_forward.6} parent=39 // loop_header
              %s727 = sphi 0, %s731
              %p728 = scmp.ge.s32.totalorder %s727, 1
              %s732 = sphi [#allocation2], [#allocation2]
              %s733 = sphi %s3, %s3
            $region50: #{model_forward.6} parent=39 // loop_header_branch
              %730 = sbr.rel (%p728) target = $region54
            $region51: #{model_forward.6} parent=39 // loop_body
              %v734 = vld [vmem:[%s732] sm:%s725]
              %735 = vst [vmem:[%s733] sm:%s725] %v734
              %v736 = vld [vmem:[%s732 + $0x4] sm:%s725]
              %737 = vst [vmem:[%s733 + $0x4] sm:%s725] %v736
              %v738 = vld [vmem:[%s732 + $0x8] sm:%s725]
              %739 = vst [vmem:[%s733 + $0x8] sm:%s725] %v738
              %v740 = vld [vmem:[%s732 + $0xc] sm:%s725]
              %741 = vst [vmem:[%s733 + $0xc] sm:%s725] %v740
              %v742 = vld [vmem:[%s732 + $0x10] sm:%s725]
              %743 = vst [vmem:[%s733 + $0x10] sm:%s725] %v742
              %v744 = vld [vmem:[%s732 + $0x14] sm:%s725]
              %745 = vst [vmem:[%s733 + $0x14] sm:%s725] %v744
              %v746 = vld [vmem:[%s732 + $0x18] sm:%s725]
              %747 = vst [vmem:[%s733 + $0x18] sm:%s725] %v746
              %v748 = vld [vmem:[%s732 + $0x1c] sm:%s725]
              %749 = vst [vmem:[%s733 + $0x1c] sm:%s725] %v748
              %v750 = vld [vmem:[%s732 + $0x20] sm:%s725]
              %751 = vst [vmem:[%s733 + $0x20] sm:%s725] %v750
            $region52: #{model_forward.6} parent=39 // loop_footer
              %s731 = sadd.s32 1, %s727
            $region53: #{model_forward.6} parent=39 // loop_footer_branch
              %726 = sbr.rel target = $region49
            $region54: #{model_forward.6} parent=39 // loop_exit
              _
          $region40: #{model_forward.6} parent=24 // pred_fallthru
            _
        $region25: #{model_forward.6} parent=20 // pred_fallthru
          _
        // Predicated region
        $region26: #{model_forward.6} parent=20 // pred_check
          _
        $region27: #{model_forward.6} parent=20 // pred_check_branch
          %685 = sbr.rel (0) target = $region29
        $region28: #{model_forward.6} parent=20 // pred_region
          %s687 = ssub.s32 16, 1
          loop: start=0, step=1, limit=1
          $region30: #{model_forward.6} parent=28 // loop_pre_header
            _
          $region31: #{model_forward.6} parent=28 // loop_header
            %s689 = sphi 0, %s693
            %p690 = scmp.ge.s32.totalorder %s689, 1
            %s694 = sphi [#allocation2], [#allocation2]
            %s695 = sphi %s3, %s3
          $region32: #{model_forward.6} parent=28 // loop_header_branch
            %692 = sbr.rel (%p690) target = $region36
          $region33: #{model_forward.6} parent=28 // loop_body
            %v696 = vld [vmem:[%s694] sm:%s687]
            %697 = vst [vmem:[%s695] sm:%s687] %v696
            %v698 = vld [vmem:[%s694 + $0x4] sm:%s687]
            %699 = vst [vmem:[%s695 + $0x4] sm:%s687] %v698
            %v700 = vld [vmem:[%s694 + $0x8] sm:%s687]
            %701 = vst [vmem:[%s695 + $0x8] sm:%s687] %v700
            %v702 = vld [vmem:[%s694 + $0xc] sm:%s687]
            %703 = vst [vmem:[%s695 + $0xc] sm:%s687] %v702
            %v704 = vld [vmem:[%s694 + $0x10] sm:%s687]
            %705 = vst [vmem:[%s695 + $0x10] sm:%s687] %v704
            %v706 = vld [vmem:[%s694 + $0x14] sm:%s687]
            %707 = vst [vmem:[%s695 + $0x14] sm:%s687] %v706
            %v708 = vld [vmem:[%s694 + $0x18] sm:%s687]
            %709 = vst [vmem:[%s695 + $0x18] sm:%s687] %v708
            %v710 = vld [vmem:[%s694 + $0x1c] sm:%s687]
            %711 = vst [vmem:[%s695 + $0x1c] sm:%s687] %v710
            %v712 = vld [vmem:[%s694 + $0x20] sm:%s687]
            %713 = vst [vmem:[%s695 + $0x20] sm:%s687] %v712
          $region34: #{model_forward.6} parent=28 // loop_footer
            %s693 = sadd.s32 1, %s689
          $region35: #{model_forward.6} parent=28 // loop_footer_branch
            %688 = sbr.rel target = $region31
          $region36: #{model_forward.6} parent=28 // loop_exit
            _
        $region29: #{model_forward.6} parent=20 // pred_fallthru
          _
      $region21: #{model_forward.6} parent=16 // pred_fallthru
        _
      %752 = vnop
    $region17: #{model_forward.6} parent=1 // pred_fallthru
      _
    // Predicated region
    $region55: #{model_forward.6} parent=1 // pred_check
      _
    $region56: #{model_forward.6} parent=1 // pred_check_branch
      %754 = sbr.rel (0) target = $region58
    $region57: #{model_forward.6} parent=1 // pred_region
      _
    $region58: #{model_forward.6} parent=1 // pred_fallthru
      _

// kernel: model_forward.7
$region0: #{model_forward.7}
  #allocation0 [shape = 'u32[]', space=smem, size = 0x4, offset = 0x4, fixed_abs, tag = 'smem constant byte address 0x4 - core index']
  #allocation1 [shape = 'u32[72,128]{1,0:T(1,128)}', space=vmem, size = 0x9000, scoped, tag = 'internal scratch']
  %s0 = inlined_call_operand.vmem [shape: bf16[2,4608], index: 0, kind: input, shape index: {}]
  %s1 = inlined_call_operand.vmem [shape: bf16[4608,512], index: 1, kind: input, shape index: {}]
  %s2 = inlined_call_operand.vmem [shape: f32[1,512], index: 2, kind: input, shape index: {}]
  %s3 = inlined_call_operand.vmem [shape: bf16[512,128], index: 3, kind: input, shape index: {}]
  %s4 = inlined_call_operand.vmem [shape: f32[1,128], index: 4, kind: input, shape index: {}]
  %s5 = inlined_call_operand.hbm [shape: bf16[2,512], index: 5, kind: output, shape index: {0}]
  %s6 = inlined_call_operand.vmem [shape: f32[2,128], index: 6, kind: output, shape index: {1}]
  %7 = xla_tuple %s5, %s6
  %s8 = sld [smem:[#allocation0]]
  $region68: #{model_forward.7} parent=0
    _
  %s10 = ssub.s32 1, %s8
  %s11 = scalar_select 0, %s10, %s8
  $region1: #{model_forward.7} parent=0
    #allocation2 [shape = 'u8[16384]{0}', space=vmem, size = 0x4000, scoped, tag = 'output window, operand 0, single buffered']
    #allocation3 [shape = 's32[1]{0}', space=sflag, size = 0x4, scoped, tag = 'scoped memory for model_forward.7']
    #allocation4 [shape = 'u8[8192]{0}', space=vmem, size = 0x2000, scoped, tag = 'output window, operand 1, single buffered']
    %12 = vsyncpa [#allocation3], 0
    // Predicated region
    $region2: #{model_forward.7} parent=1 // pred_check
      _
    $region3: #{model_forward.7} parent=1 // pred_check_branch
      %14 = sbr.rel (0) target = $region5
    $region4: #{model_forward.7} parent=1 // pred_region
      _
    $region5: #{model_forward.7} parent=1 // pred_fallthru
      _
    // Predicated region
    $region6: #{model_forward.7} parent=1 // pred_check
      _
    $region7: #{model_forward.7} parent=1 // pred_check_branch
      %16 = sbr.rel (0) target = $region9
    $region8: #{model_forward.7} parent=1 // pred_region
      _
    $region9: #{model_forward.7} parent=1 // pred_fallthru
      _
    // Predicated region
    $region10: #{model_forward.7} parent=1 // pred_check
      _
    $region11: #{model_forward.7} parent=1 // pred_check_branch
      %18 = sbr.rel (0) target = $region13
    $region12: #{model_forward.7} parent=1 // pred_region
      _
    $region13: #{model_forward.7} parent=1 // pred_fallthru
      _
    // Predicated region
    $region14: #{model_forward.7} parent=1 // pred_check
      _
    $region15: #{model_forward.7} parent=1 // pred_check_branch
      %20 = sbr.rel (0) target = $region17
    $region16: #{model_forward.7} parent=1 // pred_region
      _
    $region17: #{model_forward.7} parent=1 // pred_fallthru
      _
    // Predicated region
    $region18: #{model_forward.7} parent=1 // pred_check
      _
    $region19: #{model_forward.7} parent=1 // pred_check_branch
      %22 = sbr.rel (0) target = $region21
    $region20: #{model_forward.7} parent=1 // pred_region
      _
    $region21: #{model_forward.7} parent=1 // pred_fallthru
      _
    %v23 = vld [vmem:[%s0] sm:$0xff]
    %v24 = vld [vmem:[%s0 + $0x8] sm:$0xff]
    %v25 = vld [vmem:[%s0 + $0x10] sm:$0xff]
    %v26 = vld [vmem:[%s0 + $0x18] sm:$0xff]
    %v27 = vld [vmem:[%s0 + $0x20] sm:$0xf]
    %v28 = vld [vmem:[%s0 + $0x24] sm:$0xff]
    %v29 = vld [vmem:[%s0 + $0x2c] sm:$0xff]
    %v30 = vld [vmem:[%s0 + $0x34] sm:$0xff]
    %v31 = vld [vmem:[%s0 + $0x3c] sm:$0xff]
    %v32 = vld [vmem:[%s0 + $0x44] sm:$0xf]
    %v33 = vld [vmem:[%s0 + $0x48] sm:$0xff]
    %v34 = vld [vmem:[%s0 + $0x50] sm:$0xff]
    %v35 = vld [vmem:[%s0 + $0x58] sm:$0xff]
    %v36 = vld [vmem:[%s0 + $0x60] sm:$0xff]
    %v37 = vld [vmem:[%s0 + $0x68] sm:$0xf]
    %v38 = vld [vmem:[%s0 + $0x6c] sm:$0xff]
    %v39 = vld [vmem:[%s0 + $0x74] sm:$0xff]
    %v40 = vld [vmem:[%s0 + $0x7c] sm:$0xff]
    %v41 = vld [vmem:[%s0 + $0x84] sm:$0xff]
    %v42 = vld [vmem:[%s0 + $0x8c] sm:$0xf]
    %v43 = vld [vmem:[%s0 + $0x90] sm:$0xff]
    %v44 = vld [vmem:[%s0 + $0x98] sm:$0xff]
    %v45 = vld [vmem:[%s0 + $0xa0] sm:$0xff]
    %v46 = vld [vmem:[%s0 + $0xa8] sm:$0xff]
    %v47 = vld [vmem:[%s0 + $0xb0] sm:$0xf]
    %v48 = vld [vmem:[%s0 + $0xb4] sm:$0xff]
    %v49 = vld [vmem:[%s0 + $0xbc] sm:$0xff]
    %v50 = vld [vmem:[%s0 + $0xc4] sm:$0xff]
    %v51 = vld [vmem:[%s0 + $0xcc] sm:$0xff]
    %v52 = vld [vmem:[%s0 + $0xd4] sm:$0xf]
    %v53 = vld [vmem:[%s0 + $0xd8] sm:$0xff]
    %v54 = vld [vmem:[%s0 + $0xe0] sm:$0xff]
    %v55 = vld [vmem:[%s0 + $0xe8] sm:$0xff]
    %v56 = vld [vmem:[%s0 + $0xf0] sm:$0xff]
    %v57 = vld [vmem:[%s0 + $0xf8] sm:$0xf]
    %v58 = vld [vmem:[%s0 + $0xfc] sm:$0xff]
    %v59 = vld [vmem:[%s0 + $0x104] sm:$0xff]
    %v60 = vld [vmem:[%s0 + $0x10c] sm:$0xff]
    %v61 = vld [vmem:[%s0 + $0x114] sm:$0xff]
    %v62 = vld [vmem:[%s0 + $0x11c] sm:$0xf]
    %v63 = vld [vmem:[%s1] sm:$0xff]
    %v64 = vld [vmem:[%s1 + $0x8] sm:$0xff]
    %v65 = vld [vmem:[%s1 + $0x10] sm:$0xff]
    %v66 = vld [vmem:[%s1 + $0x18] sm:$0xff]
    %v67 = vld [vmem:[%s1 + $0x20] sm:$0xff]
    %v68 = vld [vmem:[%s1 + $0x28] sm:$0xff]
    %v69 = vld [vmem:[%s1 + $0x30] sm:$0xff]
    %v70 = vld [vmem:[%s1 + $0x38] sm:$0xff]
    %v71 = vld [vmem:[%s1 + $0x40] sm:$0xff]
    %v72 = vld [vmem:[%s1 + $0x48] sm:$0xff]
    %v73 = vld [vmem:[%s1 + $0x50] sm:$0xff]
    %v74 = vld [vmem:[%s1 + $0x58] sm:$0xff]
    %v75 = vld [vmem:[%s1 + $0x60] sm:$0xff]
    %v76 = vld [vmem:[%s1 + $0x68] sm:$0xff]
    %v77 = vld [vmem:[%s1 + $0x70] sm:$0xff]
    %v78 = vld [vmem:[%s1 + $0x78] sm:$0xff]
    %v79 = vld [vmem:[%s1 + $0x80] sm:$0xff]
    %v80 = vld [vmem:[%s1 + $0x88] sm:$0xff]
    %v81 = vld [vmem:[%s1 + $0x90] sm:$0xff]
    %v82 = vld [vmem:[%s1 + $0x98] sm:$0xff]
    %v83 = vld [vmem:[%s1 + $0xa0] sm:$0xff]
    %v84 = vld [vmem:[%s1 + $0xa8] sm:$0xff]
    %v85 = vld [vmem:[%s1 + $0xb0] sm:$0xff]
    %v86 = vld [vmem:[%s1 + $0xb8] sm:$0xff]
    %v87 = vld [vmem:[%s1 + $0xc0] sm:$0xff]
    %v88 = vld [vmem:[%s1 + $0xc8] sm:$0xff]
    %v89 = vld [vmem:[%s1 + $0xd0] sm:$0xff]
    %v90 = vld [vmem:[%s1 + $0xd8] sm:$0xff]
    %v91 = vld [vmem:[%s1 + $0xe0] sm:$0xff]
    %v92 = vld [vmem:[%s1 + $0xe8] sm:$0xff]
    %v93 = vld [vmem:[%s1 + $0xf0] sm:$0xff]
    %v94 = vld [vmem:[%s1 + $0xf8] sm:$0xff]
    %v95 = vld [vmem:[%s1 + $0x100] sm:$0xff]
    %v96 = vld [vmem:[%s1 + $0x108] sm:$0xff]
    %v97 = vld [vmem:[%s1 + $0x110] sm:$0xff]
    %v98 = vld [vmem:[%s1 + $0x118] sm:$0xff]
    %v99 = vld [vmem:[%s1 + $0x120] sm:$0xff]
    %v100 = vld [vmem:[%s1 + $0x128] sm:$0xff]
    %v101 = vld [vmem:[%s1 + $0x130] sm:$0xff]
    %v102 = vld [vmem:[%s1 + $0x138] sm:$0xff]
    %v103 = vld [vmem:[%s1 + $0x140] sm:$0xff]
    %v104 = vld [vmem:[%s1 + $0x148] sm:$0xff]
    %v105 = vld [vmem:[%s1 + $0x150] sm:$0xff]
    %v106 = vld [vmem:[%s1 + $0x158] sm:$0xff]
    %v107 = vld [vmem:[%s1 + $0x160] sm:$0xff]
    %v108 = vld [vmem:[%s1 + $0x168] sm:$0xff]
    %v109 = vld [vmem:[%s1 + $0x170] sm:$0xff]
    %v110 = vld [vmem:[%s1 + $0x178] sm:$0xff]
    %v111 = vld [vmem:[%s1 + $0x180] sm:$0xff]
    %v112 = vld [vmem:[%s1 + $0x188] sm:$0xff]
    %v113 = vld [vmem:[%s1 + $0x190] sm:$0xff]
    %v114 = vld [vmem:[%s1 + $0x198] sm:$0xff]
    %v115 = vld [vmem:[%s1 + $0x1a0] sm:$0xff]
    %v116 = vld [vmem:[%s1 + $0x1a8] sm:$0xff]
    %v117 = vld [vmem:[%s1 + $0x1b0] sm:$0xff]
    %v118 = vld [vmem:[%s1 + $0x1b8] sm:$0xff]
    %v119 = vld [vmem:[%s1 + $0x1c0] sm:$0xff]
    %v120 = vld [vmem:[%s1 + $0x1c8] sm:$0xff]
    %v121 = vld [vmem:[%s1 + $0x1d0] sm:$0xff]
    %v122 = vld [vmem:[%s1 + $0x1d8] sm:$0xff]
    %v123 = vld [vmem:[%s1 + $0x1e0] sm:$0xff]
    %v124 = vld [vmem:[%s1 + $0x1e8] sm:$0xff]
    %v125 = vld [vmem:[%s1 + $0x1f0] sm:$0xff]
    %v126 = vld [vmem:[%s1 + $0x1f8] sm:$0xff]
    %v127 = vld [vmem:[%s1 + $0x200] sm:$0xff]
    %v128 = vld [vmem:[%s1 + $0x208] sm:$0xff]
    %v129 = vld [vmem:[%s1 + $0x210] sm:$0xff]
    %v130 = vld [vmem:[%s1 + $0x218] sm:$0xff]
    %v131 = vld [vmem:[%s1 + $0x220] sm:$0xff]
    %v132 = vld [vmem:[%s1 + $0x228] sm:$0xff]
    %v133 = vld [vmem:[%s1 + $0x230] sm:$0xff]
    %v134 = vld [vmem:[%s1 + $0x238] sm:$0xff]
    %v135 = vld [vmem:[%s1 + $0x240] sm:$0xff]
    %v136 = vld [vmem:[%s1 + $0x248] sm:$0xff]
    %v137 = vld [vmem:[%s1 + $0x250] sm:$0xff]
    %v138 = vld [vmem:[%s1 + $0x258] sm:$0xff]
    %v139 = vld [vmem:[%s1 + $0x260] sm:$0xff]
    %v140 = vld [vmem:[%s1 + $0x268] sm:$0xff]
    %v141 = vld [vmem:[%s1 + $0x270] sm:$0xff]
    %v142 = vld [vmem:[%s1 + $0x278] sm:$0xff]
    %v143 = vld [vmem:[%s1 + $0x280] sm:$0xff]
    %v144 = vld [vmem:[%s1 + $0x288] sm:$0xff]
    %v145 = vld [vmem:[%s1 + $0x290] sm:$0xff]
    %v146 = vld [vmem:[%s1 + $0x298] sm:$0xff]
    %v147 = vld [vmem:[%s1 + $0x2a0] sm:$0xff]
    %v148 = vld [vmem:[%s1 + $0x2a8] sm:$0xff]
    %v149 = vld [vmem:[%s1 + $0x2b0] sm:$0xff]
    %v150 = vld [vmem:[%s1 + $0x2b8] sm:$0xff]
    %v151 = vld [vmem:[%s1 + $0x2c0] sm:$0xff]
    %v152 = vld [vmem:[%s1 + $0x2c8] sm:$0xff]
    %v153 = vld [vmem:[%s1 + $0x2d0] sm:$0xff]
    %v154 = vld [vmem:[%s1 + $0x2d8] sm:$0xff]
    %v155 = vld [vmem:[%s1 + $0x2e0] sm:$0xff]
    %v156 = vld [vmem:[%s1 + $0x2e8] sm:$0xff]
    %v157 = vld [vmem:[%s1 + $0x2f0] sm:$0xff]
    %v158 = vld [vmem:[%s1 + $0x2f8] sm:$0xff]
    %v159 = vld [vmem:[%s1 + $0x300] sm:$0xff]
    %v160 = vld [vmem:[%s1 + $0x308] sm:$0xff]
    %v161 = vld [vmem:[%s1 + $0x310] sm:$0xff]
    %v162 = vld [vmem:[%s1 + $0x318] sm:$0xff]
    %v163 = vld [vmem:[%s1 + $0x320] sm:$0xff]
    %v164 = vld [vmem:[%s1 + $0x328] sm:$0xff]
    %v165 = vld [vmem:[%s1 + $0x330] sm:$0xff]
    %v166 = vld [vmem:[%s1 + $0x338] sm:$0xff]
    %v167 = vld [vmem:[%s1 + $0x340] sm:$0xff]
    %v168 = vld [vmem:[%s1 + $0x348] sm:$0xff]
    %v169 = vld [vmem:[%s1 + $0x350] sm:$0xff]
    %v170 = vld [vmem:[%s1 + $0x358] sm:$0xff]
    %v171 = vld [vmem:[%s1 + $0x360] sm:$0xff]
    %v172 = vld [vmem:[%s1 + $0x368] sm:$0xff]
    %v173 = vld [vmem:[%s1 + $0x370] sm:$0xff]
    %v174 = vld [vmem:[%s1 + $0x378] sm:$0xff]
    %v175 = vld [vmem:[%s1 + $0x380] sm:$0xff]
    %v176 = vld [vmem:[%s1 + $0x388] sm:$0xff]
    %v177 = vld [vmem:[%s1 + $0x390] sm:$0xff]
    %v178 = vld [vmem:[%s1 + $0x398] sm:$0xff]
    %v179 = vld [vmem:[%s1 + $0x3a0] sm:$0xff]
    %v180 = vld [vmem:[%s1 + $0x3a8] sm:$0xff]
    %v181 = vld [vmem:[%s1 + $0x3b0] sm:$0xff]
    %v182 = vld [vmem:[%s1 + $0x3b8] sm:$0xff]
    %v183 = vld [vmem:[%s1 + $0x3c0] sm:$0xff]
    %v184 = vld [vmem:[%s1 + $0x3c8] sm:$0xff]
    %v185 = vld [vmem:[%s1 + $0x3d0] sm:$0xff]
    %v186 = vld [vmem:[%s1 + $0x3d8] sm:$0xff]
    %v187 = vld [vmem:[%s1 + $0x3e0] sm:$0xff]
    %v188 = vld [vmem:[%s1 + $0x3e8] sm:$0xff]
    %v189 = vld [vmem:[%s1 + $0x3f0] sm:$0xff]
    %v190 = vld [vmem:[%s1 + $0x3f8] sm:$0xff]
    %v191 = vld [vmem:[%s1 + $0x400] sm:$0xff]
    %v192 = vld [vmem:[%s1 + $0x408] sm:$0xff]
    %v193 = vld [vmem:[%s1 + $0x410] sm:$0xff]
    %v194 = vld [vmem:[%s1 + $0x418] sm:$0xff]
    %v195 = vld [vmem:[%s1 + $0x420] sm:$0xff]
    %v196 = vld [vmem:[%s1 + $0x428] sm:$0xff]
    %v197 = vld [vmem:[%s1 + $0x430] sm:$0xff]
    %v198 = vld [vmem:[%s1 + $0x438] sm:$0xff]
    %v199 = vld [vmem:[%s1 + $0x440] sm:$0xff]
    %v200 = vld [vmem:[%s1 + $0x448] sm:$0xff]
    %v201 = vld [vmem:[%s1 + $0x450] sm:$0xff]
    %v202 = vld [vmem:[%s1 + $0x458] sm:$0xff]
    %v203 = vld [vmem:[%s1 + $0x460] sm:$0xff]
    %v204 = vld [vmem:[%s1 + $0x468] sm:$0xff]
    %v205 = vld [vmem:[%s1 + $0x470] sm:$0xff]
    %v206 = vld [vmem:[%s1 + $0x478] sm:$0xff]
    %v207 = vld [vmem:[%s1 + $0x480] sm:$0xff]
    %v208 = vld [vmem:[%s1 + $0x488] sm:$0xff]
    %v209 = vld [vmem:[%s1 + $0x490] sm:$0xff]
    %v210 = vld [vmem:[%s1 + $0x498] sm:$0xff]
    %v211 = vld [vmem:[%s1 + $0x4a0] sm:$0xff]
    %v212 = vld [vmem:[%s1 + $0x4a8] sm:$0xff]
    %v213 = vld [vmem:[%s1 + $0x4b0] sm:$0xff]
    %v214 = vld [vmem:[%s1 + $0x4b8] sm:$0xff]
    %v215 = vld [vmem:[%s1 + $0x4c0] sm:$0xff]
    %v216 = vld [vmem:[%s1 + $0x4c8] sm:$0xff]
    %v217 = vld [vmem:[%s1 + $0x4d0] sm:$0xff]
    %v218 = vld [vmem:[%s1 + $0x4d8] sm:$0xff]
    %v219 = vld [vmem:[%s1 + $0x4e0] sm:$0xff]
    %v220 = vld [vmem:[%s1 + $0x4e8] sm:$0xff]
    %v221 = vld [vmem:[%s1 + $0x4f0] sm:$0xff]
    %v222 = vld [vmem:[%s1 + $0x4f8] sm:$0xff]
    %v223 = vld [vmem:[%s1 + $0x500] sm:$0xff]
    %v224 = vld [vmem:[%s1 + $0x508] sm:$0xff]
    %v225 = vld [vmem:[%s1 + $0x510] sm:$0xff]
    %v226 = vld [vmem:[%s1 + $0x518] sm:$0xff]
    %v227 = vld [vmem:[%s1 + $0x520] sm:$0xff]
    %v228 = vld [vmem:[%s1 + $0x528] sm:$0xff]
    %v229 = vld [vmem:[%s1 + $0x530] sm:$0xff]
    %v230 = vld [vmem:[%s1 + $0x538] sm:$0xff]
    %v231 = vld [vmem:[%s1 + $0x540] sm:$0xff]
    %v232 = vld [vmem:[%s1 + $0x548] sm:$0xff]
    %v233 = vld [vmem:[%s1 + $0x550] sm:$0xff]
    %v234 = vld [vmem:[%s1 + $0x558] sm:$0xff]
    %v235 = vld [vmem:[%s1 + $0x560] sm:$0xff]
    %v236 = vld [vmem:[%s1 + $0x568] sm:$0xff]
    %v237 = vld [vmem:[%s1 + $0x570] sm:$0xff]
    %v238 = vld [vmem:[%s1 + $0x578] sm:$0xff]
    %v239 = vld [vmem:[%s1 + $0x580] sm:$0xff]
    %v240 = vld [vmem:[%s1 + $0x588] sm:$0xff]
    %v241 = vld [vmem:[%s1 + $0x590] sm:$0xff]
    %v242 = vld [vmem:[%s1 + $0x598] sm:$0xff]
    %v243 = vld [vmem:[%s1 + $0x5a0] sm:$0xff]
    %v244 = vld [vmem:[%s1 + $0x5a8] sm:$0xff]
    %v245 = vld [vmem:[%s1 + $0x5b0] sm:$0xff]
    %v246 = vld [vmem:[%s1 + $0x5b8] sm:$0xff]
    %v247 = vld [vmem:[%s1 + $0x5c0] sm:$0xff]
    %v248 = vld [vmem:[%s1 + $0x5c8] sm:$0xff]
    %v249 = vld [vmem:[%s1 + $0x5d0] sm:$0xff]
    %v250 = vld [vmem:[%s1 + $0x5d8] sm:$0xff]
    %v251 = vld [vmem:[%s1 + $0x5e0] sm:$0xff]
    %v252 = vld [vmem:[%s1 + $0x5e8] sm:$0xff]
    %v253 = vld [vmem:[%s1 + $0x5f0] sm:$0xff]
    %v254 = vld [vmem:[%s1 + $0x5f8] sm:$0xff]
    %v255 = vld [vmem:[%s1 + $0x600] sm:$0xff]
    %v256 = vld [vmem:[%s1 + $0x608] sm:$0xff]
    %v257 = vld [vmem:[%s1 + $0x610] sm:$0xff]
    %v258 = vld [vmem:[%s1 + $0x618] sm:$0xff]
    %v259 = vld [vmem:[%s1 + $0x620] sm:$0xff]
    %v260 = vld [vmem:[%s1 + $0x628] sm:$0xff]
    %v261 = vld [vmem:[%s1 + $0x630] sm:$0xff]
    %v262 = vld [vmem:[%s1 + $0x638] sm:$0xff]
    %v263 = vld [vmem:[%s1 + $0x640] sm:$0xff]
    %v264 = vld [vmem:[%s1 + $0x648] sm:$0xff]
    %v265 = vld [vmem:[%s1 + $0x650] sm:$0xff]
    %v266 = vld [vmem:[%s1 + $0x658] sm:$0xff]
    %v267 = vld [vmem:[%s1 + $0x660] sm:$0xff]
    %v268 = vld [vmem:[%s1 + $0x668] sm:$0xff]
    %v269 = vld [vmem:[%s1 + $0x670] sm:$0xff]
    %v270 = vld [vmem:[%s1 + $0x678] sm:$0xff]
    %v271 = vld [vmem:[%s1 + $0x680] sm:$0xff]
    %v272 = vld [vmem:[%s1 + $0x688] sm:$0xff]
    %v273 = vld [vmem:[%s1 + $0x690] sm:$0xff]
    %v274 = vld [vmem:[%s1 + $0x698] sm:$0xff]
    %v275 = vld [vmem:[%s1 + $0x6a0] sm:$0xff]
    %v276 = vld [vmem:[%s1 + $0x6a8] sm:$0xff]
    %v277 = vld [vmem:[%s1 + $0x6b0] sm:$0xff]
    %v278 = vld [vmem:[%s1 + $0x6b8] sm:$0xff]
    %v279 = vld [vmem:[%s1 + $0x6c0] sm:$0xff]
    %v280 = vld [vmem:[%s1 + $0x6c8] sm:$0xff]
    %v281 = vld [vmem:[%s1 + $0x6d0] sm:$0xff]
    %v282 = vld [vmem:[%s1 + $0x6d8] sm:$0xff]
    %v283 = vld [vmem:[%s1 + $0x6e0] sm:$0xff]
    %v284 = vld [vmem:[%s1 + $0x6e8] sm:$0xff]
    %v285 = vld [vmem:[%s1 + $0x6f0] sm:$0xff]
    %v286 = vld [vmem:[%s1 + $0x6f8] sm:$0xff]
    %v287 = vld [vmem:[%s1 + $0x700] sm:$0xff]
    %v288 = vld [vmem:[%s1 + $0x708] sm:$0xff]
    %v289 = vld [vmem:[%s1 + $0x710] sm:$0xff]
    %v290 = vld [vmem:[%s1 + $0x718] sm:$0xff]
    %v291 = vld [vmem:[%s1 + $0x720] sm:$0xff]
    %v292 = vld [vmem:[%s1 + $0x728] sm:$0xff]
    %v293 = vld [vmem:[%s1 + $0x730] sm:$0xff]
    %v294 = vld [vmem:[%s1 + $0x738] sm:$0xff]
    %v295 = vld [vmem:[%s1 + $0x740] sm:$0xff]
    %v296 = vld [vmem:[%s1 + $0x748] sm:$0xff]
    %v297 = vld [vmem:[%s1 + $0x750] sm:$0xff]
    %v298 = vld [vmem:[%s1 + $0x758] sm:$0xff]
    %v299 = vld [vmem:[%s1 + $0x760] sm:$0xff]
    %v300 = vld [vmem:[%s1 + $0x768] sm:$0xff]
    %v301 = vld [vmem:[%s1 + $0x770] sm:$0xff]
    %v302 = vld [vmem:[%s1 + $0x778] sm:$0xff]
    %v303 = vld [vmem:[%s1 + $0x780] sm:$0xff]
    %v304 = vld [vmem:[%s1 + $0x788] sm:$0xff]
    %v305 = vld [vmem:[%s1 + $0x790] sm:$0xff]
    %v306 = vld [vmem:[%s1 + $0x798] sm:$0xff]
    %v307 = vld [vmem:[%s1 + $0x7a0] sm:$0xff]
    %v308 = vld [vmem:[%s1 + $0x7a8] sm:$0xff]
    %v309 = vld [vmem:[%s1 + $0x7b0] sm:$0xff]
    %v310 = vld [vmem:[%s1 + $0x7b8] sm:$0xff]
    %v311 = vld [vmem:[%s1 + $0x7c0] sm:$0xff]
    %v312 = vld [vmem:[%s1 + $0x7c8] sm:$0xff]
    %v313 = vld [vmem:[%s1 + $0x7d0] sm:$0xff]
    %v314 = vld [vmem:[%s1 + $0x7d8] sm:$0xff]
    %v315 = vld [vmem:[%s1 + $0x7e0] sm:$0xff]
    %v316 = vld [vmem:[%s1 + $0x7e8] sm:$0xff]
    %v317 = vld [vmem:[%s1 + $0x7f0] sm:$0xff]
    %v318 = vld [vmem:[%s1 + $0x7f8] sm:$0xff]
    %v319 = vld [vmem:[%s1 + $0x800] sm:$0xff]
    %v320 = vld [vmem:[%s1 + $0x808] sm:$0xff]
    %v321 = vld [vmem:[%s1 + $0x810] sm:$0xff]
    %v322 = vld [vmem:[%s1 + $0x818] sm:$0xff]
    %v323 = vld [vmem:[%s1 + $0x820] sm:$0xff]
    %v324 = vld [vmem:[%s1 + $0x828] sm:$0xff]
    %v325 = vld [vmem:[%s1 + $0x830] sm:$0xff]
    %v326 = vld [vmem:[%s1 + $0x838] sm:$0xff]
    %v327 = vld [vmem:[%s1 + $0x840] sm:$0xff]
    %v328 = vld [vmem:[%s1 + $0x848] sm:$0xff]
    %v329 = vld [vmem:[%s1 + $0x850] sm:$0xff]
    %v330 = vld [vmem:[%s1 + $0x858] sm:$0xff]
    %v331 = vld [vmem:[%s1 + $0x860] sm:$0xff]
    %v332 = vld [vmem:[%s1 + $0x868] sm:$0xff]
    %v333 = vld [vmem:[%s1 + $0x870] sm:$0xff]
    %v334 = vld [vmem:[%s1 + $0x878] sm:$0xff]
    %v335 = vld [vmem:[%s1 + $0x880] sm:$0xff]
    %v336 = vld [vmem:[%s1 + $0x888] sm:$0xff]
    %v337 = vld [vmem:[%s1 + $0x890] sm:$0xff]
    %v338 = vld [vmem:[%s1 + $0x898] sm:$0xff]
    %v339 = vld [vmem:[%s1 + $0x8a0] sm:$0xff]
    %v340 = vld [vmem:[%s1 + $0x8a8] sm:$0xff]
    %v341 = vld [vmem:[%s1 + $0x8b0] sm:$0xff]
    %v342 = vld [vmem:[%s1 + $0x8b8] sm:$0xff]
    %v343 = vld [vmem:[%s1 + $0x8c0] sm:$0xff]
    %v344 = vld [vmem:[%s1 + $0x8c8] sm:$0xff]
    %v345 = vld [vmem:[%s1 + $0x8d0] sm:$0xff]
    %v346 = vld [vmem:[%s1 + $0x8d8] sm:$0xff]
    %v347 = vld [vmem:[%s1 + $0x8e0] sm:$0xff]
    %v348 = vld [vmem:[%s1 + $0x8e8] sm:$0xff]
    %v349 = vld [vmem:[%s1 + $0x8f0] sm:$0xff]
    %v350 = vld [vmem:[%s1 + $0x8f8] sm:$0xff]
    %v351 = vld [vmem:[%s1 + $0x900] sm:$0xff]
    %v352 = vld [vmem:[%s1 + $0x908] sm:$0xff]
    %v353 = vld [vmem:[%s1 + $0x910] sm:$0xff]
    %v354 = vld [vmem:[%s1 + $0x918] sm:$0xff]
    %v355 = vld [vmem:[%s1 + $0x920] sm:$0xff]
    %v356 = vld [vmem:[%s1 + $0x928] sm:$0xff]
    %v357 = vld [vmem:[%s1 + $0x930] sm:$0xff]
    %v358 = vld [vmem:[%s1 + $0x938] sm:$0xff]
    %v359 = vld [vmem:[%s1 + $0x940] sm:$0xff]
    %v360 = vld [vmem:[%s1 + $0x948] sm:$0xff]
    %v361 = vld [vmem:[%s1 + $0x950] sm:$0xff]
    %v362 = vld [vmem:[%s1 + $0x958] sm:$0xff]
    %v363 = vld [vmem:[%s1 + $0x960] sm:$0xff]
    %v364 = vld [vmem:[%s1 + $0x968] sm:$0xff]
    %v365 = vld [vmem:[%s1 + $0x970] sm:$0xff]
    %v366 = vld [vmem:[%s1 + $0x978] sm:$0xff]
    %v367 = vld [vmem:[%s1 + $0x980] sm:$0xff]
    %v368 = vld [vmem:[%s1 + $0x988] sm:$0xff]
    %v369 = vld [vmem:[%s1 + $0x990] sm:$0xff]
    %v370 = vld [vmem:[%s1 + $0x998] sm:$0xff]
    %v371 = vld [vmem:[%s1 + $0x9a0] sm:$0xff]
    %v372 = vld [vmem:[%s1 + $0x9a8] sm:$0xff]
    %v373 = vld [vmem:[%s1 + $0x9b0] sm:$0xff]
    %v374 = vld [vmem:[%s1 + $0x9b8] sm:$0xff]
    %v375 = vld [vmem:[%s1 + $0x9c0] sm:$0xff]
    %v376 = vld [vmem:[%s1 + $0x9c8] sm:$0xff]
    %v377 = vld [vmem:[%s1 + $0x9d0] sm:$0xff]
    %v378 = vld [vmem:[%s1 + $0x9d8] sm:$0xff]
    %v379 = vld [vmem:[%s1 + $0x9e0] sm:$0xff]
    %v380 = vld [vmem:[%s1 + $0x9e8] sm:$0xff]
    %v381 = vld [vmem:[%s1 + $0x9f0] sm:$0xff]
    %v382 = vld [vmem:[%s1 + $0x9f8] sm:$0xff]
    %v383 = vld [vmem:[%s1 + $0xa00] sm:$0xff]
    %v384 = vld [vmem:[%s1 + $0xa08] sm:$0xff]
    %v385 = vld [vmem:[%s1 + $0xa10] sm:$0xff]
    %v386 = vld [vmem:[%s1 + $0xa18] sm:$0xff]
    %v387 = vld [vmem:[%s1 + $0xa20] sm:$0xff]
    %v388 = vld [vmem:[%s1 + $0xa28] sm:$0xff]
    %v389 = vld [vmem:[%s1 + $0xa30] sm:$0xff]
    %v390 = vld [vmem:[%s1 + $0xa38] sm:$0xff]
    %v391 = vld [vmem:[%s1 + $0xa40] sm:$0xff]
    %v392 = vld [vmem:[%s1 + $0xa48] sm:$0xff]
    %v393 = vld [vmem:[%s1 + $0xa50] sm:$0xff]
    %v394 = vld [vmem:[%s1 + $0xa58] sm:$0xff]
    %v395 = vld [vmem:[%s1 + $0xa60] sm:$0xff]
    %v396 = vld [vmem:[%s1 + $0xa68] sm:$0xff]
    %v397 = vld [vmem:[%s1 + $0xa70] sm:$0xff]
    %v398 = vld [vmem:[%s1 + $0xa78] sm:$0xff]
    %v399 = vld [vmem:[%s1 + $0xa80] sm:$0xff]
    %v400 = vld [vmem:[%s1 + $0xa88] sm:$0xff]
    %v401 = vld [vmem:[%s1 + $0xa90] sm:$0xff]
    %v402 = vld [vmem:[%s1 + $0xa98] sm:$0xff]
    %v403 = vld [vmem:[%s1 + $0xaa0] sm:$0xff]
    %v404 = vld [vmem:[%s1 + $0xaa8] sm:$0xff]
    %v405 = vld [vmem:[%s1 + $0xab0] sm:$0xff]
    %v406 = vld [vmem:[%s1 + $0xab8] sm:$0xff]
    %v407 = vld [vmem:[%s1 + $0xac0] sm:$0xff]
    %v408 = vld [vmem:[%s1 + $0xac8] sm:$0xff]
    %v409 = vld [vmem:[%s1 + $0xad0] sm:$0xff]
    %v410 = vld [vmem:[%s1 + $0xad8] sm:$0xff]
    %v411 = vld [vmem:[%s1 + $0xae0] sm:$0xff]
    %v412 = vld [vmem:[%s1 + $0xae8] sm:$0xff]
    %v413 = vld [vmem:[%s1 + $0xaf0] sm:$0xff]
    %v414 = vld [vmem:[%s1 + $0xaf8] sm:$0xff]
    %v415 = vld [vmem:[%s1 + $0xb00] sm:$0xff]
    %v416 = vld [vmem:[%s1 + $0xb08] sm:$0xff]
    %v417 = vld [vmem:[%s1 + $0xb10] sm:$0xff]
    %v418 = vld [vmem:[%s1 + $0xb18] sm:$0xff]
    %v419 = vld [vmem:[%s1 + $0xb20] sm:$0xff]
    %v420 = vld [vmem:[%s1 + $0xb28] sm:$0xff]
    %v421 = vld [vmem:[%s1 + $0xb30] sm:$0xff]
    %v422 = vld [vmem:[%s1 + $0xb38] sm:$0xff]
    %v423 = vld [vmem:[%s1 + $0xb40] sm:$0xff]
    %v424 = vld [vmem:[%s1 + $0xb48] sm:$0xff]
    %v425 = vld [vmem:[%s1 + $0xb50] sm:$0xff]
    %v426 = vld [vmem:[%s1 + $0xb58] sm:$0xff]
    %v427 = vld [vmem:[%s1 + $0xb60] sm:$0xff]
    %v428 = vld [vmem:[%s1 + $0xb68] sm:$0xff]
    %v429 = vld [vmem:[%s1 + $0xb70] sm:$0xff]
    %v430 = vld [vmem:[%s1 + $0xb78] sm:$0xff]
    %v431 = vld [vmem:[%s1 + $0xb80] sm:$0xff]
    %v432 = vld [vmem:[%s1 + $0xb88] sm:$0xff]
    %v433 = vld [vmem:[%s1 + $0xb90] sm:$0xff]
    %v434 = vld [vmem:[%s1 + $0xb98] sm:$0xff]
    %v435 = vld [vmem:[%s1 + $0xba0] sm:$0xff]
    %v436 = vld [vmem:[%s1 + $0xba8] sm:$0xff]
    %v437 = vld [vmem:[%s1 + $0xbb0] sm:$0xff]
    %v438 = vld [vmem:[%s1 + $0xbb8] sm:$0xff]
    %v439 = vld [vmem:[%s1 + $0xbc0] sm:$0xff]
    %v440 = vld [vmem:[%s1 + $0xbc8] sm:$0xff]
    %v441 = vld [vmem:[%s1 + $0xbd0] sm:$0xff]
    %v442 = vld [vmem:[%s1 + $0xbd8] sm:$0xff]
    %v443 = vld [vmem:[%s1 + $0xbe0] sm:$0xff]
    %v444 = vld [vmem:[%s1 + $0xbe8] sm:$0xff]
    %v445 = vld [vmem:[%s1 + $0xbf0] sm:$0xff]
    %v446 = vld [vmem:[%s1 + $0xbf8] sm:$0xff]
    %v447 = vld [vmem:[%s1 + $0xc00] sm:$0xff]
    %v448 = vld [vmem:[%s1 + $0xc08] sm:$0xff]
    %v449 = vld [vmem:[%s1 + $0xc10] sm:$0xff]
    %v450 = vld [vmem:[%s1 + $0xc18] sm:$0xff]
    %v451 = vld [vmem:[%s1 + $0xc20] sm:$0xff]
    %v452 = vld [vmem:[%s1 + $0xc28] sm:$0xff]
    %v453 = vld [vmem:[%s1 + $0xc30] sm:$0xff]
    %v454 = vld [vmem:[%s1 + $0xc38] sm:$0xff]
    %v455 = vld [vmem:[%s1 + $0xc40] sm:$0xff]
    %v456 = vld [vmem:[%s1 + $0xc48] sm:$0xff]
    %v457 = vld [vmem:[%s1 + $0xc50] sm:$0xff]
    %v458 = vld [vmem:[%s1 + $0xc58] sm:$0xff]
    %v459 = vld [vmem:[%s1 + $0xc60] sm:$0xff]
    %v460 = vld [vmem:[%s1 + $0xc68] sm:$0xff]
    %v461 = vld [vmem:[%s1 + $0xc70] sm:$0xff]
    %v462 = vld [vmem:[%s1 + $0xc78] sm:$0xff]
    %v463 = vld [vmem:[%s1 + $0xc80] sm:$0xff]
    %v464 = vld [vmem:[%s1 + $0xc88] sm:$0xff]
    %v465 = vld [vmem:[%s1 + $0xc90] sm:$0xff]
    %v466 = vld [vmem:[%s1 + $0xc98] sm:$0xff]
    %v467 = vld [vmem:[%s1 + $0xca0] sm:$0xff]
    %v468 = vld [vmem:[%s1 + $0xca8] sm:$0xff]
    %v469 = vld [vmem:[%s1 + $0xcb0] sm:$0xff]
    %v470 = vld [vmem:[%s1 + $0xcb8] sm:$0xff]
    %v471 = vld [vmem:[%s1 + $0xcc0] sm:$0xff]
    %v472 = vld [vmem:[%s1 + $0xcc8] sm:$0xff]
    %v473 = vld [vmem:[%s1 + $0xcd0] sm:$0xff]
    %v474 = vld [vmem:[%s1 + $0xcd8] sm:$0xff]
    %v475 = vld [vmem:[%s1 + $0xce0] sm:$0xff]
    %v476 = vld [vmem:[%s1 + $0xce8] sm:$0xff]
    %v477 = vld [vmem:[%s1 + $0xcf0] sm:$0xff]
    %v478 = vld [vmem:[%s1 + $0xcf8] sm:$0xff]
    %v479 = vld [vmem:[%s1 + $0xd00] sm:$0xff]
    %v480 = vld [vmem:[%s1 + $0xd08] sm:$0xff]
    %v481 = vld [vmem:[%s1 + $0xd10] sm:$0xff]
    %v482 = vld [vmem:[%s1 + $0xd18] sm:$0xff]
    %v483 = vld [vmem:[%s1 + $0xd20] sm:$0xff]
    %v484 = vld [vmem:[%s1 + $0xd28] sm:$0xff]
    %v485 = vld [vmem:[%s1 + $0xd30] sm:$0xff]
    %v486 = vld [vmem:[%s1 + $0xd38] sm:$0xff]
    %v487 = vld [vmem:[%s1 + $0xd40] sm:$0xff]
    %v488 = vld [vmem:[%s1 + $0xd48] sm:$0xff]
    %v489 = vld [vmem:[%s1 + $0xd50] sm:$0xff]
    %v490 = vld [vmem:[%s1 + $0xd58] sm:$0xff]
    %v491 = vld [vmem:[%s1 + $0xd60] sm:$0xff]
    %v492 = vld [vmem:[%s1 + $0xd68] sm:$0xff]
    %v493 = vld [vmem:[%s1 + $0xd70] sm:$0xff]
    %v494 = vld [vmem:[%s1 + $0xd78] sm:$0xff]
    %v495 = vld [vmem:[%s1 + $0xd80] sm:$0xff]
    %v496 = vld [vmem:[%s1 + $0xd88] sm:$0xff]
    %v497 = vld [vmem:[%s1 + $0xd90] sm:$0xff]
    %v498 = vld [vmem:[%s1 + $0xd98] sm:$0xff]
    %v499 = vld [vmem:[%s1 + $0xda0] sm:$0xff]
    %v500 = vld [vmem:[%s1 + $0xda8] sm:$0xff]
    %v501 = vld [vmem:[%s1 + $0xdb0] sm:$0xff]
    %v502 = vld [vmem:[%s1 + $0xdb8] sm:$0xff]
    %v503 = vld [vmem:[%s1 + $0xdc0] sm:$0xff]
    %v504 = vld [vmem:[%s1 + $0xdc8] sm:$0xff]
    %v505 = vld [vmem:[%s1 + $0xdd0] sm:$0xff]
    %v506 = vld [vmem:[%s1 + $0xdd8] sm:$0xff]
    %v507 = vld [vmem:[%s1 + $0xde0] sm:$0xff]
    %v508 = vld [vmem:[%s1 + $0xde8] sm:$0xff]
    %v509 = vld [vmem:[%s1 + $0xdf0] sm:$0xff]
    %v510 = vld [vmem:[%s1 + $0xdf8] sm:$0xff]
    %v511 = vld [vmem:[%s1 + $0xe00] sm:$0xff]
    %v512 = vld [vmem:[%s1 + $0xe08] sm:$0xff]
    %v513 = vld [vmem:[%s1 + $0xe10] sm:$0xff]
    %v514 = vld [vmem:[%s1 + $0xe18] sm:$0xff]
    %v515 = vld [vmem:[%s1 + $0xe20] sm:$0xff]
    %v516 = vld [vmem:[%s1 + $0xe28] sm:$0xff]
    %v517 = vld [vmem:[%s1 + $0xe30] sm:$0xff]
    %v518 = vld [vmem:[%s1 + $0xe38] sm:$0xff]
    %v519 = vld [vmem:[%s1 + $0xe40] sm:$0xff]
    %v520 = vld [vmem:[%s1 + $0xe48] sm:$0xff]
    %v521 = vld [vmem:[%s1 + $0xe50] sm:$0xff]
    %v522 = vld [vmem:[%s1 + $0xe58] sm:$0xff]
    %v523 = vld [vmem:[%s1 + $0xe60] sm:$0xff]
    %v524 = vld [vmem:[%s1 + $0xe68] sm:$0xff]
    %v525 = vld [vmem:[%s1 + $0xe70] sm:$0xff]
    %v526 = vld [vmem:[%s1 + $0xe78] sm:$0xff]
    %v527 = vld [vmem:[%s1 + $0xe80] sm:$0xff]
    %v528 = vld [vmem:[%s1 + $0xe88] sm:$0xff]
    %v529 = vld [vmem:[%s1 + $0xe90] sm:$0xff]
    %v530 = vld [vmem:[%s1 + $0xe98] sm:$0xff]
    %v531 = vld [vmem:[%s1 + $0xea0] sm:$0xff]
    %v532 = vld [vmem:[%s1 + $0xea8] sm:$0xff]
    %v533 = vld [vmem:[%s1 + $0xeb0] sm:$0xff]
    %v534 = vld [vmem:[%s1 + $0xeb8] sm:$0xff]
    %v535 = vld [vmem:[%s1 + $0xec0] sm:$0xff]
    %v536 = vld [vmem:[%s1 + $0xec8] sm:$0xff]
    %v537 = vld [vmem:[%s1 + $0xed0] sm:$0xff]
    %v538 = vld [vmem:[%s1 + $0xed8] sm:$0xff]
    %v539 = vld [vmem:[%s1 + $0xee0] sm:$0xff]
    %v540 = vld [vmem:[%s1 + $0xee8] sm:$0xff]
    %v541 = vld [vmem:[%s1 + $0xef0] sm:$0xff]
    %v542 = vld [vmem:[%s1 + $0xef8] sm:$0xff]
    %v543 = vld [vmem:[%s1 + $0xf00] sm:$0xff]
    %v544 = vld [vmem:[%s1 + $0xf08] sm:$0xff]
    %v545 = vld [vmem:[%s1 + $0xf10] sm:$0xff]
    %v546 = vld [vmem:[%s1 + $0xf18] sm:$0xff]
    %v547 = vld [vmem:[%s1 + $0xf20] sm:$0xff]
    %v548 = vld [vmem:[%s1 + $0xf28] sm:$0xff]
    %v549 = vld [vmem:[%s1 + $0xf30] sm:$0xff]
    %v550 = vld [vmem:[%s1 + $0xf38] sm:$0xff]
    %v551 = vld [vmem:[%s1 + $0xf40] sm:$0xff]
    %v552 = vld [vmem:[%s1 + $0xf48] sm:$0xff]
    %v553 = vld [vmem:[%s1 + $0xf50] sm:$0xff]
    %v554 = vld [vmem:[%s1 + $0xf58] sm:$0xff]
    %v555 = vld [vmem:[%s1 + $0xf60] sm:$0xff]
    %v556 = vld [vmem:[%s1 + $0xf68] sm:$0xff]
    %v557 = vld [vmem:[%s1 + $0xf70] sm:$0xff]
    %v558 = vld [vmem:[%s1 + $0xf78] sm:$0xff]
    %v559 = vld [vmem:[%s1 + $0xf80] sm:$0xff]
    %v560 = vld [vmem:[%s1 + $0xf88] sm:$0xff]
    %v561 = vld [vmem:[%s1 + $0xf90] sm:$0xff]
    %v562 = vld [vmem:[%s1 + $0xf98] sm:$0xff]
    %v563 = vld [vmem:[%s1 + $0xfa0] sm:$0xff]
    %v564 = vld [vmem:[%s1 + $0xfa8] sm:$0xff]
    %v565 = vld [vmem:[%s1 + $0xfb0] sm:$0xff]
    %v566 = vld [vmem:[%s1 + $0xfb8] sm:$0xff]
    %v567 = vld [vmem:[%s1 + $0xfc0] sm:$0xff]
    %v568 = vld [vmem:[%s1 + $0xfc8] sm:$0xff]
    %v569 = vld [vmem:[%s1 + $0xfd0] sm:$0xff]
    %v570 = vld [vmem:[%s1 + $0xfd8] sm:$0xff]
    %v571 = vld [vmem:[%s1 + $0xfe0] sm:$0xff]
    %v572 = vld [vmem:[%s1 + $0xfe8] sm:$0xff]
    %v573 = vld [vmem:[%s1 + $0xff0] sm:$0xff]
    %v574 = vld [vmem:[%s1 + $0xff8] sm:$0xff]
    %v575 = vld [vmem:[%s1 + $0x1000] sm:$0xff]
    %v576 = vld [vmem:[%s1 + $0x1008] sm:$0xff]
    %v577 = vld [vmem:[%s1 + $0x1010] sm:$0xff]
    %v578 = vld [vmem:[%s1 + $0x1018] sm:$0xff]
    %v579 = vld [vmem:[%s1 + $0x1020] sm:$0xff]
    %v580 = vld [vmem:[%s1 + $0x1028] sm:$0xff]
    %v581 = vld [vmem:[%s1 + $0x1030] sm:$0xff]
    %v582 = vld [vmem:[%s1 + $0x1038] sm:$0xff]
    %v583 = vld [vmem:[%s1 + $0x1040] sm:$0xff]
    %v584 = vld [vmem:[%s1 + $0x1048] sm:$0xff]
    %v585 = vld [vmem:[%s1 + $0x1050] sm:$0xff]
    %v586 = vld [vmem:[%s1 + $0x1058] sm:$0xff]
    %v587 = vld [vmem:[%s1 + $0x1060] sm:$0xff]
    %v588 = vld [vmem:[%s1 + $0x1068] sm:$0xff]
    %v589 = vld [vmem:[%s1 + $0x1070] sm:$0xff]
    %v590 = vld [vmem:[%s1 + $0x1078] sm:$0xff]
    %v591 = vld [vmem:[%s1 + $0x1080] sm:$0xff]
    %v592 = vld [vmem:[%s1 + $0x1088] sm:$0xff]
    %v593 = vld [vmem:[%s1 + $0x1090] sm:$0xff]
    %v594 = vld [vmem:[%s1 + $0x1098] sm:$0xff]
    %v595 = vld [vmem:[%s1 + $0x10a0] sm:$0xff]
    %v596 = vld [vmem:[%s1 + $0x10a8] sm:$0xff]
    %v597 = vld [vmem:[%s1 + $0x10b0] sm:$0xff]
    %v598 = vld [vmem:[%s1 + $0x10b8] sm:$0xff]
    %v599 = vld [vmem:[%s1 + $0x10c0] sm:$0xff]
    %v600 = vld [vmem:[%s1 + $0x10c8] sm:$0xff]
    %v601 = vld [vmem:[%s1 + $0x10d0] sm:$0xff]
    %v602 = vld [vmem:[%s1 + $0x10d8] sm:$0xff]
    %v603 = vld [vmem:[%s1 + $0x10e0] sm:$0xff]
    %v604 = vld [vmem:[%s1 + $0x10e8] sm:$0xff]
    %v605 = vld [vmem:[%s1 + $0x10f0] sm:$0xff]
    %v606 = vld [vmem:[%s1 + $0x10f8] sm:$0xff]
    %v607 = vld [vmem:[%s1 + $0x1100] sm:$0xff]
    %v608 = vld [vmem:[%s1 + $0x1108] sm:$0xff]
    %v609 = vld [vmem:[%s1 + $0x1110] sm:$0xff]
    %v610 = vld [vmem:[%s1 + $0x1118] sm:$0xff]
    %v611 = vld [vmem:[%s1 + $0x1120] sm:$0xff]
    %v612 = vld [vmem:[%s1 + $0x1128] sm:$0xff]
    %v613 = vld [vmem:[%s1 + $0x1130] sm:$0xff]
    %v614 = vld [vmem:[%s1 + $0x1138] sm:$0xff]
    %v615 = vld [vmem:[%s1 + $0x1140] sm:$0xff]
    %v616 = vld [vmem:[%s1 + $0x1148] sm:$0xff]
    %v617 = vld [vmem:[%s1 + $0x1150] sm:$0xff]
    %v618 = vld [vmem:[%s1 + $0x1158] sm:$0xff]
    %v619 = vld [vmem:[%s1 + $0x1160] sm:$0xff]
    %v620 = vld [vmem:[%s1 + $0x1168] sm:$0xff]
    %v621 = vld [vmem:[%s1 + $0x1170] sm:$0xff]
    %v622 = vld [vmem:[%s1 + $0x1178] sm:$0xff]
    %v623 = vld [vmem:[%s1 + $0x1180] sm:$0xff]
    %v624 = vld [vmem:[%s1 + $0x1188] sm:$0xff]
    %v625 = vld [vmem:[%s1 + $0x1190] sm:$0xff]
    %v626 = vld [vmem:[%s1 + $0x1198] sm:$0xff]
    %v627 = vld [vmem:[%s1 + $0x11a0] sm:$0xff]
    %v628 = vld [vmem:[%s1 + $0x11a8] sm:$0xff]
    %v629 = vld [vmem:[%s1 + $0x11b0] sm:$0xff]
    %v630 = vld [vmem:[%s1 + $0x11b8] sm:$0xff]
    %v631 = vld [vmem:[%s1 + $0x11c0] sm:$0xff]
    %v632 = vld [vmem:[%s1 + $0x11c8] sm:$0xff]
    %v633 = vld [vmem:[%s1 + $0x11d0] sm:$0xff]
    %v634 = vld [vmem:[%s1 + $0x11d8] sm:$0xff]
    %v635 = vld [vmem:[%s1 + $0x11e0] sm:$0xff]
    %v636 = vld [vmem:[%s1 + $0x11e8] sm:$0xff]
    %v637 = vld [vmem:[%s1 + $0x11f0] sm:$0xff]
    %v638 = vld [vmem:[%s1 + $0x11f8] sm:$0xff]
    %v639 = vld [vmem:[%s1 + $0x1200] sm:$0xff]
    %v640 = vld [vmem:[%s1 + $0x1208] sm:$0xff]
    %v641 = vld [vmem:[%s1 + $0x1210] sm:$0xff]
    %v642 = vld [vmem:[%s1 + $0x1218] sm:$0xff]
    %v643 = vld [vmem:[%s1 + $0x1220] sm:$0xff]
    %v644 = vld [vmem:[%s1 + $0x1228] sm:$0xff]
    %v645 = vld [vmem:[%s1 + $0x1230] sm:$0xff]
    %v646 = vld [vmem:[%s1 + $0x1238] sm:$0xff]
    %v647 = vld [vmem:[%s1 + $0x1240] sm:$0xff]
    %v648 = vld [vmem:[%s1 + $0x1248] sm:$0xff]
    %v649 = vld [vmem:[%s1 + $0x1250] sm:$0xff]
    %v650 = vld [vmem:[%s1 + $0x1258] sm:$0xff]
    %v651 = vld [vmem:[%s1 + $0x1260] sm:$0xff]
    %v652 = vld [vmem:[%s1 + $0x1268] sm:$0xff]
    %v653 = vld [vmem:[%s1 + $0x1270] sm:$0xff]
    %v654 = vld [vmem:[%s1 + $0x1278] sm:$0xff]
    %v655 = vld [vmem:[%s1 + $0x1280] sm:$0xff]
    %v656 = vld [vmem:[%s1 + $0x1288] sm:$0xff]
    %v657 = vld [vmem:[%s1 + $0x1290] sm:$0xff]
    %v658 = vld [vmem:[%s1 + $0x1298] sm:$0xff]
    %v659 = vld [vmem:[%s1 + $0x12a0] sm:$0xff]
    %v660 = vld [vmem:[%s1 + $0x12a8] sm:$0xff]
    %v661 = vld [vmem:[%s1 + $0x12b0] sm:$0xff]
    %v662 = vld [vmem:[%s1 + $0x12b8] sm:$0xff]
    %v663 = vld [vmem:[%s1 + $0x12c0] sm:$0xff]
    %v664 = vld [vmem:[%s1 + $0x12c8] sm:$0xff]
    %v665 = vld [vmem:[%s1 + $0x12d0] sm:$0xff]
    %v666 = vld [vmem:[%s1 + $0x12d8] sm:$0xff]
    %v667 = vld [vmem:[%s1 + $0x12e0] sm:$0xff]
    %v668 = vld [vmem:[%s1 + $0x12e8] sm:$0xff]
    %v669 = vld [vmem:[%s1 + $0x12f0] sm:$0xff]
    %v670 = vld [vmem:[%s1 + $0x12f8] sm:$0xff]
    %v671 = vld [vmem:[%s1 + $0x1300] sm:$0xff]
    %v672 = vld [vmem:[%s1 + $0x1308] sm:$0xff]
    %v673 = vld [vmem:[%s1 + $0x1310] sm:$0xff]
    %v674 = vld [vmem:[%s1 + $0x1318] sm:$0xff]
    %v675 = vld [vmem:[%s1 + $0x1320] sm:$0xff]
    %v676 = vld [vmem:[%s1 + $0x1328] sm:$0xff]
    %v677 = vld [vmem:[%s1 + $0x1330] sm:$0xff]
    %v678 = vld [vmem:[%s1 + $0x1338] sm:$0xff]
    %v679 = vld [vmem:[%s1 + $0x1340] sm:$0xff]
    %v680 = vld [vmem:[%s1 + $0x1348] sm:$0xff]
    %v681 = vld [vmem:[%s1 + $0x1350] sm:$0xff]
    %v682 = vld [vmem:[%s1 + $0x1358] sm:$0xff]
    %v683 = vld [vmem:[%s1 + $0x1360] sm:$0xff]
    %v684 = vld [vmem:[%s1 + $0x1368] sm:$0xff]
    %v685 = vld [vmem:[%s1 + $0x1370] sm:$0xff]
    %v686 = vld [vmem:[%s1 + $0x1378] sm:$0xff]
    %v687 = vld [vmem:[%s1 + $0x1380] sm:$0xff]
    %v688 = vld [vmem:[%s1 + $0x1388] sm:$0xff]
    %v689 = vld [vmem:[%s1 + $0x1390] sm:$0xff]
    %v690 = vld [vmem:[%s1 + $0x1398] sm:$0xff]
    %v691 = vld [vmem:[%s1 + $0x13a0] sm:$0xff]
    %v692 = vld [vmem:[%s1 + $0x13a8] sm:$0xff]
    %v693 = vld [vmem:[%s1 + $0x13b0] sm:$0xff]
    %v694 = vld [vmem:[%s1 + $0x13b8] sm:$0xff]
    %v695 = vld [vmem:[%s1 + $0x13c0] sm:$0xff]
    %v696 = vld [vmem:[%s1 + $0x13c8] sm:$0xff]
    %v697 = vld [vmem:[%s1 + $0x13d0] sm:$0xff]
    %v698 = vld [vmem:[%s1 + $0x13d8] sm:$0xff]
    %v699 = vld [vmem:[%s1 + $0x13e0] sm:$0xff]
    %v700 = vld [vmem:[%s1 + $0x13e8] sm:$0xff]
    %v701 = vld [vmem:[%s1 + $0x13f0] sm:$0xff]
    %v702 = vld [vmem:[%s1 + $0x13f8] sm:$0xff]
    %v703 = vld [vmem:[%s1 + $0x1400] sm:$0xff]
    %v704 = vld [vmem:[%s1 + $0x1408] sm:$0xff]
    %v705 = vld [vmem:[%s1 + $0x1410] sm:$0xff]
    %v706 = vld [vmem:[%s1 + $0x1418] sm:$0xff]
    %v707 = vld [vmem:[%s1 + $0x1420] sm:$0xff]
    %v708 = vld [vmem:[%s1 + $0x1428] sm:$0xff]
    %v709 = vld [vmem:[%s1 + $0x1430] sm:$0xff]
    %v710 = vld [vmem:[%s1 + $0x1438] sm:$0xff]
    %v711 = vld [vmem:[%s1 + $0x1440] sm:$0xff]
    %v712 = vld [vmem:[%s1 + $0x1448] sm:$0xff]
    %v713 = vld [vmem:[%s1 + $0x1450] sm:$0xff]
    %v714 = vld [vmem:[%s1 + $0x1458] sm:$0xff]
    %v715 = vld [vmem:[%s1 + $0x1460] sm:$0xff]
    %v716 = vld [vmem:[%s1 + $0x1468] sm:$0xff]
    %v717 = vld [vmem:[%s1 + $0x1470] sm:$0xff]
    %v718 = vld [vmem:[%s1 + $0x1478] sm:$0xff]
    %v719 = vld [vmem:[%s1 + $0x1480] sm:$0xff]
    %v720 = vld [vmem:[%s1 + $0x1488] sm:$0xff]
    %v721 = vld [vmem:[%s1 + $0x1490] sm:$0xff]
    %v722 = vld [vmem:[%s1 + $0x1498] sm:$0xff]
    %v723 = vld [vmem:[%s1 + $0x14a0] sm:$0xff]
    %v724 = vld [vmem:[%s1 + $0x14a8] sm:$0xff]
    %v725 = vld [vmem:[%s1 + $0x14b0] sm:$0xff]
    %v726 = vld [vmem:[%s1 + $0x14b8] sm:$0xff]
    %v727 = vld [vmem:[%s1 + $0x14c0] sm:$0xff]
    %v728 = vld [vmem:[%s1 + $0x14c8] sm:$0xff]
    %v729 = vld [vmem:[%s1 + $0x14d0] sm:$0xff]
    %v730 = vld [vmem:[%s1 + $0x14d8] sm:$0xff]
    %v731 = vld [vmem:[%s1 + $0x14e0] sm:$0xff]
    %v732 = vld [vmem:[%s1 + $0x14e8] sm:$0xff]
    %v733 = vld [vmem:[%s1 + $0x14f0] sm:$0xff]
    %v734 = vld [vmem:[%s1 + $0x14f8] sm:$0xff]
    %v735 = vld [vmem:[%s1 + $0x1500] sm:$0xff]
    %v736 = vld [vmem:[%s1 + $0x1508] sm:$0xff]
    %v737 = vld [vmem:[%s1 + $0x1510] sm:$0xff]
    %v738 = vld [vmem:[%s1 + $0x1518] sm:$0xff]
    %v739 = vld [vmem:[%s1 + $0x1520] sm:$0xff]
    %v740 = vld [vmem:[%s1 + $0x1528] sm:$0xff]
    %v741 = vld [vmem:[%s1 + $0x1530] sm:$0xff]
    %v742 = vld [vmem:[%s1 + $0x1538] sm:$0xff]
    %v743 = vld [vmem:[%s1 + $0x1540] sm:$0xff]
    %v744 = vld [vmem:[%s1 + $0x1548] sm:$0xff]
    %v745 = vld [vmem:[%s1 + $0x1550] sm:$0xff]
    %v746 = vld [vmem:[%s1 + $0x1558] sm:$0xff]
    %v747 = vld [vmem:[%s1 + $0x1560] sm:$0xff]
    %v748 = vld [vmem:[%s1 + $0x1568] sm:$0xff]
    %v749 = vld [vmem:[%s1 + $0x1570] sm:$0xff]
    %v750 = vld [vmem:[%s1 + $0x1578] sm:$0xff]
    %v751 = vld [vmem:[%s1 + $0x1580] sm:$0xff]
    %v752 = vld [vmem:[%s1 + $0x1588] sm:$0xff]
    %v753 = vld [vmem:[%s1 + $0x1590] sm:$0xff]
    %v754 = vld [vmem:[%s1 + $0x1598] sm:$0xff]
    %v755 = vld [vmem:[%s1 + $0x15a0] sm:$0xff]
    %v756 = vld [vmem:[%s1 + $0x15a8] sm:$0xff]
    %v757 = vld [vmem:[%s1 + $0x15b0] sm:$0xff]
    %v758 = vld [vmem:[%s1 + $0x15b8] sm:$0xff]
    %v759 = vld [vmem:[%s1 + $0x15c0] sm:$0xff]
    %v760 = vld [vmem:[%s1 + $0x15c8] sm:$0xff]
    %v761 = vld [vmem:[%s1 + $0x15d0] sm:$0xff]
    %v762 = vld [vmem:[%s1 + $0x15d8] sm:$0xff]
    %v763 = vld [vmem:[%s1 + $0x15e0] sm:$0xff]
    %v764 = vld [vmem:[%s1 + $0x15e8] sm:$0xff]
    %v765 = vld [vmem:[%s1 + $0x15f0] sm:$0xff]
    %v766 = vld [vmem:[%s1 + $0x15f8] sm:$0xff]
    %v767 = vld [vmem:[%s1 + $0x1600] sm:$0xff]
    %v768 = vld [vmem:[%s1 + $0x1608] sm:$0xff]
    %v769 = vld [vmem:[%s1 + $0x1610] sm:$0xff]
    %v770 = vld [vmem:[%s1 + $0x1618] sm:$0xff]
    %v771 = vld [vmem:[%s1 + $0x1620] sm:$0xff]
    %v772 = vld [vmem:[%s1 + $0x1628] sm:$0xff]
    %v773 = vld [vmem:[%s1 + $0x1630] sm:$0xff]
    %v774 = vld [vmem:[%s1 + $0x1638] sm:$0xff]
    %v775 = vld [vmem:[%s1 + $0x1640] sm:$0xff]
    %v776 = vld [vmem:[%s1 + $0x1648] sm:$0xff]
    %v777 = vld [vmem:[%s1 + $0x1650] sm:$0xff]
    %v778 = vld [vmem:[%s1 + $0x1658] sm:$0xff]
    %v779 = vld [vmem:[%s1 + $0x1660] sm:$0xff]
    %v780 = vld [vmem:[%s1 + $0x1668] sm:$0xff]
    %v781 = vld [vmem:[%s1 + $0x1670] sm:$0xff]
    %v782 = vld [vmem:[%s1 + $0x1678] sm:$0xff]
    %v783 = vld [vmem:[%s1 + $0x1680] sm:$0xff]
    %v784 = vld [vmem:[%s1 + $0x1688] sm:$0xff]
    %v785 = vld [vmem:[%s1 + $0x1690] sm:$0xff]
    %v786 = vld [vmem:[%s1 + $0x1698] sm:$0xff]
    %v787 = vld [vmem:[%s1 + $0x16a0] sm:$0xff]
    %v788 = vld [vmem:[%s1 + $0x16a8] sm:$0xff]
    %v789 = vld [vmem:[%s1 + $0x16b0] sm:$0xff]
    %v790 = vld [vmem:[%s1 + $0x16b8] sm:$0xff]
    %v791 = vld [vmem:[%s1 + $0x16c0] sm:$0xff]
    %v792 = vld [vmem:[%s1 + $0x16c8] sm:$0xff]
    %v793 = vld [vmem:[%s1 + $0x16d0] sm:$0xff]
    %v794 = vld [vmem:[%s1 + $0x16d8] sm:$0xff]
    %v795 = vld [vmem:[%s1 + $0x16e0] sm:$0xff]
    %v796 = vld [vmem:[%s1 + $0x16e8] sm:$0xff]
    %v797 = vld [vmem:[%s1 + $0x16f0] sm:$0xff]
    %v798 = vld [vmem:[%s1 + $0x16f8] sm:$0xff]
    %v799 = vld [vmem:[%s1 + $0x1700] sm:$0xff]
    %v800 = vld [vmem:[%s1 + $0x1708] sm:$0xff]
    %v801 = vld [vmem:[%s1 + $0x1710] sm:$0xff]
    %v802 = vld [vmem:[%s1 + $0x1718] sm:$0xff]
    %v803 = vld [vmem:[%s1 + $0x1720] sm:$0xff]
    %v804 = vld [vmem:[%s1 + $0x1728] sm:$0xff]
    %v805 = vld [vmem:[%s1 + $0x1730] sm:$0xff]
    %v806 = vld [vmem:[%s1 + $0x1738] sm:$0xff]
    %v807 = vld [vmem:[%s1 + $0x1740] sm:$0xff]
    %v808 = vld [vmem:[%s1 + $0x1748] sm:$0xff]
    %v809 = vld [vmem:[%s1 + $0x1750] sm:$0xff]
    %v810 = vld [vmem:[%s1 + $0x1758] sm:$0xff]
    %v811 = vld [vmem:[%s1 + $0x1760] sm:$0xff]
    %v812 = vld [vmem:[%s1 + $0x1768] sm:$0xff]
    %v813 = vld [vmem:[%s1 + $0x1770] sm:$0xff]
    %v814 = vld [vmem:[%s1 + $0x1778] sm:$0xff]
    %v815 = vld [vmem:[%s1 + $0x1780] sm:$0xff]
    %v816 = vld [vmem:[%s1 + $0x1788] sm:$0xff]
    %v817 = vld [vmem:[%s1 + $0x1790] sm:$0xff]
    %v818 = vld [vmem:[%s1 + $0x1798] sm:$0xff]
    %v819 = vld [vmem:[%s1 + $0x17a0] sm:$0xff]
    %v820 = vld [vmem:[%s1 + $0x17a8] sm:$0xff]
    %v821 = vld [vmem:[%s1 + $0x17b0] sm:$0xff]
    %v822 = vld [vmem:[%s1 + $0x17b8] sm:$0xff]
    %v823 = vld [vmem:[%s1 + $0x17c0] sm:$0xff]
    %v824 = vld [vmem:[%s1 + $0x17c8] sm:$0xff]
    %v825 = vld [vmem:[%s1 + $0x17d0] sm:$0xff]
    %v826 = vld [vmem:[%s1 + $0x17d8] sm:$0xff]
    %v827 = vld [vmem:[%s1 + $0x17e0] sm:$0xff]
    %v828 = vld [vmem:[%s1 + $0x17e8] sm:$0xff]
    %v829 = vld [vmem:[%s1 + $0x17f0] sm:$0xff]
    %v830 = vld [vmem:[%s1 + $0x17f8] sm:$0xff]
    %v831 = vld [vmem:[%s1 + $0x1800] sm:$0xff]
    %v832 = vld [vmem:[%s1 + $0x1808] sm:$0xff]
    %v833 = vld [vmem:[%s1 + $0x1810] sm:$0xff]
    %v834 = vld [vmem:[%s1 + $0x1818] sm:$0xff]
    %v835 = vld [vmem:[%s1 + $0x1820] sm:$0xff]
    %v836 = vld [vmem:[%s1 + $0x1828] sm:$0xff]
    %v837 = vld [vmem:[%s1 + $0x1830] sm:$0xff]
    %v838 = vld [vmem:[%s1 + $0x1838] sm:$0xff]
    %v839 = vld [vmem:[%s1 + $0x1840] sm:$0xff]
    %v840 = vld [vmem:[%s1 + $0x1848] sm:$0xff]
    %v841 = vld [vmem:[%s1 + $0x1850] sm:$0xff]
    %v842 = vld [vmem:[%s1 + $0x1858] sm:$0xff]
    %v843 = vld [vmem:[%s1 + $0x1860] sm:$0xff]
    %v844 = vld [vmem:[%s1 + $0x1868] sm:$0xff]
    %v845 = vld [vmem:[%s1 + $0x1870] sm:$0xff]
    %v846 = vld [vmem:[%s1 + $0x1878] sm:$0xff]
    %v847 = vld [vmem:[%s1 + $0x1880] sm:$0xff]
    %v848 = vld [vmem:[%s1 + $0x1888] sm:$0xff]
    %v849 = vld [vmem:[%s1 + $0x1890] sm:$0xff]
    %v850 = vld [vmem:[%s1 + $0x1898] sm:$0xff]
    %v851 = vld [vmem:[%s1 + $0x18a0] sm:$0xff]
    %v852 = vld [vmem:[%s1 + $0x18a8] sm:$0xff]
    %v853 = vld [vmem:[%s1 + $0x18b0] sm:$0xff]
    %v854 = vld [vmem:[%s1 + $0x18b8] sm:$0xff]
    %v855 = vld [vmem:[%s1 + $0x18c0] sm:$0xff]
    %v856 = vld [vmem:[%s1 + $0x18c8] sm:$0xff]
    %v857 = vld [vmem:[%s1 + $0x18d0] sm:$0xff]
    %v858 = vld [vmem:[%s1 + $0x18d8] sm:$0xff]
    %v859 = vld [vmem:[%s1 + $0x18e0] sm:$0xff]
    %v860 = vld [vmem:[%s1 + $0x18e8] sm:$0xff]
    %v861 = vld [vmem:[%s1 + $0x18f0] sm:$0xff]
    %v862 = vld [vmem:[%s1 + $0x18f8] sm:$0xff]
    %v863 = vld [vmem:[%s1 + $0x1900] sm:$0xff]
    %v864 = vld [vmem:[%s1 + $0x1908] sm:$0xff]
    %v865 = vld [vmem:[%s1 + $0x1910] sm:$0xff]
    %v866 = vld [vmem:[%s1 + $0x1918] sm:$0xff]
    %v867 = vld [vmem:[%s1 + $0x1920] sm:$0xff]
    %v868 = vld [vmem:[%s1 + $0x1928] sm:$0xff]
    %v869 = vld [vmem:[%s1 + $0x1930] sm:$0xff]
    %v870 = vld [vmem:[%s1 + $0x1938] sm:$0xff]
    %v871 = vld [vmem:[%s1 + $0x1940] sm:$0xff]
    %v872 = vld [vmem:[%s1 + $0x1948] sm:$0xff]
    %v873 = vld [vmem:[%s1 + $0x1950] sm:$0xff]
    %v874 = vld [vmem:[%s1 + $0x1958] sm:$0xff]
    %v875 = vld [vmem:[%s1 + $0x1960] sm:$0xff]
    %v876 = vld [vmem:[%s1 + $0x1968] sm:$0xff]
    %v877 = vld [vmem:[%s1 + $0x1970] sm:$0xff]
    %v878 = vld [vmem:[%s1 + $0x1978] sm:$0xff]
    %v879 = vld [vmem:[%s1 + $0x1980] sm:$0xff]
    %v880 = vld [vmem:[%s1 + $0x1988] sm:$0xff]
    %v881 = vld [vmem:[%s1 + $0x1990] sm:$0xff]
    %v882 = vld [vmem:[%s1 + $0x1998] sm:$0xff]
    %v883 = vld [vmem:[%s1 + $0x19a0] sm:$0xff]
    %v884 = vld [vmem:[%s1 + $0x19a8] sm:$0xff]
    %v885 = vld [vmem:[%s1 + $0x19b0] sm:$0xff]
    %v886 = vld [vmem:[%s1 + $0x19b8] sm:$0xff]
    %v887 = vld [vmem:[%s1 + $0x19c0] sm:$0xff]
    %v888 = vld [vmem:[%s1 + $0x19c8] sm:$0xff]
    %v889 = vld [vmem:[%s1 + $0x19d0] sm:$0xff]
    %v890 = vld [vmem:[%s1 + $0x19d8] sm:$0xff]
    %v891 = vld [vmem:[%s1 + $0x19e0] sm:$0xff]
    %v892 = vld [vmem:[%s1 + $0x19e8] sm:$0xff]
    %v893 = vld [vmem:[%s1 + $0x19f0] sm:$0xff]
    %v894 = vld [vmem:[%s1 + $0x19f8] sm:$0xff]
    %v895 = vld [vmem:[%s1 + $0x1a00] sm:$0xff]
    %v896 = vld [vmem:[%s1 + $0x1a08] sm:$0xff]
    %v897 = vld [vmem:[%s1 + $0x1a10] sm:$0xff]
    %v898 = vld [vmem:[%s1 + $0x1a18] sm:$0xff]
    %v899 = vld [vmem:[%s1 + $0x1a20] sm:$0xff]
    %v900 = vld [vmem:[%s1 + $0x1a28] sm:$0xff]
    %v901 = vld [vmem:[%s1 + $0x1a30] sm:$0xff]
    %v902 = vld [vmem:[%s1 + $0x1a38] sm:$0xff]
    %v903 = vld [vmem:[%s1 + $0x1a40] sm:$0xff]
    %v904 = vld [vmem:[%s1 + $0x1a48] sm:$0xff]
    %v905 = vld [vmem:[%s1 + $0x1a50] sm:$0xff]
    %v906 = vld [vmem:[%s1 + $0x1a58] sm:$0xff]
    %v907 = vld [vmem:[%s1 + $0x1a60] sm:$0xff]
    %v908 = vld [vmem:[%s1 + $0x1a68] sm:$0xff]
    %v909 = vld [vmem:[%s1 + $0x1a70] sm:$0xff]
    %v910 = vld [vmem:[%s1 + $0x1a78] sm:$0xff]
    %v911 = vld [vmem:[%s1 + $0x1a80] sm:$0xff]
    %v912 = vld [vmem:[%s1 + $0x1a88] sm:$0xff]
    %v913 = vld [vmem:[%s1 + $0x1a90] sm:$0xff]
    %v914 = vld [vmem:[%s1 + $0x1a98] sm:$0xff]
    %v915 = vld [vmem:[%s1 + $0x1aa0] sm:$0xff]
    %v916 = vld [vmem:[%s1 + $0x1aa8] sm:$0xff]
    %v917 = vld [vmem:[%s1 + $0x1ab0] sm:$0xff]
    %v918 = vld [vmem:[%s1 + $0x1ab8] sm:$0xff]
    %v919 = vld [vmem:[%s1 + $0x1ac0] sm:$0xff]
    %v920 = vld [vmem:[%s1 + $0x1ac8] sm:$0xff]
    %v921 = vld [vmem:[%s1 + $0x1ad0] sm:$0xff]
    %v922 = vld [vmem:[%s1 + $0x1ad8] sm:$0xff]
    %v923 = vld [vmem:[%s1 + $0x1ae0] sm:$0xff]
    %v924 = vld [vmem:[%s1 + $0x1ae8] sm:$0xff]
    %v925 = vld [vmem:[%s1 + $0x1af0] sm:$0xff]
    %v926 = vld [vmem:[%s1 + $0x1af8] sm:$0xff]
    %v927 = vld [vmem:[%s1 + $0x1b00] sm:$0xff]
    %v928 = vld [vmem:[%s1 + $0x1b08] sm:$0xff]
    %v929 = vld [vmem:[%s1 + $0x1b10] sm:$0xff]
    %v930 = vld [vmem:[%s1 + $0x1b18] sm:$0xff]
    %v931 = vld [vmem:[%s1 + $0x1b20] sm:$0xff]
    %v932 = vld [vmem:[%s1 + $0x1b28] sm:$0xff]
    %v933 = vld [vmem:[%s1 + $0x1b30] sm:$0xff]
    %v934 = vld [vmem:[%s1 + $0x1b38] sm:$0xff]
    %v935 = vld [vmem:[%s1 + $0x1b40] sm:$0xff]
    %v936 = vld [vmem:[%s1 + $0x1b48] sm:$0xff]
    %v937 = vld [vmem:[%s1 + $0x1b50] sm:$0xff]
    %v938 = vld [vmem:[%s1 + $0x1b58] sm:$0xff]
    %v939 = vld [vmem:[%s1 + $0x1b60] sm:$0xff]
    %v940 = vld [vmem:[%s1 + $0x1b68] sm:$0xff]
    %v941 = vld [vmem:[%s1 + $0x1b70] sm:$0xff]
    %v942 = vld [vmem:[%s1 + $0x1b78] sm:$0xff]
    %v943 = vld [vmem:[%s1 + $0x1b80] sm:$0xff]
    %v944 = vld [vmem:[%s1 + $0x1b88] sm:$0xff]
    %v945 = vld [vmem:[%s1 + $0x1b90] sm:$0xff]
    %v946 = vld [vmem:[%s1 + $0x1b98] sm:$0xff]
    %v947 = vld [vmem:[%s1 + $0x1ba0] sm:$0xff]
    %v948 = vld [vmem:[%s1 + $0x1ba8] sm:$0xff]
    %v949 = vld [vmem:[%s1 + $0x1bb0] sm:$0xff]
    %v950 = vld [vmem:[%s1 + $0x1bb8] sm:$0xff]
    %v951 = vld [vmem:[%s1 + $0x1bc0] sm:$0xff]
    %v952 = vld [vmem:[%s1 + $0x1bc8] sm:$0xff]
    %v953 = vld [vmem:[%s1 + $0x1bd0] sm:$0xff]
    %v954 = vld [vmem:[%s1 + $0x1bd8] sm:$0xff]
    %v955 = vld [vmem:[%s1 + $0x1be0] sm:$0xff]
    %v956 = vld [vmem:[%s1 + $0x1be8] sm:$0xff]
    %v957 = vld [vmem:[%s1 + $0x1bf0] sm:$0xff]
    %v958 = vld [vmem:[%s1 + $0x1bf8] sm:$0xff]
    %v959 = vld [vmem:[%s1 + $0x1c00] sm:$0xff]
    %v960 = vld [vmem:[%s1 + $0x1c08] sm:$0xff]
    %v961 = vld [vmem:[%s1 + $0x1c10] sm:$0xff]
    %v962 = vld [vmem:[%s1 + $0x1c18] sm:$0xff]
    %v963 = vld [vmem:[%s1 + $0x1c20] sm:$0xff]
    %v964 = vld [vmem:[%s1 + $0x1c28] sm:$0xff]
    %v965 = vld [vmem:[%s1 + $0x1c30] sm:$0xff]
    %v966 = vld [vmem:[%s1 + $0x1c38] sm:$0xff]
    %v967 = vld [vmem:[%s1 + $0x1c40] sm:$0xff]
    %v968 = vld [vmem:[%s1 + $0x1c48] sm:$0xff]
    %v969 = vld [vmem:[%s1 + $0x1c50] sm:$0xff]
    %v970 = vld [vmem:[%s1 + $0x1c58] sm:$0xff]
    %v971 = vld [vmem:[%s1 + $0x1c60] sm:$0xff]
    %v972 = vld [vmem:[%s1 + $0x1c68] sm:$0xff]
    %v973 = vld [vmem:[%s1 + $0x1c70] sm:$0xff]
    %v974 = vld [vmem:[%s1 + $0x1c78] sm:$0xff]
    %v975 = vld [vmem:[%s1 + $0x1c80] sm:$0xff]
    %v976 = vld [vmem:[%s1 + $0x1c88] sm:$0xff]
    %v977 = vld [vmem:[%s1 + $0x1c90] sm:$0xff]
    %v978 = vld [vmem:[%s1 + $0x1c98] sm:$0xff]
    %v979 = vld [vmem:[%s1 + $0x1ca0] sm:$0xff]
    %v980 = vld [vmem:[%s1 + $0x1ca8] sm:$0xff]
    %v981 = vld [vmem:[%s1 + $0x1cb0] sm:$0xff]
    %v982 = vld [vmem:[%s1 + $0x1cb8] sm:$0xff]
    %v983 = vld [vmem:[%s1 + $0x1cc0] sm:$0xff]
    %v984 = vld [vmem:[%s1 + $0x1cc8] sm:$0xff]
    %v985 = vld [vmem:[%s1 + $0x1cd0] sm:$0xff]
    %v986 = vld [vmem:[%s1 + $0x1cd8] sm:$0xff]
    %v987 = vld [vmem:[%s1 + $0x1ce0] sm:$0xff]
    %v988 = vld [vmem:[%s1 + $0x1ce8] sm:$0xff]
    %v989 = vld [vmem:[%s1 + $0x1cf0] sm:$0xff]
    %v990 = vld [vmem:[%s1 + $0x1cf8] sm:$0xff]
    %v991 = vld [vmem:[%s1 + $0x1d00] sm:$0xff]
    %v992 = vld [vmem:[%s1 + $0x1d08] sm:$0xff]
    %v993 = vld [vmem:[%s1 + $0x1d10] sm:$0xff]
    %v994 = vld [vmem:[%s1 + $0x1d18] sm:$0xff]
    %v995 = vld [vmem:[%s1 + $0x1d20] sm:$0xff]
    %v996 = vld [vmem:[%s1 + $0x1d28] sm:$0xff]
    %v997 = vld [vmem:[%s1 + $0x1d30] sm:$0xff]
    %v998 = vld [vmem:[%s1 + $0x1d38] sm:$0xff]
    %v999 = vld [vmem:[%s1 + $0x1d40] sm:$0xff]
    %v1000 = vld [vmem:[%s1 + $0x1d48] sm:$0xff]
    %v1001 = vld [vmem:[%s1 + $0x1d50] sm:$0xff]
    %v1002 = vld [vmem:[%s1 + $0x1d58] sm:$0xff]
    %v1003 = vld [vmem:[%s1 + $0x1d60] sm:$0xff]
    %v1004 = vld [vmem:[%s1 + $0x1d68] sm:$0xff]
    %v1005 = vld [vmem:[%s1 + $0x1d70] sm:$0xff]
    %v1006 = vld [vmem:[%s1 + $0x1d78] sm:$0xff]
    %v1007 = vld [vmem:[%s1 + $0x1d80] sm:$0xff]
    %v1008 = vld [vmem:[%s1 + $0x1d88] sm:$0xff]
    %v1009 = vld [vmem:[%s1 + $0x1d90] sm:$0xff]
    %v1010 = vld [vmem:[%s1 + $0x1d98] sm:$0xff]
    %v1011 = vld [vmem:[%s1 + $0x1da0] sm:$0xff]
    %v1012 = vld [vmem:[%s1 + $0x1da8] sm:$0xff]
    %v1013 = vld [vmem:[%s1 + $0x1db0] sm:$0xff]
    %v1014 = vld [vmem:[%s1 + $0x1db8] sm:$0xff]
    %v1015 = vld [vmem:[%s1 + $0x1dc0] sm:$0xff]
    %v1016 = vld [vmem:[%s1 + $0x1dc8] sm:$0xff]
    %v1017 = vld [vmem:[%s1 + $0x1dd0] sm:$0xff]
    %v1018 = vld [vmem:[%s1 + $0x1dd8] sm:$0xff]
    %v1019 = vld [vmem:[%s1 + $0x1de0] sm:$0xff]
    %v1020 = vld [vmem:[%s1 + $0x1de8] sm:$0xff]
    %v1021 = vld [vmem:[%s1 + $0x1df0] sm:$0xff]
    %v1022 = vld [vmem:[%s1 + $0x1df8] sm:$0xff]
    %v1023 = vld [vmem:[%s1 + $0x1e00] sm:$0xff]
    %v1024 = vld [vmem:[%s1 + $0x1e08] sm:$0xff]
    %v1025 = vld [vmem:[%s1 + $0x1e10] sm:$0xff]
    %v1026 = vld [vmem:[%s1 + $0x1e18] sm:$0xff]
    %v1027 = vld [vmem:[%s1 + $0x1e20] sm:$0xff]
    %v1028 = vld [vmem:[%s1 + $0x1e28] sm:$0xff]
    %v1029 = vld [vmem:[%s1 + $0x1e30] sm:$0xff]
    %v1030 = vld [vmem:[%s1 + $0x1e38] sm:$0xff]
    %v1031 = vld [vmem:[%s1 + $0x1e40] sm:$0xff]
    %v1032 = vld [vmem:[%s1 + $0x1e48] sm:$0xff]
    %v1033 = vld [vmem:[%s1 + $0x1e50] sm:$0xff]
    %v1034 = vld [vmem:[%s1 + $0x1e58] sm:$0xff]
    %v1035 = vld [vmem:[%s1 + $0x1e60] sm:$0xff]
    %v1036 = vld [vmem:[%s1 + $0x1e68] sm:$0xff]
    %v1037 = vld [vmem:[%s1 + $0x1e70] sm:$0xff]
    %v1038 = vld [vmem:[%s1 + $0x1e78] sm:$0xff]
    %v1039 = vld [vmem:[%s1 + $0x1e80] sm:$0xff]
    %v1040 = vld [vmem:[%s1 + $0x1e88] sm:$0xff]
    %v1041 = vld [vmem:[%s1 + $0x1e90] sm:$0xff]
    %v1042 = vld [vmem:[%s1 + $0x1e98] sm:$0xff]
    %v1043 = vld [vmem:[%s1 + $0x1ea0] sm:$0xff]
    %v1044 = vld [vmem:[%s1 + $0x1ea8] sm:$0xff]
    %v1045 = vld [vmem:[%s1 + $0x1eb0] sm:$0xff]
    %v1046 = vld [vmem:[%s1 + $0x1eb8] sm:$0xff]
    %v1047 = vld [vmem:[%s1 + $0x1ec0] sm:$0xff]
    %v1048 = vld [vmem:[%s1 + $0x1ec8] sm:$0xff]
    %v1049 = vld [vmem:[%s1 + $0x1ed0] sm:$0xff]
    %v1050 = vld [vmem:[%s1 + $0x1ed8] sm:$0xff]
    %v1051 = vld [vmem:[%s1 + $0x1ee0] sm:$0xff]
    %v1052 = vld [vmem:[%s1 + $0x1ee8] sm:$0xff]
    %v1053 = vld [vmem:[%s1 + $0x1ef0] sm:$0xff]
    %v1054 = vld [vmem:[%s1 + $0x1ef8] sm:$0xff]
    %v1055 = vld [vmem:[%s1 + $0x1f00] sm:$0xff]
    %v1056 = vld [vmem:[%s1 + $0x1f08] sm:$0xff]
    %v1057 = vld [vmem:[%s1 + $0x1f10] sm:$0xff]
    %v1058 = vld [vmem:[%s1 + $0x1f18] sm:$0xff]
    %v1059 = vld [vmem:[%s1 + $0x1f20] sm:$0xff]
    %v1060 = vld [vmem:[%s1 + $0x1f28] sm:$0xff]
    %v1061 = vld [vmem:[%s1 + $0x1f30] sm:$0xff]
    %v1062 = vld [vmem:[%s1 + $0x1f38] sm:$0xff]
    %v1063 = vld [vmem:[%s1 + $0x1f40] sm:$0xff]
    %v1064 = vld [vmem:[%s1 + $0x1f48] sm:$0xff]
    %v1065 = vld [vmem:[%s1 + $0x1f50] sm:$0xff]
    %v1066 = vld [vmem:[%s1 + $0x1f58] sm:$0xff]
    %v1067 = vld [vmem:[%s1 + $0x1f60] sm:$0xff]
    %v1068 = vld [vmem:[%s1 + $0x1f68] sm:$0xff]
    %v1069 = vld [vmem:[%s1 + $0x1f70] sm:$0xff]
    %v1070 = vld [vmem:[%s1 + $0x1f78] sm:$0xff]
    %v1071 = vld [vmem:[%s1 + $0x1f80] sm:$0xff]
    %v1072 = vld [vmem:[%s1 + $0x1f88] sm:$0xff]
    %v1073 = vld [vmem:[%s1 + $0x1f90] sm:$0xff]
    %v1074 = vld [vmem:[%s1 + $0x1f98] sm:$0xff]
    %v1075 = vld [vmem:[%s1 + $0x1fa0] sm:$0xff]
    %v1076 = vld [vmem:[%s1 + $0x1fa8] sm:$0xff]
    %v1077 = vld [vmem:[%s1 + $0x1fb0] sm:$0xff]
    %v1078 = vld [vmem:[%s1 + $0x1fb8] sm:$0xff]
    %v1079 = vld [vmem:[%s1 + $0x1fc0] sm:$0xff]
    %v1080 = vld [vmem:[%s1 + $0x1fc8] sm:$0xff]
    %v1081 = vld [vmem:[%s1 + $0x1fd0] sm:$0xff]
    %v1082 = vld [vmem:[%s1 + $0x1fd8] sm:$0xff]
    %v1083 = vld [vmem:[%s1 + $0x1fe0] sm:$0xff]
    %v1084 = vld [vmem:[%s1 + $0x1fe8] sm:$0xff]
    %v1085 = vld [vmem:[%s1 + $0x1ff0] sm:$0xff]
    %v1086 = vld [vmem:[%s1 + $0x1ff8] sm:$0xff]
    %v1087 = vld [vmem:[%s1 + $0x2000] sm:$0xff]
    %v1088 = vld [vmem:[%s1 + $0x2008] sm:$0xff]
    %v1089 = vld [vmem:[%s1 + $0x2010] sm:$0xff]
    %v1090 = vld [vmem:[%s1 + $0x2018] sm:$0xff]
    %v1091 = vld [vmem:[%s1 + $0x2020] sm:$0xff]
    %v1092 = vld [vmem:[%s1 + $0x2028] sm:$0xff]
    %v1093 = vld [vmem:[%s1 + $0x2030] sm:$0xff]
    %v1094 = vld [vmem:[%s1 + $0x2038] sm:$0xff]
    %v1095 = vld [vmem:[%s1 + $0x2040] sm:$0xff]
    %v1096 = vld [vmem:[%s1 + $0x2048] sm:$0xff]
    %v1097 = vld [vmem:[%s1 + $0x2050] sm:$0xff]
    %v1098 = vld [vmem:[%s1 + $0x2058] sm:$0xff]
    %v1099 = vld [vmem:[%s1 + $0x2060] sm:$0xff]
    %v1100 = vld [vmem:[%s1 + $0x2068] sm:$0xff]
    %v1101 = vld [vmem:[%s1 + $0x2070] sm:$0xff]
    %v1102 = vld [vmem:[%s1 + $0x2078] sm:$0xff]
    %v1103 = vld [vmem:[%s1 + $0x2080] sm:$0xff]
    %v1104 = vld [vmem:[%s1 + $0x2088] sm:$0xff]
    %v1105 = vld [vmem:[%s1 + $0x2090] sm:$0xff]
    %v1106 = vld [vmem:[%s1 + $0x2098] sm:$0xff]
    %v1107 = vld [vmem:[%s1 + $0x20a0] sm:$0xff]
    %v1108 = vld [vmem:[%s1 + $0x20a8] sm:$0xff]
    %v1109 = vld [vmem:[%s1 + $0x20b0] sm:$0xff]
    %v1110 = vld [vmem:[%s1 + $0x20b8] sm:$0xff]
    %v1111 = vld [vmem:[%s1 + $0x20c0] sm:$0xff]
    %v1112 = vld [vmem:[%s1 + $0x20c8] sm:$0xff]
    %v1113 = vld [vmem:[%s1 + $0x20d0] sm:$0xff]
    %v1114 = vld [vmem:[%s1 + $0x20d8] sm:$0xff]
    %v1115 = vld [vmem:[%s1 + $0x20e0] sm:$0xff]
    %v1116 = vld [vmem:[%s1 + $0x20e8] sm:$0xff]
    %v1117 = vld [vmem:[%s1 + $0x20f0] sm:$0xff]
    %v1118 = vld [vmem:[%s1 + $0x20f8] sm:$0xff]
    %v1119 = vld [vmem:[%s1 + $0x2100] sm:$0xff]
    %v1120 = vld [vmem:[%s1 + $0x2108] sm:$0xff]
    %v1121 = vld [vmem:[%s1 + $0x2110] sm:$0xff]
    %v1122 = vld [vmem:[%s1 + $0x2118] sm:$0xff]
    %v1123 = vld [vmem:[%s1 + $0x2120] sm:$0xff]
    %v1124 = vld [vmem:[%s1 + $0x2128] sm:$0xff]
    %v1125 = vld [vmem:[%s1 + $0x2130] sm:$0xff]
    %v1126 = vld [vmem:[%s1 + $0x2138] sm:$0xff]
    %v1127 = vld [vmem:[%s1 + $0x2140] sm:$0xff]
    %v1128 = vld [vmem:[%s1 + $0x2148] sm:$0xff]
    %v1129 = vld [vmem:[%s1 + $0x2150] sm:$0xff]
    %v1130 = vld [vmem:[%s1 + $0x2158] sm:$0xff]
    %v1131 = vld [vmem:[%s1 + $0x2160] sm:$0xff]
    %v1132 = vld [vmem:[%s1 + $0x2168] sm:$0xff]
    %v1133 = vld [vmem:[%s1 + $0x2170] sm:$0xff]
    %v1134 = vld [vmem:[%s1 + $0x2178] sm:$0xff]
    %v1135 = vld [vmem:[%s1 + $0x2180] sm:$0xff]
    %v1136 = vld [vmem:[%s1 + $0x2188] sm:$0xff]
    %v1137 = vld [vmem:[%s1 + $0x2190] sm:$0xff]
    %v1138 = vld [vmem:[%s1 + $0x2198] sm:$0xff]
    %v1139 = vld [vmem:[%s1 + $0x21a0] sm:$0xff]
    %v1140 = vld [vmem:[%s1 + $0x21a8] sm:$0xff]
    %v1141 = vld [vmem:[%s1 + $0x21b0] sm:$0xff]
    %v1142 = vld [vmem:[%s1 + $0x21b8] sm:$0xff]
    %v1143 = vld [vmem:[%s1 + $0x21c0] sm:$0xff]
    %v1144 = vld [vmem:[%s1 + $0x21c8] sm:$0xff]
    %v1145 = vld [vmem:[%s1 + $0x21d0] sm:$0xff]
    %v1146 = vld [vmem:[%s1 + $0x21d8] sm:$0xff]
    %v1147 = vld [vmem:[%s1 + $0x21e0] sm:$0xff]
    %v1148 = vld [vmem:[%s1 + $0x21e8] sm:$0xff]
    %v1149 = vld [vmem:[%s1 + $0x21f0] sm:$0xff]
    %v1150 = vld [vmem:[%s1 + $0x21f8] sm:$0xff]
    %v1151 = vld [vmem:[%s1 + $0x2200] sm:$0xff]
    %v1152 = vld [vmem:[%s1 + $0x2208] sm:$0xff]
    %v1153 = vld [vmem:[%s1 + $0x2210] sm:$0xff]
    %v1154 = vld [vmem:[%s1 + $0x2218] sm:$0xff]
    %v1155 = vld [vmem:[%s1 + $0x2220] sm:$0xff]
    %v1156 = vld [vmem:[%s1 + $0x2228] sm:$0xff]
    %v1157 = vld [vmem:[%s1 + $0x2230] sm:$0xff]
    %v1158 = vld [vmem:[%s1 + $0x2238] sm:$0xff]
    %v1159 = vld [vmem:[%s1 + $0x2240] sm:$0xff]
    %v1160 = vld [vmem:[%s1 + $0x2248] sm:$0xff]
    %v1161 = vld [vmem:[%s1 + $0x2250] sm:$0xff]
    %v1162 = vld [vmem:[%s1 + $0x2258] sm:$0xff]
    %v1163 = vld [vmem:[%s1 + $0x2260] sm:$0xff]
    %v1164 = vld [vmem:[%s1 + $0x2268] sm:$0xff]
    %v1165 = vld [vmem:[%s1 + $0x2270] sm:$0xff]
    %v1166 = vld [vmem:[%s1 + $0x2278] sm:$0xff]
    %v1167 = vld [vmem:[%s1 + $0x2280] sm:$0xff]
    %v1168 = vld [vmem:[%s1 + $0x2288] sm:$0xff]
    %v1169 = vld [vmem:[%s1 + $0x2290] sm:$0xff]
    %v1170 = vld [vmem:[%s1 + $0x2298] sm:$0xff]
    %v1171 = vld [vmem:[%s1 + $0x22a0] sm:$0xff]
    %v1172 = vld [vmem:[%s1 + $0x22a8] sm:$0xff]
    %v1173 = vld [vmem:[%s1 + $0x22b0] sm:$0xff]
    %v1174 = vld [vmem:[%s1 + $0x22b8] sm:$0xff]
    %v1175 = vld [vmem:[%s1 + $0x22c0] sm:$0xff]
    %v1176 = vld [vmem:[%s1 + $0x22c8] sm:$0xff]
    %v1177 = vld [vmem:[%s1 + $0x22d0] sm:$0xff]
    %v1178 = vld [vmem:[%s1 + $0x22d8] sm:$0xff]
    %v1179 = vld [vmem:[%s1 + $0x22e0] sm:$0xff]
    %v1180 = vld [vmem:[%s1 + $0x22e8] sm:$0xff]
    %v1181 = vld [vmem:[%s1 + $0x22f0] sm:$0xff]
    %v1182 = vld [vmem:[%s1 + $0x22f8] sm:$0xff]
    %v1183 = vld [vmem:[%s1 + $0x2300] sm:$0xff]
    %v1184 = vld [vmem:[%s1 + $0x2308] sm:$0xff]
    %v1185 = vld [vmem:[%s1 + $0x2310] sm:$0xff]
    %v1186 = vld [vmem:[%s1 + $0x2318] sm:$0xff]
    %v1187 = vld [vmem:[%s1 + $0x2320] sm:$0xff]
    %v1188 = vld [vmem:[%s1 + $0x2328] sm:$0xff]
    %v1189 = vld [vmem:[%s1 + $0x2330] sm:$0xff]
    %v1190 = vld [vmem:[%s1 + $0x2338] sm:$0xff]
    %v1191 = vld [vmem:[%s1 + $0x2340] sm:$0xff]
    %v1192 = vld [vmem:[%s1 + $0x2348] sm:$0xff]
    %v1193 = vld [vmem:[%s1 + $0x2350] sm:$0xff]
    %v1194 = vld [vmem:[%s1 + $0x2358] sm:$0xff]
    %v1195 = vld [vmem:[%s1 + $0x2360] sm:$0xff]
    %v1196 = vld [vmem:[%s1 + $0x2368] sm:$0xff]
    %v1197 = vld [vmem:[%s1 + $0x2370] sm:$0xff]
    %v1198 = vld [vmem:[%s1 + $0x2378] sm:$0xff]
    %v1199 = vld [vmem:[%s1 + $0x2380] sm:$0xff]
    %v1200 = vld [vmem:[%s1 + $0x2388] sm:$0xff]
    %v1201 = vld [vmem:[%s1 + $0x2390] sm:$0xff]
    %v1202 = vld [vmem:[%s1 + $0x2398] sm:$0xff]
    %v1203 = vld [vmem:[%s1 + $0x23a0] sm:$0xff]
    %v1204 = vld [vmem:[%s1 + $0x23a8] sm:$0xff]
    %v1205 = vld [vmem:[%s1 + $0x23b0] sm:$0xff]
    %v1206 = vld [vmem:[%s1 + $0x23b8] sm:$0xff]
    %v1207 = vld [vmem:[%s1 + $0x23c0] sm:$0xff]
    %v1208 = vld [vmem:[%s1 + $0x23c8] sm:$0xff]
    %v1209 = vld [vmem:[%s1 + $0x23d0] sm:$0xff]
    %v1210 = vld [vmem:[%s1 + $0x23d8] sm:$0xff]
    %v1211 = vld [vmem:[%s1 + $0x23e0] sm:$0xff]
    %v1212 = vld [vmem:[%s1 + $0x23e8] sm:$0xff]
    %v1213 = vld [vmem:[%s1 + $0x23f0] sm:$0xff]
    %v1214 = vld [vmem:[%s1 + $0x23f8] sm:$0xff]
    %v1215 = vld [vmem:[%s2] sm:$0xf]
    %v1217 = vperm.slane %v1215, 0
    %v1218 = vperm.slane %v1215, 1
    %v1219 = vperm.slane %v1215, 2
    %v1220 = vperm.slane %v1215, 3
    %1226 = vst [vmem:[#allocation1] ss:$9 sm:$0xff] %v23
    %s1228 = scalar_lea.vmem [#allocation1], 1
    %1229 = vst [vmem:[%s1228] ss:$9 sm:$0xff] %v28
    %s1231 = scalar_lea.vmem [#allocation1], 2
    %1232 = vst [vmem:[%s1231] ss:$9 sm:$0xff] %v33
    %s1234 = scalar_lea.vmem [#allocation1], 3
    %1235 = vst [vmem:[%s1234] ss:$9 sm:$0xff] %v38
    %s1237 = scalar_lea.vmem [#allocation1], 4
    %1238 = vst [vmem:[%s1237] ss:$9 sm:$0xff] %v43
    %s1240 = scalar_lea.vmem [#allocation1], 5
    %1241 = vst [vmem:[%s1240] ss:$9 sm:$0xff] %v48
    %s1243 = scalar_lea.vmem [#allocation1], 6
    %1244 = vst [vmem:[%s1243] ss:$9 sm:$0xff] %v53
    %s1246 = scalar_lea.vmem [#allocation1], 7
    %1247 = vst [vmem:[%s1246] ss:$9 sm:$0xff] %v58
    %v1248 = vld [vmem:[#allocation1] sm:$0xff]
    %v1249 = vld [vmem:[#allocation1 + $0x9] sm:$0xff]
    %v1250 = vld [vmem:[#allocation1 + $0x12] sm:$0xff]
    %v1251 = vld [vmem:[#allocation1 + $0x1b] sm:$0xff]
    %v1252 = vld [vmem:[#allocation1 + $0x24] sm:$0xff]
    %v1253 = vld [vmem:[#allocation1 + $0x2d] sm:$0xff]
    %v1254 = vld [vmem:[#allocation1 + $0x36] sm:$0xff]
    %v1255 = vld [vmem:[#allocation1 + $0x3f] sm:$0xff]
    %1257 = vst [vmem:[#allocation1] ss:$9 sm:$0xff] %v24
    %1259 = vst [vmem:[%s1228] ss:$9 sm:$0xff] %v29
    %1261 = vst [vmem:[%s1231] ss:$9 sm:$0xff] %v34
    %1263 = vst [vmem:[%s1234] ss:$9 sm:$0xff] %v39
    %1265 = vst [vmem:[%s1237] ss:$9 sm:$0xff] %v44
    %1267 = vst [vmem:[%s1240] ss:$9 sm:$0xff] %v49
    %1269 = vst [vmem:[%s1243] ss:$9 sm:$0xff] %v54
    %1271 = vst [vmem:[%s1246] ss:$9 sm:$0xff] %v59
    %v1272 = vld [vmem:[#allocation1] sm:$0xff]
    %v1273 = vld [vmem:[#allocation1 + $0x9] sm:$0xff]
    %v1274 = vld [vmem:[#allocation1 + $0x12] sm:$0xff]
    %v1275 = vld [vmem:[#allocation1 + $0x1b] sm:$0xff]
    %v1276 = vld [vmem:[#allocation1 + $0x24] sm:$0xff]
    %v1277 = vld [vmem:[#allocation1 + $0x2d] sm:$0xff]
    %v1278 = vld [vmem:[#allocation1 + $0x36] sm:$0xff]
    %v1279 = vld [vmem:[#allocation1 + $0x3f] sm:$0xff]
    %1281 = vst [vmem:[#allocation1] ss:$9 sm:$0xff] %v25
    %1283 = vst [vmem:[%s1228] ss:$9 sm:$0xff] %v30
    %1285 = vst [vmem:[%s1231] ss:$9 sm:$0xff] %v35
    %1287 = vst [vmem:[%s1234] ss:$9 sm:$0xff] %v40
    %1289 = vst [vmem:[%s1237] ss:$9 sm:$0xff] %v45
    %1291 = vst [vmem:[%s1240] ss:$9 sm:$0xff] %v50
    %1293 = vst [vmem:[%s1243] ss:$9 sm:$0xff] %v55
    %1295 = vst [vmem:[%s1246] ss:$9 sm:$0xff] %v60
    %v1296 = vld [vmem:[#allocation1] sm:$0xff]
    %v1297 = vld [vmem:[#allocation1 + $0x9] sm:$0xff]
    %v1298 = vld [vmem:[#allocation1 + $0x12] sm:$0xff]
    %v1299 = vld [vmem:[#allocation1 + $0x1b] sm:$0xff]
    %v1300 = vld [vmem:[#allocation1 + $0x24] sm:$0xff]
    %v1301 = vld [vmem:[#allocation1 + $0x2d] sm:$0xff]
    %v1302 = vld [vmem:[#allocation1 + $0x36] sm:$0xff]
    %v1303 = vld [vmem:[#allocation1 + $0x3f] sm:$0xff]
    %1305 = vst [vmem:[#allocation1] ss:$9 sm:$0xff] %v26
    %1307 = vst [vmem:[%s1228] ss:$9 sm:$0xff] %v31
    %1309 = vst [vmem:[%s1231] ss:$9 sm:$0xff] %v36
    %1311 = vst [vmem:[%s1234] ss:$9 sm:$0xff] %v41
    %1313 = vst [vmem:[%s1237] ss:$9 sm:$0xff] %v46
    %1315 = vst [vmem:[%s1240] ss:$9 sm:$0xff] %v51
    %1317 = vst [vmem:[%s1243] ss:$9 sm:$0xff] %v56
    %1319 = vst [vmem:[%s1246] ss:$9 sm:$0xff] %v61
    %v1320 = vld [vmem:[#allocation1] sm:$0xff]
    %v1321 = vld [vmem:[#allocation1 + $0x9] sm:$0xff]
    %v1322 = vld [vmem:[#allocation1 + $0x12] sm:$0xff]
    %v1323 = vld [vmem:[#allocation1 + $0x1b] sm:$0xff]
    %v1324 = vld [vmem:[#allocation1 + $0x24] sm:$0xff]
    %v1325 = vld [vmem:[#allocation1 + $0x2d] sm:$0xff]
    %v1326 = vld [vmem:[#allocation1 + $0x36] sm:$0xff]
    %v1327 = vld [vmem:[#allocation1 + $0x3f] sm:$0xff]
    %1329 = vst [vmem:[#allocation1] ss:$9 sm:$0xff] %v27
    %1331 = vst [vmem:[%s1228] ss:$9 sm:$0xff] %v32
    %1333 = vst [vmem:[%s1231] ss:$9 sm:$0xff] %v37
    %1335 = vst [vmem:[%s1234] ss:$9 sm:$0xff] %v42
    %1337 = vst [vmem:[%s1237] ss:$9 sm:$0xff] %v47
    %1339 = vst [vmem:[%s1240] ss:$9 sm:$0xff] %v52
    %1341 = vst [vmem:[%s1243] ss:$9 sm:$0xff] %v57
    %1343 = vst [vmem:[%s1246] ss:$9 sm:$0xff] %v62
    %v1344 = vld [vmem:[#allocation1] sm:$0xff]
    %v1345 = vld [vmem:[#allocation1 + $0x9] sm:$0xff]
    %v1346 = vld [vmem:[#allocation1 + $0x12] sm:$0xff]
    %v1347 = vld [vmem:[#allocation1 + $0x1b] sm:$0xff]
    %v2536 = vunpack.c.l.b16 %v63
    %v2537 = vunpack.c.h.b16 %v63
    %v2538 = vunpack.c.l.b16 %v64
    %v2539 = vunpack.c.h.b16 %v64
    %v2540 = vunpack.c.l.b16 %v65
    %v2541 = vunpack.c.h.b16 %v65
    %v2542 = vunpack.c.l.b16 %v66
    %v2543 = vunpack.c.h.b16 %v66
    %v2544 = vunpack.c.l.b16 %v67
    %v2545 = vunpack.c.h.b16 %v67
    %v2546 = vunpack.c.l.b16 %v68
    %v2547 = vunpack.c.h.b16 %v68
    %v2548 = vunpack.c.l.b16 %v69
    %v2549 = vunpack.c.h.b16 %v69
    %v2550 = vunpack.c.l.b16 %v70
    %v2551 = vunpack.c.h.b16 %v70
    %v2552 = vunpack.c.l.b16 %v71
    %v2553 = vunpack.c.h.b16 %v71
    %v2554 = vunpack.c.l.b16 %v72
    %v2555 = vunpack.c.h.b16 %v72
    %v2556 = vunpack.c.l.b16 %v73
    %v2557 = vunpack.c.h.b16 %v73
    %v2558 = vunpack.c.l.b16 %v74
    %v2559 = vunpack.c.h.b16 %v74
    %v2560 = vunpack.c.l.b16 %v75
    %v2561 = vunpack.c.h.b16 %v75
    %v2562 = vunpack.c.l.b16 %v76
    %v2563 = vunpack.c.h.b16 %v76
    %v2564 = vunpack.c.l.b16 %v77
    %v2565 = vunpack.c.h.b16 %v77
    %v2566 = vunpack.c.l.b16 %v78
    %v2567 = vunpack.c.h.b16 %v78
    %v2568 = vunpack.c.l.b16 %v79
    %v2569 = vunpack.c.h.b16 %v79
    %v2570 = vunpack.c.l.b16 %v80
    %v2571 = vunpack.c.h.b16 %v80
    %v2572 = vunpack.c.l.b16 %v81
    %v2573 = vunpack.c.h.b16 %v81
    %v2574 = vunpack.c.l.b16 %v82
    %v2575 = vunpack.c.h.b16 %v82
    %v2576 = vunpack.c.l.b16 %v83
    %v2577 = vunpack.c.h.b16 %v83
    %v2578 = vunpack.c.l.b16 %v84
    %v2579 = vunpack.c.h.b16 %v84
    %v2580 = vunpack.c.l.b16 %v85
    %v2581 = vunpack.c.h.b16 %v85
    %v2582 = vunpack.c.l.b16 %v86
    %v2583 = vunpack.c.h.b16 %v86
    %v2584 = vunpack.c.l.b16 %v87
    %v2585 = vunpack.c.h.b16 %v87
    %v2586 = vunpack.c.l.b16 %v88
    %v2587 = vunpack.c.h.b16 %v88
    %v2588 = vunpack.c.l.b16 %v89
    %v2589 = vunpack.c.h.b16 %v89
    %v2590 = vunpack.c.l.b16 %v90
    %v2591 = vunpack.c.h.b16 %v90
    %v2592 = vunpack.c.l.b16 %v91
    %v2593 = vunpack.c.h.b16 %v91
    %v2594 = vunpack.c.l.b16 %v92
    %v2595 = vunpack.c.h.b16 %v92
    %v2596 = vunpack.c.l.b16 %v93
    %v2597 = vunpack.c.h.b16 %v93
    %v2598 = vunpack.c.l.b16 %v94
    %v2599 = vunpack.c.h.b16 %v94
    %v2600 = vunpack.c.l.b16 %v95
    %v2601 = vunpack.c.h.b16 %v95
    %v2602 = vunpack.c.l.b16 %v96
    %v2603 = vunpack.c.h.b16 %v96
    %v2604 = vunpack.c.l.b16 %v97
    %v2605 = vunpack.c.h.b16 %v97
    %v2606 = vunpack.c.l.b16 %v98
    %v2607 = vunpack.c.h.b16 %v98
    %v2608 = vunpack.c.l.b16 %v99
    %v2609 = vunpack.c.h.b16 %v99
    %v2610 = vunpack.c.l.b16 %v100
    %v2611 = vunpack.c.h.b16 %v100
    %v2612 = vunpack.c.l.b16 %v101
    %v2613 = vunpack.c.h.b16 %v101
    %v2614 = vunpack.c.l.b16 %v102
    %v2615 = vunpack.c.h.b16 %v102
    %v2616 = vunpack.c.l.b16 %v103
    %v2617 = vunpack.c.h.b16 %v103
    %v2618 = vunpack.c.l.b16 %v104
    %v2619 = vunpack.c.h.b16 %v104
    %v2620 = vunpack.c.l.b16 %v105
    %v2621 = vunpack.c.h.b16 %v105
    %v2622 = vunpack.c.l.b16 %v106
    %v2623 = vunpack.c.h.b16 %v106
    %v2624 = vunpack.c.l.b16 %v107
    %v2625 = vunpack.c.h.b16 %v107
    %v2626 = vunpack.c.l.b16 %v108
    %v2627 = vunpack.c.h.b16 %v108
    %v2628 = vunpack.c.l.b16 %v109
    %v2629 = vunpack.c.h.b16 %v109
    %v2630 = vunpack.c.l.b16 %v110
    %v2631 = vunpack.c.h.b16 %v110
    %v2632 = vunpack.c.l.b16 %v111
    %v2633 = vunpack.c.h.b16 %v111
    %v2634 = vunpack.c.l.b16 %v112
    %v2635 = vunpack.c.h.b16 %v112
    %v2636 = vunpack.c.l.b16 %v113
    %v2637 = vunpack.c.h.b16 %v113
    %v2638 = vunpack.c.l.b16 %v114
    %v2639 = vunpack.c.h.b16 %v114
    %v2640 = vunpack.c.l.b16 %v115
    %v2641 = vunpack.c.h.b16 %v115
    %v2642 = vunpack.c.l.b16 %v116
    %v2643 = vunpack.c.h.b16 %v116
    %v2644 = vunpack.c.l.b16 %v117
    %v2645 = vunpack.c.h.b16 %v117
    %v2646 = vunpack.c.l.b16 %v118
    %v2647 = vunpack.c.h.b16 %v118
    %v2648 = vunpack.c.l.b16 %v119
    %v2649 = vunpack.c.h.b16 %v119
    %v2650 = vunpack.c.l.b16 %v120
    %v2651 = vunpack.c.h.b16 %v120
    %v2652 = vunpack.c.l.b16 %v121
    %v2653 = vunpack.c.h.b16 %v121
    %v2654 = vunpack.c.l.b16 %v122
    %v2655 = vunpack.c.h.b16 %v122
    %v2656 = vunpack.c.l.b16 %v123
    %v2657 = vunpack.c.h.b16 %v123
    %v2658 = vunpack.c.l.b16 %v124
    %v2659 = vunpack.c.h.b16 %v124
    %v2660 = vunpack.c.l.b16 %v125
    %v2661 = vunpack.c.h.b16 %v125
    %v2662 = vunpack.c.l.b16 %v126
    %v2663 = vunpack.c.h.b16 %v126
    %v2664 = vunpack.c.l.b16 %v127
    %v2665 = vunpack.c.h.b16 %v127
    %v2666 = vunpack.c.l.b16 %v128
    %v2667 = vunpack.c.h.b16 %v128
    %v2668 = vunpack.c.l.b16 %v129
    %v2669 = vunpack.c.h.b16 %v129
    %v2670 = vunpack.c.l.b16 %v130
    %v2671 = vunpack.c.h.b16 %v130
    %v2672 = vunpack.c.l.b16 %v131
    %v2673 = vunpack.c.h.b16 %v131
    %v2674 = vunpack.c.l.b16 %v132
    %v2675 = vunpack.c.h.b16 %v132
    %v2676 = vunpack.c.l.b16 %v133
    %v2677 = vunpack.c.h.b16 %v133
    %v2678 = vunpack.c.l.b16 %v134
    %v2679 = vunpack.c.h.b16 %v134
    %v2680 = vunpack.c.l.b16 %v135
    %v2681 = vunpack.c.h.b16 %v135
    %v2682 = vunpack.c.l.b16 %v136
    %v2683 = vunpack.c.h.b16 %v136
    %v2684 = vunpack.c.l.b16 %v137
    %v2685 = vunpack.c.h.b16 %v137
    %v2686 = vunpack.c.l.b16 %v138
    %v2687 = vunpack.c.h.b16 %v138
    %v2688 = vunpack.c.l.b16 %v139
    %v2689 = vunpack.c.h.b16 %v139
    %v2690 = vunpack.c.l.b16 %v140
    %v2691 = vunpack.c.h.b16 %v140
    %v2692 = vunpack.c.l.b16 %v141
    %v2693 = vunpack.c.h.b16 %v141
    %v2694 = vunpack.c.l.b16 %v142
    %v2695 = vunpack.c.h.b16 %v142
    %v2696 = vunpack.c.l.b16 %v143
    %v2697 = vunpack.c.h.b16 %v143
    %v2698 = vunpack.c.l.b16 %v144
    %v2699 = vunpack.c.h.b16 %v144
    %v2700 = vunpack.c.l.b16 %v145
    %v2701 = vunpack.c.h.b16 %v145
    %v2702 = vunpack.c.l.b16 %v146
    %v2703 = vunpack.c.h.b16 %v146
    %v2704 = vunpack.c.l.b16 %v147
    %v2705 = vunpack.c.h.b16 %v147
    %v2706 = vunpack.c.l.b16 %v148
    %v2707 = vunpack.c.h.b16 %v148
    %v2708 = vunpack.c.l.b16 %v149
    %v2709 = vunpack.c.h.b16 %v149
    %v2710 = vunpack.c.l.b16 %v150
    %v2711 = vunpack.c.h.b16 %v150
    %v2712 = vunpack.c.l.b16 %v151
    %v2713 = vunpack.c.h.b16 %v151
    %v2714 = vunpack.c.l.b16 %v152
    %v2715 = vunpack.c.h.b16 %v152
    %v2716 = vunpack.c.l.b16 %v153
    %v2717 = vunpack.c.h.b16 %v153
    %v2718 = vunpack.c.l.b16 %v154
    %v2719 = vunpack.c.h.b16 %v154
    %v2720 = vunpack.c.l.b16 %v155
    %v2721 = vunpack.c.h.b16 %v155
    %v2722 = vunpack.c.l.b16 %v156
    %v2723 = vunpack.c.h.b16 %v156
    %v2724 = vunpack.c.l.b16 %v157
    %v2725 = vunpack.c.h.b16 %v157
    %v2726 = vunpack.c.l.b16 %v158
    %v2727 = vunpack.c.h.b16 %v158
    %v2728 = vunpack.c.l.b16 %v159
    %v2729 = vunpack.c.h.b16 %v159
    %v2730 = vunpack.c.l.b16 %v160
    %v2731 = vunpack.c.h.b16 %v160
    %v2732 = vunpack.c.l.b16 %v161
    %v2733 = vunpack.c.h.b16 %v161
    %v2734 = vunpack.c.l.b16 %v162
    %v2735 = vunpack.c.h.b16 %v162
    %v2736 = vunpack.c.l.b16 %v163
    %v2737 = vunpack.c.h.b16 %v163
    %v2738 = vunpack.c.l.b16 %v164
    %v2739 = vunpack.c.h.b16 %v164
    %v2740 = vunpack.c.l.b16 %v165
    %v2741 = vunpack.c.h.b16 %v165
    %v2742 = vunpack.c.l.b16 %v166
    %v2743 = vunpack.c.h.b16 %v166
    %v2744 = vunpack.c.l.b16 %v167
    %v2745 = vunpack.c.h.b16 %v167
    %v2746 = vunpack.c.l.b16 %v168
    %v2747 = vunpack.c.h.b16 %v168
    %v2748 = vunpack.c.l.b16 %v169
    %v2749 = vunpack.c.h.b16 %v169
    %v2750 = vunpack.c.l.b16 %v170
    %v2751 = vunpack.c.h.b16 %v170
    %v2752 = vunpack.c.l.b16 %v171
    %v2753 = vunpack.c.h.b16 %v171
    %v2754 = vunpack.c.l.b16 %v172
    %v2755 = vunpack.c.h.b16 %v172
    %v2756 = vunpack.c.l.b16 %v173
    %v2757 = vunpack.c.h.b16 %v173
    %v2758 = vunpack.c.l.b16 %v174
    %v2759 = vunpack.c.h.b16 %v174
    %v2760 = vunpack.c.l.b16 %v175
    %v2761 = vunpack.c.h.b16 %v175
    %v2762 = vunpack.c.l.b16 %v176
    %v2763 = vunpack.c.h.b16 %v176
    %v2764 = vunpack.c.l.b16 %v177
    %v2765 = vunpack.c.h.b16 %v177
    %v2766 = vunpack.c.l.b16 %v178
    %v2767 = vunpack.c.h.b16 %v178
    %v2768 = vunpack.c.l.b16 %v179
    %v2769 = vunpack.c.h.b16 %v179
    %v2770 = vunpack.c.l.b16 %v180
    %v2771 = vunpack.c.h.b16 %v180
    %v2772 = vunpack.c.l.b16 %v181
    %v2773 = vunpack.c.h.b16 %v181
    %v2774 = vunpack.c.l.b16 %v182
    %v2775 = vunpack.c.h.b16 %v182
    %v2776 = vunpack.c.l.b16 %v183
    %v2777 = vunpack.c.h.b16 %v183
    %v2778 = vunpack.c.l.b16 %v184
    %v2779 = vunpack.c.h.b16 %v184
    %v2780 = vunpack.c.l.b16 %v185
    %v2781 = vunpack.c.h.b16 %v185
    %v2782 = vunpack.c.l.b16 %v186
    %v2783 = vunpack.c.h.b16 %v186
    %v2784 = vunpack.c.l.b16 %v187
    %v2785 = vunpack.c.h.b16 %v187
    %v2786 = vunpack.c.l.b16 %v188
    %v2787 = vunpack.c.h.b16 %v188
    %v2788 = vunpack.c.l.b16 %v189
    %v2789 = vunpack.c.h.b16 %v189
    %v2790 = vunpack.c.l.b16 %v190
    %v2791 = vunpack.c.h.b16 %v190
    %v2792 = vunpack.c.l.b16 %v191
    %v2793 = vunpack.c.h.b16 %v191
    %v2794 = vunpack.c.l.b16 %v192
    %v2795 = vunpack.c.h.b16 %v192
    %v2796 = vunpack.c.l.b16 %v193
    %v2797 = vunpack.c.h.b16 %v193
    %v2798 = vunpack.c.l.b16 %v194
    %v2799 = vunpack.c.h.b16 %v194
    %v2800 = vunpack.c.l.b16 %v195
    %v2801 = vunpack.c.h.b16 %v195
    %v2802 = vunpack.c.l.b16 %v196
    %v2803 = vunpack.c.h.b16 %v196
    %v2804 = vunpack.c.l.b16 %v197
    %v2805 = vunpack.c.h.b16 %v197
    %v2806 = vunpack.c.l.b16 %v198
    %v2807 = vunpack.c.h.b16 %v198
    %v2808 = vunpack.c.l.b16 %v199
    %v2809 = vunpack.c.h.b16 %v199
    %v2810 = vunpack.c.l.b16 %v200
    %v2811 = vunpack.c.h.b16 %v200
    %v2812 = vunpack.c.l.b16 %v201
    %v2813 = vunpack.c.h.b16 %v201
    %v2814 = vunpack.c.l.b16 %v202
    %v2815 = vunpack.c.h.b16 %v202
    %v2816 = vunpack.c.l.b16 %v203
    %v2817 = vunpack.c.h.b16 %v203
    %v2818 = vunpack.c.l.b16 %v204
    %v2819 = vunpack.c.h.b16 %v204
    %v2820 = vunpack.c.l.b16 %v205
    %v2821 = vunpack.c.h.b16 %v205
    %v2822 = vunpack.c.l.b16 %v206
    %v2823 = vunpack.c.h.b16 %v206
    %v2824 = vunpack.c.l.b16 %v207
    %v2825 = vunpack.c.h.b16 %v207
    %v2826 = vunpack.c.l.b16 %v208
    %v2827 = vunpack.c.h.b16 %v208
    %v2828 = vunpack.c.l.b16 %v209
    %v2829 = vunpack.c.h.b16 %v209
    %v2830 = vunpack.c.l.b16 %v210
    %v2831 = vunpack.c.h.b16 %v210
    %v2832 = vunpack.c.l.b16 %v211
    %v2833 = vunpack.c.h.b16 %v211
    %v2834 = vunpack.c.l.b16 %v212
    %v2835 = vunpack.c.h.b16 %v212
    %v2836 = vunpack.c.l.b16 %v213
    %v2837 = vunpack.c.h.b16 %v213
    %v2838 = vunpack.c.l.b16 %v214
    %v2839 = vunpack.c.h.b16 %v214
    %v2840 = vunpack.c.l.b16 %v215
    %v2841 = vunpack.c.h.b16 %v215
    %v2842 = vunpack.c.l.b16 %v216
    %v2843 = vunpack.c.h.b16 %v216
    %v2844 = vunpack.c.l.b16 %v217
    %v2845 = vunpack.c.h.b16 %v217
    %v2846 = vunpack.c.l.b16 %v218
    %v2847 = vunpack.c.h.b16 %v218
    %v2848 = vunpack.c.l.b16 %v219
    %v2849 = vunpack.c.h.b16 %v219
    %v2850 = vunpack.c.l.b16 %v220
    %v2851 = vunpack.c.h.b16 %v220
    %v2852 = vunpack.c.l.b16 %v221
    %v2853 = vunpack.c.h.b16 %v221
    %v2854 = vunpack.c.l.b16 %v222
    %v2855 = vunpack.c.h.b16 %v222
    %v2856 = vunpack.c.l.b16 %v223
    %v2857 = vunpack.c.h.b16 %v223
    %v2858 = vunpack.c.l.b16 %v224
    %v2859 = vunpack.c.h.b16 %v224
    %v2860 = vunpack.c.l.b16 %v225
    %v2861 = vunpack.c.h.b16 %v225
    %v2862 = vunpack.c.l.b16 %v226
    %v2863 = vunpack.c.h.b16 %v226
    %v2864 = vunpack.c.l.b16 %v227
    %v2865 = vunpack.c.h.b16 %v227
    %v2866 = vunpack.c.l.b16 %v228
    %v2867 = vunpack.c.h.b16 %v228
    %v2868 = vunpack.c.l.b16 %v229
    %v2869 = vunpack.c.h.b16 %v229
    %v2870 = vunpack.c.l.b16 %v230
    %v2871 = vunpack.c.h.b16 %v230
    %v2872 = vunpack.c.l.b16 %v231
    %v2873 = vunpack.c.h.b16 %v231
    %v2874 = vunpack.c.l.b16 %v232
    %v2875 = vunpack.c.h.b16 %v232
    %v2876 = vunpack.c.l.b16 %v233
    %v2877 = vunpack.c.h.b16 %v233
    %v2878 = vunpack.c.l.b16 %v234
    %v2879 = vunpack.c.h.b16 %v234
    %v2880 = vunpack.c.l.b16 %v235
    %v2881 = vunpack.c.h.b16 %v235
    %v2882 = vunpack.c.l.b16 %v236
    %v2883 = vunpack.c.h.b16 %v236
    %v2884 = vunpack.c.l.b16 %v237
    %v2885 = vunpack.c.h.b16 %v237
    %v2886 = vunpack.c.l.b16 %v238
    %v2887 = vunpack.c.h.b16 %v238
    %v2888 = vunpack.c.l.b16 %v239
    %v2889 = vunpack.c.h.b16 %v239
    %v2890 = vunpack.c.l.b16 %v240
    %v2891 = vunpack.c.h.b16 %v240
    %v2892 = vunpack.c.l.b16 %v241
    %v2893 = vunpack.c.h.b16 %v241
    %v2894 = vunpack.c.l.b16 %v242
    %v2895 = vunpack.c.h.b16 %v242
    %v2896 = vunpack.c.l.b16 %v243
    %v2897 = vunpack.c.h.b16 %v243
    %v2898 = vunpack.c.l.b16 %v244
    %v2899 = vunpack.c.h.b16 %v244
    %v2900 = vunpack.c.l.b16 %v245
    %v2901 = vunpack.c.h.b16 %v245
    %v2902 = vunpack.c.l.b16 %v246
    %v2903 = vunpack.c.h.b16 %v246
    %v2904 = vunpack.c.l.b16 %v247
    %v2905 = vunpack.c.h.b16 %v247
    %v2906 = vunpack.c.l.b16 %v248
    %v2907 = vunpack.c.h.b16 %v248
    %v2908 = vunpack.c.l.b16 %v249
    %v2909 = vunpack.c.h.b16 %v249
    %v2910 = vunpack.c.l.b16 %v250
    %v2911 = vunpack.c.h.b16 %v250
    %v2912 = vunpack.c.l.b16 %v251
    %v2913 = vunpack.c.h.b16 %v251
    %v2914 = vunpack.c.l.b16 %v252
    %v2915 = vunpack.c.h.b16 %v252
    %v2916 = vunpack.c.l.b16 %v253
    %v2917 = vunpack.c.h.b16 %v253
    %v2918 = vunpack.c.l.b16 %v254
    %v2919 = vunpack.c.h.b16 %v254
    %v2920 = vunpack.c.l.b16 %v255
    %v2921 = vunpack.c.h.b16 %v255
    %v2922 = vunpack.c.l.b16 %v256
    %v2923 = vunpack.c.h.b16 %v256
    %v2924 = vunpack.c.l.b16 %v257
    %v2925 = vunpack.c.h.b16 %v257
    %v2926 = vunpack.c.l.b16 %v258
    %v2927 = vunpack.c.h.b16 %v258
    %v2928 = vunpack.c.l.b16 %v259
    %v2929 = vunpack.c.h.b16 %v259
    %v2930 = vunpack.c.l.b16 %v260
    %v2931 = vunpack.c.h.b16 %v260
    %v2932 = vunpack.c.l.b16 %v261
    %v2933 = vunpack.c.h.b16 %v261
    %v2934 = vunpack.c.l.b16 %v262
    %v2935 = vunpack.c.h.b16 %v262
    %v2936 = vunpack.c.l.b16 %v263
    %v2937 = vunpack.c.h.b16 %v263
    %v2938 = vunpack.c.l.b16 %v264
    %v2939 = vunpack.c.h.b16 %v264
    %v2940 = vunpack.c.l.b16 %v265
    %v2941 = vunpack.c.h.b16 %v265
    %v2942 = vunpack.c.l.b16 %v266
    %v2943 = vunpack.c.h.b16 %v266
    %v2944 = vunpack.c.l.b16 %v267
    %v2945 = vunpack.c.h.b16 %v267
    %v2946 = vunpack.c.l.b16 %v268
    %v2947 = vunpack.c.h.b16 %v268
    %v2948 = vunpack.c.l.b16 %v269
    %v2949 = vunpack.c.h.b16 %v269
    %v2950 = vunpack.c.l.b16 %v270
    %v2951 = vunpack.c.h.b16 %v270
    %v2952 = vunpack.c.l.b16 %v271
    %v2953 = vunpack.c.h.b16 %v271
    %v2954 = vunpack.c.l.b16 %v272
    %v2955 = vunpack.c.h.b16 %v272
    %v2956 = vunpack.c.l.b16 %v273
    %v2957 = vunpack.c.h.b16 %v273
    %v2958 = vunpack.c.l.b16 %v274
    %v2959 = vunpack.c.h.b16 %v274
    %v2960 = vunpack.c.l.b16 %v275
    %v2961 = vunpack.c.h.b16 %v275
    %v2962 = vunpack.c.l.b16 %v276
    %v2963 = vunpack.c.h.b16 %v276
    %v2964 = vunpack.c.l.b16 %v277
    %v2965 = vunpack.c.h.b16 %v277
    %v2966 = vunpack.c.l.b16 %v278
    %v2967 = vunpack.c.h.b16 %v278
    %v2968 = vunpack.c.l.b16 %v279
    %v2969 = vunpack.c.h.b16 %v279
    %v2970 = vunpack.c.l.b16 %v280
    %v2971 = vunpack.c.h.b16 %v280
    %v2972 = vunpack.c.l.b16 %v281
    %v2973 = vunpack.c.h.b16 %v281
    %v2974 = vunpack.c.l.b16 %v282
    %v2975 = vunpack.c.h.b16 %v282
    %v2976 = vunpack.c.l.b16 %v283
    %v2977 = vunpack.c.h.b16 %v283
    %v2978 = vunpack.c.l.b16 %v284
    %v2979 = vunpack.c.h.b16 %v284
    %v2980 = vunpack.c.l.b16 %v285
    %v2981 = vunpack.c.h.b16 %v285
    %v2982 = vunpack.c.l.b16 %v286
    %v2983 = vunpack.c.h.b16 %v286
    %v2984 = vunpack.c.l.b16 %v287
    %v2985 = vunpack.c.h.b16 %v287
    %v2986 = vunpack.c.l.b16 %v288
    %v2987 = vunpack.c.h.b16 %v288
    %v2988 = vunpack.c.l.b16 %v289
    %v2989 = vunpack.c.h.b16 %v289
    %v2990 = vunpack.c.l.b16 %v290
    %v2991 = vunpack.c.h.b16 %v290
    %v2992 = vunpack.c.l.b16 %v291
    %v2993 = vunpack.c.h.b16 %v291
    %v2994 = vunpack.c.l.b16 %v292
    %v2995 = vunpack.c.h.b16 %v292
    %v2996 = vunpack.c.l.b16 %v293
    %v2997 = vunpack.c.h.b16 %v293
    %v2998 = vunpack.c.l.b16 %v294
    %v2999 = vunpack.c.h.b16 %v294
    %v3000 = vunpack.c.l.b16 %v295
    %v3001 = vunpack.c.h.b16 %v295
    %v3002 = vunpack.c.l.b16 %v296
    %v3003 = vunpack.c.h.b16 %v296
    %v3004 = vunpack.c.l.b16 %v297
    %v3005 = vunpack.c.h.b16 %v297
    %v3006 = vunpack.c.l.b16 %v298
    %v3007 = vunpack.c.h.b16 %v298
    %v3008 = vunpack.c.l.b16 %v299
    %v3009 = vunpack.c.h.b16 %v299
    %v3010 = vunpack.c.l.b16 %v300
    %v3011 = vunpack.c.h.b16 %v300
    %v3012 = vunpack.c.l.b16 %v301
    %v3013 = vunpack.c.h.b16 %v301
    %v3014 = vunpack.c.l.b16 %v302
    %v3015 = vunpack.c.h.b16 %v302
    %v3016 = vunpack.c.l.b16 %v303
    %v3017 = vunpack.c.h.b16 %v303
    %v3018 = vunpack.c.l.b16 %v304
    %v3019 = vunpack.c.h.b16 %v304
    %v3020 = vunpack.c.l.b16 %v305
    %v3021 = vunpack.c.h.b16 %v305
    %v3022 = vunpack.c.l.b16 %v306
    %v3023 = vunpack.c.h.b16 %v306
    %v3024 = vunpack.c.l.b16 %v307
    %v3025 = vunpack.c.h.b16 %v307
    %v3026 = vunpack.c.l.b16 %v308
    %v3027 = vunpack.c.h.b16 %v308
    %v3028 = vunpack.c.l.b16 %v309
    %v3029 = vunpack.c.h.b16 %v309
    %v3030 = vunpack.c.l.b16 %v310
    %v3031 = vunpack.c.h.b16 %v310
    %v3032 = vunpack.c.l.b16 %v311
    %v3033 = vunpack.c.h.b16 %v311
    %v3034 = vunpack.c.l.b16 %v312
    %v3035 = vunpack.c.h.b16 %v312
    %v3036 = vunpack.c.l.b16 %v313
    %v3037 = vunpack.c.h.b16 %v313
    %v3038 = vunpack.c.l.b16 %v314
    %v3039 = vunpack.c.h.b16 %v314
    %v3040 = vunpack.c.l.b16 %v315
    %v3041 = vunpack.c.h.b16 %v315
    %v3042 = vunpack.c.l.b16 %v316
    %v3043 = vunpack.c.h.b16 %v316
    %v3044 = vunpack.c.l.b16 %v317
    %v3045 = vunpack.c.h.b16 %v317
    %v3046 = vunpack.c.l.b16 %v318
    %v3047 = vunpack.c.h.b16 %v318
    %v3048 = vunpack.c.l.b16 %v319
    %v3049 = vunpack.c.h.b16 %v319
    %v3050 = vunpack.c.l.b16 %v320
    %v3051 = vunpack.c.h.b16 %v320
    %v3052 = vunpack.c.l.b16 %v321
    %v3053 = vunpack.c.h.b16 %v321
    %v3054 = vunpack.c.l.b16 %v322
    %v3055 = vunpack.c.h.b16 %v322
    %v3056 = vunpack.c.l.b16 %v323
    %v3057 = vunpack.c.h.b16 %v323
    %v3058 = vunpack.c.l.b16 %v324
    %v3059 = vunpack.c.h.b16 %v324
    %v3060 = vunpack.c.l.b16 %v325
    %v3061 = vunpack.c.h.b16 %v325
    %v3062 = vunpack.c.l.b16 %v326
    %v3063 = vunpack.c.h.b16 %v326
    %v3064 = vunpack.c.l.b16 %v327
    %v3065 = vunpack.c.h.b16 %v327
    %v3066 = vunpack.c.l.b16 %v328
    %v3067 = vunpack.c.h.b16 %v328
    %v3068 = vunpack.c.l.b16 %v329
    %v3069 = vunpack.c.h.b16 %v329
    %v3070 = vunpack.c.l.b16 %v330
    %v3071 = vunpack.c.h.b16 %v330
    %v3072 = vunpack.c.l.b16 %v331
    %v3073 = vunpack.c.h.b16 %v331
    %v3074 = vunpack.c.l.b16 %v332
    %v3075 = vunpack.c.h.b16 %v332
    %v3076 = vunpack.c.l.b16 %v333
    %v3077 = vunpack.c.h.b16 %v333
    %v3078 = vunpack.c.l.b16 %v334
    %v3079 = vunpack.c.h.b16 %v334
    %v3080 = vunpack.c.l.b16 %v335
    %v3081 = vunpack.c.h.b16 %v335
    %v3082 = vunpack.c.l.b16 %v336
    %v3083 = vunpack.c.h.b16 %v336
    %v3084 = vunpack.c.l.b16 %v337
    %v3085 = vunpack.c.h.b16 %v337
    %v3086 = vunpack.c.l.b16 %v338
    %v3087 = vunpack.c.h.b16 %v338
    %v3088 = vunpack.c.l.b16 %v339
    %v3089 = vunpack.c.h.b16 %v339
    %v3090 = vunpack.c.l.b16 %v340
    %v3091 = vunpack.c.h.b16 %v340
    %v3092 = vunpack.c.l.b16 %v341
    %v3093 = vunpack.c.h.b16 %v341
    %v3094 = vunpack.c.l.b16 %v342
    %v3095 = vunpack.c.h.b16 %v342
    %v3096 = vunpack.c.l.b16 %v343
    %v3097 = vunpack.c.h.b16 %v343
    %v3098 = vunpack.c.l.b16 %v344
    %v3099 = vunpack.c.h.b16 %v344
    %v3100 = vunpack.c.l.b16 %v345
    %v3101 = vunpack.c.h.b16 %v345
    %v3102 = vunpack.c.l.b16 %v346
    %v3103 = vunpack.c.h.b16 %v346
    %v3104 = vunpack.c.l.b16 %v347
    %v3105 = vunpack.c.h.b16 %v347
    %v3106 = vunpack.c.l.b16 %v348
    %v3107 = vunpack.c.h.b16 %v348
    %v3108 = vunpack.c.l.b16 %v349
    %v3109 = vunpack.c.h.b16 %v349
    %v3110 = vunpack.c.l.b16 %v350
    %v3111 = vunpack.c.h.b16 %v350
    %v3112 = vunpack.c.l.b16 %v351
    %v3113 = vunpack.c.h.b16 %v351
    %v3114 = vunpack.c.l.b16 %v352
    %v3115 = vunpack.c.h.b16 %v352
    %v3116 = vunpack.c.l.b16 %v353
    %v3117 = vunpack.c.h.b16 %v353
    %v3118 = vunpack.c.l.b16 %v354
    %v3119 = vunpack.c.h.b16 %v354
    %v3120 = vunpack.c.l.b16 %v355
    %v3121 = vunpack.c.h.b16 %v355
    %v3122 = vunpack.c.l.b16 %v356
    %v3123 = vunpack.c.h.b16 %v356
    %v3124 = vunpack.c.l.b16 %v357
    %v3125 = vunpack.c.h.b16 %v357
    %v3126 = vunpack.c.l.b16 %v358
    %v3127 = vunpack.c.h.b16 %v358
    %v3128 = vunpack.c.l.b16 %v359
    %v3129 = vunpack.c.h.b16 %v359
    %v3130 = vunpack.c.l.b16 %v360
    %v3131 = vunpack.c.h.b16 %v360
    %v3132 = vunpack.c.l.b16 %v361
    %v3133 = vunpack.c.h.b16 %v361
    %v3134 = vunpack.c.l.b16 %v362
    %v3135 = vunpack.c.h.b16 %v362
    %v3136 = vunpack.c.l.b16 %v363
    %v3137 = vunpack.c.h.b16 %v363
    %v3138 = vunpack.c.l.b16 %v364
    %v3139 = vunpack.c.h.b16 %v364
    %v3140 = vunpack.c.l.b16 %v365
    %v3141 = vunpack.c.h.b16 %v365
    %v3142 = vunpack.c.l.b16 %v366
    %v3143 = vunpack.c.h.b16 %v366
    %v3144 = vunpack.c.l.b16 %v367
    %v3145 = vunpack.c.h.b16 %v367
    %v3146 = vunpack.c.l.b16 %v368
    %v3147 = vunpack.c.h.b16 %v368
    %v3148 = vunpack.c.l.b16 %v369
    %v3149 = vunpack.c.h.b16 %v369
    %v3150 = vunpack.c.l.b16 %v370
    %v3151 = vunpack.c.h.b16 %v370
    %v3152 = vunpack.c.l.b16 %v371
    %v3153 = vunpack.c.h.b16 %v371
    %v3154 = vunpack.c.l.b16 %v372
    %v3155 = vunpack.c.h.b16 %v372
    %v3156 = vunpack.c.l.b16 %v373
    %v3157 = vunpack.c.h.b16 %v373
    %v3158 = vunpack.c.l.b16 %v374
    %v3159 = vunpack.c.h.b16 %v374
    %v3160 = vunpack.c.l.b16 %v375
    %v3161 = vunpack.c.h.b16 %v375
    %v3162 = vunpack.c.l.b16 %v376
    %v3163 = vunpack.c.h.b16 %v376
    %v3164 = vunpack.c.l.b16 %v377
    %v3165 = vunpack.c.h.b16 %v377
    %v3166 = vunpack.c.l.b16 %v378
    %v3167 = vunpack.c.h.b16 %v378
    %v3168 = vunpack.c.l.b16 %v379
    %v3169 = vunpack.c.h.b16 %v379
    %v3170 = vunpack.c.l.b16 %v380
    %v3171 = vunpack.c.h.b16 %v380
    %v3172 = vunpack.c.l.b16 %v381
    %v3173 = vunpack.c.h.b16 %v381
    %v3174 = vunpack.c.l.b16 %v382
    %v3175 = vunpack.c.h.b16 %v382
    %v3176 = vunpack.c.l.b16 %v383
    %v3177 = vunpack.c.h.b16 %v383
    %v3178 = vunpack.c.l.b16 %v384
    %v3179 = vunpack.c.h.b16 %v384
    %v3180 = vunpack.c.l.b16 %v385
    %v3181 = vunpack.c.h.b16 %v385
    %v3182 = vunpack.c.l.b16 %v386
    %v3183 = vunpack.c.h.b16 %v386
    %v3184 = vunpack.c.l.b16 %v387
    %v3185 = vunpack.c.h.b16 %v387
    %v3186 = vunpack.c.l.b16 %v388
    %v3187 = vunpack.c.h.b16 %v388
    %v3188 = vunpack.c.l.b16 %v389
    %v3189 = vunpack.c.h.b16 %v389
    %v3190 = vunpack.c.l.b16 %v390
    %v3191 = vunpack.c.h.b16 %v390
    %v3192 = vunpack.c.l.b16 %v391
    %v3193 = vunpack.c.h.b16 %v391
    %v3194 = vunpack.c.l.b16 %v392
    %v3195 = vunpack.c.h.b16 %v392
    %v3196 = vunpack.c.l.b16 %v393
    %v3197 = vunpack.c.h.b16 %v393
    %v3198 = vunpack.c.l.b16 %v394
    %v3199 = vunpack.c.h.b16 %v394
    %v3200 = vunpack.c.l.b16 %v395
    %v3201 = vunpack.c.h.b16 %v395
    %v3202 = vunpack.c.l.b16 %v396
    %v3203 = vunpack.c.h.b16 %v396
    %v3204 = vunpack.c.l.b16 %v397
    %v3205 = vunpack.c.h.b16 %v397
    %v3206 = vunpack.c.l.b16 %v398
    %v3207 = vunpack.c.h.b16 %v398
    %v3208 = vunpack.c.l.b16 %v399
    %v3209 = vunpack.c.h.b16 %v399
    %v3210 = vunpack.c.l.b16 %v400
    %v3211 = vunpack.c.h.b16 %v400
    %v3212 = vunpack.c.l.b16 %v401
    %v3213 = vunpack.c.h.b16 %v401
    %v3214 = vunpack.c.l.b16 %v402
    %v3215 = vunpack.c.h.b16 %v402
    %v3216 = vunpack.c.l.b16 %v403
    %v3217 = vunpack.c.h.b16 %v403
    %v3218 = vunpack.c.l.b16 %v404
    %v3219 = vunpack.c.h.b16 %v404
    %v3220 = vunpack.c.l.b16 %v405
    %v3221 = vunpack.c.h.b16 %v405
    %v3222 = vunpack.c.l.b16 %v406
    %v3223 = vunpack.c.h.b16 %v406
    %v3224 = vunpack.c.l.b16 %v407
    %v3225 = vunpack.c.h.b16 %v407
    %v3226 = vunpack.c.l.b16 %v408
    %v3227 = vunpack.c.h.b16 %v408
    %v3228 = vunpack.c.l.b16 %v409
    %v3229 = vunpack.c.h.b16 %v409
    %v3230 = vunpack.c.l.b16 %v410
    %v3231 = vunpack.c.h.b16 %v410
    %v3232 = vunpack.c.l.b16 %v411
    %v3233 = vunpack.c.h.b16 %v411
    %v3234 = vunpack.c.l.b16 %v412
    %v3235 = vunpack.c.h.b16 %v412
    %v3236 = vunpack.c.l.b16 %v413
    %v3237 = vunpack.c.h.b16 %v413
    %v3238 = vunpack.c.l.b16 %v414
    %v3239 = vunpack.c.h.b16 %v414
    %v3240 = vunpack.c.l.b16 %v415
    %v3241 = vunpack.c.h.b16 %v415
    %v3242 = vunpack.c.l.b16 %v416
    %v3243 = vunpack.c.h.b16 %v416
    %v3244 = vunpack.c.l.b16 %v417
    %v3245 = vunpack.c.h.b16 %v417
    %v3246 = vunpack.c.l.b16 %v418
    %v3247 = vunpack.c.h.b16 %v418
    %v3248 = vunpack.c.l.b16 %v419
    %v3249 = vunpack.c.h.b16 %v419
    %v3250 = vunpack.c.l.b16 %v420
    %v3251 = vunpack.c.h.b16 %v420
    %v3252 = vunpack.c.l.b16 %v421
    %v3253 = vunpack.c.h.b16 %v421
    %v3254 = vunpack.c.l.b16 %v422
    %v3255 = vunpack.c.h.b16 %v422
    %v3256 = vunpack.c.l.b16 %v423
    %v3257 = vunpack.c.h.b16 %v423
    %v3258 = vunpack.c.l.b16 %v424
    %v3259 = vunpack.c.h.b16 %v424
    %v3260 = vunpack.c.l.b16 %v425
    %v3261 = vunpack.c.h.b16 %v425
    %v3262 = vunpack.c.l.b16 %v426
    %v3263 = vunpack.c.h.b16 %v426
    %v3264 = vunpack.c.l.b16 %v427
    %v3265 = vunpack.c.h.b16 %v427
    %v3266 = vunpack.c.l.b16 %v428
    %v3267 = vunpack.c.h.b16 %v428
    %v3268 = vunpack.c.l.b16 %v429
    %v3269 = vunpack.c.h.b16 %v429
    %v3270 = vunpack.c.l.b16 %v430
    %v3271 = vunpack.c.h.b16 %v430
    %v3272 = vunpack.c.l.b16 %v431
    %v3273 = vunpack.c.h.b16 %v431
    %v3274 = vunpack.c.l.b16 %v432
    %v3275 = vunpack.c.h.b16 %v432
    %v3276 = vunpack.c.l.b16 %v433
    %v3277 = vunpack.c.h.b16 %v433
    %v3278 = vunpack.c.l.b16 %v434
    %v3279 = vunpack.c.h.b16 %v434
    %v3280 = vunpack.c.l.b16 %v435
    %v3281 = vunpack.c.h.b16 %v435
    %v3282 = vunpack.c.l.b16 %v436
    %v3283 = vunpack.c.h.b16 %v436
    %v3284 = vunpack.c.l.b16 %v437
    %v3285 = vunpack.c.h.b16 %v437
    %v3286 = vunpack.c.l.b16 %v438
    %v3287 = vunpack.c.h.b16 %v438
    %v3288 = vunpack.c.l.b16 %v439
    %v3289 = vunpack.c.h.b16 %v439
    %v3290 = vunpack.c.l.b16 %v440
    %v3291 = vunpack.c.h.b16 %v440
    %v3292 = vunpack.c.l.b16 %v441
    %v3293 = vunpack.c.h.b16 %v441
    %v3294 = vunpack.c.l.b16 %v442
    %v3295 = vunpack.c.h.b16 %v442
    %v3296 = vunpack.c.l.b16 %v443
    %v3297 = vunpack.c.h.b16 %v443
    %v3298 = vunpack.c.l.b16 %v444
    %v3299 = vunpack.c.h.b16 %v444
    %v3300 = vunpack.c.l.b16 %v445
    %v3301 = vunpack.c.h.b16 %v445
    %v3302 = vunpack.c.l.b16 %v446
    %v3303 = vunpack.c.h.b16 %v446
    %v3304 = vunpack.c.l.b16 %v447
    %v3305 = vunpack.c.h.b16 %v447
    %v3306 = vunpack.c.l.b16 %v448
    %v3307 = vunpack.c.h.b16 %v448
    %v3308 = vunpack.c.l.b16 %v449
    %v3309 = vunpack.c.h.b16 %v449
    %v3310 = vunpack.c.l.b16 %v450
    %v3311 = vunpack.c.h.b16 %v450
    %v3312 = vunpack.c.l.b16 %v451
    %v3313 = vunpack.c.h.b16 %v451
    %v3314 = vunpack.c.l.b16 %v452
    %v3315 = vunpack.c.h.b16 %v452
    %v3316 = vunpack.c.l.b16 %v453
    %v3317 = vunpack.c.h.b16 %v453
    %v3318 = vunpack.c.l.b16 %v454
    %v3319 = vunpack.c.h.b16 %v454
    %v3320 = vunpack.c.l.b16 %v455
    %v3321 = vunpack.c.h.b16 %v455
    %v3322 = vunpack.c.l.b16 %v456
    %v3323 = vunpack.c.h.b16 %v456
    %v3324 = vunpack.c.l.b16 %v457
    %v3325 = vunpack.c.h.b16 %v457
    %v3326 = vunpack.c.l.b16 %v458
    %v3327 = vunpack.c.h.b16 %v458
    %v3328 = vunpack.c.l.b16 %v459
    %v3329 = vunpack.c.h.b16 %v459
    %v3330 = vunpack.c.l.b16 %v460
    %v3331 = vunpack.c.h.b16 %v460
    %v3332 = vunpack.c.l.b16 %v461
    %v3333 = vunpack.c.h.b16 %v461
    %v3334 = vunpack.c.l.b16 %v462
    %v3335 = vunpack.c.h.b16 %v462
    %v3336 = vunpack.c.l.b16 %v463
    %v3337 = vunpack.c.h.b16 %v463
    %v3338 = vunpack.c.l.b16 %v464
    %v3339 = vunpack.c.h.b16 %v464
    %v3340 = vunpack.c.l.b16 %v465
    %v3341 = vunpack.c.h.b16 %v465
    %v3342 = vunpack.c.l.b16 %v466
    %v3343 = vunpack.c.h.b16 %v466
    %v3344 = vunpack.c.l.b16 %v467
    %v3345 = vunpack.c.h.b16 %v467
    %v3346 = vunpack.c.l.b16 %v468
    %v3347 = vunpack.c.h.b16 %v468
    %v3348 = vunpack.c.l.b16 %v469
    %v3349 = vunpack.c.h.b16 %v469
    %v3350 = vunpack.c.l.b16 %v470
    %v3351 = vunpack.c.h.b16 %v470
    %v3352 = vunpack.c.l.b16 %v471
    %v3353 = vunpack.c.h.b16 %v471
    %v3354 = vunpack.c.l.b16 %v472
    %v3355 = vunpack.c.h.b16 %v472
    %v3356 = vunpack.c.l.b16 %v473
    %v3357 = vunpack.c.h.b16 %v473
    %v3358 = vunpack.c.l.b16 %v474
    %v3359 = vunpack.c.h.b16 %v474
    %v3360 = vunpack.c.l.b16 %v475
    %v3361 = vunpack.c.h.b16 %v475
    %v3362 = vunpack.c.l.b16 %v476
    %v3363 = vunpack.c.h.b16 %v476
    %v3364 = vunpack.c.l.b16 %v477
    %v3365 = vunpack.c.h.b16 %v477
    %v3366 = vunpack.c.l.b16 %v478
    %v3367 = vunpack.c.h.b16 %v478
    %v3368 = vunpack.c.l.b16 %v479
    %v3369 = vunpack.c.h.b16 %v479
    %v3370 = vunpack.c.l.b16 %v480
    %v3371 = vunpack.c.h.b16 %v480
    %v3372 = vunpack.c.l.b16 %v481
    %v3373 = vunpack.c.h.b16 %v481
    %v3374 = vunpack.c.l.b16 %v482
    %v3375 = vunpack.c.h.b16 %v482
    %v3376 = vunpack.c.l.b16 %v483
    %v3377 = vunpack.c.h.b16 %v483
    %v3378 = vunpack.c.l.b16 %v484
    %v3379 = vunpack.c.h.b16 %v484
    %v3380 = vunpack.c.l.b16 %v485
    %v3381 = vunpack.c.h.b16 %v485
    %v3382 = vunpack.c.l.b16 %v486
    %v3383 = vunpack.c.h.b16 %v486
    %v3384 = vunpack.c.l.b16 %v487
    %v3385 = vunpack.c.h.b16 %v487
    %v3386 = vunpack.c.l.b16 %v488
    %v3387 = vunpack.c.h.b16 %v488
    %v3388 = vunpack.c.l.b16 %v489
    %v3389 = vunpack.c.h.b16 %v489
    %v3390 = vunpack.c.l.b16 %v490
    %v3391 = vunpack.c.h.b16 %v490
    %v3392 = vunpack.c.l.b16 %v491
    %v3393 = vunpack.c.h.b16 %v491
    %v3394 = vunpack.c.l.b16 %v492
    %v3395 = vunpack.c.h.b16 %v492
    %v3396 = vunpack.c.l.b16 %v493
    %v3397 = vunpack.c.h.b16 %v493
    %v3398 = vunpack.c.l.b16 %v494
    %v3399 = vunpack.c.h.b16 %v494
    %v3400 = vunpack.c.l.b16 %v495
    %v3401 = vunpack.c.h.b16 %v495
    %v3402 = vunpack.c.l.b16 %v496
    %v3403 = vunpack.c.h.b16 %v496
    %v3404 = vunpack.c.l.b16 %v497
    %v3405 = vunpack.c.h.b16 %v497
    %v3406 = vunpack.c.l.b16 %v498
    %v3407 = vunpack.c.h.b16 %v498
    %v3408 = vunpack.c.l.b16 %v499
    %v3409 = vunpack.c.h.b16 %v499
    %v3410 = vunpack.c.l.b16 %v500
    %v3411 = vunpack.c.h.b16 %v500
    %v3412 = vunpack.c.l.b16 %v501
    %v3413 = vunpack.c.h.b16 %v501
    %v3414 = vunpack.c.l.b16 %v502
    %v3415 = vunpack.c.h.b16 %v502
    %v3416 = vunpack.c.l.b16 %v503
    %v3417 = vunpack.c.h.b16 %v503
    %v3418 = vunpack.c.l.b16 %v504
    %v3419 = vunpack.c.h.b16 %v504
    %v3420 = vunpack.c.l.b16 %v505
    %v3421 = vunpack.c.h.b16 %v505
    %v3422 = vunpack.c.l.b16 %v506
    %v3423 = vunpack.c.h.b16 %v506
    %v3424 = vunpack.c.l.b16 %v507
    %v3425 = vunpack.c.h.b16 %v507
    %v3426 = vunpack.c.l.b16 %v508
    %v3427 = vunpack.c.h.b16 %v508
    %v3428 = vunpack.c.l.b16 %v509
    %v3429 = vunpack.c.h.b16 %v509
    %v3430 = vunpack.c.l.b16 %v510
    %v3431 = vunpack.c.h.b16 %v510
    %v3432 = vunpack.c.l.b16 %v511
    %v3433 = vunpack.c.h.b16 %v511
    %v3434 = vunpack.c.l.b16 %v512
    %v3435 = vunpack.c.h.b16 %v512
    %v3436 = vunpack.c.l.b16 %v513
    %v3437 = vunpack.c.h.b16 %v513
    %v3438 = vunpack.c.l.b16 %v514
    %v3439 = vunpack.c.h.b16 %v514
    %v3440 = vunpack.c.l.b16 %v515
    %v3441 = vunpack.c.h.b16 %v515
    %v3442 = vunpack.c.l.b16 %v516
    %v3443 = vunpack.c.h.b16 %v516
    %v3444 = vunpack.c.l.b16 %v517
    %v3445 = vunpack.c.h.b16 %v517
    %v3446 = vunpack.c.l.b16 %v518
    %v3447 = vunpack.c.h.b16 %v518
    %v3448 = vunpack.c.l.b16 %v519
    %v3449 = vunpack.c.h.b16 %v519
    %v3450 = vunpack.c.l.b16 %v520
    %v3451 = vunpack.c.h.b16 %v520
    %v3452 = vunpack.c.l.b16 %v521
    %v3453 = vunpack.c.h.b16 %v521
    %v3454 = vunpack.c.l.b16 %v522
    %v3455 = vunpack.c.h.b16 %v522
    %v3456 = vunpack.c.l.b16 %v523
    %v3457 = vunpack.c.h.b16 %v523
    %v3458 = vunpack.c.l.b16 %v524
    %v3459 = vunpack.c.h.b16 %v524
    %v3460 = vunpack.c.l.b16 %v525
    %v3461 = vunpack.c.h.b16 %v525
    %v3462 = vunpack.c.l.b16 %v526
    %v3463 = vunpack.c.h.b16 %v526
    %v3464 = vunpack.c.l.b16 %v527
    %v3465 = vunpack.c.h.b16 %v527
    %v3466 = vunpack.c.l.b16 %v528
    %v3467 = vunpack.c.h.b16 %v528
    %v3468 = vunpack.c.l.b16 %v529
    %v3469 = vunpack.c.h.b16 %v529
    %v3470 = vunpack.c.l.b16 %v530
    %v3471 = vunpack.c.h.b16 %v530
    %v3472 = vunpack.c.l.b16 %v531
    %v3473 = vunpack.c.h.b16 %v531
    %v3474 = vunpack.c.l.b16 %v532
    %v3475 = vunpack.c.h.b16 %v532
    %v3476 = vunpack.c.l.b16 %v533
    %v3477 = vunpack.c.h.b16 %v533
    %v3478 = vunpack.c.l.b16 %v534
    %v3479 = vunpack.c.h.b16 %v534
    %v3480 = vunpack.c.l.b16 %v535
    %v3481 = vunpack.c.h.b16 %v535
    %v3482 = vunpack.c.l.b16 %v536
    %v3483 = vunpack.c.h.b16 %v536
    %v3484 = vunpack.c.l.b16 %v537
    %v3485 = vunpack.c.h.b16 %v537
    %v3486 = vunpack.c.l.b16 %v538
    %v3487 = vunpack.c.h.b16 %v538
    %v3488 = vunpack.c.l.b16 %v539
    %v3489 = vunpack.c.h.b16 %v539
    %v3490 = vunpack.c.l.b16 %v540
    %v3491 = vunpack.c.h.b16 %v540
    %v3492 = vunpack.c.l.b16 %v541
    %v3493 = vunpack.c.h.b16 %v541
    %v3494 = vunpack.c.l.b16 %v542
    %v3495 = vunpack.c.h.b16 %v542
    %v3496 = vunpack.c.l.b16 %v543
    %v3497 = vunpack.c.h.b16 %v543
    %v3498 = vunpack.c.l.b16 %v544
    %v3499 = vunpack.c.h.b16 %v544
    %v3500 = vunpack.c.l.b16 %v545
    %v3501 = vunpack.c.h.b16 %v545
    %v3502 = vunpack.c.l.b16 %v546
    %v3503 = vunpack.c.h.b16 %v546
    %v3504 = vunpack.c.l.b16 %v547
    %v3505 = vunpack.c.h.b16 %v547
    %v3506 = vunpack.c.l.b16 %v548
    %v3507 = vunpack.c.h.b16 %v548
    %v3508 = vunpack.c.l.b16 %v549
    %v3509 = vunpack.c.h.b16 %v549
    %v3510 = vunpack.c.l.b16 %v550
    %v3511 = vunpack.c.h.b16 %v550
    %v3512 = vunpack.c.l.b16 %v551
    %v3513 = vunpack.c.h.b16 %v551
    %v3514 = vunpack.c.l.b16 %v552
    %v3515 = vunpack.c.h.b16 %v552
    %v3516 = vunpack.c.l.b16 %v553
    %v3517 = vunpack.c.h.b16 %v553
    %v3518 = vunpack.c.l.b16 %v554
    %v3519 = vunpack.c.h.b16 %v554
    %v3520 = vunpack.c.l.b16 %v555
    %v3521 = vunpack.c.h.b16 %v555
    %v3522 = vunpack.c.l.b16 %v556
    %v3523 = vunpack.c.h.b16 %v556
    %v3524 = vunpack.c.l.b16 %v557
    %v3525 = vunpack.c.h.b16 %v557
    %v3526 = vunpack.c.l.b16 %v558
    %v3527 = vunpack.c.h.b16 %v558
    %v3528 = vunpack.c.l.b16 %v559
    %v3529 = vunpack.c.h.b16 %v559
    %v3530 = vunpack.c.l.b16 %v560
    %v3531 = vunpack.c.h.b16 %v560
    %v3532 = vunpack.c.l.b16 %v561
    %v3533 = vunpack.c.h.b16 %v561
    %v3534 = vunpack.c.l.b16 %v562
    %v3535 = vunpack.c.h.b16 %v562
    %v3536 = vunpack.c.l.b16 %v563
    %v3537 = vunpack.c.h.b16 %v563
    %v3538 = vunpack.c.l.b16 %v564
    %v3539 = vunpack.c.h.b16 %v564
    %v3540 = vunpack.c.l.b16 %v565
    %v3541 = vunpack.c.h.b16 %v565
    %v3542 = vunpack.c.l.b16 %v566
    %v3543 = vunpack.c.h.b16 %v566
    %v3544 = vunpack.c.l.b16 %v567
    %v3545 = vunpack.c.h.b16 %v567
    %v3546 = vunpack.c.l.b16 %v568
    %v3547 = vunpack.c.h.b16 %v568
    %v3548 = vunpack.c.l.b16 %v569
    %v3549 = vunpack.c.h.b16 %v569
    %v3550 = vunpack.c.l.b16 %v570
    %v3551 = vunpack.c.h.b16 %v570
    %v3552 = vunpack.c.l.b16 %v571
    %v3553 = vunpack.c.h.b16 %v571
    %v3554 = vunpack.c.l.b16 %v572
    %v3555 = vunpack.c.h.b16 %v572
    %v3556 = vunpack.c.l.b16 %v573
    %v3557 = vunpack.c.h.b16 %v573
    %v3558 = vunpack.c.l.b16 %v574
    %v3559 = vunpack.c.h.b16 %v574
    %v3560 = vunpack.c.l.b16 %v575
    %v3561 = vunpack.c.h.b16 %v575
    %v3562 = vunpack.c.l.b16 %v576
    %v3563 = vunpack.c.h.b16 %v576
    %v3564 = vunpack.c.l.b16 %v577
    %v3565 = vunpack.c.h.b16 %v577
    %v3566 = vunpack.c.l.b16 %v578
    %v3567 = vunpack.c.h.b16 %v578
    %v3568 = vunpack.c.l.b16 %v579
    %v3569 = vunpack.c.h.b16 %v579
    %v3570 = vunpack.c.l.b16 %v580
    %v3571 = vunpack.c.h.b16 %v580
    %v3572 = vunpack.c.l.b16 %v581
    %v3573 = vunpack.c.h.b16 %v581
    %v3574 = vunpack.c.l.b16 %v582
    %v3575 = vunpack.c.h.b16 %v582
    %v3576 = vunpack.c.l.b16 %v583
    %v3577 = vunpack.c.h.b16 %v583
    %v3578 = vunpack.c.l.b16 %v584
    %v3579 = vunpack.c.h.b16 %v584
    %v3580 = vunpack.c.l.b16 %v585
    %v3581 = vunpack.c.h.b16 %v585
    %v3582 = vunpack.c.l.b16 %v586
    %v3583 = vunpack.c.h.b16 %v586
    %v3584 = vunpack.c.l.b16 %v587
    %v3585 = vunpack.c.h.b16 %v587
    %v3586 = vunpack.c.l.b16 %v588
    %v3587 = vunpack.c.h.b16 %v588
    %v3588 = vunpack.c.l.b16 %v589
    %v3589 = vunpack.c.h.b16 %v589
    %v3590 = vunpack.c.l.b16 %v590
    %v3591 = vunpack.c.h.b16 %v590
    %v3592 = vunpack.c.l.b16 %v591
    %v3593 = vunpack.c.h.b16 %v591
    %v3594 = vunpack.c.l.b16 %v592
    %v3595 = vunpack.c.h.b16 %v592
    %v3596 = vunpack.c.l.b16 %v593
    %v3597 = vunpack.c.h.b16 %v593
    %v3598 = vunpack.c.l.b16 %v594
    %v3599 = vunpack.c.h.b16 %v594
    %v3600 = vunpack.c.l.b16 %v595
    %v3601 = vunpack.c.h.b16 %v595
    %v3602 = vunpack.c.l.b16 %v596
    %v3603 = vunpack.c.h.b16 %v596
    %v3604 = vunpack.c.l.b16 %v597
    %v3605 = vunpack.c.h.b16 %v597
    %v3606 = vunpack.c.l.b16 %v598
    %v3607 = vunpack.c.h.b16 %v598
    %v3608 = vunpack.c.l.b16 %v599
    %v3609 = vunpack.c.h.b16 %v599
    %v3610 = vunpack.c.l.b16 %v600
    %v3611 = vunpack.c.h.b16 %v600
    %v3612 = vunpack.c.l.b16 %v601
    %v3613 = vunpack.c.h.b16 %v601
    %v3614 = vunpack.c.l.b16 %v602
    %v3615 = vunpack.c.h.b16 %v602
    %v3616 = vunpack.c.l.b16 %v603
    %v3617 = vunpack.c.h.b16 %v603
    %v3618 = vunpack.c.l.b16 %v604
    %v3619 = vunpack.c.h.b16 %v604
    %v3620 = vunpack.c.l.b16 %v605
    %v3621 = vunpack.c.h.b16 %v605
    %v3622 = vunpack.c.l.b16 %v606
    %v3623 = vunpack.c.h.b16 %v606
    %v3624 = vunpack.c.l.b16 %v607
    %v3625 = vunpack.c.h.b16 %v607
    %v3626 = vunpack.c.l.b16 %v608
    %v3627 = vunpack.c.h.b16 %v608
    %v3628 = vunpack.c.l.b16 %v609
    %v3629 = vunpack.c.h.b16 %v609
    %v3630 = vunpack.c.l.b16 %v610
    %v3631 = vunpack.c.h.b16 %v610
    %v3632 = vunpack.c.l.b16 %v611
    %v3633 = vunpack.c.h.b16 %v611
    %v3634 = vunpack.c.l.b16 %v612
    %v3635 = vunpack.c.h.b16 %v612
    %v3636 = vunpack.c.l.b16 %v613
    %v3637 = vunpack.c.h.b16 %v613
    %v3638 = vunpack.c.l.b16 %v614
    %v3639 = vunpack.c.h.b16 %v614
    %v3640 = vunpack.c.l.b16 %v615
    %v3641 = vunpack.c.h.b16 %v615
    %v3642 = vunpack.c.l.b16 %v616
    %v3643 = vunpack.c.h.b16 %v616
    %v3644 = vunpack.c.l.b16 %v617
    %v3645 = vunpack.c.h.b16 %v617
    %v3646 = vunpack.c.l.b16 %v618
    %v3647 = vunpack.c.h.b16 %v618
    %v3648 = vunpack.c.l.b16 %v619
    %v3649 = vunpack.c.h.b16 %v619
    %v3650 = vunpack.c.l.b16 %v620
    %v3651 = vunpack.c.h.b16 %v620
    %v3652 = vunpack.c.l.b16 %v621
    %v3653 = vunpack.c.h.b16 %v621
    %v3654 = vunpack.c.l.b16 %v622
    %v3655 = vunpack.c.h.b16 %v622
    %v3656 = vunpack.c.l.b16 %v623
    %v3657 = vunpack.c.h.b16 %v623
    %v3658 = vunpack.c.l.b16 %v624
    %v3659 = vunpack.c.h.b16 %v624
    %v3660 = vunpack.c.l.b16 %v625
    %v3661 = vunpack.c.h.b16 %v625
    %v3662 = vunpack.c.l.b16 %v626
    %v3663 = vunpack.c.h.b16 %v626
    %v3664 = vunpack.c.l.b16 %v627
    %v3665 = vunpack.c.h.b16 %v627
    %v3666 = vunpack.c.l.b16 %v628
    %v3667 = vunpack.c.h.b16 %v628
    %v3668 = vunpack.c.l.b16 %v629
    %v3669 = vunpack.c.h.b16 %v629
    %v3670 = vunpack.c.l.b16 %v630
    %v3671 = vunpack.c.h.b16 %v630
    %v3672 = vunpack.c.l.b16 %v631
    %v3673 = vunpack.c.h.b16 %v631
    %v3674 = vunpack.c.l.b16 %v632
    %v3675 = vunpack.c.h.b16 %v632
    %v3676 = vunpack.c.l.b16 %v633
    %v3677 = vunpack.c.h.b16 %v633
    %v3678 = vunpack.c.l.b16 %v634
    %v3679 = vunpack.c.h.b16 %v634
    %v3680 = vunpack.c.l.b16 %v635
    %v3681 = vunpack.c.h.b16 %v635
    %v3682 = vunpack.c.l.b16 %v636
    %v3683 = vunpack.c.h.b16 %v636
    %v3684 = vunpack.c.l.b16 %v637
    %v3685 = vunpack.c.h.b16 %v637
    %v3686 = vunpack.c.l.b16 %v638
    %v3687 = vunpack.c.h.b16 %v638
    %v3688 = vunpack.c.l.b16 %v639
    %v3689 = vunpack.c.h.b16 %v639
    %v3690 = vunpack.c.l.b16 %v640
    %v3691 = vunpack.c.h.b16 %v640
    %v3692 = vunpack.c.l.b16 %v641
    %v3693 = vunpack.c.h.b16 %v641
    %v3694 = vunpack.c.l.b16 %v642
    %v3695 = vunpack.c.h.b16 %v642
    %v3696 = vunpack.c.l.b16 %v643
    %v3697 = vunpack.c.h.b16 %v643
    %v3698 = vunpack.c.l.b16 %v644
    %v3699 = vunpack.c.h.b16 %v644
    %v3700 = vunpack.c.l.b16 %v645
    %v3701 = vunpack.c.h.b16 %v645
    %v3702 = vunpack.c.l.b16 %v646
    %v3703 = vunpack.c.h.b16 %v646
    %v3704 = vunpack.c.l.b16 %v647
    %v3705 = vunpack.c.h.b16 %v647
    %v3706 = vunpack.c.l.b16 %v648
    %v3707 = vunpack.c.h.b16 %v648
    %v3708 = vunpack.c.l.b16 %v649
    %v3709 = vunpack.c.h.b16 %v649
    %v3710 = vunpack.c.l.b16 %v650
    %v3711 = vunpack.c.h.b16 %v650
    %v3712 = vunpack.c.l.b16 %v651
    %v3713 = vunpack.c.h.b16 %v651
    %v3714 = vunpack.c.l.b16 %v652
    %v3715 = vunpack.c.h.b16 %v652
    %v3716 = vunpack.c.l.b16 %v653
    %v3717 = vunpack.c.h.b16 %v653
    %v3718 = vunpack.c.l.b16 %v654
    %v3719 = vunpack.c.h.b16 %v654
    %v3720 = vunpack.c.l.b16 %v655
    %v3721 = vunpack.c.h.b16 %v655
    %v3722 = vunpack.c.l.b16 %v656
    %v3723 = vunpack.c.h.b16 %v656
    %v3724 = vunpack.c.l.b16 %v657
    %v3725 = vunpack.c.h.b16 %v657
    %v3726 = vunpack.c.l.b16 %v658
    %v3727 = vunpack.c.h.b16 %v658
    %v3728 = vunpack.c.l.b16 %v659
    %v3729 = vunpack.c.h.b16 %v659
    %v3730 = vunpack.c.l.b16 %v660
    %v3731 = vunpack.c.h.b16 %v660
    %v3732 = vunpack.c.l.b16 %v661
    %v3733 = vunpack.c.h.b16 %v661
    %v3734 = vunpack.c.l.b16 %v662
    %v3735 = vunpack.c.h.b16 %v662
    %v3736 = vunpack.c.l.b16 %v663
    %v3737 = vunpack.c.h.b16 %v663
    %v3738 = vunpack.c.l.b16 %v664
    %v3739 = vunpack.c.h.b16 %v664
    %v3740 = vunpack.c.l.b16 %v665
    %v3741 = vunpack.c.h.b16 %v665
    %v3742 = vunpack.c.l.b16 %v666
    %v3743 = vunpack.c.h.b16 %v666
    %v3744 = vunpack.c.l.b16 %v667
    %v3745 = vunpack.c.h.b16 %v667
    %v3746 = vunpack.c.l.b16 %v668
    %v3747 = vunpack.c.h.b16 %v668
    %v3748 = vunpack.c.l.b16 %v669
    %v3749 = vunpack.c.h.b16 %v669
    %v3750 = vunpack.c.l.b16 %v670
    %v3751 = vunpack.c.h.b16 %v670
    %v3752 = vunpack.c.l.b16 %v671
    %v3753 = vunpack.c.h.b16 %v671
    %v3754 = vunpack.c.l.b16 %v672
    %v3755 = vunpack.c.h.b16 %v672
    %v3756 = vunpack.c.l.b16 %v673
    %v3757 = vunpack.c.h.b16 %v673
    %v3758 = vunpack.c.l.b16 %v674
    %v3759 = vunpack.c.h.b16 %v674
    %v3760 = vunpack.c.l.b16 %v675
    %v3761 = vunpack.c.h.b16 %v675
    %v3762 = vunpack.c.l.b16 %v676
    %v3763 = vunpack.c.h.b16 %v676
    %v3764 = vunpack.c.l.b16 %v677
    %v3765 = vunpack.c.h.b16 %v677
    %v3766 = vunpack.c.l.b16 %v678
    %v3767 = vunpack.c.h.b16 %v678
    %v3768 = vunpack.c.l.b16 %v679
    %v3769 = vunpack.c.h.b16 %v679
    %v3770 = vunpack.c.l.b16 %v680
    %v3771 = vunpack.c.h.b16 %v680
    %v3772 = vunpack.c.l.b16 %v681
    %v3773 = vunpack.c.h.b16 %v681
    %v3774 = vunpack.c.l.b16 %v682
    %v3775 = vunpack.c.h.b16 %v682
    %v3776 = vunpack.c.l.b16 %v683
    %v3777 = vunpack.c.h.b16 %v683
    %v3778 = vunpack.c.l.b16 %v684
    %v3779 = vunpack.c.h.b16 %v684
    %v3780 = vunpack.c.l.b16 %v685
    %v3781 = vunpack.c.h.b16 %v685
    %v3782 = vunpack.c.l.b16 %v686
    %v3783 = vunpack.c.h.b16 %v686
    %v3784 = vunpack.c.l.b16 %v687
    %v3785 = vunpack.c.h.b16 %v687
    %v3786 = vunpack.c.l.b16 %v688
    %v3787 = vunpack.c.h.b16 %v688
    %v3788 = vunpack.c.l.b16 %v689
    %v3789 = vunpack.c.h.b16 %v689
    %v3790 = vunpack.c.l.b16 %v690
    %v3791 = vunpack.c.h.b16 %v690
    %v3792 = vunpack.c.l.b16 %v691
    %v3793 = vunpack.c.h.b16 %v691
    %v3794 = vunpack.c.l.b16 %v692
    %v3795 = vunpack.c.h.b16 %v692
    %v3796 = vunpack.c.l.b16 %v693
    %v3797 = vunpack.c.h.b16 %v693
    %v3798 = vunpack.c.l.b16 %v694
    %v3799 = vunpack.c.h.b16 %v694
    %v3800 = vunpack.c.l.b16 %v695
    %v3801 = vunpack.c.h.b16 %v695
    %v3802 = vunpack.c.l.b16 %v696
    %v3803 = vunpack.c.h.b16 %v696
    %v3804 = vunpack.c.l.b16 %v697
    %v3805 = vunpack.c.h.b16 %v697
    %v3806 = vunpack.c.l.b16 %v698
    %v3807 = vunpack.c.h.b16 %v698
    %v3808 = vunpack.c.l.b16 %v699
    %v3809 = vunpack.c.h.b16 %v699
    %v3810 = vunpack.c.l.b16 %v700
    %v3811 = vunpack.c.h.b16 %v700
    %v3812 = vunpack.c.l.b16 %v701
    %v3813 = vunpack.c.h.b16 %v701
    %v3814 = vunpack.c.l.b16 %v702
    %v3815 = vunpack.c.h.b16 %v702
    %v3816 = vunpack.c.l.b16 %v703
    %v3817 = vunpack.c.h.b16 %v703
    %v3818 = vunpack.c.l.b16 %v704
    %v3819 = vunpack.c.h.b16 %v704
    %v3820 = vunpack.c.l.b16 %v705
    %v3821 = vunpack.c.h.b16 %v705
    %v3822 = vunpack.c.l.b16 %v706
    %v3823 = vunpack.c.h.b16 %v706
    %v3824 = vunpack.c.l.b16 %v707
    %v3825 = vunpack.c.h.b16 %v707
    %v3826 = vunpack.c.l.b16 %v708
    %v3827 = vunpack.c.h.b16 %v708
    %v3828 = vunpack.c.l.b16 %v709
    %v3829 = vunpack.c.h.b16 %v709
    %v3830 = vunpack.c.l.b16 %v710
    %v3831 = vunpack.c.h.b16 %v710
    %v3832 = vunpack.c.l.b16 %v711
    %v3833 = vunpack.c.h.b16 %v711
    %v3834 = vunpack.c.l.b16 %v712
    %v3835 = vunpack.c.h.b16 %v712
    %v3836 = vunpack.c.l.b16 %v713
    %v3837 = vunpack.c.h.b16 %v713
    %v3838 = vunpack.c.l.b16 %v714
    %v3839 = vunpack.c.h.b16 %v714
    %v3840 = vunpack.c.l.b16 %v715
    %v3841 = vunpack.c.h.b16 %v715
    %v3842 = vunpack.c.l.b16 %v716
    %v3843 = vunpack.c.h.b16 %v716
    %v3844 = vunpack.c.l.b16 %v717
    %v3845 = vunpack.c.h.b16 %v717
    %v3846 = vunpack.c.l.b16 %v718
    %v3847 = vunpack.c.h.b16 %v718
    %v3848 = vunpack.c.l.b16 %v719
    %v3849 = vunpack.c.h.b16 %v719
    %v3850 = vunpack.c.l.b16 %v720
    %v3851 = vunpack.c.h.b16 %v720
    %v3852 = vunpack.c.l.b16 %v721
    %v3853 = vunpack.c.h.b16 %v721
    %v3854 = vunpack.c.l.b16 %v722
    %v3855 = vunpack.c.h.b16 %v722
    %v3856 = vunpack.c.l.b16 %v723
    %v3857 = vunpack.c.h.b16 %v723
    %v3858 = vunpack.c.l.b16 %v724
    %v3859 = vunpack.c.h.b16 %v724
    %v3860 = vunpack.c.l.b16 %v725
    %v3861 = vunpack.c.h.b16 %v725
    %v3862 = vunpack.c.l.b16 %v726
    %v3863 = vunpack.c.h.b16 %v726
    %v3864 = vunpack.c.l.b16 %v727
    %v3865 = vunpack.c.h.b16 %v727
    %v3866 = vunpack.c.l.b16 %v728
    %v3867 = vunpack.c.h.b16 %v728
    %v3868 = vunpack.c.l.b16 %v729
    %v3869 = vunpack.c.h.b16 %v729
    %v3870 = vunpack.c.l.b16 %v730
    %v3871 = vunpack.c.h.b16 %v730
    %v3872 = vunpack.c.l.b16 %v731
    %v3873 = vunpack.c.h.b16 %v731
    %v3874 = vunpack.c.l.b16 %v732
    %v3875 = vunpack.c.h.b16 %v732
    %v3876 = vunpack.c.l.b16 %v733
    %v3877 = vunpack.c.h.b16 %v733
    %v3878 = vunpack.c.l.b16 %v734
    %v3879 = vunpack.c.h.b16 %v734
    %v3880 = vunpack.c.l.b16 %v735
    %v3881 = vunpack.c.h.b16 %v735
    %v3882 = vunpack.c.l.b16 %v736
    %v3883 = vunpack.c.h.b16 %v736
    %v3884 = vunpack.c.l.b16 %v737
    %v3885 = vunpack.c.h.b16 %v737
    %v3886 = vunpack.c.l.b16 %v738
    %v3887 = vunpack.c.h.b16 %v738
    %v3888 = vunpack.c.l.b16 %v739
    %v3889 = vunpack.c.h.b16 %v739
    %v3890 = vunpack.c.l.b16 %v740
    %v3891 = vunpack.c.h.b16 %v740
    %v3892 = vunpack.c.l.b16 %v741
    %v3893 = vunpack.c.h.b16 %v741
    %v3894 = vunpack.c.l.b16 %v742
    %v3895 = vunpack.c.h.b16 %v742
    %v3896 = vunpack.c.l.b16 %v743
    %v3897 = vunpack.c.h.b16 %v743
    %v3898 = vunpack.c.l.b16 %v744
    %v3899 = vunpack.c.h.b16 %v744
    %v3900 = vunpack.c.l.b16 %v745
    %v3901 = vunpack.c.h.b16 %v745
    %v3902 = vunpack.c.l.b16 %v746
    %v3903 = vunpack.c.h.b16 %v746
    %v3904 = vunpack.c.l.b16 %v747
    %v3905 = vunpack.c.h.b16 %v747
    %v3906 = vunpack.c.l.b16 %v748
    %v3907 = vunpack.c.h.b16 %v748
    %v3908 = vunpack.c.l.b16 %v749
    %v3909 = vunpack.c.h.b16 %v749
    %v3910 = vunpack.c.l.b16 %v750
    %v3911 = vunpack.c.h.b16 %v750
    %v3912 = vunpack.c.l.b16 %v751
    %v3913 = vunpack.c.h.b16 %v751
    %v3914 = vunpack.c.l.b16 %v752
    %v3915 = vunpack.c.h.b16 %v752
    %v3916 = vunpack.c.l.b16 %v753
    %v3917 = vunpack.c.h.b16 %v753
    %v3918 = vunpack.c.l.b16 %v754
    %v3919 = vunpack.c.h.b16 %v754
    %v3920 = vunpack.c.l.b16 %v755
    %v3921 = vunpack.c.h.b16 %v755
    %v3922 = vunpack.c.l.b16 %v756
    %v3923 = vunpack.c.h.b16 %v756
    %v3924 = vunpack.c.l.b16 %v757
    %v3925 = vunpack.c.h.b16 %v757
    %v3926 = vunpack.c.l.b16 %v758
    %v3927 = vunpack.c.h.b16 %v758
    %v3928 = vunpack.c.l.b16 %v759
    %v3929 = vunpack.c.h.b16 %v759
    %v3930 = vunpack.c.l.b16 %v760
    %v3931 = vunpack.c.h.b16 %v760
    %v3932 = vunpack.c.l.b16 %v761
    %v3933 = vunpack.c.h.b16 %v761
    %v3934 = vunpack.c.l.b16 %v762
    %v3935 = vunpack.c.h.b16 %v762
    %v3936 = vunpack.c.l.b16 %v763
    %v3937 = vunpack.c.h.b16 %v763
    %v3938 = vunpack.c.l.b16 %v764
    %v3939 = vunpack.c.h.b16 %v764
    %v3940 = vunpack.c.l.b16 %v765
    %v3941 = vunpack.c.h.b16 %v765
    %v3942 = vunpack.c.l.b16 %v766
    %v3943 = vunpack.c.h.b16 %v766
    %v3944 = vunpack.c.l.b16 %v767
    %v3945 = vunpack.c.h.b16 %v767
    %v3946 = vunpack.c.l.b16 %v768
    %v3947 = vunpack.c.h.b16 %v768
    %v3948 = vunpack.c.l.b16 %v769
    %v3949 = vunpack.c.h.b16 %v769
    %v3950 = vunpack.c.l.b16 %v770
    %v3951 = vunpack.c.h.b16 %v770
    %v3952 = vunpack.c.l.b16 %v771
    %v3953 = vunpack.c.h.b16 %v771
    %v3954 = vunpack.c.l.b16 %v772
    %v3955 = vunpack.c.h.b16 %v772
    %v3956 = vunpack.c.l.b16 %v773
    %v3957 = vunpack.c.h.b16 %v773
    %v3958 = vunpack.c.l.b16 %v774
    %v3959 = vunpack.c.h.b16 %v774
    %v3960 = vunpack.c.l.b16 %v775
    %v3961 = vunpack.c.h.b16 %v775
    %v3962 = vunpack.c.l.b16 %v776
    %v3963 = vunpack.c.h.b16 %v776
    %v3964 = vunpack.c.l.b16 %v777
    %v3965 = vunpack.c.h.b16 %v777
    %v3966 = vunpack.c.l.b16 %v778
    %v3967 = vunpack.c.h.b16 %v778
    %v3968 = vunpack.c.l.b16 %v779
    %v3969 = vunpack.c.h.b16 %v779
    %v3970 = vunpack.c.l.b16 %v780
    %v3971 = vunpack.c.h.b16 %v780
    %v3972 = vunpack.c.l.b16 %v781
    %v3973 = vunpack.c.h.b16 %v781
    %v3974 = vunpack.c.l.b16 %v782
    %v3975 = vunpack.c.h.b16 %v782
    %v3976 = vunpack.c.l.b16 %v783
    %v3977 = vunpack.c.h.b16 %v783
    %v3978 = vunpack.c.l.b16 %v784
    %v3979 = vunpack.c.h.b16 %v784
    %v3980 = vunpack.c.l.b16 %v785
    %v3981 = vunpack.c.h.b16 %v785
    %v3982 = vunpack.c.l.b16 %v786
    %v3983 = vunpack.c.h.b16 %v786
    %v3984 = vunpack.c.l.b16 %v787
    %v3985 = vunpack.c.h.b16 %v787
    %v3986 = vunpack.c.l.b16 %v788
    %v3987 = vunpack.c.h.b16 %v788
    %v3988 = vunpack.c.l.b16 %v789
    %v3989 = vunpack.c.h.b16 %v789
    %v3990 = vunpack.c.l.b16 %v790
    %v3991 = vunpack.c.h.b16 %v790
    %v3992 = vunpack.c.l.b16 %v791
    %v3993 = vunpack.c.h.b16 %v791
    %v3994 = vunpack.c.l.b16 %v792
    %v3995 = vunpack.c.h.b16 %v792
    %v3996 = vunpack.c.l.b16 %v793
    %v3997 = vunpack.c.h.b16 %v793
    %v3998 = vunpack.c.l.b16 %v794
    %v3999 = vunpack.c.h.b16 %v794
    %v4000 = vunpack.c.l.b16 %v795
    %v4001 = vunpack.c.h.b16 %v795
    %v4002 = vunpack.c.l.b16 %v796
    %v4003 = vunpack.c.h.b16 %v796
    %v4004 = vunpack.c.l.b16 %v797
    %v4005 = vunpack.c.h.b16 %v797
    %v4006 = vunpack.c.l.b16 %v798
    %v4007 = vunpack.c.h.b16 %v798
    %v4008 = vunpack.c.l.b16 %v799
    %v4009 = vunpack.c.h.b16 %v799
    %v4010 = vunpack.c.l.b16 %v800
    %v4011 = vunpack.c.h.b16 %v800
    %v4012 = vunpack.c.l.b16 %v801
    %v4013 = vunpack.c.h.b16 %v801
    %v4014 = vunpack.c.l.b16 %v802
    %v4015 = vunpack.c.h.b16 %v802
    %v4016 = vunpack.c.l.b16 %v803
    %v4017 = vunpack.c.h.b16 %v803
    %v4018 = vunpack.c.l.b16 %v804
    %v4019 = vunpack.c.h.b16 %v804
    %v4020 = vunpack.c.l.b16 %v805
    %v4021 = vunpack.c.h.b16 %v805
    %v4022 = vunpack.c.l.b16 %v806
    %v4023 = vunpack.c.h.b16 %v806
    %v4024 = vunpack.c.l.b16 %v807
    %v4025 = vunpack.c.h.b16 %v807
    %v4026 = vunpack.c.l.b16 %v808
    %v4027 = vunpack.c.h.b16 %v808
    %v4028 = vunpack.c.l.b16 %v809
    %v4029 = vunpack.c.h.b16 %v809
    %v4030 = vunpack.c.l.b16 %v810
    %v4031 = vunpack.c.h.b16 %v810
    %v4032 = vunpack.c.l.b16 %v811
    %v4033 = vunpack.c.h.b16 %v811
    %v4034 = vunpack.c.l.b16 %v812
    %v4035 = vunpack.c.h.b16 %v812
    %v4036 = vunpack.c.l.b16 %v813
    %v4037 = vunpack.c.h.b16 %v813
    %v4038 = vunpack.c.l.b16 %v814
    %v4039 = vunpack.c.h.b16 %v814
    %v4040 = vunpack.c.l.b16 %v815
    %v4041 = vunpack.c.h.b16 %v815
    %v4042 = vunpack.c.l.b16 %v816
    %v4043 = vunpack.c.h.b16 %v816
    %v4044 = vunpack.c.l.b16 %v817
    %v4045 = vunpack.c.h.b16 %v817
    %v4046 = vunpack.c.l.b16 %v818
    %v4047 = vunpack.c.h.b16 %v818
    %v4048 = vunpack.c.l.b16 %v819
    %v4049 = vunpack.c.h.b16 %v819
    %v4050 = vunpack.c.l.b16 %v820
    %v4051 = vunpack.c.h.b16 %v820
    %v4052 = vunpack.c.l.b16 %v821
    %v4053 = vunpack.c.h.b16 %v821
    %v4054 = vunpack.c.l.b16 %v822
    %v4055 = vunpack.c.h.b16 %v822
    %v4056 = vunpack.c.l.b16 %v823
    %v4057 = vunpack.c.h.b16 %v823
    %v4058 = vunpack.c.l.b16 %v824
    %v4059 = vunpack.c.h.b16 %v824
    %v4060 = vunpack.c.l.b16 %v825
    %v4061 = vunpack.c.h.b16 %v825
    %v4062 = vunpack.c.l.b16 %v826
    %v4063 = vunpack.c.h.b16 %v826
    %v4064 = vunpack.c.l.b16 %v827
    %v4065 = vunpack.c.h.b16 %v827
    %v4066 = vunpack.c.l.b16 %v828
    %v4067 = vunpack.c.h.b16 %v828
    %v4068 = vunpack.c.l.b16 %v829
    %v4069 = vunpack.c.h.b16 %v829
    %v4070 = vunpack.c.l.b16 %v830
    %v4071 = vunpack.c.h.b16 %v830
    %v4072 = vunpack.c.l.b16 %v831
    %v4073 = vunpack.c.h.b16 %v831
    %v4074 = vunpack.c.l.b16 %v832
    %v4075 = vunpack.c.h.b16 %v832
    %v4076 = vunpack.c.l.b16 %v833
    %v4077 = vunpack.c.h.b16 %v833
    %v4078 = vunpack.c.l.b16 %v834
    %v4079 = vunpack.c.h.b16 %v834
    %v4080 = vunpack.c.l.b16 %v835
    %v4081 = vunpack.c.h.b16 %v835
    %v4082 = vunpack.c.l.b16 %v836
    %v4083 = vunpack.c.h.b16 %v836
    %v4084 = vunpack.c.l.b16 %v837
    %v4085 = vunpack.c.h.b16 %v837
    %v4086 = vunpack.c.l.b16 %v838
    %v4087 = vunpack.c.h.b16 %v838
    %v4088 = vunpack.c.l.b16 %v839
    %v4089 = vunpack.c.h.b16 %v839
    %v4090 = vunpack.c.l.b16 %v840
    %v4091 = vunpack.c.h.b16 %v840
    %v4092 = vunpack.c.l.b16 %v841
    %v4093 = vunpack.c.h.b16 %v841
    %v4094 = vunpack.c.l.b16 %v842
    %v4095 = vunpack.c.h.b16 %v842
    %v4096 = vunpack.c.l.b16 %v843
    %v4097 = vunpack.c.h.b16 %v843
    %v4098 = vunpack.c.l.b16 %v844
    %v4099 = vunpack.c.h.b16 %v844
    %v4100 = vunpack.c.l.b16 %v845
    %v4101 = vunpack.c.h.b16 %v845
    %v4102 = vunpack.c.l.b16 %v846
    %v4103 = vunpack.c.h.b16 %v846
    %v4104 = vunpack.c.l.b16 %v847
    %v4105 = vunpack.c.h.b16 %v847
    %v4106 = vunpack.c.l.b16 %v848
    %v4107 = vunpack.c.h.b16 %v848
    %v4108 = vunpack.c.l.b16 %v849
    %v4109 = vunpack.c.h.b16 %v849
    %v4110 = vunpack.c.l.b16 %v850
    %v4111 = vunpack.c.h.b16 %v850
    %v4112 = vunpack.c.l.b16 %v851
    %v4113 = vunpack.c.h.b16 %v851
    %v4114 = vunpack.c.l.b16 %v852
    %v4115 = vunpack.c.h.b16 %v852
    %v4116 = vunpack.c.l.b16 %v853
    %v4117 = vunpack.c.h.b16 %v853
    %v4118 = vunpack.c.l.b16 %v854
    %v4119 = vunpack.c.h.b16 %v854
    %v4120 = vunpack.c.l.b16 %v855
    %v4121 = vunpack.c.h.b16 %v855
    %v4122 = vunpack.c.l.b16 %v856
    %v4123 = vunpack.c.h.b16 %v856
    %v4124 = vunpack.c.l.b16 %v857
    %v4125 = vunpack.c.h.b16 %v857
    %v4126 = vunpack.c.l.b16 %v858
    %v4127 = vunpack.c.h.b16 %v858
    %v4128 = vunpack.c.l.b16 %v859
    %v4129 = vunpack.c.h.b16 %v859
    %v4130 = vunpack.c.l.b16 %v860
    %v4131 = vunpack.c.h.b16 %v860
    %v4132 = vunpack.c.l.b16 %v861
    %v4133 = vunpack.c.h.b16 %v861
    %v4134 = vunpack.c.l.b16 %v862
    %v4135 = vunpack.c.h.b16 %v862
    %v4136 = vunpack.c.l.b16 %v863
    %v4137 = vunpack.c.h.b16 %v863
    %v4138 = vunpack.c.l.b16 %v864
    %v4139 = vunpack.c.h.b16 %v864
    %v4140 = vunpack.c.l.b16 %v865
    %v4141 = vunpack.c.h.b16 %v865
    %v4142 = vunpack.c.l.b16 %v866
    %v4143 = vunpack.c.h.b16 %v866
    %v4144 = vunpack.c.l.b16 %v867
    %v4145 = vunpack.c.h.b16 %v867
    %v4146 = vunpack.c.l.b16 %v868
    %v4147 = vunpack.c.h.b16 %v868
    %v4148 = vunpack.c.l.b16 %v869
    %v4149 = vunpack.c.h.b16 %v869
    %v4150 = vunpack.c.l.b16 %v870
    %v4151 = vunpack.c.h.b16 %v870
    %v4152 = vunpack.c.l.b16 %v871
    %v4153 = vunpack.c.h.b16 %v871
    %v4154 = vunpack.c.l.b16 %v872
    %v4155 = vunpack.c.h.b16 %v872
    %v4156 = vunpack.c.l.b16 %v873
    %v4157 = vunpack.c.h.b16 %v873
    %v4158 = vunpack.c.l.b16 %v874
    %v4159 = vunpack.c.h.b16 %v874
    %v4160 = vunpack.c.l.b16 %v875
    %v4161 = vunpack.c.h.b16 %v875
    %v4162 = vunpack.c.l.b16 %v876
    %v4163 = vunpack.c.h.b16 %v876
    %v4164 = vunpack.c.l.b16 %v877
    %v4165 = vunpack.c.h.b16 %v877
    %v4166 = vunpack.c.l.b16 %v878
    %v4167 = vunpack.c.h.b16 %v878
    %v4168 = vunpack.c.l.b16 %v879
    %v4169 = vunpack.c.h.b16 %v879
    %v4170 = vunpack.c.l.b16 %v880
    %v4171 = vunpack.c.h.b16 %v880
    %v4172 = vunpack.c.l.b16 %v881
    %v4173 = vunpack.c.h.b16 %v881
    %v4174 = vunpack.c.l.b16 %v882
    %v4175 = vunpack.c.h.b16 %v882
    %v4176 = vunpack.c.l.b16 %v883
    %v4177 = vunpack.c.h.b16 %v883
    %v4178 = vunpack.c.l.b16 %v884
    %v4179 = vunpack.c.h.b16 %v884
    %v4180 = vunpack.c.l.b16 %v885
    %v4181 = vunpack.c.h.b16 %v885
    %v4182 = vunpack.c.l.b16 %v886
    %v4183 = vunpack.c.h.b16 %v886
    %v4184 = vunpack.c.l.b16 %v887
    %v4185 = vunpack.c.h.b16 %v887
    %v4186 = vunpack.c.l.b16 %v888
    %v4187 = vunpack.c.h.b16 %v888
    %v4188 = vunpack.c.l.b16 %v889
    %v4189 = vunpack.c.h.b16 %v889
    %v4190 = vunpack.c.l.b16 %v890
    %v4191 = vunpack.c.h.b16 %v890
    %v4192 = vunpack.c.l.b16 %v891
    %v4193 = vunpack.c.h.b16 %v891
    %v4194 = vunpack.c.l.b16 %v892
    %v4195 = vunpack.c.h.b16 %v892
    %v4196 = vunpack.c.l.b16 %v893
    %v4197 = vunpack.c.h.b16 %v893
    %v4198 = vunpack.c.l.b16 %v894
    %v4199 = vunpack.c.h.b16 %v894
    %v4200 = vunpack.c.l.b16 %v895
    %v4201 = vunpack.c.h.b16 %v895
    %v4202 = vunpack.c.l.b16 %v896
    %v4203 = vunpack.c.h.b16 %v896
    %v4204 = vunpack.c.l.b16 %v897
    %v4205 = vunpack.c.h.b16 %v897
    %v4206 = vunpack.c.l.b16 %v898
    %v4207 = vunpack.c.h.b16 %v898
    %v4208 = vunpack.c.l.b16 %v899
    %v4209 = vunpack.c.h.b16 %v899
    %v4210 = vunpack.c.l.b16 %v900
    %v4211 = vunpack.c.h.b16 %v900
    %v4212 = vunpack.c.l.b16 %v901
    %v4213 = vunpack.c.h.b16 %v901
    %v4214 = vunpack.c.l.b16 %v902
    %v4215 = vunpack.c.h.b16 %v902
    %v4216 = vunpack.c.l.b16 %v903
    %v4217 = vunpack.c.h.b16 %v903
    %v4218 = vunpack.c.l.b16 %v904
    %v4219 = vunpack.c.h.b16 %v904
    %v4220 = vunpack.c.l.b16 %v905
    %v4221 = vunpack.c.h.b16 %v905
    %v4222 = vunpack.c.l.b16 %v906
    %v4223 = vunpack.c.h.b16 %v906
    %v4224 = vunpack.c.l.b16 %v907
    %v4225 = vunpack.c.h.b16 %v907
    %v4226 = vunpack.c.l.b16 %v908
    %v4227 = vunpack.c.h.b16 %v908
    %v4228 = vunpack.c.l.b16 %v909
    %v4229 = vunpack.c.h.b16 %v909
    %v4230 = vunpack.c.l.b16 %v910
    %v4231 = vunpack.c.h.b16 %v910
    %v4232 = vunpack.c.l.b16 %v911
    %v4233 = vunpack.c.h.b16 %v911
    %v4234 = vunpack.c.l.b16 %v912
    %v4235 = vunpack.c.h.b16 %v912
    %v4236 = vunpack.c.l.b16 %v913
    %v4237 = vunpack.c.h.b16 %v913
    %v4238 = vunpack.c.l.b16 %v914
    %v4239 = vunpack.c.h.b16 %v914
    %v4240 = vunpack.c.l.b16 %v915
    %v4241 = vunpack.c.h.b16 %v915
    %v4242 = vunpack.c.l.b16 %v916
    %v4243 = vunpack.c.h.b16 %v916
    %v4244 = vunpack.c.l.b16 %v917
    %v4245 = vunpack.c.h.b16 %v917
    %v4246 = vunpack.c.l.b16 %v918
    %v4247 = vunpack.c.h.b16 %v918
    %v4248 = vunpack.c.l.b16 %v919
    %v4249 = vunpack.c.h.b16 %v919
    %v4250 = vunpack.c.l.b16 %v920
    %v4251 = vunpack.c.h.b16 %v920
    %v4252 = vunpack.c.l.b16 %v921
    %v4253 = vunpack.c.h.b16 %v921
    %v4254 = vunpack.c.l.b16 %v922
    %v4255 = vunpack.c.h.b16 %v922
    %v4256 = vunpack.c.l.b16 %v923
    %v4257 = vunpack.c.h.b16 %v923
    %v4258 = vunpack.c.l.b16 %v924
    %v4259 = vunpack.c.h.b16 %v924
    %v4260 = vunpack.c.l.b16 %v925
    %v4261 = vunpack.c.h.b16 %v925
    %v4262 = vunpack.c.l.b16 %v926
    %v4263 = vunpack.c.h.b16 %v926
    %v4264 = vunpack.c.l.b16 %v927
    %v4265 = vunpack.c.h.b16 %v927
    %v4266 = vunpack.c.l.b16 %v928
    %v4267 = vunpack.c.h.b16 %v928
    %v4268 = vunpack.c.l.b16 %v929
    %v4269 = vunpack.c.h.b16 %v929
    %v4270 = vunpack.c.l.b16 %v930
    %v4271 = vunpack.c.h.b16 %v930
    %v4272 = vunpack.c.l.b16 %v931
    %v4273 = vunpack.c.h.b16 %v931
    %v4274 = vunpack.c.l.b16 %v932
    %v4275 = vunpack.c.h.b16 %v932
    %v4276 = vunpack.c.l.b16 %v933
    %v4277 = vunpack.c.h.b16 %v933
    %v4278 = vunpack.c.l.b16 %v934
    %v4279 = vunpack.c.h.b16 %v934
    %v4280 = vunpack.c.l.b16 %v935
    %v4281 = vunpack.c.h.b16 %v935
    %v4282 = vunpack.c.l.b16 %v936
    %v4283 = vunpack.c.h.b16 %v936
    %v4284 = vunpack.c.l.b16 %v937
    %v4285 = vunpack.c.h.b16 %v937
    %v4286 = vunpack.c.l.b16 %v938
    %v4287 = vunpack.c.h.b16 %v938
    %v4288 = vunpack.c.l.b16 %v939
    %v4289 = vunpack.c.h.b16 %v939
    %v4290 = vunpack.c.l.b16 %v940
    %v4291 = vunpack.c.h.b16 %v940
    %v4292 = vunpack.c.l.b16 %v941
    %v4293 = vunpack.c.h.b16 %v941
    %v4294 = vunpack.c.l.b16 %v942
    %v4295 = vunpack.c.h.b16 %v942
    %v4296 = vunpack.c.l.b16 %v943
    %v4297 = vunpack.c.h.b16 %v943
    %v4298 = vunpack.c.l.b16 %v944
    %v4299 = vunpack.c.h.b16 %v944
    %v4300 = vunpack.c.l.b16 %v945
    %v4301 = vunpack.c.h.b16 %v945
    %v4302 = vunpack.c.l.b16 %v946
    %v4303 = vunpack.c.h.b16 %v946
    %v4304 = vunpack.c.l.b16 %v947
    %v4305 = vunpack.c.h.b16 %v947
    %v4306 = vunpack.c.l.b16 %v948
    %v4307 = vunpack.c.h.b16 %v948
    %v4308 = vunpack.c.l.b16 %v949
    %v4309 = vunpack.c.h.b16 %v949
    %v4310 = vunpack.c.l.b16 %v950
    %v4311 = vunpack.c.h.b16 %v950
    %v4312 = vunpack.c.l.b16 %v951
    %v4313 = vunpack.c.h.b16 %v951
    %v4314 = vunpack.c.l.b16 %v952
    %v4315 = vunpack.c.h.b16 %v952
    %v4316 = vunpack.c.l.b16 %v953
    %v4317 = vunpack.c.h.b16 %v953
    %v4318 = vunpack.c.l.b16 %v954
    %v4319 = vunpack.c.h.b16 %v954
    %v4320 = vunpack.c.l.b16 %v955
    %v4321 = vunpack.c.h.b16 %v955
    %v4322 = vunpack.c.l.b16 %v956
    %v4323 = vunpack.c.h.b16 %v956
    %v4324 = vunpack.c.l.b16 %v957
    %v4325 = vunpack.c.h.b16 %v957
    %v4326 = vunpack.c.l.b16 %v958
    %v4327 = vunpack.c.h.b16 %v958
    %v4328 = vunpack.c.l.b16 %v959
    %v4329 = vunpack.c.h.b16 %v959
    %v4330 = vunpack.c.l.b16 %v960
    %v4331 = vunpack.c.h.b16 %v960
    %v4332 = vunpack.c.l.b16 %v961
    %v4333 = vunpack.c.h.b16 %v961
    %v4334 = vunpack.c.l.b16 %v962
    %v4335 = vunpack.c.h.b16 %v962
    %v4336 = vunpack.c.l.b16 %v963
    %v4337 = vunpack.c.h.b16 %v963
    %v4338 = vunpack.c.l.b16 %v964
    %v4339 = vunpack.c.h.b16 %v964
    %v4340 = vunpack.c.l.b16 %v965
    %v4341 = vunpack.c.h.b16 %v965
    %v4342 = vunpack.c.l.b16 %v966
    %v4343 = vunpack.c.h.b16 %v966
    %v4344 = vunpack.c.l.b16 %v967
    %v4345 = vunpack.c.h.b16 %v967
    %v4346 = vunpack.c.l.b16 %v968
    %v4347 = vunpack.c.h.b16 %v968
    %v4348 = vunpack.c.l.b16 %v969
    %v4349 = vunpack.c.h.b16 %v969
    %v4350 = vunpack.c.l.b16 %v970
    %v4351 = vunpack.c.h.b16 %v970
    %v4352 = vunpack.c.l.b16 %v971
    %v4353 = vunpack.c.h.b16 %v971
    %v4354 = vunpack.c.l.b16 %v972
    %v4355 = vunpack.c.h.b16 %v972
    %v4356 = vunpack.c.l.b16 %v973
    %v4357 = vunpack.c.h.b16 %v973
    %v4358 = vunpack.c.l.b16 %v974
    %v4359 = vunpack.c.h.b16 %v974
    %v4360 = vunpack.c.l.b16 %v975
    %v4361 = vunpack.c.h.b16 %v975
    %v4362 = vunpack.c.l.b16 %v976
    %v4363 = vunpack.c.h.b16 %v976
    %v4364 = vunpack.c.l.b16 %v977
    %v4365 = vunpack.c.h.b16 %v977
    %v4366 = vunpack.c.l.b16 %v978
    %v4367 = vunpack.c.h.b16 %v978
    %v4368 = vunpack.c.l.b16 %v979
    %v4369 = vunpack.c.h.b16 %v979
    %v4370 = vunpack.c.l.b16 %v980
    %v4371 = vunpack.c.h.b16 %v980
    %v4372 = vunpack.c.l.b16 %v981
    %v4373 = vunpack.c.h.b16 %v981
    %v4374 = vunpack.c.l.b16 %v982
    %v4375 = vunpack.c.h.b16 %v982
    %v4376 = vunpack.c.l.b16 %v983
    %v4377 = vunpack.c.h.b16 %v983
    %v4378 = vunpack.c.l.b16 %v984
    %v4379 = vunpack.c.h.b16 %v984
    %v4380 = vunpack.c.l.b16 %v985
    %v4381 = vunpack.c.h.b16 %v985
    %v4382 = vunpack.c.l.b16 %v986
    %v4383 = vunpack.c.h.b16 %v986
    %v4384 = vunpack.c.l.b16 %v987
    %v4385 = vunpack.c.h.b16 %v987
    %v4386 = vunpack.c.l.b16 %v988
    %v4387 = vunpack.c.h.b16 %v988
    %v4388 = vunpack.c.l.b16 %v989
    %v4389 = vunpack.c.h.b16 %v989
    %v4390 = vunpack.c.l.b16 %v990
    %v4391 = vunpack.c.h.b16 %v990
    %v4392 = vunpack.c.l.b16 %v991
    %v4393 = vunpack.c.h.b16 %v991
    %v4394 = vunpack.c.l.b16 %v992
    %v4395 = vunpack.c.h.b16 %v992
    %v4396 = vunpack.c.l.b16 %v993
    %v4397 = vunpack.c.h.b16 %v993
    %v4398 = vunpack.c.l.b16 %v994
    %v4399 = vunpack.c.h.b16 %v994
    %v4400 = vunpack.c.l.b16 %v995
    %v4401 = vunpack.c.h.b16 %v995
    %v4402 = vunpack.c.l.b16 %v996
    %v4403 = vunpack.c.h.b16 %v996
    %v4404 = vunpack.c.l.b16 %v997
    %v4405 = vunpack.c.h.b16 %v997
    %v4406 = vunpack.c.l.b16 %v998
    %v4407 = vunpack.c.h.b16 %v998
    %v4408 = vunpack.c.l.b16 %v999
    %v4409 = vunpack.c.h.b16 %v999
    %v4410 = vunpack.c.l.b16 %v1000
    %v4411 = vunpack.c.h.b16 %v1000
    %v4412 = vunpack.c.l.b16 %v1001
    %v4413 = vunpack.c.h.b16 %v1001
    %v4414 = vunpack.c.l.b16 %v1002
    %v4415 = vunpack.c.h.b16 %v1002
    %v4416 = vunpack.c.l.b16 %v1003
    %v4417 = vunpack.c.h.b16 %v1003
    %v4418 = vunpack.c.l.b16 %v1004
    %v4419 = vunpack.c.h.b16 %v1004
    %v4420 = vunpack.c.l.b16 %v1005
    %v4421 = vunpack.c.h.b16 %v1005
    %v4422 = vunpack.c.l.b16 %v1006
    %v4423 = vunpack.c.h.b16 %v1006
    %v4424 = vunpack.c.l.b16 %v1007
    %v4425 = vunpack.c.h.b16 %v1007
    %v4426 = vunpack.c.l.b16 %v1008
    %v4427 = vunpack.c.h.b16 %v1008
    %v4428 = vunpack.c.l.b16 %v1009
    %v4429 = vunpack.c.h.b16 %v1009
    %v4430 = vunpack.c.l.b16 %v1010
    %v4431 = vunpack.c.h.b16 %v1010
    %v4432 = vunpack.c.l.b16 %v1011
    %v4433 = vunpack.c.h.b16 %v1011
    %v4434 = vunpack.c.l.b16 %v1012
    %v4435 = vunpack.c.h.b16 %v1012
    %v4436 = vunpack.c.l.b16 %v1013
    %v4437 = vunpack.c.h.b16 %v1013
    %v4438 = vunpack.c.l.b16 %v1014
    %v4439 = vunpack.c.h.b16 %v1014
    %v4440 = vunpack.c.l.b16 %v1015
    %v4441 = vunpack.c.h.b16 %v1015
    %v4442 = vunpack.c.l.b16 %v1016
    %v4443 = vunpack.c.h.b16 %v1016
    %v4444 = vunpack.c.l.b16 %v1017
    %v4445 = vunpack.c.h.b16 %v1017
    %v4446 = vunpack.c.l.b16 %v1018
    %v4447 = vunpack.c.h.b16 %v1018
    %v4448 = vunpack.c.l.b16 %v1019
    %v4449 = vunpack.c.h.b16 %v1019
    %v4450 = vunpack.c.l.b16 %v1020
    %v4451 = vunpack.c.h.b16 %v1020
    %v4452 = vunpack.c.l.b16 %v1021
    %v4453 = vunpack.c.h.b16 %v1021
    %v4454 = vunpack.c.l.b16 %v1022
    %v4455 = vunpack.c.h.b16 %v1022
    %v4456 = vunpack.c.l.b16 %v1023
    %v4457 = vunpack.c.h.b16 %v1023
    %v4458 = vunpack.c.l.b16 %v1024
    %v4459 = vunpack.c.h.b16 %v1024
    %v4460 = vunpack.c.l.b16 %v1025
    %v4461 = vunpack.c.h.b16 %v1025
    %v4462 = vunpack.c.l.b16 %v1026
    %v4463 = vunpack.c.h.b16 %v1026
    %v4464 = vunpack.c.l.b16 %v1027
    %v4465 = vunpack.c.h.b16 %v1027
    %v4466 = vunpack.c.l.b16 %v1028
    %v4467 = vunpack.c.h.b16 %v1028
    %v4468 = vunpack.c.l.b16 %v1029
    %v4469 = vunpack.c.h.b16 %v1029
    %v4470 = vunpack.c.l.b16 %v1030
    %v4471 = vunpack.c.h.b16 %v1030
    %v4472 = vunpack.c.l.b16 %v1031
    %v4473 = vunpack.c.h.b16 %v1031
    %v4474 = vunpack.c.l.b16 %v1032
    %v4475 = vunpack.c.h.b16 %v1032
    %v4476 = vunpack.c.l.b16 %v1033
    %v4477 = vunpack.c.h.b16 %v1033
    %v4478 = vunpack.c.l.b16 %v1034
    %v4479 = vunpack.c.h.b16 %v1034
    %v4480 = vunpack.c.l.b16 %v1035
    %v4481 = vunpack.c.h.b16 %v1035
    %v4482 = vunpack.c.l.b16 %v1036
    %v4483 = vunpack.c.h.b16 %v1036
    %v4484 = vunpack.c.l.b16 %v1037
    %v4485 = vunpack.c.h.b16 %v1037
    %v4486 = vunpack.c.l.b16 %v1038
    %v4487 = vunpack.c.h.b16 %v1038
    %v4488 = vunpack.c.l.b16 %v1039
    %v4489 = vunpack.c.h.b16 %v1039
    %v4490 = vunpack.c.l.b16 %v1040
    %v4491 = vunpack.c.h.b16 %v1040
    %v4492 = vunpack.c.l.b16 %v1041
    %v4493 = vunpack.c.h.b16 %v1041
    %v4494 = vunpack.c.l.b16 %v1042
    %v4495 = vunpack.c.h.b16 %v1042
    %v4496 = vunpack.c.l.b16 %v1043
    %v4497 = vunpack.c.h.b16 %v1043
    %v4498 = vunpack.c.l.b16 %v1044
    %v4499 = vunpack.c.h.b16 %v1044
    %v4500 = vunpack.c.l.b16 %v1045
    %v4501 = vunpack.c.h.b16 %v1045
    %v4502 = vunpack.c.l.b16 %v1046
    %v4503 = vunpack.c.h.b16 %v1046
    %v4504 = vunpack.c.l.b16 %v1047
    %v4505 = vunpack.c.h.b16 %v1047
    %v4506 = vunpack.c.l.b16 %v1048
    %v4507 = vunpack.c.h.b16 %v1048
    %v4508 = vunpack.c.l.b16 %v1049
    %v4509 = vunpack.c.h.b16 %v1049
    %v4510 = vunpack.c.l.b16 %v1050
    %v4511 = vunpack.c.h.b16 %v1050
    %v4512 = vunpack.c.l.b16 %v1051
    %v4513 = vunpack.c.h.b16 %v1051
    %v4514 = vunpack.c.l.b16 %v1052
    %v4515 = vunpack.c.h.b16 %v1052
    %v4516 = vunpack.c.l.b16 %v1053
    %v4517 = vunpack.c.h.b16 %v1053
    %v4518 = vunpack.c.l.b16 %v1054
    %v4519 = vunpack.c.h.b16 %v1054
    %v4520 = vunpack.c.l.b16 %v1055
    %v4521 = vunpack.c.h.b16 %v1055
    %v4522 = vunpack.c.l.b16 %v1056
    %v4523 = vunpack.c.h.b16 %v1056
    %v4524 = vunpack.c.l.b16 %v1057
    %v4525 = vunpack.c.h.b16 %v1057
    %v4526 = vunpack.c.l.b16 %v1058
    %v4527 = vunpack.c.h.b16 %v1058
    %v4528 = vunpack.c.l.b16 %v1059
    %v4529 = vunpack.c.h.b16 %v1059
    %v4530 = vunpack.c.l.b16 %v1060
    %v4531 = vunpack.c.h.b16 %v1060
    %v4532 = vunpack.c.l.b16 %v1061
    %v4533 = vunpack.c.h.b16 %v1061
    %v4534 = vunpack.c.l.b16 %v1062
    %v4535 = vunpack.c.h.b16 %v1062
    %v4536 = vunpack.c.l.b16 %v1063
    %v4537 = vunpack.c.h.b16 %v1063
    %v4538 = vunpack.c.l.b16 %v1064
    %v4539 = vunpack.c.h.b16 %v1064
    %v4540 = vunpack.c.l.b16 %v1065
    %v4541 = vunpack.c.h.b16 %v1065
    %v4542 = vunpack.c.l.b16 %v1066
    %v4543 = vunpack.c.h.b16 %v1066
    %v4544 = vunpack.c.l.b16 %v1067
    %v4545 = vunpack.c.h.b16 %v1067
    %v4546 = vunpack.c.l.b16 %v1068
    %v4547 = vunpack.c.h.b16 %v1068
    %v4548 = vunpack.c.l.b16 %v1069
    %v4549 = vunpack.c.h.b16 %v1069
    %v4550 = vunpack.c.l.b16 %v1070
    %v4551 = vunpack.c.h.b16 %v1070
    %v4552 = vunpack.c.l.b16 %v1071
    %v4553 = vunpack.c.h.b16 %v1071
    %v4554 = vunpack.c.l.b16 %v1072
    %v4555 = vunpack.c.h.b16 %v1072
    %v4556 = vunpack.c.l.b16 %v1073
    %v4557 = vunpack.c.h.b16 %v1073
    %v4558 = vunpack.c.l.b16 %v1074
    %v4559 = vunpack.c.h.b16 %v1074
    %v4560 = vunpack.c.l.b16 %v1075
    %v4561 = vunpack.c.h.b16 %v1075
    %v4562 = vunpack.c.l.b16 %v1076
    %v4563 = vunpack.c.h.b16 %v1076
    %v4564 = vunpack.c.l.b16 %v1077
    %v4565 = vunpack.c.h.b16 %v1077
    %v4566 = vunpack.c.l.b16 %v1078
    %v4567 = vunpack.c.h.b16 %v1078
    %v4568 = vunpack.c.l.b16 %v1079
    %v4569 = vunpack.c.h.b16 %v1079
    %v4570 = vunpack.c.l.b16 %v1080
    %v4571 = vunpack.c.h.b16 %v1080
    %v4572 = vunpack.c.l.b16 %v1081
    %v4573 = vunpack.c.h.b16 %v1081
    %v4574 = vunpack.c.l.b16 %v1082
    %v4575 = vunpack.c.h.b16 %v1082
    %v4576 = vunpack.c.l.b16 %v1083
    %v4577 = vunpack.c.h.b16 %v1083
    %v4578 = vunpack.c.l.b16 %v1084
    %v4579 = vunpack.c.h.b16 %v1084
    %v4580 = vunpack.c.l.b16 %v1085
    %v4581 = vunpack.c.h.b16 %v1085
    %v4582 = vunpack.c.l.b16 %v1086
    %v4583 = vunpack.c.h.b16 %v1086
    %v4584 = vunpack.c.l.b16 %v1087
    %v4585 = vunpack.c.h.b16 %v1087
    %v4586 = vunpack.c.l.b16 %v1088
    %v4587 = vunpack.c.h.b16 %v1088
    %v4588 = vunpack.c.l.b16 %v1089
    %v4589 = vunpack.c.h.b16 %v1089
    %v4590 = vunpack.c.l.b16 %v1090
    %v4591 = vunpack.c.h.b16 %v1090
    %v4592 = vunpack.c.l.b16 %v1091
    %v4593 = vunpack.c.h.b16 %v1091
    %v4594 = vunpack.c.l.b16 %v1092
    %v4595 = vunpack.c.h.b16 %v1092
    %v4596 = vunpack.c.l.b16 %v1093
    %v4597 = vunpack.c.h.b16 %v1093
    %v4598 = vunpack.c.l.b16 %v1094
    %v4599 = vunpack.c.h.b16 %v1094
    %v4600 = vunpack.c.l.b16 %v1095
    %v4601 = vunpack.c.h.b16 %v1095
    %v4602 = vunpack.c.l.b16 %v1096
    %v4603 = vunpack.c.h.b16 %v1096
    %v4604 = vunpack.c.l.b16 %v1097
    %v4605 = vunpack.c.h.b16 %v1097
    %v4606 = vunpack.c.l.b16 %v1098
    %v4607 = vunpack.c.h.b16 %v1098
    %v4608 = vunpack.c.l.b16 %v1099
    %v4609 = vunpack.c.h.b16 %v1099
    %v4610 = vunpack.c.l.b16 %v1100
    %v4611 = vunpack.c.h.b16 %v1100
    %v4612 = vunpack.c.l.b16 %v1101
    %v4613 = vunpack.c.h.b16 %v1101
    %v4614 = vunpack.c.l.b16 %v1102
    %v4615 = vunpack.c.h.b16 %v1102
    %v4616 = vunpack.c.l.b16 %v1103
    %v4617 = vunpack.c.h.b16 %v1103
    %v4618 = vunpack.c.l.b16 %v1104
    %v4619 = vunpack.c.h.b16 %v1104
    %v4620 = vunpack.c.l.b16 %v1105
    %v4621 = vunpack.c.h.b16 %v1105
    %v4622 = vunpack.c.l.b16 %v1106
    %v4623 = vunpack.c.h.b16 %v1106
    %v4624 = vunpack.c.l.b16 %v1107
    %v4625 = vunpack.c.h.b16 %v1107
    %v4626 = vunpack.c.l.b16 %v1108
    %v4627 = vunpack.c.h.b16 %v1108
    %v4628 = vunpack.c.l.b16 %v1109
    %v4629 = vunpack.c.h.b16 %v1109
    %v4630 = vunpack.c.l.b16 %v1110
    %v4631 = vunpack.c.h.b16 %v1110
    %v4632 = vunpack.c.l.b16 %v1111
    %v4633 = vunpack.c.h.b16 %v1111
    %v4634 = vunpack.c.l.b16 %v1112
    %v4635 = vunpack.c.h.b16 %v1112
    %v4636 = vunpack.c.l.b16 %v1113
    %v4637 = vunpack.c.h.b16 %v1113
    %v4638 = vunpack.c.l.b16 %v1114
    %v4639 = vunpack.c.h.b16 %v1114
    %v4640 = vunpack.c.l.b16 %v1115
    %v4641 = vunpack.c.h.b16 %v1115
    %v4642 = vunpack.c.l.b16 %v1116
    %v4643 = vunpack.c.h.b16 %v1116
    %v4644 = vunpack.c.l.b16 %v1117
    %v4645 = vunpack.c.h.b16 %v1117
    %v4646 = vunpack.c.l.b16 %v1118
    %v4647 = vunpack.c.h.b16 %v1118
    %v4648 = vunpack.c.l.b16 %v1119
    %v4649 = vunpack.c.h.b16 %v1119
    %v4650 = vunpack.c.l.b16 %v1120
    %v4651 = vunpack.c.h.b16 %v1120
    %v4652 = vunpack.c.l.b16 %v1121
    %v4653 = vunpack.c.h.b16 %v1121
    %v4654 = vunpack.c.l.b16 %v1122
    %v4655 = vunpack.c.h.b16 %v1122
    %v4656 = vunpack.c.l.b16 %v1123
    %v4657 = vunpack.c.h.b16 %v1123
    %v4658 = vunpack.c.l.b16 %v1124
    %v4659 = vunpack.c.h.b16 %v1124
    %v4660 = vunpack.c.l.b16 %v1125
    %v4661 = vunpack.c.h.b16 %v1125
    %v4662 = vunpack.c.l.b16 %v1126
    %v4663 = vunpack.c.h.b16 %v1126
    %v4664 = vunpack.c.l.b16 %v1127
    %v4665 = vunpack.c.h.b16 %v1127
    %v4666 = vunpack.c.l.b16 %v1128
    %v4667 = vunpack.c.h.b16 %v1128
    %v4668 = vunpack.c.l.b16 %v1129
    %v4669 = vunpack.c.h.b16 %v1129
    %v4670 = vunpack.c.l.b16 %v1130
    %v4671 = vunpack.c.h.b16 %v1130
    %v4672 = vunpack.c.l.b16 %v1131
    %v4673 = vunpack.c.h.b16 %v1131
    %v4674 = vunpack.c.l.b16 %v1132
    %v4675 = vunpack.c.h.b16 %v1132
    %v4676 = vunpack.c.l.b16 %v1133
    %v4677 = vunpack.c.h.b16 %v1133
    %v4678 = vunpack.c.l.b16 %v1134
    %v4679 = vunpack.c.h.b16 %v1134
    %v4680 = vunpack.c.l.b16 %v1135
    %v4681 = vunpack.c.h.b16 %v1135
    %v4682 = vunpack.c.l.b16 %v1136
    %v4683 = vunpack.c.h.b16 %v1136
    %v4684 = vunpack.c.l.b16 %v1137
    %v4685 = vunpack.c.h.b16 %v1137
    %v4686 = vunpack.c.l.b16 %v1138
    %v4687 = vunpack.c.h.b16 %v1138
    %v4688 = vunpack.c.l.b16 %v1139
    %v4689 = vunpack.c.h.b16 %v1139
    %v4690 = vunpack.c.l.b16 %v1140
    %v4691 = vunpack.c.h.b16 %v1140
    %v4692 = vunpack.c.l.b16 %v1141
    %v4693 = vunpack.c.h.b16 %v1141
    %v4694 = vunpack.c.l.b16 %v1142
    %v4695 = vunpack.c.h.b16 %v1142
    %v4696 = vunpack.c.l.b16 %v1143
    %v4697 = vunpack.c.h.b16 %v1143
    %v4698 = vunpack.c.l.b16 %v1144
    %v4699 = vunpack.c.h.b16 %v1144
    %v4700 = vunpack.c.l.b16 %v1145
    %v4701 = vunpack.c.h.b16 %v1145
    %v4702 = vunpack.c.l.b16 %v1146
    %v4703 = vunpack.c.h.b16 %v1146
    %v4704 = vunpack.c.l.b16 %v1147
    %v4705 = vunpack.c.h.b16 %v1147
    %v4706 = vunpack.c.l.b16 %v1148
    %v4707 = vunpack.c.h.b16 %v1148
    %v4708 = vunpack.c.l.b16 %v1149
    %v4709 = vunpack.c.h.b16 %v1149
    %v4710 = vunpack.c.l.b16 %v1150
    %v4711 = vunpack.c.h.b16 %v1150
    %v4712 = vunpack.c.l.b16 %v1151
    %v4713 = vunpack.c.h.b16 %v1151
    %v4714 = vunpack.c.l.b16 %v1152
    %v4715 = vunpack.c.h.b16 %v1152
    %v4716 = vunpack.c.l.b16 %v1153
    %v4717 = vunpack.c.h.b16 %v1153
    %v4718 = vunpack.c.l.b16 %v1154
    %v4719 = vunpack.c.h.b16 %v1154
    %v4720 = vunpack.c.l.b16 %v1155
    %v4721 = vunpack.c.h.b16 %v1155
    %v4722 = vunpack.c.l.b16 %v1156
    %v4723 = vunpack.c.h.b16 %v1156
    %v4724 = vunpack.c.l.b16 %v1157
    %v4725 = vunpack.c.h.b16 %v1157
    %v4726 = vunpack.c.l.b16 %v1158
    %v4727 = vunpack.c.h.b16 %v1158
    %v4728 = vunpack.c.l.b16 %v1159
    %v4729 = vunpack.c.h.b16 %v1159
    %v4730 = vunpack.c.l.b16 %v1160
    %v4731 = vunpack.c.h.b16 %v1160
    %v4732 = vunpack.c.l.b16 %v1161
    %v4733 = vunpack.c.h.b16 %v1161
    %v4734 = vunpack.c.l.b16 %v1162
    %v4735 = vunpack.c.h.b16 %v1162
    %v4736 = vunpack.c.l.b16 %v1163
    %v4737 = vunpack.c.h.b16 %v1163
    %v4738 = vunpack.c.l.b16 %v1164
    %v4739 = vunpack.c.h.b16 %v1164
    %v4740 = vunpack.c.l.b16 %v1165
    %v4741 = vunpack.c.h.b16 %v1165
    %v4742 = vunpack.c.l.b16 %v1166
    %v4743 = vunpack.c.h.b16 %v1166
    %v4744 = vunpack.c.l.b16 %v1167
    %v4745 = vunpack.c.h.b16 %v1167
    %v4746 = vunpack.c.l.b16 %v1168
    %v4747 = vunpack.c.h.b16 %v1168
    %v4748 = vunpack.c.l.b16 %v1169
    %v4749 = vunpack.c.h.b16 %v1169
    %v4750 = vunpack.c.l.b16 %v1170
    %v4751 = vunpack.c.h.b16 %v1170
    %v4752 = vunpack.c.l.b16 %v1171
    %v4753 = vunpack.c.h.b16 %v1171
    %v4754 = vunpack.c.l.b16 %v1172
    %v4755 = vunpack.c.h.b16 %v1172
    %v4756 = vunpack.c.l.b16 %v1173
    %v4757 = vunpack.c.h.b16 %v1173
    %v4758 = vunpack.c.l.b16 %v1174
    %v4759 = vunpack.c.h.b16 %v1174
    %v4760 = vunpack.c.l.b16 %v1175
    %v4761 = vunpack.c.h.b16 %v1175
    %v4762 = vunpack.c.l.b16 %v1176
    %v4763 = vunpack.c.h.b16 %v1176
    %v4764 = vunpack.c.l.b16 %v1177
    %v4765 = vunpack.c.h.b16 %v1177
    %v4766 = vunpack.c.l.b16 %v1178
    %v4767 = vunpack.c.h.b16 %v1178
    %v4768 = vunpack.c.l.b16 %v1179
    %v4769 = vunpack.c.h.b16 %v1179
    %v4770 = vunpack.c.l.b16 %v1180
    %v4771 = vunpack.c.h.b16 %v1180
    %v4772 = vunpack.c.l.b16 %v1181
    %v4773 = vunpack.c.h.b16 %v1181
    %v4774 = vunpack.c.l.b16 %v1182
    %v4775 = vunpack.c.h.b16 %v1182
    %v4776 = vunpack.c.l.b16 %v1183
    %v4777 = vunpack.c.h.b16 %v1183
    %v4778 = vunpack.c.l.b16 %v1184
    %v4779 = vunpack.c.h.b16 %v1184
    %v4780 = vunpack.c.l.b16 %v1185
    %v4781 = vunpack.c.h.b16 %v1185
    %v4782 = vunpack.c.l.b16 %v1186
    %v4783 = vunpack.c.h.b16 %v1186
    %v4784 = vunpack.c.l.b16 %v1187
    %v4785 = vunpack.c.h.b16 %v1187
    %v4786 = vunpack.c.l.b16 %v1188
    %v4787 = vunpack.c.h.b16 %v1188
    %v4788 = vunpack.c.l.b16 %v1189
    %v4789 = vunpack.c.h.b16 %v1189
    %v4790 = vunpack.c.l.b16 %v1190
    %v4791 = vunpack.c.h.b16 %v1190
    %v4792 = vunpack.c.l.b16 %v1191
    %v4793 = vunpack.c.h.b16 %v1191
    %v4794 = vunpack.c.l.b16 %v1192
    %v4795 = vunpack.c.h.b16 %v1192
    %v4796 = vunpack.c.l.b16 %v1193
    %v4797 = vunpack.c.h.b16 %v1193
    %v4798 = vunpack.c.l.b16 %v1194
    %v4799 = vunpack.c.h.b16 %v1194
    %v4800 = vunpack.c.l.b16 %v1195
    %v4801 = vunpack.c.h.b16 %v1195
    %v4802 = vunpack.c.l.b16 %v1196
    %v4803 = vunpack.c.h.b16 %v1196
    %v4804 = vunpack.c.l.b16 %v1197
    %v4805 = vunpack.c.h.b16 %v1197
    %v4806 = vunpack.c.l.b16 %v1198
    %v4807 = vunpack.c.h.b16 %v1198
    %v4808 = vunpack.c.l.b16 %v1199
    %v4809 = vunpack.c.h.b16 %v1199
    %v4810 = vunpack.c.l.b16 %v1200
    %v4811 = vunpack.c.h.b16 %v1200
    %v4812 = vunpack.c.l.b16 %v1201
    %v4813 = vunpack.c.h.b16 %v1201
    %v4814 = vunpack.c.l.b16 %v1202
    %v4815 = vunpack.c.h.b16 %v1202
    %v4816 = vunpack.c.l.b16 %v1203
    %v4817 = vunpack.c.h.b16 %v1203
    %v4818 = vunpack.c.l.b16 %v1204
    %v4819 = vunpack.c.h.b16 %v1204
    %v4820 = vunpack.c.l.b16 %v1205
    %v4821 = vunpack.c.h.b16 %v1205
    %v4822 = vunpack.c.l.b16 %v1206
    %v4823 = vunpack.c.h.b16 %v1206
    %v4824 = vunpack.c.l.b16 %v1207
    %v4825 = vunpack.c.h.b16 %v1207
    %v4826 = vunpack.c.l.b16 %v1208
    %v4827 = vunpack.c.h.b16 %v1208
    %v4828 = vunpack.c.l.b16 %v1209
    %v4829 = vunpack.c.h.b16 %v1209
    %v4830 = vunpack.c.l.b16 %v1210
    %v4831 = vunpack.c.h.b16 %v1210
    %v4832 = vunpack.c.l.b16 %v1211
    %v4833 = vunpack.c.h.b16 %v1211
    %v4834 = vunpack.c.l.b16 %v1212
    %v4835 = vunpack.c.h.b16 %v1212
    %v4836 = vunpack.c.l.b16 %v1213
    %v4837 = vunpack.c.h.b16 %v1213
    %v4838 = vunpack.c.l.b16 %v1214
    %v4839 = vunpack.c.h.b16 %v1214
    %v4840 = vpack.c.b16 %v2540, %v2536
    %v4841 = vpack.c.b16 %v2541, %v2537
    %v4842 = vpack.c.b16 %v2542, %v2538
    %v4843 = vpack.c.b16 %v2543, %v2539
    %v4844 = vpack.c.b16 %v2548, %v2544
    %v4845 = vpack.c.b16 %v2549, %v2545
    %v4846 = vpack.c.b16 %v2550, %v2546
    %v4847 = vpack.c.b16 %v2551, %v2547
    %v4848 = vpack.c.b16 %v2556, %v2552
    %v4849 = vpack.c.b16 %v2557, %v2553
    %v4850 = vpack.c.b16 %v2558, %v2554
    %v4851 = vpack.c.b16 %v2559, %v2555
    %v4852 = vpack.c.b16 %v2564, %v2560
    %v4853 = vpack.c.b16 %v2565, %v2561
    %v4854 = vpack.c.b16 %v2566, %v2562
    %v4855 = vpack.c.b16 %v2567, %v2563
    %v4856 = vpack.c.b16 %v2572, %v2568
    %v4857 = vpack.c.b16 %v2573, %v2569
    %v4858 = vpack.c.b16 %v2574, %v2570
    %v4859 = vpack.c.b16 %v2575, %v2571
    %v4860 = vpack.c.b16 %v2580, %v2576
    %v4861 = vpack.c.b16 %v2581, %v2577
    %v4862 = vpack.c.b16 %v2582, %v2578
    %v4863 = vpack.c.b16 %v2583, %v2579
    %v4864 = vpack.c.b16 %v2588, %v2584
    %v4865 = vpack.c.b16 %v2589, %v2585
    %v4866 = vpack.c.b16 %v2590, %v2586
    %v4867 = vpack.c.b16 %v2591, %v2587
    %v4868 = vpack.c.b16 %v2596, %v2592
    %v4869 = vpack.c.b16 %v2597, %v2593
    %v4870 = vpack.c.b16 %v2598, %v2594
    %v4871 = vpack.c.b16 %v2599, %v2595
    %v4872 = vpack.c.b16 %v2604, %v2600
    %v4873 = vpack.c.b16 %v2605, %v2601
    %v4874 = vpack.c.b16 %v2606, %v2602
    %v4875 = vpack.c.b16 %v2607, %v2603
    %v4876 = vpack.c.b16 %v2612, %v2608
    %v4877 = vpack.c.b16 %v2613, %v2609
    %v4878 = vpack.c.b16 %v2614, %v2610
    %v4879 = vpack.c.b16 %v2615, %v2611
    %v4880 = vpack.c.b16 %v2620, %v2616
    %v4881 = vpack.c.b16 %v2621, %v2617
    %v4882 = vpack.c.b16 %v2622, %v2618
    %v4883 = vpack.c.b16 %v2623, %v2619
    %v4884 = vpack.c.b16 %v2628, %v2624
    %v4885 = vpack.c.b16 %v2629, %v2625
    %v4886 = vpack.c.b16 %v2630, %v2626
    %v4887 = vpack.c.b16 %v2631, %v2627
    %v4888 = vpack.c.b16 %v2636, %v2632
    %v4889 = vpack.c.b16 %v2637, %v2633
    %v4890 = vpack.c.b16 %v2638, %v2634
    %v4891 = vpack.c.b16 %v2639, %v2635
    %v4892 = vpack.c.b16 %v2644, %v2640
    %v4893 = vpack.c.b16 %v2645, %v2641
    %v4894 = vpack.c.b16 %v2646, %v2642
    %v4895 = vpack.c.b16 %v2647, %v2643
    %v4896 = vpack.c.b16 %v2652, %v2648
    %v4897 = vpack.c.b16 %v2653, %v2649
    %v4898 = vpack.c.b16 %v2654, %v2650
    %v4899 = vpack.c.b16 %v2655, %v2651
    %v4900 = vpack.c.b16 %v2660, %v2656
    %v4901 = vpack.c.b16 %v2661, %v2657
    %v4902 = vpack.c.b16 %v2662, %v2658
    %v4903 = vpack.c.b16 %v2663, %v2659
    %v4904 = vpack.c.b16 %v2668, %v2664
    %v4905 = vpack.c.b16 %v2669, %v2665
    %v4906 = vpack.c.b16 %v2670, %v2666
    %v4907 = vpack.c.b16 %v2671, %v2667
    %v4908 = vpack.c.b16 %v2676, %v2672
    %v4909 = vpack.c.b16 %v2677, %v2673
    %v4910 = vpack.c.b16 %v2678, %v2674
    %v4911 = vpack.c.b16 %v2679, %v2675
    %v4912 = vpack.c.b16 %v2684, %v2680
    %v4913 = vpack.c.b16 %v2685, %v2681
    %v4914 = vpack.c.b16 %v2686, %v2682
    %v4915 = vpack.c.b16 %v2687, %v2683
    %v4916 = vpack.c.b16 %v2692, %v2688
    %v4917 = vpack.c.b16 %v2693, %v2689
    %v4918 = vpack.c.b16 %v2694, %v2690
    %v4919 = vpack.c.b16 %v2695, %v2691
    %v4920 = vpack.c.b16 %v2700, %v2696
    %v4921 = vpack.c.b16 %v2701, %v2697
    %v4922 = vpack.c.b16 %v2702, %v2698
    %v4923 = vpack.c.b16 %v2703, %v2699
    %v4924 = vpack.c.b16 %v2708, %v2704
    %v4925 = vpack.c.b16 %v2709, %v2705
    %v4926 = vpack.c.b16 %v2710, %v2706
    %v4927 = vpack.c.b16 %v2711, %v2707
    %v4928 = vpack.c.b16 %v2716, %v2712
    %v4929 = vpack.c.b16 %v2717, %v2713
    %v4930 = vpack.c.b16 %v2718, %v2714
    %v4931 = vpack.c.b16 %v2719, %v2715
    %v4932 = vpack.c.b16 %v2724, %v2720
    %v4933 = vpack.c.b16 %v2725, %v2721
    %v4934 = vpack.c.b16 %v2726, %v2722
    %v4935 = vpack.c.b16 %v2727, %v2723
    %v4936 = vpack.c.b16 %v2732, %v2728
    %v4937 = vpack.c.b16 %v2733, %v2729
    %v4938 = vpack.c.b16 %v2734, %v2730
    %v4939 = vpack.c.b16 %v2735, %v2731
    %v4940 = vpack.c.b16 %v2740, %v2736
    %v4941 = vpack.c.b16 %v2741, %v2737
    %v4942 = vpack.c.b16 %v2742, %v2738
    %v4943 = vpack.c.b16 %v2743, %v2739
    %v4944 = vpack.c.b16 %v2748, %v2744
    %v4945 = vpack.c.b16 %v2749, %v2745
    %v4946 = vpack.c.b16 %v2750, %v2746
    %v4947 = vpack.c.b16 %v2751, %v2747
    %v4948 = vpack.c.b16 %v2756, %v2752
    %v4949 = vpack.c.b16 %v2757, %v2753
    %v4950 = vpack.c.b16 %v2758, %v2754
    %v4951 = vpack.c.b16 %v2759, %v2755
    %v4952 = vpack.c.b16 %v2764, %v2760
    %v4953 = vpack.c.b16 %v2765, %v2761
    %v4954 = vpack.c.b16 %v2766, %v2762
    %v4955 = vpack.c.b16 %v2767, %v2763
    %v4956 = vpack.c.b16 %v2772, %v2768
    %v4957 = vpack.c.b16 %v2773, %v2769
    %v4958 = vpack.c.b16 %v2774, %v2770
    %v4959 = vpack.c.b16 %v2775, %v2771
    %v4960 = vpack.c.b16 %v2780, %v2776
    %v4961 = vpack.c.b16 %v2781, %v2777
    %v4962 = vpack.c.b16 %v2782, %v2778
    %v4963 = vpack.c.b16 %v2783, %v2779
    %v4964 = vpack.c.b16 %v2788, %v2784
    %v4965 = vpack.c.b16 %v2789, %v2785
    %v4966 = vpack.c.b16 %v2790, %v2786
    %v4967 = vpack.c.b16 %v2791, %v2787
    %v4968 = vpack.c.b16 %v2796, %v2792
    %v4969 = vpack.c.b16 %v2797, %v2793
    %v4970 = vpack.c.b16 %v2798, %v2794
    %v4971 = vpack.c.b16 %v2799, %v2795
    %v4972 = vpack.c.b16 %v2804, %v2800
    %v4973 = vpack.c.b16 %v2805, %v2801
    %v4974 = vpack.c.b16 %v2806, %v2802
    %v4975 = vpack.c.b16 %v2807, %v2803
    %v4976 = vpack.c.b16 %v2812, %v2808
    %v4977 = vpack.c.b16 %v2813, %v2809
    %v4978 = vpack.c.b16 %v2814, %v2810
    %v4979 = vpack.c.b16 %v2815, %v2811
    %v4980 = vpack.c.b16 %v2820, %v2816
    %v4981 = vpack.c.b16 %v2821, %v2817
    %v4982 = vpack.c.b16 %v2822, %v2818
    %v4983 = vpack.c.b16 %v2823, %v2819
    %v4984 = vpack.c.b16 %v2828, %v2824
    %v4985 = vpack.c.b16 %v2829, %v2825
    %v4986 = vpack.c.b16 %v2830, %v2826
    %v4987 = vpack.c.b16 %v2831, %v2827
    %v4988 = vpack.c.b16 %v2836, %v2832
    %v4989 = vpack.c.b16 %v2837, %v2833
    %v4990 = vpack.c.b16 %v2838, %v2834
    %v4991 = vpack.c.b16 %v2839, %v2835
    %v4992 = vpack.c.b16 %v2844, %v2840
    %v4993 = vpack.c.b16 %v2845, %v2841
    %v4994 = vpack.c.b16 %v2846, %v2842
    %v4995 = vpack.c.b16 %v2847, %v2843
    %v4996 = vpack.c.b16 %v2852, %v2848
    %v4997 = vpack.c.b16 %v2853, %v2849
    %v4998 = vpack.c.b16 %v2854, %v2850
    %v4999 = vpack.c.b16 %v2855, %v2851
    %v5000 = vpack.c.b16 %v2860, %v2856
    %v5001 = vpack.c.b16 %v2861, %v2857
    %v5002 = vpack.c.b16 %v2862, %v2858
    %v5003 = vpack.c.b16 %v2863, %v2859
    %v5004 = vpack.c.b16 %v2868, %v2864
    %v5005 = vpack.c.b16 %v2869, %v2865
    %v5006 = vpack.c.b16 %v2870, %v2866
    %v5007 = vpack.c.b16 %v2871, %v2867
    %v5008 = vpack.c.b16 %v2876, %v2872
    %v5009 = vpack.c.b16 %v2877, %v2873
    %v5010 = vpack.c.b16 %v2878, %v2874
    %v5011 = vpack.c.b16 %v2879, %v2875
    %v5012 = vpack.c.b16 %v2884, %v2880
    %v5013 = vpack.c.b16 %v2885, %v2881
    %v5014 = vpack.c.b16 %v2886, %v2882
    %v5015 = vpack.c.b16 %v2887, %v2883
    %v5016 = vpack.c.b16 %v2892, %v2888
    %v5017 = vpack.c.b16 %v2893, %v2889
    %v5018 = vpack.c.b16 %v2894, %v2890
    %v5019 = vpack.c.b16 %v2895, %v2891
    %v5020 = vpack.c.b16 %v2900, %v2896
    %v5021 = vpack.c.b16 %v2901, %v2897
    %v5022 = vpack.c.b16 %v2902, %v2898
    %v5023 = vpack.c.b16 %v2903, %v2899
    %v5024 = vpack.c.b16 %v2908, %v2904
    %v5025 = vpack.c.b16 %v2909, %v2905
    %v5026 = vpack.c.b16 %v2910, %v2906
    %v5027 = vpack.c.b16 %v2911, %v2907
    %v5028 = vpack.c.b16 %v2916, %v2912
    %v5029 = vpack.c.b16 %v2917, %v2913
    %v5030 = vpack.c.b16 %v2918, %v2914
    %v5031 = vpack.c.b16 %v2919, %v2915
    %v5032 = vpack.c.b16 %v2924, %v2920
    %v5033 = vpack.c.b16 %v2925, %v2921
    %v5034 = vpack.c.b16 %v2926, %v2922
    %v5035 = vpack.c.b16 %v2927, %v2923
    %v5036 = vpack.c.b16 %v2932, %v2928
    %v5037 = vpack.c.b16 %v2933, %v2929
    %v5038 = vpack.c.b16 %v2934, %v2930
    %v5039 = vpack.c.b16 %v2935, %v2931
    %v5040 = vpack.c.b16 %v2940, %v2936
    %v5041 = vpack.c.b16 %v2941, %v2937
    %v5042 = vpack.c.b16 %v2942, %v2938
    %v5043 = vpack.c.b16 %v2943, %v2939
    %v5044 = vpack.c.b16 %v2948, %v2944
    %v5045 = vpack.c.b16 %v2949, %v2945
    %v5046 = vpack.c.b16 %v2950, %v2946
    %v5047 = vpack.c.b16 %v2951, %v2947
    %v5048 = vpack.c.b16 %v2956, %v2952
    %v5049 = vpack.c.b16 %v2957, %v2953
    %v5050 = vpack.c.b16 %v2958, %v2954
    %v5051 = vpack.c.b16 %v2959, %v2955
    %v5052 = vpack.c.b16 %v2964, %v2960
    %v5053 = vpack.c.b16 %v2965, %v2961
    %v5054 = vpack.c.b16 %v2966, %v2962
    %v5055 = vpack.c.b16 %v2967, %v2963
    %v5056 = vpack.c.b16 %v2972, %v2968
    %v5057 = vpack.c.b16 %v2973, %v2969
    %v5058 = vpack.c.b16 %v2974, %v2970
    %v5059 = vpack.c.b16 %v2975, %v2971
    %v5060 = vpack.c.b16 %v2980, %v2976
    %v5061 = vpack.c.b16 %v2981, %v2977
    %v5062 = vpack.c.b16 %v2982, %v2978
    %v5063 = vpack.c.b16 %v2983, %v2979
    %v5064 = vpack.c.b16 %v2988, %v2984
    %v5065 = vpack.c.b16 %v2989, %v2985
    %v5066 = vpack.c.b16 %v2990, %v2986
    %v5067 = vpack.c.b16 %v2991, %v2987
    %v5068 = vpack.c.b16 %v2996, %v2992
    %v5069 = vpack.c.b16 %v2997, %v2993
    %v5070 = vpack.c.b16 %v2998, %v2994
    %v5071 = vpack.c.b16 %v2999, %v2995
    %v5072 = vpack.c.b16 %v3004, %v3000
    %v5073 = vpack.c.b16 %v3005, %v3001
    %v5074 = vpack.c.b16 %v3006, %v3002
    %v5075 = vpack.c.b16 %v3007, %v3003
    %v5076 = vpack.c.b16 %v3012, %v3008
    %v5077 = vpack.c.b16 %v3013, %v3009
    %v5078 = vpack.c.b16 %v3014, %v3010
    %v5079 = vpack.c.b16 %v3015, %v3011
    %v5080 = vpack.c.b16 %v3020, %v3016
    %v5081 = vpack.c.b16 %v3021, %v3017
    %v5082 = vpack.c.b16 %v3022, %v3018
    %v5083 = vpack.c.b16 %v3023, %v3019
    %v5084 = vpack.c.b16 %v3028, %v3024
    %v5085 = vpack.c.b16 %v3029, %v3025
    %v5086 = vpack.c.b16 %v3030, %v3026
    %v5087 = vpack.c.b16 %v3031, %v3027
    %v5088 = vpack.c.b16 %v3036, %v3032
    %v5089 = vpack.c.b16 %v3037, %v3033
    %v5090 = vpack.c.b16 %v3038, %v3034
    %v5091 = vpack.c.b16 %v3039, %v3035
    %v5092 = vpack.c.b16 %v3044, %v3040
    %v5093 = vpack.c.b16 %v3045, %v3041
    %v5094 = vpack.c.b16 %v3046, %v3042
    %v5095 = vpack.c.b16 %v3047, %v3043
    %v5096 = vpack.c.b16 %v3052, %v3048
    %v5097 = vpack.c.b16 %v3053, %v3049
    %v5098 = vpack.c.b16 %v3054, %v3050
    %v5099 = vpack.c.b16 %v3055, %v3051
    %v5100 = vpack.c.b16 %v3060, %v3056
    %v5101 = vpack.c.b16 %v3061, %v3057
    %v5102 = vpack.c.b16 %v3062, %v3058
    %v5103 = vpack.c.b16 %v3063, %v3059
    %v5104 = vpack.c.b16 %v3068, %v3064
    %v5105 = vpack.c.b16 %v3069, %v3065
    %v5106 = vpack.c.b16 %v3070, %v3066
    %v5107 = vpack.c.b16 %v3071, %v3067
    %v5108 = vpack.c.b16 %v3076, %v3072
    %v5109 = vpack.c.b16 %v3077, %v3073
    %v5110 = vpack.c.b16 %v3078, %v3074
    %v5111 = vpack.c.b16 %v3079, %v3075
    %v5112 = vpack.c.b16 %v3084, %v3080
    %v5113 = vpack.c.b16 %v3085, %v3081
    %v5114 = vpack.c.b16 %v3086, %v3082
    %v5115 = vpack.c.b16 %v3087, %v3083
    %v5116 = vpack.c.b16 %v3092, %v3088
    %v5117 = vpack.c.b16 %v3093, %v3089
    %v5118 = vpack.c.b16 %v3094, %v3090
    %v5119 = vpack.c.b16 %v3095, %v3091
    %v5120 = vpack.c.b16 %v3100, %v3096
    %v5121 = vpack.c.b16 %v3101, %v3097
    %v5122 = vpack.c.b16 %v3102, %v3098
    %v5123 = vpack.c.b16 %v3103, %v3099
    %v5124 = vpack.c.b16 %v3108, %v3104
    %v5125 = vpack.c.b16 %v3109, %v3105
    %v5126 = vpack.c.b16 %v3110, %v3106
    %v5127 = vpack.c.b16 %v3111, %v3107
    %v5128 = vpack.c.b16 %v3116, %v3112
    %v5129 = vpack.c.b16 %v3117, %v3113
    %v5130 = vpack.c.b16 %v3118, %v3114
    %v5131 = vpack.c.b16 %v3119, %v3115
    %v5132 = vpack.c.b16 %v3124, %v3120
    %v5133 = vpack.c.b16 %v3125, %v3121
    %v5134 = vpack.c.b16 %v3126, %v3122
    %v5135 = vpack.c.b16 %v3127, %v3123
    %v5136 = vpack.c.b16 %v3132, %v3128
    %v5137 = vpack.c.b16 %v3133, %v3129
    %v5138 = vpack.c.b16 %v3134, %v3130
    %v5139 = vpack.c.b16 %v3135, %v3131
    %v5140 = vpack.c.b16 %v3140, %v3136
    %v5141 = vpack.c.b16 %v3141, %v3137
    %v5142 = vpack.c.b16 %v3142, %v3138
    %v5143 = vpack.c.b16 %v3143, %v3139
    %v5144 = vpack.c.b16 %v3148, %v3144
    %v5145 = vpack.c.b16 %v3149, %v3145
    %v5146 = vpack.c.b16 %v3150, %v3146
    %v5147 = vpack.c.b16 %v3151, %v3147
    %v5148 = vpack.c.b16 %v3156, %v3152
    %v5149 = vpack.c.b16 %v3157, %v3153
    %v5150 = vpack.c.b16 %v3158, %v3154
    %v5151 = vpack.c.b16 %v3159, %v3155
    %v5152 = vpack.c.b16 %v3164, %v3160
    %v5153 = vpack.c.b16 %v3165, %v3161
    %v5154 = vpack.c.b16 %v3166, %v3162
    %v5155 = vpack.c.b16 %v3167, %v3163
    %v5156 = vpack.c.b16 %v3172, %v3168
    %v5157 = vpack.c.b16 %v3173, %v3169
    %v5158 = vpack.c.b16 %v3174, %v3170
    %v5159 = vpack.c.b16 %v3175, %v3171
    %v5160 = vpack.c.b16 %v3180, %v3176
    %v5161 = vpack.c.b16 %v3181, %v3177
    %v5162 = vpack.c.b16 %v3182, %v3178
    %v5163 = vpack.c.b16 %v3183, %v3179
    %v5164 = vpack.c.b16 %v3188, %v3184
    %v5165 = vpack.c.b16 %v3189, %v3185
    %v5166 = vpack.c.b16 %v3190, %v3186
    %v5167 = vpack.c.b16 %v3191, %v3187
    %v5168 = vpack.c.b16 %v3196, %v3192
    %v5169 = vpack.c.b16 %v3197, %v3193
    %v5170 = vpack.c.b16 %v3198, %v3194
    %v5171 = vpack.c.b16 %v3199, %v3195
    %v5172 = vpack.c.b16 %v3204, %v3200
    %v5173 = vpack.c.b16 %v3205, %v3201
    %v5174 = vpack.c.b16 %v3206, %v3202
    %v5175 = vpack.c.b16 %v3207, %v3203
    %v5176 = vpack.c.b16 %v3212, %v3208
    %v5177 = vpack.c.b16 %v3213, %v3209
    %v5178 = vpack.c.b16 %v3214, %v3210
    %v5179 = vpack.c.b16 %v3215, %v3211
    %v5180 = vpack.c.b16 %v3220, %v3216
    %v5181 = vpack.c.b16 %v3221, %v3217
    %v5182 = vpack.c.b16 %v3222, %v3218
    %v5183 = vpack.c.b16 %v3223, %v3219
    %v5184 = vpack.c.b16 %v3228, %v3224
    %v5185 = vpack.c.b16 %v3229, %v3225
    %v5186 = vpack.c.b16 %v3230, %v3226
    %v5187 = vpack.c.b16 %v3231, %v3227
    %v5188 = vpack.c.b16 %v3236, %v3232
    %v5189 = vpack.c.b16 %v3237, %v3233
    %v5190 = vpack.c.b16 %v3238, %v3234
    %v5191 = vpack.c.b16 %v3239, %v3235
    %v5192 = vpack.c.b16 %v3244, %v3240
    %v5193 = vpack.c.b16 %v3245, %v3241
    %v5194 = vpack.c.b16 %v3246, %v3242
    %v5195 = vpack.c.b16 %v3247, %v3243
    %v5196 = vpack.c.b16 %v3252, %v3248
    %v5197 = vpack.c.b16 %v3253, %v3249
    %v5198 = vpack.c.b16 %v3254, %v3250
    %v5199 = vpack.c.b16 %v3255, %v3251
    %v5200 = vpack.c.b16 %v3260, %v3256
    %v5201 = vpack.c.b16 %v3261, %v3257
    %v5202 = vpack.c.b16 %v3262, %v3258
    %v5203 = vpack.c.b16 %v3263, %v3259
    %v5204 = vpack.c.b16 %v3268, %v3264
    %v5205 = vpack.c.b16 %v3269, %v3265
    %v5206 = vpack.c.b16 %v3270, %v3266
    %v5207 = vpack.c.b16 %v3271, %v3267
    %v5208 = vpack.c.b16 %v3276, %v3272
    %v5209 = vpack.c.b16 %v3277, %v3273
    %v5210 = vpack.c.b16 %v3278, %v3274
    %v5211 = vpack.c.b16 %v3279, %v3275
    %v5212 = vpack.c.b16 %v3284, %v3280
    %v5213 = vpack.c.b16 %v3285, %v3281
    %v5214 = vpack.c.b16 %v3286, %v3282
    %v5215 = vpack.c.b16 %v3287, %v3283
    %v5216 = vpack.c.b16 %v3292, %v3288
    %v5217 = vpack.c.b16 %v3293, %v3289
    %v5218 = vpack.c.b16 %v3294, %v3290
    %v5219 = vpack.c.b16 %v3295, %v3291
    %v5220 = vpack.c.b16 %v3300, %v3296
    %v5221 = vpack.c.b16 %v3301, %v3297
    %v5222 = vpack.c.b16 %v3302, %v3298
    %v5223 = vpack.c.b16 %v3303, %v3299
    %v5224 = vpack.c.b16 %v3308, %v3304
    %v5225 = vpack.c.b16 %v3309, %v3305
    %v5226 = vpack.c.b16 %v3310, %v3306
    %v5227 = vpack.c.b16 %v3311, %v3307
    %v5228 = vpack.c.b16 %v3316, %v3312
    %v5229 = vpack.c.b16 %v3317, %v3313
    %v5230 = vpack.c.b16 %v3318, %v3314
    %v5231 = vpack.c.b16 %v3319, %v3315
    %v5232 = vpack.c.b16 %v3324, %v3320
    %v5233 = vpack.c.b16 %v3325, %v3321
    %v5234 = vpack.c.b16 %v3326, %v3322
    %v5235 = vpack.c.b16 %v3327, %v3323
    %v5236 = vpack.c.b16 %v3332, %v3328
    %v5237 = vpack.c.b16 %v3333, %v3329
    %v5238 = vpack.c.b16 %v3334, %v3330
    %v5239 = vpack.c.b16 %v3335, %v3331
    %v5240 = vpack.c.b16 %v3340, %v3336
    %v5241 = vpack.c.b16 %v3341, %v3337
    %v5242 = vpack.c.b16 %v3342, %v3338
    %v5243 = vpack.c.b16 %v3343, %v3339
    %v5244 = vpack.c.b16 %v3348, %v3344
    %v5245 = vpack.c.b16 %v3349, %v3345
    %v5246 = vpack.c.b16 %v3350, %v3346
    %v5247 = vpack.c.b16 %v3351, %v3347
    %v5248 = vpack.c.b16 %v3356, %v3352
    %v5249 = vpack.c.b16 %v3357, %v3353
    %v5250 = vpack.c.b16 %v3358, %v3354
    %v5251 = vpack.c.b16 %v3359, %v3355
    %v5252 = vpack.c.b16 %v3364, %v3360
    %v5253 = vpack.c.b16 %v3365, %v3361
    %v5254 = vpack.c.b16 %v3366, %v3362
    %v5255 = vpack.c.b16 %v3367, %v3363
    %v5256 = vpack.c.b16 %v3372, %v3368
    %v5257 = vpack.c.b16 %v3373, %v3369
    %v5258 = vpack.c.b16 %v3374, %v3370
    %v5259 = vpack.c.b16 %v3375, %v3371
    %v5260 = vpack.c.b16 %v3380, %v3376
    %v5261 = vpack.c.b16 %v3381, %v3377
    %v5262 = vpack.c.b16 %v3382, %v3378
    %v5263 = vpack.c.b16 %v3383, %v3379
    %v5264 = vpack.c.b16 %v3388, %v3384
    %v5265 = vpack.c.b16 %v3389, %v3385
    %v5266 = vpack.c.b16 %v3390, %v3386
    %v5267 = vpack.c.b16 %v3391, %v3387
    %v5268 = vpack.c.b16 %v3396, %v3392
    %v5269 = vpack.c.b16 %v3397, %v3393
    %v5270 = vpack.c.b16 %v3398, %v3394
    %v5271 = vpack.c.b16 %v3399, %v3395
    %v5272 = vpack.c.b16 %v3404, %v3400
    %v5273 = vpack.c.b16 %v3405, %v3401
    %v5274 = vpack.c.b16 %v3406, %v3402
    %v5275 = vpack.c.b16 %v3407, %v3403
    %v5276 = vpack.c.b16 %v3412, %v3408
    %v5277 = vpack.c.b16 %v3413, %v3409
    %v5278 = vpack.c.b16 %v3414, %v3410
    %v5279 = vpack.c.b16 %v3415, %v3411
    %v5280 = vpack.c.b16 %v3420, %v3416
    %v5281 = vpack.c.b16 %v3421, %v3417
    %v5282 = vpack.c.b16 %v3422, %v3418
    %v5283 = vpack.c.b16 %v3423, %v3419
    %v5284 = vpack.c.b16 %v3428, %v3424
    %v5285 = vpack.c.b16 %v3429, %v3425
    %v5286 = vpack.c.b16 %v3430, %v3426
    %v5287 = vpack.c.b16 %v3431, %v3427
    %v5288 = vpack.c.b16 %v3436, %v3432
    %v5289 = vpack.c.b16 %v3437, %v3433
    %v5290 = vpack.c.b16 %v3438, %v3434
    %v5291 = vpack.c.b16 %v3439, %v3435
    %v5292 = vpack.c.b16 %v3444, %v3440
    %v5293 = vpack.c.b16 %v3445, %v3441
    %v5294 = vpack.c.b16 %v3446, %v3442
    %v5295 = vpack.c.b16 %v3447, %v3443
    %v5296 = vpack.c.b16 %v3452, %v3448
    %v5297 = vpack.c.b16 %v3453, %v3449
    %v5298 = vpack.c.b16 %v3454, %v3450
    %v5299 = vpack.c.b16 %v3455, %v3451
    %v5300 = vpack.c.b16 %v3460, %v3456
    %v5301 = vpack.c.b16 %v3461, %v3457
    %v5302 = vpack.c.b16 %v3462, %v3458
    %v5303 = vpack.c.b16 %v3463, %v3459
    %v5304 = vpack.c.b16 %v3468, %v3464
    %v5305 = vpack.c.b16 %v3469, %v3465
    %v5306 = vpack.c.b16 %v3470, %v3466
    %v5307 = vpack.c.b16 %v3471, %v3467
    %v5308 = vpack.c.b16 %v3476, %v3472
    %v5309 = vpack.c.b16 %v3477, %v3473
    %v5310 = vpack.c.b16 %v3478, %v3474
    %v5311 = vpack.c.b16 %v3479, %v3475
    %v5312 = vpack.c.b16 %v3484, %v3480
    %v5313 = vpack.c.b16 %v3485, %v3481
    %v5314 = vpack.c.b16 %v3486, %v3482
    %v5315 = vpack.c.b16 %v3487, %v3483
    %v5316 = vpack.c.b16 %v3492, %v3488
    %v5317 = vpack.c.b16 %v3493, %v3489
    %v5318 = vpack.c.b16 %v3494, %v3490
    %v5319 = vpack.c.b16 %v3495, %v3491
    %v5320 = vpack.c.b16 %v3500, %v3496
    %v5321 = vpack.c.b16 %v3501, %v3497
    %v5322 = vpack.c.b16 %v3502, %v3498
    %v5323 = vpack.c.b16 %v3503, %v3499
    %v5324 = vpack.c.b16 %v3508, %v3504
    %v5325 = vpack.c.b16 %v3509, %v3505
    %v5326 = vpack.c.b16 %v3510, %v3506
    %v5327 = vpack.c.b16 %v3511, %v3507
    %v5328 = vpack.c.b16 %v3516, %v3512
    %v5329 = vpack.c.b16 %v3517, %v3513
    %v5330 = vpack.c.b16 %v3518, %v3514
    %v5331 = vpack.c.b16 %v3519, %v3515
    %v5332 = vpack.c.b16 %v3524, %v3520
    %v5333 = vpack.c.b16 %v3525, %v3521
    %v5334 = vpack.c.b16 %v3526, %v3522
    %v5335 = vpack.c.b16 %v3527, %v3523
    %v5336 = vpack.c.b16 %v3532, %v3528
    %v5337 = vpack.c.b16 %v3533, %v3529
    %v5338 = vpack.c.b16 %v3534, %v3530
    %v5339 = vpack.c.b16 %v3535, %v3531
    %v5340 = vpack.c.b16 %v3540, %v3536
    %v5341 = vpack.c.b16 %v3541, %v3537
    %v5342 = vpack.c.b16 %v3542, %v3538
    %v5343 = vpack.c.b16 %v3543, %v3539
    %v5344 = vpack.c.b16 %v3548, %v3544
    %v5345 = vpack.c.b16 %v3549, %v3545
    %v5346 = vpack.c.b16 %v3550, %v3546
    %v5347 = vpack.c.b16 %v3551, %v3547
    %v5348 = vpack.c.b16 %v3556, %v3552
    %v5349 = vpack.c.b16 %v3557, %v3553
    %v5350 = vpack.c.b16 %v3558, %v3554
    %v5351 = vpack.c.b16 %v3559, %v3555
    %v5352 = vpack.c.b16 %v3564, %v3560
    %v5353 = vpack.c.b16 %v3565, %v3561
    %v5354 = vpack.c.b16 %v3566, %v3562
    %v5355 = vpack.c.b16 %v3567, %v3563
    %v5356 = vpack.c.b16 %v3572, %v3568
    %v5357 = vpack.c.b16 %v3573, %v3569
    %v5358 = vpack.c.b16 %v3574, %v3570
    %v5359 = vpack.c.b16 %v3575, %v3571
    %v5360 = vpack.c.b16 %v3580, %v3576
    %v5361 = vpack.c.b16 %v3581, %v3577
    %v5362 = vpack.c.b16 %v3582, %v3578
    %v5363 = vpack.c.b16 %v3583, %v3579
    %v5364 = vpack.c.b16 %v3588, %v3584
    %v5365 = vpack.c.b16 %v3589, %v3585
    %v5366 = vpack.c.b16 %v3590, %v3586
    %v5367 = vpack.c.b16 %v3591, %v3587
    %v5368 = vpack.c.b16 %v3596, %v3592
    %v5369 = vpack.c.b16 %v3597, %v3593
    %v5370 = vpack.c.b16 %v3598, %v3594
    %v5371 = vpack.c.b16 %v3599, %v3595
    %v5372 = vpack.c.b16 %v3604, %v3600
    %v5373 = vpack.c.b16 %v3605, %v3601
    %v5374 = vpack.c.b16 %v3606, %v3602
    %v5375 = vpack.c.b16 %v3607, %v3603
    %v5376 = vpack.c.b16 %v3612, %v3608
    %v5377 = vpack.c.b16 %v3613, %v3609
    %v5378 = vpack.c.b16 %v3614, %v3610
    %v5379 = vpack.c.b16 %v3615, %v3611
    %v5380 = vpack.c.b16 %v3620, %v3616
    %v5381 = vpack.c.b16 %v3621, %v3617
    %v5382 = vpack.c.b16 %v3622, %v3618
    %v5383 = vpack.c.b16 %v3623, %v3619
    %v5384 = vpack.c.b16 %v3628, %v3624
    %v5385 = vpack.c.b16 %v3629, %v3625
    %v5386 = vpack.c.b16 %v3630, %v3626
    %v5387 = vpack.c.b16 %v3631, %v3627
    %v5388 = vpack.c.b16 %v3636, %v3632
    %v5389 = vpack.c.b16 %v3637, %v3633
    %v5390 = vpack.c.b16 %v3638, %v3634
    %v5391 = vpack.c.b16 %v3639, %v3635
    %v5392 = vpack.c.b16 %v3644, %v3640
    %v5393 = vpack.c.b16 %v3645, %v3641
    %v5394 = vpack.c.b16 %v3646, %v3642
    %v5395 = vpack.c.b16 %v3647, %v3643
    %v5396 = vpack.c.b16 %v3652, %v3648
    %v5397 = vpack.c.b16 %v3653, %v3649
    %v5398 = vpack.c.b16 %v3654, %v3650
    %v5399 = vpack.c.b16 %v3655, %v3651
    %v5400 = vpack.c.b16 %v3660, %v3656
    %v5401 = vpack.c.b16 %v3661, %v3657
    %v5402 = vpack.c.b16 %v3662, %v3658
    %v5403 = vpack.c.b16 %v3663, %v3659
    %v5404 = vpack.c.b16 %v3668, %v3664
    %v5405 = vpack.c.b16 %v3669, %v3665
    %v5406 = vpack.c.b16 %v3670, %v3666
    %v5407 = vpack.c.b16 %v3671, %v3667
    %v5408 = vpack.c.b16 %v3676, %v3672
    %v5409 = vpack.c.b16 %v3677, %v3673
    %v5410 = vpack.c.b16 %v3678, %v3674
    %v5411 = vpack.c.b16 %v3679, %v3675
    %v5412 = vpack.c.b16 %v3684, %v3680
    %v5413 = vpack.c.b16 %v3685, %v3681
    %v5414 = vpack.c.b16 %v3686, %v3682
    %v5415 = vpack.c.b16 %v3687, %v3683
    %v5416 = vpack.c.b16 %v3692, %v3688
    %v5417 = vpack.c.b16 %v3693, %v3689
    %v5418 = vpack.c.b16 %v3694, %v3690
    %v5419 = vpack.c.b16 %v3695, %v3691
    %v5420 = vpack.c.b16 %v3700, %v3696
    %v5421 = vpack.c.b16 %v3701, %v3697
    %v5422 = vpack.c.b16 %v3702, %v3698
    %v5423 = vpack.c.b16 %v3703, %v3699
    %v5424 = vpack.c.b16 %v3708, %v3704
    %v5425 = vpack.c.b16 %v3709, %v3705
    %v5426 = vpack.c.b16 %v3710, %v3706
    %v5427 = vpack.c.b16 %v3711, %v3707
    %v5428 = vpack.c.b16 %v3716, %v3712
    %v5429 = vpack.c.b16 %v3717, %v3713
    %v5430 = vpack.c.b16 %v3718, %v3714
    %v5431 = vpack.c.b16 %v3719, %v3715
    %v5432 = vpack.c.b16 %v3724, %v3720
    %v5433 = vpack.c.b16 %v3725, %v3721
    %v5434 = vpack.c.b16 %v3726, %v3722
    %v5435 = vpack.c.b16 %v3727, %v3723
    %v5436 = vpack.c.b16 %v3732, %v3728
    %v5437 = vpack.c.b16 %v3733, %v3729
    %v5438 = vpack.c.b16 %v3734, %v3730
    %v5439 = vpack.c.b16 %v3735, %v3731
    %v5440 = vpack.c.b16 %v3740, %v3736
    %v5441 = vpack.c.b16 %v3741, %v3737
    %v5442 = vpack.c.b16 %v3742, %v3738
    %v5443 = vpack.c.b16 %v3743, %v3739
    %v5444 = vpack.c.b16 %v3748, %v3744
    %v5445 = vpack.c.b16 %v3749, %v3745
    %v5446 = vpack.c.b16 %v3750, %v3746
    %v5447 = vpack.c.b16 %v3751, %v3747
    %v5448 = vpack.c.b16 %v3756, %v3752
    %v5449 = vpack.c.b16 %v3757, %v3753
    %v5450 = vpack.c.b16 %v3758, %v3754
    %v5451 = vpack.c.b16 %v3759, %v3755
    %v5452 = vpack.c.b16 %v3764, %v3760
    %v5453 = vpack.c.b16 %v3765, %v3761
    %v5454 = vpack.c.b16 %v3766, %v3762
    %v5455 = vpack.c.b16 %v3767, %v3763
    %v5456 = vpack.c.b16 %v3772, %v3768
    %v5457 = vpack.c.b16 %v3773, %v3769
    %v5458 = vpack.c.b16 %v3774, %v3770
    %v5459 = vpack.c.b16 %v3775, %v3771
    %v5460 = vpack.c.b16 %v3780, %v3776
    %v5461 = vpack.c.b16 %v3781, %v3777
    %v5462 = vpack.c.b16 %v3782, %v3778
    %v5463 = vpack.c.b16 %v3783, %v3779
    %v5464 = vpack.c.b16 %v3788, %v3784
    %v5465 = vpack.c.b16 %v3789, %v3785
    %v5466 = vpack.c.b16 %v3790, %v3786
    %v5467 = vpack.c.b16 %v3791, %v3787
    %v5468 = vpack.c.b16 %v3796, %v3792
    %v5469 = vpack.c.b16 %v3797, %v3793
    %v5470 = vpack.c.b16 %v3798, %v3794
    %v5471 = vpack.c.b16 %v3799, %v3795
    %v5472 = vpack.c.b16 %v3804, %v3800
    %v5473 = vpack.c.b16 %v3805, %v3801
    %v5474 = vpack.c.b16 %v3806, %v3802
    %v5475 = vpack.c.b16 %v3807, %v3803
    %v5476 = vpack.c.b16 %v3812, %v3808
    %v5477 = vpack.c.b16 %v3813, %v3809
    %v5478 = vpack.c.b16 %v3814, %v3810
    %v5479 = vpack.c.b16 %v3815, %v3811
    %v5480 = vpack.c.b16 %v3820, %v3816
    %v5481 = vpack.c.b16 %v3821, %v3817
    %v5482 = vpack.c.b16 %v3822, %v3818
    %v5483 = vpack.c.b16 %v3823, %v3819
    %v5484 = vpack.c.b16 %v3828, %v3824
    %v5485 = vpack.c.b16 %v3829, %v3825
    %v5486 = vpack.c.b16 %v3830, %v3826
    %v5487 = vpack.c.b16 %v3831, %v3827
    %v5488 = vpack.c.b16 %v3836, %v3832
    %v5489 = vpack.c.b16 %v3837, %v3833
    %v5490 = vpack.c.b16 %v3838, %v3834
    %v5491 = vpack.c.b16 %v3839, %v3835
    %v5492 = vpack.c.b16 %v3844, %v3840
    %v5493 = vpack.c.b16 %v3845, %v3841
    %v5494 = vpack.c.b16 %v3846, %v3842
    %v5495 = vpack.c.b16 %v3847, %v3843
    %v5496 = vpack.c.b16 %v3852, %v3848
    %v5497 = vpack.c.b16 %v3853, %v3849
    %v5498 = vpack.c.b16 %v3854, %v3850
    %v5499 = vpack.c.b16 %v3855, %v3851
    %v5500 = vpack.c.b16 %v3860, %v3856
    %v5501 = vpack.c.b16 %v3861, %v3857
    %v5502 = vpack.c.b16 %v3862, %v3858
    %v5503 = vpack.c.b16 %v3863, %v3859
    %v5504 = vpack.c.b16 %v3868, %v3864
    %v5505 = vpack.c.b16 %v3869, %v3865
    %v5506 = vpack.c.b16 %v3870, %v3866
    %v5507 = vpack.c.b16 %v3871, %v3867
    %v5508 = vpack.c.b16 %v3876, %v3872
    %v5509 = vpack.c.b16 %v3877, %v3873
    %v5510 = vpack.c.b16 %v3878, %v3874
    %v5511 = vpack.c.b16 %v3879, %v3875
    %v5512 = vpack.c.b16 %v3884, %v3880
    %v5513 = vpack.c.b16 %v3885, %v3881
    %v5514 = vpack.c.b16 %v3886, %v3882
    %v5515 = vpack.c.b16 %v3887, %v3883
    %v5516 = vpack.c.b16 %v3892, %v3888
    %v5517 = vpack.c.b16 %v3893, %v3889
    %v5518 = vpack.c.b16 %v3894, %v3890
    %v5519 = vpack.c.b16 %v3895, %v3891
    %v5520 = vpack.c.b16 %v3900, %v3896
    %v5521 = vpack.c.b16 %v3901, %v3897
    %v5522 = vpack.c.b16 %v3902, %v3898
    %v5523 = vpack.c.b16 %v3903, %v3899
    %v5524 = vpack.c.b16 %v3908, %v3904
    %v5525 = vpack.c.b16 %v3909, %v3905
    %v5526 = vpack.c.b16 %v3910, %v3906
    %v5527 = vpack.c.b16 %v3911, %v3907
    %v5528 = vpack.c.b16 %v3916, %v3912
    %v5529 = vpack.c.b16 %v3917, %v3913
    %v5530 = vpack.c.b16 %v3918, %v3914
    %v5531 = vpack.c.b16 %v3919, %v3915
    %v5532 = vpack.c.b16 %v3924, %v3920
    %v5533 = vpack.c.b16 %v3925, %v3921
    %v5534 = vpack.c.b16 %v3926, %v3922
    %v5535 = vpack.c.b16 %v3927, %v3923
    %v5536 = vpack.c.b16 %v3932, %v3928
    %v5537 = vpack.c.b16 %v3933, %v3929
    %v5538 = vpack.c.b16 %v3934, %v3930
    %v5539 = vpack.c.b16 %v3935, %v3931
    %v5540 = vpack.c.b16 %v3940, %v3936
    %v5541 = vpack.c.b16 %v3941, %v3937
    %v5542 = vpack.c.b16 %v3942, %v3938
    %v5543 = vpack.c.b16 %v3943, %v3939
    %v5544 = vpack.c.b16 %v3948, %v3944
    %v5545 = vpack.c.b16 %v3949, %v3945
    %v5546 = vpack.c.b16 %v3950, %v3946
    %v5547 = vpack.c.b16 %v3951, %v3947
    %v5548 = vpack.c.b16 %v3956, %v3952
    %v5549 = vpack.c.b16 %v3957, %v3953
    %v5550 = vpack.c.b16 %v3958, %v3954
    %v5551 = vpack.c.b16 %v3959, %v3955
    %v5552 = vpack.c.b16 %v3964, %v3960
    %v5553 = vpack.c.b16 %v3965, %v3961
    %v5554 = vpack.c.b16 %v3966, %v3962
    %v5555 = vpack.c.b16 %v3967, %v3963
    %v5556 = vpack.c.b16 %v3972, %v3968
    %v5557 = vpack.c.b16 %v3973, %v3969
    %v5558 = vpack.c.b16 %v3974, %v3970
    %v5559 = vpack.c.b16 %v3975, %v3971
    %v5560 = vpack.c.b16 %v3980, %v3976
    %v5561 = vpack.c.b16 %v3981, %v3977
    %v5562 = vpack.c.b16 %v3982, %v3978
    %v5563 = vpack.c.b16 %v3983, %v3979
    %v5564 = vpack.c.b16 %v3988, %v3984
    %v5565 = vpack.c.b16 %v3989, %v3985
    %v5566 = vpack.c.b16 %v3990, %v3986
    %v5567 = vpack.c.b16 %v3991, %v3987
    %v5568 = vpack.c.b16 %v3996, %v3992
    %v5569 = vpack.c.b16 %v3997, %v3993
    %v5570 = vpack.c.b16 %v3998, %v3994
    %v5571 = vpack.c.b16 %v3999, %v3995
    %v5572 = vpack.c.b16 %v4004, %v4000
    %v5573 = vpack.c.b16 %v4005, %v4001
    %v5574 = vpack.c.b16 %v4006, %v4002
    %v5575 = vpack.c.b16 %v4007, %v4003
    %v5576 = vpack.c.b16 %v4012, %v4008
    %v5577 = vpack.c.b16 %v4013, %v4009
    %v5578 = vpack.c.b16 %v4014, %v4010
    %v5579 = vpack.c.b16 %v4015, %v4011
    %v5580 = vpack.c.b16 %v4020, %v4016
    %v5581 = vpack.c.b16 %v4021, %v4017
    %v5582 = vpack.c.b16 %v4022, %v4018
    %v5583 = vpack.c.b16 %v4023, %v4019
    %v5584 = vpack.c.b16 %v4028, %v4024
    %v5585 = vpack.c.b16 %v4029, %v4025
    %v5586 = vpack.c.b16 %v4030, %v4026
    %v5587 = vpack.c.b16 %v4031, %v4027
    %v5588 = vpack.c.b16 %v4036, %v4032
    %v5589 = vpack.c.b16 %v4037, %v4033
    %v5590 = vpack.c.b16 %v4038, %v4034
    %v5591 = vpack.c.b16 %v4039, %v4035
    %v5592 = vpack.c.b16 %v4044, %v4040
    %v5593 = vpack.c.b16 %v4045, %v4041
    %v5594 = vpack.c.b16 %v4046, %v4042
    %v5595 = vpack.c.b16 %v4047, %v4043
    %v5596 = vpack.c.b16 %v4052, %v4048
    %v5597 = vpack.c.b16 %v4053, %v4049
    %v5598 = vpack.c.b16 %v4054, %v4050
    %v5599 = vpack.c.b16 %v4055, %v4051
    %v5600 = vpack.c.b16 %v4060, %v4056
    %v5601 = vpack.c.b16 %v4061, %v4057
    %v5602 = vpack.c.b16 %v4062, %v4058
    %v5603 = vpack.c.b16 %v4063, %v4059
    %v5604 = vpack.c.b16 %v4068, %v4064
    %v5605 = vpack.c.b16 %v4069, %v4065
    %v5606 = vpack.c.b16 %v4070, %v4066
    %v5607 = vpack.c.b16 %v4071, %v4067
    %v5608 = vpack.c.b16 %v4076, %v4072
    %v5609 = vpack.c.b16 %v4077, %v4073
    %v5610 = vpack.c.b16 %v4078, %v4074
    %v5611 = vpack.c.b16 %v4079, %v4075
    %v5612 = vpack.c.b16 %v4084, %v4080
    %v5613 = vpack.c.b16 %v4085, %v4081
    %v5614 = vpack.c.b16 %v4086, %v4082
    %v5615 = vpack.c.b16 %v4087, %v4083
    %v5616 = vpack.c.b16 %v4092, %v4088
    %v5617 = vpack.c.b16 %v4093, %v4089
    %v5618 = vpack.c.b16 %v4094, %v4090
    %v5619 = vpack.c.b16 %v4095, %v4091
    %v5620 = vpack.c.b16 %v4100, %v4096
    %v5621 = vpack.c.b16 %v4101, %v4097
    %v5622 = vpack.c.b16 %v4102, %v4098
    %v5623 = vpack.c.b16 %v4103, %v4099
    %v5624 = vpack.c.b16 %v4108, %v4104
    %v5625 = vpack.c.b16 %v4109, %v4105
    %v5626 = vpack.c.b16 %v4110, %v4106
    %v5627 = vpack.c.b16 %v4111, %v4107
    %v5628 = vpack.c.b16 %v4116, %v4112
    %v5629 = vpack.c.b16 %v4117, %v4113
    %v5630 = vpack.c.b16 %v4118, %v4114
    %v5631 = vpack.c.b16 %v4119, %v4115
    %v5632 = vpack.c.b16 %v4124, %v4120
    %v5633 = vpack.c.b16 %v4125, %v4121
    %v5634 = vpack.c.b16 %v4126, %v4122
    %v5635 = vpack.c.b16 %v4127, %v4123
    %v5636 = vpack.c.b16 %v4132, %v4128
    %v5637 = vpack.c.b16 %v4133, %v4129
    %v5638 = vpack.c.b16 %v4134, %v4130
    %v5639 = vpack.c.b16 %v4135, %v4131
    %v5640 = vpack.c.b16 %v4140, %v4136
    %v5641 = vpack.c.b16 %v4141, %v4137
    %v5642 = vpack.c.b16 %v4142, %v4138
    %v5643 = vpack.c.b16 %v4143, %v4139
    %v5644 = vpack.c.b16 %v4148, %v4144
    %v5645 = vpack.c.b16 %v4149, %v4145
    %v5646 = vpack.c.b16 %v4150, %v4146
    %v5647 = vpack.c.b16 %v4151, %v4147
    %v5648 = vpack.c.b16 %v4156, %v4152
    %v5649 = vpack.c.b16 %v4157, %v4153
    %v5650 = vpack.c.b16 %v4158, %v4154
    %v5651 = vpack.c.b16 %v4159, %v4155
    %v5652 = vpack.c.b16 %v4164, %v4160
    %v5653 = vpack.c.b16 %v4165, %v4161
    %v5654 = vpack.c.b16 %v4166, %v4162
    %v5655 = vpack.c.b16 %v4167, %v4163
    %v5656 = vpack.c.b16 %v4172, %v4168
    %v5657 = vpack.c.b16 %v4173, %v4169
    %v5658 = vpack.c.b16 %v4174, %v4170
    %v5659 = vpack.c.b16 %v4175, %v4171
    %v5660 = vpack.c.b16 %v4180, %v4176
    %v5661 = vpack.c.b16 %v4181, %v4177
    %v5662 = vpack.c.b16 %v4182, %v4178
    %v5663 = vpack.c.b16 %v4183, %v4179
    %v5664 = vpack.c.b16 %v4188, %v4184
    %v5665 = vpack.c.b16 %v4189, %v4185
    %v5666 = vpack.c.b16 %v4190, %v4186
    %v5667 = vpack.c.b16 %v4191, %v4187
    %v5668 = vpack.c.b16 %v4196, %v4192
    %v5669 = vpack.c.b16 %v4197, %v4193
    %v5670 = vpack.c.b16 %v4198, %v4194
    %v5671 = vpack.c.b16 %v4199, %v4195
    %v5672 = vpack.c.b16 %v4204, %v4200
    %v5673 = vpack.c.b16 %v4205, %v4201
    %v5674 = vpack.c.b16 %v4206, %v4202
    %v5675 = vpack.c.b16 %v4207, %v4203
    %v5676 = vpack.c.b16 %v4212, %v4208
    %v5677 = vpack.c.b16 %v4213, %v4209
    %v5678 = vpack.c.b16 %v4214, %v4210
    %v5679 = vpack.c.b16 %v4215, %v4211
    %v5680 = vpack.c.b16 %v4220, %v4216
    %v5681 = vpack.c.b16 %v4221, %v4217
    %v5682 = vpack.c.b16 %v4222, %v4218
    %v5683 = vpack.c.b16 %v4223, %v4219
    %v5684 = vpack.c.b16 %v4228, %v4224
    %v5685 = vpack.c.b16 %v4229, %v4225
    %v5686 = vpack.c.b16 %v4230, %v4226
    %v5687 = vpack.c.b16 %v4231, %v4227
    %v5688 = vpack.c.b16 %v4236, %v4232
    %v5689 = vpack.c.b16 %v4237, %v4233
    %v5690 = vpack.c.b16 %v4238, %v4234
    %v5691 = vpack.c.b16 %v4239, %v4235
    %v5692 = vpack.c.b16 %v4244, %v4240
    %v5693 = vpack.c.b16 %v4245, %v4241
    %v5694 = vpack.c.b16 %v4246, %v4242
    %v5695 = vpack.c.b16 %v4247, %v4243
    %v5696 = vpack.c.b16 %v4252, %v4248
    %v5697 = vpack.c.b16 %v4253, %v4249
    %v5698 = vpack.c.b16 %v4254, %v4250
    %v5699 = vpack.c.b16 %v4255, %v4251
    %v5700 = vpack.c.b16 %v4260, %v4256
    %v5701 = vpack.c.b16 %v4261, %v4257
    %v5702 = vpack.c.b16 %v4262, %v4258
    %v5703 = vpack.c.b16 %v4263, %v4259
    %v5704 = vpack.c.b16 %v4268, %v4264
    %v5705 = vpack.c.b16 %v4269, %v4265
    %v5706 = vpack.c.b16 %v4270, %v4266
    %v5707 = vpack.c.b16 %v4271, %v4267
    %v5708 = vpack.c.b16 %v4276, %v4272
    %v5709 = vpack.c.b16 %v4277, %v4273
    %v5710 = vpack.c.b16 %v4278, %v4274
    %v5711 = vpack.c.b16 %v4279, %v4275
    %v5712 = vpack.c.b16 %v4284, %v4280
    %v5713 = vpack.c.b16 %v4285, %v4281
    %v5714 = vpack.c.b16 %v4286, %v4282
    %v5715 = vpack.c.b16 %v4287, %v4283
    %v5716 = vpack.c.b16 %v4292, %v4288
    %v5717 = vpack.c.b16 %v4293, %v4289
    %v5718 = vpack.c.b16 %v4294, %v4290
    %v5719 = vpack.c.b16 %v4295, %v4291
    %v5720 = vpack.c.b16 %v4300, %v4296
    %v5721 = vpack.c.b16 %v4301, %v4297
    %v5722 = vpack.c.b16 %v4302, %v4298
    %v5723 = vpack.c.b16 %v4303, %v4299
    %v5724 = vpack.c.b16 %v4308, %v4304
    %v5725 = vpack.c.b16 %v4309, %v4305
    %v5726 = vpack.c.b16 %v4310, %v4306
    %v5727 = vpack.c.b16 %v4311, %v4307
    %v5728 = vpack.c.b16 %v4316, %v4312
    %v5729 = vpack.c.b16 %v4317, %v4313
    %v5730 = vpack.c.b16 %v4318, %v4314
    %v5731 = vpack.c.b16 %v4319, %v4315
    %v5732 = vpack.c.b16 %v4324, %v4320
    %v5733 = vpack.c.b16 %v4325, %v4321
    %v5734 = vpack.c.b16 %v4326, %v4322
    %v5735 = vpack.c.b16 %v4327, %v4323
    %v5736 = vpack.c.b16 %v4332, %v4328
    %v5737 = vpack.c.b16 %v4333, %v4329
    %v5738 = vpack.c.b16 %v4334, %v4330
    %v5739 = vpack.c.b16 %v4335, %v4331
    %v5740 = vpack.c.b16 %v4340, %v4336
    %v5741 = vpack.c.b16 %v4341, %v4337
    %v5742 = vpack.c.b16 %v4342, %v4338
    %v5743 = vpack.c.b16 %v4343, %v4339
    %v5744 = vpack.c.b16 %v4348, %v4344
    %v5745 = vpack.c.b16 %v4349, %v4345
    %v5746 = vpack.c.b16 %v4350, %v4346
    %v5747 = vpack.c.b16 %v4351, %v4347
    %v5748 = vpack.c.b16 %v4356, %v4352
    %v5749 = vpack.c.b16 %v4357, %v4353
    %v5750 = vpack.c.b16 %v4358, %v4354
    %v5751 = vpack.c.b16 %v4359, %v4355
    %v5752 = vpack.c.b16 %v4364, %v4360
    %v5753 = vpack.c.b16 %v4365, %v4361
    %v5754 = vpack.c.b16 %v4366, %v4362
    %v5755 = vpack.c.b16 %v4367, %v4363
    %v5756 = vpack.c.b16 %v4372, %v4368
    %v5757 = vpack.c.b16 %v4373, %v4369
    %v5758 = vpack.c.b16 %v4374, %v4370
    %v5759 = vpack.c.b16 %v4375, %v4371
    %v5760 = vpack.c.b16 %v4380, %v4376
    %v5761 = vpack.c.b16 %v4381, %v4377
    %v5762 = vpack.c.b16 %v4382, %v4378
    %v5763 = vpack.c.b16 %v4383, %v4379
    %v5764 = vpack.c.b16 %v4388, %v4384
    %v5765 = vpack.c.b16 %v4389, %v4385
    %v5766 = vpack.c.b16 %v4390, %v4386
    %v5767 = vpack.c.b16 %v4391, %v4387
    %v5768 = vpack.c.b16 %v4396, %v4392
    %v5769 = vpack.c.b16 %v4397, %v4393
    %v5770 = vpack.c.b16 %v4398, %v4394
    %v5771 = vpack.c.b16 %v4399, %v4395
    %v5772 = vpack.c.b16 %v4404, %v4400
    %v5773 = vpack.c.b16 %v4405, %v4401
    %v5774 = vpack.c.b16 %v4406, %v4402
    %v5775 = vpack.c.b16 %v4407, %v4403
    %v5776 = vpack.c.b16 %v4412, %v4408
    %v5777 = vpack.c.b16 %v4413, %v4409
    %v5778 = vpack.c.b16 %v4414, %v4410
    %v5779 = vpack.c.b16 %v4415, %v4411
    %v5780 = vpack.c.b16 %v4420, %v4416
    %v5781 = vpack.c.b16 %v4421, %v4417
    %v5782 = vpack.c.b16 %v4422, %v4418
    %v5783 = vpack.c.b16 %v4423, %v4419
    %v5784 = vpack.c.b16 %v4428, %v4424
    %v5785 = vpack.c.b16 %v4429, %v4425
    %v5786 = vpack.c.b16 %v4430, %v4426
    %v5787 = vpack.c.b16 %v4431, %v4427
    %v5788 = vpack.c.b16 %v4436, %v4432
    %v5789 = vpack.c.b16 %v4437, %v4433
    %v5790 = vpack.c.b16 %v4438, %v4434
    %v5791 = vpack.c.b16 %v4439, %v4435
    %v5792 = vpack.c.b16 %v4444, %v4440
    %v5793 = vpack.c.b16 %v4445, %v4441
    %v5794 = vpack.c.b16 %v4446, %v4442
    %v5795 = vpack.c.b16 %v4447, %v4443
    %v5796 = vpack.c.b16 %v4452, %v4448
    %v5797 = vpack.c.b16 %v4453, %v4449
    %v5798 = vpack.c.b16 %v4454, %v4450
    %v5799 = vpack.c.b16 %v4455, %v4451
    %v5800 = vpack.c.b16 %v4460, %v4456
    %v5801 = vpack.c.b16 %v4461, %v4457
    %v5802 = vpack.c.b16 %v4462, %v4458
    %v5803 = vpack.c.b16 %v4463, %v4459
    %v5804 = vpack.c.b16 %v4468, %v4464
    %v5805 = vpack.c.b16 %v4469, %v4465
    %v5806 = vpack.c.b16 %v4470, %v4466
    %v5807 = vpack.c.b16 %v4471, %v4467
    %v5808 = vpack.c.b16 %v4476, %v4472
    %v5809 = vpack.c.b16 %v4477, %v4473
    %v5810 = vpack.c.b16 %v4478, %v4474
    %v5811 = vpack.c.b16 %v4479, %v4475
    %v5812 = vpack.c.b16 %v4484, %v4480
    %v5813 = vpack.c.b16 %v4485, %v4481
    %v5814 = vpack.c.b16 %v4486, %v4482
    %v5815 = vpack.c.b16 %v4487, %v4483
    %v5816 = vpack.c.b16 %v4492, %v4488
    %v5817 = vpack.c.b16 %v4493, %v4489
    %v5818 = vpack.c.b16 %v4494, %v4490
    %v5819 = vpack.c.b16 %v4495, %v4491
    %v5820 = vpack.c.b16 %v4500, %v4496
    %v5821 = vpack.c.b16 %v4501, %v4497
    %v5822 = vpack.c.b16 %v4502, %v4498
    %v5823 = vpack.c.b16 %v4503, %v4499
    %v5824 = vpack.c.b16 %v4508, %v4504
    %v5825 = vpack.c.b16 %v4509, %v4505
    %v5826 = vpack.c.b16 %v4510, %v4506
    %v5827 = vpack.c.b16 %v4511, %v4507
    %v5828 = vpack.c.b16 %v4516, %v4512
    %v5829 = vpack.c.b16 %v4517, %v4513
    %v5830 = vpack.c.b16 %v4518, %v4514
    %v5831 = vpack.c.b16 %v4519, %v4515
    %v5832 = vpack.c.b16 %v4524, %v4520
    %v5833 = vpack.c.b16 %v4525, %v4521
    %v5834 = vpack.c.b16 %v4526, %v4522
    %v5835 = vpack.c.b16 %v4527, %v4523
    %v5836 = vpack.c.b16 %v4532, %v4528
    %v5837 = vpack.c.b16 %v4533, %v4529
    %v5838 = vpack.c.b16 %v4534, %v4530
    %v5839 = vpack.c.b16 %v4535, %v4531
    %v5840 = vpack.c.b16 %v4540, %v4536
    %v5841 = vpack.c.b16 %v4541, %v4537
    %v5842 = vpack.c.b16 %v4542, %v4538
    %v5843 = vpack.c.b16 %v4543, %v4539
    %v5844 = vpack.c.b16 %v4548, %v4544
    %v5845 = vpack.c.b16 %v4549, %v4545
    %v5846 = vpack.c.b16 %v4550, %v4546
    %v5847 = vpack.c.b16 %v4551, %v4547
    %v5848 = vpack.c.b16 %v4556, %v4552
    %v5849 = vpack.c.b16 %v4557, %v4553
    %v5850 = vpack.c.b16 %v4558, %v4554
    %v5851 = vpack.c.b16 %v4559, %v4555
    %v5852 = vpack.c.b16 %v4564, %v4560
    %v5853 = vpack.c.b16 %v4565, %v4561
    %v5854 = vpack.c.b16 %v4566, %v4562
    %v5855 = vpack.c.b16 %v4567, %v4563
    %v5856 = vpack.c.b16 %v4572, %v4568
    %v5857 = vpack.c.b16 %v4573, %v4569
    %v5858 = vpack.c.b16 %v4574, %v4570
    %v5859 = vpack.c.b16 %v4575, %v4571
    %v5860 = vpack.c.b16 %v4580, %v4576
    %v5861 = vpack.c.b16 %v4581, %v4577
    %v5862 = vpack.c.b16 %v4582, %v4578
    %v5863 = vpack.c.b16 %v4583, %v4579
    %v5864 = vpack.c.b16 %v4588, %v4584
    %v5865 = vpack.c.b16 %v4589, %v4585
    %v5866 = vpack.c.b16 %v4590, %v4586
    %v5867 = vpack.c.b16 %v4591, %v4587
    %v5868 = vpack.c.b16 %v4596, %v4592
    %v5869 = vpack.c.b16 %v4597, %v4593
    %v5870 = vpack.c.b16 %v4598, %v4594
    %v5871 = vpack.c.b16 %v4599, %v4595
    %v5872 = vpack.c.b16 %v4604, %v4600
    %v5873 = vpack.c.b16 %v4605, %v4601
    %v5874 = vpack.c.b16 %v4606, %v4602
    %v5875 = vpack.c.b16 %v4607, %v4603
    %v5876 = vpack.c.b16 %v4612, %v4608
    %v5877 = vpack.c.b16 %v4613, %v4609
    %v5878 = vpack.c.b16 %v4614, %v4610
    %v5879 = vpack.c.b16 %v4615, %v4611
    %v5880 = vpack.c.b16 %v4620, %v4616
    %v5881 = vpack.c.b16 %v4621, %v4617
    %v5882 = vpack.c.b16 %v4622, %v4618
    %v5883 = vpack.c.b16 %v4623, %v4619
    %v5884 = vpack.c.b16 %v4628, %v4624
    %v5885 = vpack.c.b16 %v4629, %v4625
    %v5886 = vpack.c.b16 %v4630, %v4626
    %v5887 = vpack.c.b16 %v4631, %v4627
    %v5888 = vpack.c.b16 %v4636, %v4632
    %v5889 = vpack.c.b16 %v4637, %v4633
    %v5890 = vpack.c.b16 %v4638, %v4634
    %v5891 = vpack.c.b16 %v4639, %v4635
    %v5892 = vpack.c.b16 %v4644, %v4640
    %v5893 = vpack.c.b16 %v4645, %v4641
    %v5894 = vpack.c.b16 %v4646, %v4642
    %v5895 = vpack.c.b16 %v4647, %v4643
    %v5896 = vpack.c.b16 %v4652, %v4648
    %v5897 = vpack.c.b16 %v4653, %v4649
    %v5898 = vpack.c.b16 %v4654, %v4650
    %v5899 = vpack.c.b16 %v4655, %v4651
    %v5900 = vpack.c.b16 %v4660, %v4656
    %v5901 = vpack.c.b16 %v4661, %v4657
    %v5902 = vpack.c.b16 %v4662, %v4658
    %v5903 = vpack.c.b16 %v4663, %v4659
    %v5904 = vpack.c.b16 %v4668, %v4664
    %v5905 = vpack.c.b16 %v4669, %v4665
    %v5906 = vpack.c.b16 %v4670, %v4666
    %v5907 = vpack.c.b16 %v4671, %v4667
    %v5908 = vpack.c.b16 %v4676, %v4672
    %v5909 = vpack.c.b16 %v4677, %v4673
    %v5910 = vpack.c.b16 %v4678, %v4674
    %v5911 = vpack.c.b16 %v4679, %v4675
    %v5912 = vpack.c.b16 %v4684, %v4680
    %v5913 = vpack.c.b16 %v4685, %v4681
    %v5914 = vpack.c.b16 %v4686, %v4682
    %v5915 = vpack.c.b16 %v4687, %v4683
    %v5916 = vpack.c.b16 %v4692, %v4688
    %v5917 = vpack.c.b16 %v4693, %v4689
    %v5918 = vpack.c.b16 %v4694, %v4690
    %v5919 = vpack.c.b16 %v4695, %v4691
    %v5920 = vpack.c.b16 %v4700, %v4696
    %v5921 = vpack.c.b16 %v4701, %v4697
    %v5922 = vpack.c.b16 %v4702, %v4698
    %v5923 = vpack.c.b16 %v4703, %v4699
    %v5924 = vpack.c.b16 %v4708, %v4704
    %v5925 = vpack.c.b16 %v4709, %v4705
    %v5926 = vpack.c.b16 %v4710, %v4706
    %v5927 = vpack.c.b16 %v4711, %v4707
    %v5928 = vpack.c.b16 %v4716, %v4712
    %v5929 = vpack.c.b16 %v4717, %v4713
    %v5930 = vpack.c.b16 %v4718, %v4714
    %v5931 = vpack.c.b16 %v4719, %v4715
    %v5932 = vpack.c.b16 %v4724, %v4720
    %v5933 = vpack.c.b16 %v4725, %v4721
    %v5934 = vpack.c.b16 %v4726, %v4722
    %v5935 = vpack.c.b16 %v4727, %v4723
    %v5936 = vpack.c.b16 %v4732, %v4728
    %v5937 = vpack.c.b16 %v4733, %v4729
    %v5938 = vpack.c.b16 %v4734, %v4730
    %v5939 = vpack.c.b16 %v4735, %v4731
    %v5940 = vpack.c.b16 %v4740, %v4736
    %v5941 = vpack.c.b16 %v4741, %v4737
    %v5942 = vpack.c.b16 %v4742, %v4738
    %v5943 = vpack.c.b16 %v4743, %v4739
    %v5944 = vpack.c.b16 %v4748, %v4744
    %v5945 = vpack.c.b16 %v4749, %v4745
    %v5946 = vpack.c.b16 %v4750, %v4746
    %v5947 = vpack.c.b16 %v4751, %v4747
    %v5948 = vpack.c.b16 %v4756, %v4752
    %v5949 = vpack.c.b16 %v4757, %v4753
    %v5950 = vpack.c.b16 %v4758, %v4754
    %v5951 = vpack.c.b16 %v4759, %v4755
    %v5952 = vpack.c.b16 %v4764, %v4760
    %v5953 = vpack.c.b16 %v4765, %v4761
    %v5954 = vpack.c.b16 %v4766, %v4762
    %v5955 = vpack.c.b16 %v4767, %v4763
    %v5956 = vpack.c.b16 %v4772, %v4768
    %v5957 = vpack.c.b16 %v4773, %v4769
    %v5958 = vpack.c.b16 %v4774, %v4770
    %v5959 = vpack.c.b16 %v4775, %v4771
    %v5960 = vpack.c.b16 %v4780, %v4776
    %v5961 = vpack.c.b16 %v4781, %v4777
    %v5962 = vpack.c.b16 %v4782, %v4778
    %v5963 = vpack.c.b16 %v4783, %v4779
    %v5964 = vpack.c.b16 %v4788, %v4784
    %v5965 = vpack.c.b16 %v4789, %v4785
    %v5966 = vpack.c.b16 %v4790, %v4786
    %v5967 = vpack.c.b16 %v4791, %v4787
    %v5968 = vpack.c.b16 %v4796, %v4792
    %v5969 = vpack.c.b16 %v4797, %v4793
    %v5970 = vpack.c.b16 %v4798, %v4794
    %v5971 = vpack.c.b16 %v4799, %v4795
    %v5972 = vpack.c.b16 %v4804, %v4800
    %v5973 = vpack.c.b16 %v4805, %v4801
    %v5974 = vpack.c.b16 %v4806, %v4802
    %v5975 = vpack.c.b16 %v4807, %v4803
    %v5976 = vpack.c.b16 %v4812, %v4808
    %v5977 = vpack.c.b16 %v4813, %v4809
    %v5978 = vpack.c.b16 %v4814, %v4810
    %v5979 = vpack.c.b16 %v4815, %v4811
    %v5980 = vpack.c.b16 %v4820, %v4816
    %v5981 = vpack.c.b16 %v4821, %v4817
    %v5982 = vpack.c.b16 %v4822, %v4818
    %v5983 = vpack.c.b16 %v4823, %v4819
    %v5984 = vpack.c.b16 %v4828, %v4824
    %v5985 = vpack.c.b16 %v4829, %v4825
    %v5986 = vpack.c.b16 %v4830, %v4826
    %v5987 = vpack.c.b16 %v4831, %v4827
    %v5988 = vpack.c.b16 %v4836, %v4832
    %v5989 = vpack.c.b16 %v4837, %v4833
    %v5990 = vpack.c.b16 %v4838, %v4834
    %v5991 = vpack.c.b16 %v4839, %v4835
    %7144 = vmatpush.bf16.msra.mxu0 %v4868
    %7145 = vmatpush.bf16.msra.mxu0 %v4864
    %7146 = vmatpush.bf16.msra.mxu0 %v4860
    %7147 = vmatpush.bf16.msra.mxu0 %v4856
    %7148 = vmatpush.bf16.msra.mxu0 %v4852
    %7149 = vmatpush.bf16.msra.mxu0 %v4848
    %7150 = vmatpush.bf16.msra.mxu0 %v4844
    %7151 = vmatpush.bf16.msra.mxu0 %v4840
    %7152 = vmatmul.bf16.gmra.mxu0 %v1248
    %v7153 = vpop.f32.mrf.mxu0
    %v7154 = vadd.f32 %v1217, %v7153
    %v7155 = vpop.f32.mrf.mxu0
    %v7156 = vadd.f32 %v1217, %v7155
    %7157 = vdwg.mxu0
    %7158 = vmatpush.bf16.msra.mxu0 %v4900
    %7159 = vmatpush.bf16.msra.mxu0 %v4896
    %7160 = vmatpush.bf16.msra.mxu0 %v4892
    %7161 = vmatpush.bf16.msra.mxu0 %v4888
    %7162 = vmatpush.bf16.msra.mxu0 %v4884
    %7163 = vmatpush.bf16.msra.mxu0 %v4880
    %7164 = vmatpush.bf16.msra.mxu0 %v4876
    %7165 = vmatpush.bf16.msra.mxu0 %v4872
    %7166 = vmatmul.bf16.gmra.mxu0 %v1249
    %v7167 = vpop.f32.mrf.mxu0
    %v7168 = vadd.f32 %v7154, %v7167
    %v7169 = vpop.f32.mrf.mxu0
    %v7170 = vadd.f32 %v7156, %v7169
    %7171 = vdwg.mxu0
    %7172 = vmatpush.bf16.msra.mxu0 %v4932
    %7173 = vmatpush.bf16.msra.mxu0 %v4928
    %7174 = vmatpush.bf16.msra.mxu0 %v4924
    %7175 = vmatpush.bf16.msra.mxu0 %v4920
    %7176 = vmatpush.bf16.msra.mxu0 %v4916
    %7177 = vmatpush.bf16.msra.mxu0 %v4912
    %7178 = vmatpush.bf16.msra.mxu0 %v4908
    %7179 = vmatpush.bf16.msra.mxu0 %v4904
    %7180 = vmatmul.bf16.gmra.mxu0 %v1250
    %v7181 = vpop.f32.mrf.mxu0
    %v7182 = vadd.f32 %v7168, %v7181
    %v7183 = vpop.f32.mrf.mxu0
    %v7184 = vadd.f32 %v7170, %v7183
    %7185 = vdwg.mxu0
    %7186 = vmatpush.bf16.msra.mxu0 %v4964
    %7187 = vmatpush.bf16.msra.mxu0 %v4960
    %7188 = vmatpush.bf16.msra.mxu0 %v4956
    %7189 = vmatpush.bf16.msra.mxu0 %v4952
    %7190 = vmatpush.bf16.msra.mxu0 %v4948
    %7191 = vmatpush.bf16.msra.mxu0 %v4944
    %7192 = vmatpush.bf16.msra.mxu0 %v4940
    %7193 = vmatpush.bf16.msra.mxu0 %v4936
    %7194 = vmatmul.bf16.gmra.mxu0 %v1251
    %v7195 = vpop.f32.mrf.mxu0
    %v7196 = vadd.f32 %v7182, %v7195
    %v7197 = vpop.f32.mrf.mxu0
    %v7198 = vadd.f32 %v7184, %v7197
    %7199 = vdwg.mxu0
    %7200 = vmatpush.bf16.msra.mxu0 %v4996
    %7201 = vmatpush.bf16.msra.mxu0 %v4992
    %7202 = vmatpush.bf16.msra.mxu0 %v4988
    %7203 = vmatpush.bf16.msra.mxu0 %v4984
    %7204 = vmatpush.bf16.msra.mxu0 %v4980
    %7205 = vmatpush.bf16.msra.mxu0 %v4976
    %7206 = vmatpush.bf16.msra.mxu0 %v4972
    %7207 = vmatpush.bf16.msra.mxu0 %v4968
    %7208 = vmatmul.bf16.gmra.mxu0 %v1252
    %v7209 = vpop.f32.mrf.mxu0
    %v7210 = vadd.f32 %v7196, %v7209
    %v7211 = vpop.f32.mrf.mxu0
    %v7212 = vadd.f32 %v7198, %v7211
    %7213 = vdwg.mxu0
    %7214 = vmatpush.bf16.msra.mxu0 %v5028
    %7215 = vmatpush.bf16.msra.mxu0 %v5024
    %7216 = vmatpush.bf16.msra.mxu0 %v5020
    %7217 = vmatpush.bf16.msra.mxu0 %v5016
    %7218 = vmatpush.bf16.msra.mxu0 %v5012
    %7219 = vmatpush.bf16.msra.mxu0 %v5008
    %7220 = vmatpush.bf16.msra.mxu0 %v5004
    %7221 = vmatpush.bf16.msra.mxu0 %v5000
    %7222 = vmatmul.bf16.gmra.mxu0 %v1253
    %v7223 = vpop.f32.mrf.mxu0
    %v7224 = vadd.f32 %v7210, %v7223
    %v7225 = vpop.f32.mrf.mxu0
    %v7226 = vadd.f32 %v7212, %v7225
    %7227 = vdwg.mxu0
    %7228 = vmatpush.bf16.msra.mxu0 %v5060
    %7229 = vmatpush.bf16.msra.mxu0 %v5056
    %7230 = vmatpush.bf16.msra.mxu0 %v5052
    %7231 = vmatpush.bf16.msra.mxu0 %v5048
    %7232 = vmatpush.bf16.msra.mxu0 %v5044
    %7233 = vmatpush.bf16.msra.mxu0 %v5040
    %7234 = vmatpush.bf16.msra.mxu0 %v5036
    %7235 = vmatpush.bf16.msra.mxu0 %v5032
    %7236 = vmatmul.bf16.gmra.mxu0 %v1254
    %v7237 = vpop.f32.mrf.mxu0
    %v7238 = vadd.f32 %v7224, %v7237
    %v7239 = vpop.f32.mrf.mxu0
    %v7240 = vadd.f32 %v7226, %v7239
    %7241 = vdwg.mxu0
    %7242 = vmatpush.bf16.msra.mxu0 %v5092
    %7243 = vmatpush.bf16.msra.mxu0 %v5088
    %7244 = vmatpush.bf16.msra.mxu0 %v5084
    %7245 = vmatpush.bf16.msra.mxu0 %v5080
    %7246 = vmatpush.bf16.msra.mxu0 %v5076
    %7247 = vmatpush.bf16.msra.mxu0 %v5072
    %7248 = vmatpush.bf16.msra.mxu0 %v5068
    %7249 = vmatpush.bf16.msra.mxu0 %v5064
    %7250 = vmatmul.bf16.gmra.mxu0 %v1255
    %v7251 = vpop.f32.mrf.mxu0
    %v7252 = vadd.f32 %v7238, %v7251
    %v7253 = vpop.f32.mrf.mxu0
    %v7254 = vadd.f32 %v7240, %v7253
    %7255 = vdwg.mxu0
    %7256 = vmatpush.bf16.msra.mxu0 %v5124
    %7257 = vmatpush.bf16.msra.mxu0 %v5120
    %7258 = vmatpush.bf16.msra.mxu0 %v5116
    %7259 = vmatpush.bf16.msra.mxu0 %v5112
    %7260 = vmatpush.bf16.msra.mxu0 %v5108
    %7261 = vmatpush.bf16.msra.mxu0 %v5104
    %7262 = vmatpush.bf16.msra.mxu0 %v5100
    %7263 = vmatpush.bf16.msra.mxu0 %v5096
    %7264 = vmatmul.bf16.gmra.mxu0 %v1272
    %v7265 = vpop.f32.mrf.mxu0
    %v7266 = vadd.f32 %v7252, %v7265
    %v7267 = vpop.f32.mrf.mxu0
    %v7268 = vadd.f32 %v7254, %v7267
    %7269 = vdwg.mxu0
    %7270 = vmatpush.bf16.msra.mxu0 %v5156
    %7271 = vmatpush.bf16.msra.mxu0 %v5152
    %7272 = vmatpush.bf16.msra.mxu0 %v5148
    %7273 = vmatpush.bf16.msra.mxu0 %v5144
    %7274 = vmatpush.bf16.msra.mxu0 %v5140
    %7275 = vmatpush.bf16.msra.mxu0 %v5136
    %7276 = vmatpush.bf16.msra.mxu0 %v5132
    %7277 = vmatpush.bf16.msra.mxu0 %v5128
    %7278 = vmatmul.bf16.gmra.mxu0 %v1273
    %v7279 = vpop.f32.mrf.mxu0
    %v7280 = vadd.f32 %v7266, %v7279
    %v7281 = vpop.f32.mrf.mxu0
    %v7282 = vadd.f32 %v7268, %v7281
    %7283 = vdwg.mxu0
    %7284 = vmatpush.bf16.msra.mxu0 %v5188
    %7285 = vmatpush.bf16.msra.mxu0 %v5184
    %7286 = vmatpush.bf16.msra.mxu0 %v5180
    %7287 = vmatpush.bf16.msra.mxu0 %v5176
    %7288 = vmatpush.bf16.msra.mxu0 %v5172
    %7289 = vmatpush.bf16.msra.mxu0 %v5168
    %7290 = vmatpush.bf16.msra.mxu0 %v5164
    %7291 = vmatpush.bf16.msra.mxu0 %v5160
    %7292 = vmatmul.bf16.gmra.mxu0 %v1274
    %v7293 = vpop.f32.mrf.mxu0
    %v7294 = vadd.f32 %v7280, %v7293
    %v7295 = vpop.f32.mrf.mxu0
    %v7296 = vadd.f32 %v7282, %v7295
    %7297 = vdwg.mxu0
    %7298 = vmatpush.bf16.msra.mxu0 %v5220
    %7299 = vmatpush.bf16.msra.mxu0 %v5216
    %7300 = vmatpush.bf16.msra.mxu0 %v5212
    %7301 = vmatpush.bf16.msra.mxu0 %v5208
    %7302 = vmatpush.bf16.msra.mxu0 %v5204
    %7303 = vmatpush.bf16.msra.mxu0 %v5200
    %7304 = vmatpush.bf16.msra.mxu0 %v5196
    %7305 = vmatpush.bf16.msra.mxu0 %v5192
    %7306 = vmatmul.bf16.gmra.mxu0 %v1275
    %v7307 = vpop.f32.mrf.mxu0
    %v7308 = vadd.f32 %v7294, %v7307
    %v7309 = vpop.f32.mrf.mxu0
    %v7310 = vadd.f32 %v7296, %v7309
    %7311 = vdwg.mxu0
    %7312 = vmatpush.bf16.msra.mxu0 %v5252
    %7313 = vmatpush.bf16.msra.mxu0 %v5248
    %7314 = vmatpush.bf16.msra.mxu0 %v5244
    %7315 = vmatpush.bf16.msra.mxu0 %v5240
    %7316 = vmatpush.bf16.msra.mxu0 %v5236
    %7317 = vmatpush.bf16.msra.mxu0 %v5232
    %7318 = vmatpush.bf16.msra.mxu0 %v5228
    %7319 = vmatpush.bf16.msra.mxu0 %v5224
    %7320 = vmatmul.bf16.gmra.mxu0 %v1276
    %v7321 = vpop.f32.mrf.mxu0
    %v7322 = vadd.f32 %v7308, %v7321
    %v7323 = vpop.f32.mrf.mxu0
    %v7324 = vadd.f32 %v7310, %v7323
    %7325 = vdwg.mxu0
    %7326 = vmatpush.bf16.msra.mxu0 %v5284
    %7327 = vmatpush.bf16.msra.mxu0 %v5280
    %7328 = vmatpush.bf16.msra.mxu0 %v5276
    %7329 = vmatpush.bf16.msra.mxu0 %v5272
    %7330 = vmatpush.bf16.msra.mxu0 %v5268
    %7331 = vmatpush.bf16.msra.mxu0 %v5264
    %7332 = vmatpush.bf16.msra.mxu0 %v5260
    %7333 = vmatpush.bf16.msra.mxu0 %v5256
    %7334 = vmatmul.bf16.gmra.mxu0 %v1277
    %v7335 = vpop.f32.mrf.mxu0
    %v7336 = vadd.f32 %v7322, %v7335
    %v7337 = vpop.f32.mrf.mxu0
    %v7338 = vadd.f32 %v7324, %v7337
    %7339 = vdwg.mxu0
    %7340 = vmatpush.bf16.msra.mxu0 %v5316
    %7341 = vmatpush.bf16.msra.mxu0 %v5312
    %7342 = vmatpush.bf16.msra.mxu0 %v5308
    %7343 = vmatpush.bf16.msra.mxu0 %v5304
    %7344 = vmatpush.bf16.msra.mxu0 %v5300
    %7345 = vmatpush.bf16.msra.mxu0 %v5296
    %7346 = vmatpush.bf16.msra.mxu0 %v5292
    %7347 = vmatpush.bf16.msra.mxu0 %v5288
    %7348 = vmatmul.bf16.gmra.mxu0 %v1278
    %v7349 = vpop.f32.mrf.mxu0
    %v7350 = vadd.f32 %v7336, %v7349
    %v7351 = vpop.f32.mrf.mxu0
    %v7352 = vadd.f32 %v7338, %v7351
    %7353 = vdwg.mxu0
    %7354 = vmatpush.bf16.msra.mxu0 %v5348
    %7355 = vmatpush.bf16.msra.mxu0 %v5344
    %7356 = vmatpush.bf16.msra.mxu0 %v5340
    %7357 = vmatpush.bf16.msra.mxu0 %v5336
    %7358 = vmatpush.bf16.msra.mxu0 %v5332
    %7359 = vmatpush.bf16.msra.mxu0 %v5328
    %7360 = vmatpush.bf16.msra.mxu0 %v5324
    %7361 = vmatpush.bf16.msra.mxu0 %v5320
    %7362 = vmatmul.bf16.gmra.mxu0 %v1279
    %v7363 = vpop.f32.mrf.mxu0
    %v7364 = vadd.f32 %v7350, %v7363
    %v7365 = vpop.f32.mrf.mxu0
    %v7366 = vadd.f32 %v7352, %v7365
    %7367 = vdwg.mxu0
    %7368 = vmatpush.bf16.msra.mxu0 %v5380
    %7369 = vmatpush.bf16.msra.mxu0 %v5376
    %7370 = vmatpush.bf16.msra.mxu0 %v5372
    %7371 = vmatpush.bf16.msra.mxu0 %v5368
    %7372 = vmatpush.bf16.msra.mxu0 %v5364
    %7373 = vmatpush.bf16.msra.mxu0 %v5360
    %7374 = vmatpush.bf16.msra.mxu0 %v5356
    %7375 = vmatpush.bf16.msra.mxu0 %v5352
    %7376 = vmatmul.bf16.gmra.mxu0 %v1296
    %v7377 = vpop.f32.mrf.mxu0
    %v7378 = vadd.f32 %v7364, %v7377
    %v7379 = vpop.f32.mrf.mxu0
    %v7380 = vadd.f32 %v7366, %v7379
    %7381 = vdwg.mxu0
    %7382 = vmatpush.bf16.msra.mxu0 %v5412
    %7383 = vmatpush.bf16.msra.mxu0 %v5408
    %7384 = vmatpush.bf16.msra.mxu0 %v5404
    %7385 = vmatpush.bf16.msra.mxu0 %v5400
    %7386 = vmatpush.bf16.msra.mxu0 %v5396
    %7387 = vmatpush.bf16.msra.mxu0 %v5392
    %7388 = vmatpush.bf16.msra.mxu0 %v5388
    %7389 = vmatpush.bf16.msra.mxu0 %v5384
    %7390 = vmatmul.bf16.gmra.mxu0 %v1297
    %v7391 = vpop.f32.mrf.mxu0
    %v7392 = vadd.f32 %v7378, %v7391
    %v7393 = vpop.f32.mrf.mxu0
    %v7394 = vadd.f32 %v7380, %v7393
    %7395 = vdwg.mxu0
    %7396 = vmatpush.bf16.msra.mxu0 %v5444
    %7397 = vmatpush.bf16.msra.mxu0 %v5440
    %7398 = vmatpush.bf16.msra.mxu0 %v5436
    %7399 = vmatpush.bf16.msra.mxu0 %v5432
    %7400 = vmatpush.bf16.msra.mxu0 %v5428
    %7401 = vmatpush.bf16.msra.mxu0 %v5424
    %7402 = vmatpush.bf16.msra.mxu0 %v5420
    %7403 = vmatpush.bf16.msra.mxu0 %v5416
    %7404 = vmatmul.bf16.gmra.mxu0 %v1298
    %v7405 = vpop.f32.mrf.mxu0
    %v7406 = vadd.f32 %v7392, %v7405
    %v7407 = vpop.f32.mrf.mxu0
    %v7408 = vadd.f32 %v7394, %v7407
    %7409 = vdwg.mxu0
    %7410 = vmatpush.bf16.msra.mxu0 %v5476
    %7411 = vmatpush.bf16.msra.mxu0 %v5472
    %7412 = vmatpush.bf16.msra.mxu0 %v5468
    %7413 = vmatpush.bf16.msra.mxu0 %v5464
    %7414 = vmatpush.bf16.msra.mxu0 %v5460
    %7415 = vmatpush.bf16.msra.mxu0 %v5456
    %7416 = vmatpush.bf16.msra.mxu0 %v5452
    %7417 = vmatpush.bf16.msra.mxu0 %v5448
    %7418 = vmatmul.bf16.gmra.mxu0 %v1299
    %v7419 = vpop.f32.mrf.mxu0
    %v7420 = vadd.f32 %v7406, %v7419
    %v7421 = vpop.f32.mrf.mxu0
    %v7422 = vadd.f32 %v7408, %v7421
    %7423 = vdwg.mxu0
    %7424 = vmatpush.bf16.msra.mxu0 %v5508
    %7425 = vmatpush.bf16.msra.mxu0 %v5504
    %7426 = vmatpush.bf16.msra.mxu0 %v5500
    %7427 = vmatpush.bf16.msra.mxu0 %v5496
    %7428 = vmatpush.bf16.msra.mxu0 %v5492
    %7429 = vmatpush.bf16.msra.mxu0 %v5488
    %7430 = vmatpush.bf16.msra.mxu0 %v5484
    %7431 = vmatpush.bf16.msra.mxu0 %v5480
    %7432 = vmatmul.bf16.gmra.mxu0 %v1300
    %v7433 = vpop.f32.mrf.mxu0
    %v7434 = vadd.f32 %v7420, %v7433
    %v7435 = vpop.f32.mrf.mxu0
    %v7436 = vadd.f32 %v7422, %v7435
    %7437 = vdwg.mxu0
    %7438 = vmatpush.bf16.msra.mxu0 %v5540
    %7439 = vmatpush.bf16.msra.mxu0 %v5536
    %7440 = vmatpush.bf16.msra.mxu0 %v5532
    %7441 = vmatpush.bf16.msra.mxu0 %v5528
    %7442 = vmatpush.bf16.msra.mxu0 %v5524
    %7443 = vmatpush.bf16.msra.mxu0 %v5520
    %7444 = vmatpush.bf16.msra.mxu0 %v5516
    %7445 = vmatpush.bf16.msra.mxu0 %v5512
    %7446 = vmatmul.bf16.gmra.mxu0 %v1301
    %v7447 = vpop.f32.mrf.mxu0
    %v7448 = vadd.f32 %v7434, %v7447
    %v7449 = vpop.f32.mrf.mxu0
    %v7450 = vadd.f32 %v7436, %v7449
    %7451 = vdwg.mxu0
    %7452 = vmatpush.bf16.msra.mxu0 %v5572
    %7453 = vmatpush.bf16.msra.mxu0 %v5568
    %7454 = vmatpush.bf16.msra.mxu0 %v5564
    %7455 = vmatpush.bf16.msra.mxu0 %v5560
    %7456 = vmatpush.bf16.msra.mxu0 %v5556
    %7457 = vmatpush.bf16.msra.mxu0 %v5552
    %7458 = vmatpush.bf16.msra.mxu0 %v5548
    %7459 = vmatpush.bf16.msra.mxu0 %v5544
    %7460 = vmatmul.bf16.gmra.mxu0 %v1302
    %v7461 = vpop.f32.mrf.mxu0
    %v7462 = vadd.f32 %v7448, %v7461
    %v7463 = vpop.f32.mrf.mxu0
    %v7464 = vadd.f32 %v7450, %v7463
    %7465 = vdwg.mxu0
    %7466 = vmatpush.bf16.msra.mxu0 %v5604
    %7467 = vmatpush.bf16.msra.mxu0 %v5600
    %7468 = vmatpush.bf16.msra.mxu0 %v5596
    %7469 = vmatpush.bf16.msra.mxu0 %v5592
    %7470 = vmatpush.bf16.msra.mxu0 %v5588
    %7471 = vmatpush.bf16.msra.mxu0 %v5584
    %7472 = vmatpush.bf16.msra.mxu0 %v5580
    %7473 = vmatpush.bf16.msra.mxu0 %v5576
    %7474 = vmatmul.bf16.gmra.mxu0 %v1303
    %v7475 = vpop.f32.mrf.mxu0
    %v7476 = vadd.f32 %v7462, %v7475
    %v7477 = vpop.f32.mrf.mxu0
    %v7478 = vadd.f32 %v7464, %v7477
    %7479 = vdwg.mxu0
    %7480 = vmatpush.bf16.msra.mxu0 %v5636
    %7481 = vmatpush.bf16.msra.mxu0 %v5632
    %7482 = vmatpush.bf16.msra.mxu0 %v5628
    %7483 = vmatpush.bf16.msra.mxu0 %v5624
    %7484 = vmatpush.bf16.msra.mxu0 %v5620
    %7485 = vmatpush.bf16.msra.mxu0 %v5616
    %7486 = vmatpush.bf16.msra.mxu0 %v5612
    %7487 = vmatpush.bf16.msra.mxu0 %v5608
    %7488 = vmatmul.bf16.gmra.mxu0 %v1320
    %v7489 = vpop.f32.mrf.mxu0
    %v7490 = vadd.f32 %v7476, %v7489
    %v7491 = vpop.f32.mrf.mxu0
    %v7492 = vadd.f32 %v7478, %v7491
    %7493 = vdwg.mxu0
    %7494 = vmatpush.bf16.msra.mxu0 %v5668
    %7495 = vmatpush.bf16.msra.mxu0 %v5664
    %7496 = vmatpush.bf16.msra.mxu0 %v5660
    %7497 = vmatpush.bf16.msra.mxu0 %v5656
    %7498 = vmatpush.bf16.msra.mxu0 %v5652
    %7499 = vmatpush.bf16.msra.mxu0 %v5648
    %7500 = vmatpush.bf16.msra.mxu0 %v5644
    %7501 = vmatpush.bf16.msra.mxu0 %v5640
    %7502 = vmatmul.bf16.gmra.mxu0 %v1321
    %v7503 = vpop.f32.mrf.mxu0
    %v7504 = vadd.f32 %v7490, %v7503
    %v7505 = vpop.f32.mrf.mxu0
    %v7506 = vadd.f32 %v7492, %v7505
    %7507 = vdwg.mxu0
    %7508 = vmatpush.bf16.msra.mxu0 %v5700
    %7509 = vmatpush.bf16.msra.mxu0 %v5696
    %7510 = vmatpush.bf16.msra.mxu0 %v5692
    %7511 = vmatpush.bf16.msra.mxu0 %v5688
    %7512 = vmatpush.bf16.msra.mxu0 %v5684
    %7513 = vmatpush.bf16.msra.mxu0 %v5680
    %7514 = vmatpush.bf16.msra.mxu0 %v5676
    %7515 = vmatpush.bf16.msra.mxu0 %v5672
    %7516 = vmatmul.bf16.gmra.mxu0 %v1322
    %v7517 = vpop.f32.mrf.mxu0
    %v7518 = vadd.f32 %v7504, %v7517
    %v7519 = vpop.f32.mrf.mxu0
    %v7520 = vadd.f32 %v7506, %v7519
    %7521 = vdwg.mxu0
    %7522 = vmatpush.bf16.msra.mxu0 %v5732
    %7523 = vmatpush.bf16.msra.mxu0 %v5728
    %7524 = vmatpush.bf16.msra.mxu0 %v5724
    %7525 = vmatpush.bf16.msra.mxu0 %v5720
    %7526 = vmatpush.bf16.msra.mxu0 %v5716
    %7527 = vmatpush.bf16.msra.mxu0 %v5712
    %7528 = vmatpush.bf16.msra.mxu0 %v5708
    %7529 = vmatpush.bf16.msra.mxu0 %v5704
    %7530 = vmatmul.bf16.gmra.mxu0 %v1323
    %v7531 = vpop.f32.mrf.mxu0
    %v7532 = vadd.f32 %v7518, %v7531
    %v7533 = vpop.f32.mrf.mxu0
    %v7534 = vadd.f32 %v7520, %v7533
    %7535 = vdwg.mxu0
    %7536 = vmatpush.bf16.msra.mxu0 %v5764
    %7537 = vmatpush.bf16.msra.mxu0 %v5760
    %7538 = vmatpush.bf16.msra.mxu0 %v5756
    %7539 = vmatpush.bf16.msra.mxu0 %v5752
    %7540 = vmatpush.bf16.msra.mxu0 %v5748
    %7541 = vmatpush.bf16.msra.mxu0 %v5744
    %7542 = vmatpush.bf16.msra.mxu0 %v5740
    %7543 = vmatpush.bf16.msra.mxu0 %v5736
    %7544 = vmatmul.bf16.gmra.mxu0 %v1324
    %v7545 = vpop.f32.mrf.mxu0
    %v7546 = vadd.f32 %v7532, %v7545
    %v7547 = vpop.f32.mrf.mxu0
    %v7548 = vadd.f32 %v7534, %v7547
    %7549 = vdwg.mxu0
    %7550 = vmatpush.bf16.msra.mxu0 %v5796
    %7551 = vmatpush.bf16.msra.mxu0 %v5792
    %7552 = vmatpush.bf16.msra.mxu0 %v5788
    %7553 = vmatpush.bf16.msra.mxu0 %v5784
    %7554 = vmatpush.bf16.msra.mxu0 %v5780
    %7555 = vmatpush.bf16.msra.mxu0 %v5776
    %7556 = vmatpush.bf16.msra.mxu0 %v5772
    %7557 = vmatpush.bf16.msra.mxu0 %v5768
    %7558 = vmatmul.bf16.gmra.mxu0 %v1325
    %v7559 = vpop.f32.mrf.mxu0
    %v7560 = vadd.f32 %v7546, %v7559
    %v7561 = vpop.f32.mrf.mxu0
    %v7562 = vadd.f32 %v7548, %v7561
    %7563 = vdwg.mxu0
    %7564 = vmatpush.bf16.msra.mxu0 %v5828
    %7565 = vmatpush.bf16.msra.mxu0 %v5824
    %7566 = vmatpush.bf16.msra.mxu0 %v5820
    %7567 = vmatpush.bf16.msra.mxu0 %v5816
    %7568 = vmatpush.bf16.msra.mxu0 %v5812
    %7569 = vmatpush.bf16.msra.mxu0 %v5808
    %7570 = vmatpush.bf16.msra.mxu0 %v5804
    %7571 = vmatpush.bf16.msra.mxu0 %v5800
    %7572 = vmatmul.bf16.gmra.mxu0 %v1326
    %v7573 = vpop.f32.mrf.mxu0
    %v7574 = vadd.f32 %v7560, %v7573
    %v7575 = vpop.f32.mrf.mxu0
    %v7576 = vadd.f32 %v7562, %v7575
    %7577 = vdwg.mxu0
    %7578 = vmatpush.bf16.msra.mxu0 %v5860
    %7579 = vmatpush.bf16.msra.mxu0 %v5856
    %7580 = vmatpush.bf16.msra.mxu0 %v5852
    %7581 = vmatpush.bf16.msra.mxu0 %v5848
    %7582 = vmatpush.bf16.msra.mxu0 %v5844
    %7583 = vmatpush.bf16.msra.mxu0 %v5840
    %7584 = vmatpush.bf16.msra.mxu0 %v5836
    %7585 = vmatpush.bf16.msra.mxu0 %v5832
    %7586 = vmatmul.bf16.gmra.mxu0 %v1327
    %v7587 = vpop.f32.mrf.mxu0
    %v7588 = vadd.f32 %v7574, %v7587
    %v7589 = vpop.f32.mrf.mxu0
    %v7590 = vadd.f32 %v7576, %v7589
    %7591 = vdwg.mxu0
    %7592 = vmatpush.bf16.msra.mxu0 %v5892
    %7593 = vmatpush.bf16.msra.mxu0 %v5888
    %7594 = vmatpush.bf16.msra.mxu0 %v5884
    %7595 = vmatpush.bf16.msra.mxu0 %v5880
    %7596 = vmatpush.bf16.msra.mxu0 %v5876
    %7597 = vmatpush.bf16.msra.mxu0 %v5872
    %7598 = vmatpush.bf16.msra.mxu0 %v5868
    %7599 = vmatpush.bf16.msra.mxu0 %v5864
    %7600 = vmatmul.bf16.gmra.mxu0 %v1344
    %v7601 = vpop.f32.mrf.mxu0
    %v7602 = vadd.f32 %v7588, %v7601
    %v7603 = vpop.f32.mrf.mxu0
    %v7604 = vadd.f32 %v7590, %v7603
    %7605 = vdwg.mxu0
    %7606 = vmatpush.bf16.msra.mxu0 %v5924
    %7607 = vmatpush.bf16.msra.mxu0 %v5920
    %7608 = vmatpush.bf16.msra.mxu0 %v5916
    %7609 = vmatpush.bf16.msra.mxu0 %v5912
    %7610 = vmatpush.bf16.msra.mxu0 %v5908
    %7611 = vmatpush.bf16.msra.mxu0 %v5904
    %7612 = vmatpush.bf16.msra.mxu0 %v5900
    %7613 = vmatpush.bf16.msra.mxu0 %v5896
    %7614 = vmatmul.bf16.gmra.mxu0 %v1345
    %v7615 = vpop.f32.mrf.mxu0
    %v7616 = vadd.f32 %v7602, %v7615
    %v7617 = vpop.f32.mrf.mxu0
    %v7618 = vadd.f32 %v7604, %v7617
    %7619 = vdwg.mxu0
    %7620 = vmatpush.bf16.msra.mxu0 %v5956
    %7621 = vmatpush.bf16.msra.mxu0 %v5952
    %7622 = vmatpush.bf16.msra.mxu0 %v5948
    %7623 = vmatpush.bf16.msra.mxu0 %v5944
    %7624 = vmatpush.bf16.msra.mxu0 %v5940
    %7625 = vmatpush.bf16.msra.mxu0 %v5936
    %7626 = vmatpush.bf16.msra.mxu0 %v5932
    %7627 = vmatpush.bf16.msra.mxu0 %v5928
    %7628 = vmatmul.bf16.gmra.mxu0 %v1346
    %v7629 = vpop.f32.mrf.mxu0
    %v7630 = vadd.f32 %v7616, %v7629
    %v7631 = vpop.f32.mrf.mxu0
    %v7632 = vadd.f32 %v7618, %v7631
    %7633 = vdwg.mxu0
    %7634 = vmatpush.bf16.msra.mxu0 %v5988
    %7635 = vmatpush.bf16.msra.mxu0 %v5984
    %7636 = vmatpush.bf16.msra.mxu0 %v5980
    %7637 = vmatpush.bf16.msra.mxu0 %v5976
    %7638 = vmatpush.bf16.msra.mxu0 %v5972
    %7639 = vmatpush.bf16.msra.mxu0 %v5968
    %7640 = vmatpush.bf16.msra.mxu0 %v5964
    %7641 = vmatpush.bf16.msra.mxu0 %v5960
    %7642 = vmatmul.bf16.gmra.mxu0 %v1347
    %v7643 = vpop.f32.mrf.mxu0
    %v7644 = vadd.f32 %v7630, %v7643
    %v7645 = vpop.f32.mrf.mxu0
    %v7646 = vadd.f32 %v7632, %v7645
    %7647 = vdwg.mxu0
    %7648 = vmatpush.bf16.msra.mxu0 %v4869
    %7649 = vmatpush.bf16.msra.mxu0 %v4865
    %7650 = vmatpush.bf16.msra.mxu0 %v4861
    %7651 = vmatpush.bf16.msra.mxu0 %v4857
    %7652 = vmatpush.bf16.msra.mxu0 %v4853
    %7653 = vmatpush.bf16.msra.mxu0 %v4849
    %7654 = vmatpush.bf16.msra.mxu0 %v4845
    %7655 = vmatpush.bf16.msra.mxu0 %v4841
    %7656 = vmatmul.bf16.gmra.mxu0 %v1248
    %v7657 = vpop.f32.mrf.mxu0
    %v7658 = vadd.f32 %v1218, %v7657
    %v7659 = vpop.f32.mrf.mxu0
    %v7660 = vadd.f32 %v1218, %v7659
    %7661 = vdwg.mxu0
    %7662 = vmatpush.bf16.msra.mxu0 %v4901
    %7663 = vmatpush.bf16.msra.mxu0 %v4897
    %7664 = vmatpush.bf16.msra.mxu0 %v4893
    %7665 = vmatpush.bf16.msra.mxu0 %v4889
    %7666 = vmatpush.bf16.msra.mxu0 %v4885
    %7667 = vmatpush.bf16.msra.mxu0 %v4881
    %7668 = vmatpush.bf16.msra.mxu0 %v4877
    %7669 = vmatpush.bf16.msra.mxu0 %v4873
    %7670 = vmatmul.bf16.gmra.mxu0 %v1249
    %v7671 = vpop.f32.mrf.mxu0
    %v7672 = vadd.f32 %v7658, %v7671
    %v7673 = vpop.f32.mrf.mxu0
    %v7674 = vadd.f32 %v7660, %v7673
    %7675 = vdwg.mxu0
    %7676 = vmatpush.bf16.msra.mxu0 %v4933
    %7677 = vmatpush.bf16.msra.mxu0 %v4929
    %7678 = vmatpush.bf16.msra.mxu0 %v4925
    %7679 = vmatpush.bf16.msra.mxu0 %v4921
    %7680 = vmatpush.bf16.msra.mxu0 %v4917
    %7681 = vmatpush.bf16.msra.mxu0 %v4913
    %7682 = vmatpush.bf16.msra.mxu0 %v4909
    %7683 = vmatpush.bf16.msra.mxu0 %v4905
    %7684 = vmatmul.bf16.gmra.mxu0 %v1250
    %v7685 = vpop.f32.mrf.mxu0
    %v7686 = vadd.f32 %v7672, %v7685
    %v7687 = vpop.f32.mrf.mxu0
    %v7688 = vadd.f32 %v7674, %v7687
    %7689 = vdwg.mxu0
    %7690 = vmatpush.bf16.msra.mxu0 %v4965
    %7691 = vmatpush.bf16.msra.mxu0 %v4961
    %7692 = vmatpush.bf16.msra.mxu0 %v4957
    %7693 = vmatpush.bf16.msra.mxu0 %v4953
    %7694 = vmatpush.bf16.msra.mxu0 %v4949
    %7695 = vmatpush.bf16.msra.mxu0 %v4945
    %7696 = vmatpush.bf16.msra.mxu0 %v4941
    %7697 = vmatpush.bf16.msra.mxu0 %v4937
    %7698 = vmatmul.bf16.gmra.mxu0 %v1251
    %v7699 = vpop.f32.mrf.mxu0
    %v7700 = vadd.f32 %v7686, %v7699
    %v7701 = vpop.f32.mrf.mxu0
    %v7702 = vadd.f32 %v7688, %v7701
    %7703 = vdwg.mxu0
    %7704 = vmatpush.bf16.msra.mxu0 %v4997
    %7705 = vmatpush.bf16.msra.mxu0 %v4993
    %7706 = vmatpush.bf16.msra.mxu0 %v4989
    %7707 = vmatpush.bf16.msra.mxu0 %v4985
    %7708 = vmatpush.bf16.msra.mxu0 %v4981
    %7709 = vmatpush.bf16.msra.mxu0 %v4977
    %7710 = vmatpush.bf16.msra.mxu0 %v4973
    %7711 = vmatpush.bf16.msra.mxu0 %v4969
    %7712 = vmatmul.bf16.gmra.mxu0 %v1252
    %v7713 = vpop.f32.mrf.mxu0
    %v7714 = vadd.f32 %v7700, %v7713
    %v7715 = vpop.f32.mrf.mxu0
    %v7716 = vadd.f32 %v7702, %v7715
    %7717 = vdwg.mxu0
    %7718 = vmatpush.bf16.msra.mxu0 %v5029
    %7719 = vmatpush.bf16.msra.mxu0 %v5025
    %7720 = vmatpush.bf16.msra.mxu0 %v5021
    %7721 = vmatpush.bf16.msra.mxu0 %v5017
    %7722 = vmatpush.bf16.msra.mxu0 %v5013
    %7723 = vmatpush.bf16.msra.mxu0 %v5009
    %7724 = vmatpush.bf16.msra.mxu0 %v5005
    %7725 = vmatpush.bf16.msra.mxu0 %v5001
    %7726 = vmatmul.bf16.gmra.mxu0 %v1253
    %v7727 = vpop.f32.mrf.mxu0
    %v7728 = vadd.f32 %v7714, %v7727
    %v7729 = vpop.f32.mrf.mxu0
    %v7730 = vadd.f32 %v7716, %v7729
    %7731 = vdwg.mxu0
    %7732 = vmatpush.bf16.msra.mxu0 %v5061
    %7733 = vmatpush.bf16.msra.mxu0 %v5057
    %7734 = vmatpush.bf16.msra.mxu0 %v5053
    %7735 = vmatpush.bf16.msra.mxu0 %v5049
    %7736 = vmatpush.bf16.msra.mxu0 %v5045
    %7737 = vmatpush.bf16.msra.mxu0 %v5041
    %7738 = vmatpush.bf16.msra.mxu0 %v5037
    %7739 = vmatpush.bf16.msra.mxu0 %v5033
    %7740 = vmatmul.bf16.gmra.mxu0 %v1254
    %v7741 = vpop.f32.mrf.mxu0
    %v7742 = vadd.f32 %v7728, %v7741
    %v7743 = vpop.f32.mrf.mxu0
    %v7744 = vadd.f32 %v7730, %v7743
    %7745 = vdwg.mxu0
    %7746 = vmatpush.bf16.msra.mxu0 %v5093
    %7747 = vmatpush.bf16.msra.mxu0 %v5089
    %7748 = vmatpush.bf16.msra.mxu0 %v5085
    %7749 = vmatpush.bf16.msra.mxu0 %v5081
    %7750 = vmatpush.bf16.msra.mxu0 %v5077
    %7751 = vmatpush.bf16.msra.mxu0 %v5073
    %7752 = vmatpush.bf16.msra.mxu0 %v5069
    %7753 = vmatpush.bf16.msra.mxu0 %v5065
    %7754 = vmatmul.bf16.gmra.mxu0 %v1255
    %v7755 = vpop.f32.mrf.mxu0
    %v7756 = vadd.f32 %v7742, %v7755
    %v7757 = vpop.f32.mrf.mxu0
    %v7758 = vadd.f32 %v7744, %v7757
    %7759 = vdwg.mxu0
    %7760 = vmatpush.bf16.msra.mxu0 %v5125
    %7761 = vmatpush.bf16.msra.mxu0 %v5121
    %7762 = vmatpush.bf16.msra.mxu0 %v5117
    %7763 = vmatpush.bf16.msra.mxu0 %v5113
    %7764 = vmatpush.bf16.msra.mxu0 %v5109
    %7765 = vmatpush.bf16.msra.mxu0 %v5105
    %7766 = vmatpush.bf16.msra.mxu0 %v5101
    %7767 = vmatpush.bf16.msra.mxu0 %v5097
    %7768 = vmatmul.bf16.gmra.mxu0 %v1272
    %v7769 = vpop.f32.mrf.mxu0
    %v7770 = vadd.f32 %v7756, %v7769
    %v7771 = vpop.f32.mrf.mxu0
    %v7772 = vadd.f32 %v7758, %v7771
    %7773 = vdwg.mxu0
    %7774 = vmatpush.bf16.msra.mxu0 %v5157
    %7775 = vmatpush.bf16.msra.mxu0 %v5153
    %7776 = vmatpush.bf16.msra.mxu0 %v5149
    %7777 = vmatpush.bf16.msra.mxu0 %v5145
    %7778 = vmatpush.bf16.msra.mxu0 %v5141
    %7779 = vmatpush.bf16.msra.mxu0 %v5137
    %7780 = vmatpush.bf16.msra.mxu0 %v5133
    %7781 = vmatpush.bf16.msra.mxu0 %v5129
    %7782 = vmatmul.bf16.gmra.mxu0 %v1273
    %v7783 = vpop.f32.mrf.mxu0
    %v7784 = vadd.f32 %v7770, %v7783
    %v7785 = vpop.f32.mrf.mxu0
    %v7786 = vadd.f32 %v7772, %v7785
    %7787 = vdwg.mxu0
    %7788 = vmatpush.bf16.msra.mxu0 %v5189
    %7789 = vmatpush.bf16.msra.mxu0 %v5185
    %7790 = vmatpush.bf16.msra.mxu0 %v5181
    %7791 = vmatpush.bf16.msra.mxu0 %v5177
    %7792 = vmatpush.bf16.msra.mxu0 %v5173
    %7793 = vmatpush.bf16.msra.mxu0 %v5169
    %7794 = vmatpush.bf16.msra.mxu0 %v5165
    %7795 = vmatpush.bf16.msra.mxu0 %v5161
    %7796 = vmatmul.bf16.gmra.mxu0 %v1274
    %v7797 = vpop.f32.mrf.mxu0
    %v7798 = vadd.f32 %v7784, %v7797
    %v7799 = vpop.f32.mrf.mxu0
    %v7800 = vadd.f32 %v7786, %v7799
    %7801 = vdwg.mxu0
    %7802 = vmatpush.bf16.msra.mxu0 %v5221
    %7803 = vmatpush.bf16.msra.mxu0 %v5217
    %7804 = vmatpush.bf16.msra.mxu0 %v5213
    %7805 = vmatpush.bf16.msra.mxu0 %v5209
    %7806 = vmatpush.bf16.msra.mxu0 %v5205
    %7807 = vmatpush.bf16.msra.mxu0 %v5201
    %7808 = vmatpush.bf16.msra.mxu0 %v5197
    %7809 = vmatpush.bf16.msra.mxu0 %v5193
    %7810 = vmatmul.bf16.gmra.mxu0 %v1275
    %v7811 = vpop.f32.mrf.mxu0
    %v7812 = vadd.f32 %v7798, %v7811
    %v7813 = vpop.f32.mrf.mxu0
    %v7814 = vadd.f32 %v7800, %v7813
    %7815 = vdwg.mxu0
    %7816 = vmatpush.bf16.msra.mxu0 %v5253
    %7817 = vmatpush.bf16.msra.mxu0 %v5249
    %7818 = vmatpush.bf16.msra.mxu0 %v5245
    %7819 = vmatpush.bf16.msra.mxu0 %v5241
    %7820 = vmatpush.bf16.msra.mxu0 %v5237
    %7821 = vmatpush.bf16.msra.mxu0 %v5233
    %7822 = vmatpush.bf16.msra.mxu0 %v5229
    %7823 = vmatpush.bf16.msra.mxu0 %v5225
    %7824 = vmatmul.bf16.gmra.mxu0 %v1276
    %v7825 = vpop.f32.mrf.mxu0
    %v7826 = vadd.f32 %v7812, %v7825
    %v7827 = vpop.f32.mrf.mxu0
    %v7828 = vadd.f32 %v7814, %v7827
    %7829 = vdwg.mxu0
    %7830 = vmatpush.bf16.msra.mxu0 %v5285
    %7831 = vmatpush.bf16.msra.mxu0 %v5281
    %7832 = vmatpush.bf16.msra.mxu0 %v5277
    %7833 = vmatpush.bf16.msra.mxu0 %v5273
    %7834 = vmatpush.bf16.msra.mxu0 %v5269
    %7835 = vmatpush.bf16.msra.mxu0 %v5265
    %7836 = vmatpush.bf16.msra.mxu0 %v5261
    %7837 = vmatpush.bf16.msra.mxu0 %v5257
    %7838 = vmatmul.bf16.gmra.mxu0 %v1277
    %v7839 = vpop.f32.mrf.mxu0
    %v7840 = vadd.f32 %v7826, %v7839
    %v7841 = vpop.f32.mrf.mxu0
    %v7842 = vadd.f32 %v7828, %v7841
    %7843 = vdwg.mxu0
    %7844 = vmatpush.bf16.msra.mxu0 %v5317
    %7845 = vmatpush.bf16.msra.mxu0 %v5313
    %7846 = vmatpush.bf16.msra.mxu0 %v5309
    %7847 = vmatpush.bf16.msra.mxu0 %v5305
    %7848 = vmatpush.bf16.msra.mxu0 %v5301
    %7849 = vmatpush.bf16.msra.mxu0 %v5297
    %7850 = vmatpush.bf16.msra.mxu0 %v5293
    %7851 = vmatpush.bf16.msra.mxu0 %v5289
    %7852 = vmatmul.bf16.gmra.mxu0 %v1278
    %v7853 = vpop.f32.mrf.mxu0
    %v7854 = vadd.f32 %v7840, %v7853
    %v7855 = vpop.f32.mrf.mxu0
    %v7856 = vadd.f32 %v7842, %v7855
    %7857 = vdwg.mxu0
    %7858 = vmatpush.bf16.msra.mxu0 %v5349
    %7859 = vmatpush.bf16.msra.mxu0 %v5345
    %7860 = vmatpush.bf16.msra.mxu0 %v5341
    %7861 = vmatpush.bf16.msra.mxu0 %v5337
    %7862 = vmatpush.bf16.msra.mxu0 %v5333
    %7863 = vmatpush.bf16.msra.mxu0 %v5329
    %7864 = vmatpush.bf16.msra.mxu0 %v5325
    %7865 = vmatpush.bf16.msra.mxu0 %v5321
    %7866 = vmatmul.bf16.gmra.mxu0 %v1279
    %v7867 = vpop.f32.mrf.mxu0
    %v7868 = vadd.f32 %v7854, %v7867
    %v7869 = vpop.f32.mrf.mxu0
    %v7870 = vadd.f32 %v7856, %v7869
    %7871 = vdwg.mxu0
    %7872 = vmatpush.bf16.msra.mxu0 %v5381
    %7873 = vmatpush.bf16.msra.mxu0 %v5377
    %7874 = vmatpush.bf16.msra.mxu0 %v5373
    %7875 = vmatpush.bf16.msra.mxu0 %v5369
    %7876 = vmatpush.bf16.msra.mxu0 %v5365
    %7877 = vmatpush.bf16.msra.mxu0 %v5361
    %7878 = vmatpush.bf16.msra.mxu0 %v5357
    %7879 = vmatpush.bf16.msra.mxu0 %v5353
    %7880 = vmatmul.bf16.gmra.mxu0 %v1296
    %v7881 = vpop.f32.mrf.mxu0
    %v7882 = vadd.f32 %v7868, %v7881
    %v7883 = vpop.f32.mrf.mxu0
    %v7884 = vadd.f32 %v7870, %v7883
    %7885 = vdwg.mxu0
    %7886 = vmatpush.bf16.msra.mxu0 %v5413
    %7887 = vmatpush.bf16.msra.mxu0 %v5409
    %7888 = vmatpush.bf16.msra.mxu0 %v5405
    %7889 = vmatpush.bf16.msra.mxu0 %v5401
    %7890 = vmatpush.bf16.msra.mxu0 %v5397
    %7891 = vmatpush.bf16.msra.mxu0 %v5393
    %7892 = vmatpush.bf16.msra.mxu0 %v5389
    %7893 = vmatpush.bf16.msra.mxu0 %v5385
    %7894 = vmatmul.bf16.gmra.mxu0 %v1297
    %v7895 = vpop.f32.mrf.mxu0
    %v7896 = vadd.f32 %v7882, %v7895
    %v7897 = vpop.f32.mrf.mxu0
    %v7898 = vadd.f32 %v7884, %v7897
    %7899 = vdwg.mxu0
    %7900 = vmatpush.bf16.msra.mxu0 %v5445
    %7901 = vmatpush.bf16.msra.mxu0 %v5441
    %7902 = vmatpush.bf16.msra.mxu0 %v5437
    %7903 = vmatpush.bf16.msra.mxu0 %v5433
    %7904 = vmatpush.bf16.msra.mxu0 %v5429
    %7905 = vmatpush.bf16.msra.mxu0 %v5425
    %7906 = vmatpush.bf16.msra.mxu0 %v5421
    %7907 = vmatpush.bf16.msra.mxu0 %v5417
    %7908 = vmatmul.bf16.gmra.mxu0 %v1298
    %v7909 = vpop.f32.mrf.mxu0
    %v7910 = vadd.f32 %v7896, %v7909
    %v7911 = vpop.f32.mrf.mxu0
    %v7912 = vadd.f32 %v7898, %v7911
    %7913 = vdwg.mxu0
    %7914 = vmatpush.bf16.msra.mxu0 %v5477
    %7915 = vmatpush.bf16.msra.mxu0 %v5473
    %7916 = vmatpush.bf16.msra.mxu0 %v5469
    %7917 = vmatpush.bf16.msra.mxu0 %v5465
    %7918 = vmatpush.bf16.msra.mxu0 %v5461
    %7919 = vmatpush.bf16.msra.mxu0 %v5457
    %7920 = vmatpush.bf16.msra.mxu0 %v5453
    %7921 = vmatpush.bf16.msra.mxu0 %v5449
    %7922 = vmatmul.bf16.gmra.mxu0 %v1299
    %v7923 = vpop.f32.mrf.mxu0
    %v7924 = vadd.f32 %v7910, %v7923
    %v7925 = vpop.f32.mrf.mxu0
    %v7926 = vadd.f32 %v7912, %v7925
    %7927 = vdwg.mxu0
    %7928 = vmatpush.bf16.msra.mxu0 %v5509
    %7929 = vmatpush.bf16.msra.mxu0 %v5505
    %7930 = vmatpush.bf16.msra.mxu0 %v5501
    %7931 = vmatpush.bf16.msra.mxu0 %v5497
    %7932 = vmatpush.bf16.msra.mxu0 %v5493
    %7933 = vmatpush.bf16.msra.mxu0 %v5489
    %7934 = vmatpush.bf16.msra.mxu0 %v5485
    %7935 = vmatpush.bf16.msra.mxu0 %v5481
    %7936 = vmatmul.bf16.gmra.mxu0 %v1300
    %v7937 = vpop.f32.mrf.mxu0
    %v7938 = vadd.f32 %v7924, %v7937
    %v7939 = vpop.f32.mrf.mxu0
    %v7940 = vadd.f32 %v7926, %v7939
    %7941 = vdwg.mxu0
    %7942 = vmatpush.bf16.msra.mxu0 %v5541
    %7943 = vmatpush.bf16.msra.mxu0 %v5537
    %7944 = vmatpush.bf16.msra.mxu0 %v5533
    %7945 = vmatpush.bf16.msra.mxu0 %v5529
    %7946 = vmatpush.bf16.msra.mxu0 %v5525
    %7947 = vmatpush.bf16.msra.mxu0 %v5521
    %7948 = vmatpush.bf16.msra.mxu0 %v5517
    %7949 = vmatpush.bf16.msra.mxu0 %v5513
    %7950 = vmatmul.bf16.gmra.mxu0 %v1301
    %v7951 = vpop.f32.mrf.mxu0
    %v7952 = vadd.f32 %v7938, %v7951
    %v7953 = vpop.f32.mrf.mxu0
    %v7954 = vadd.f32 %v7940, %v7953
    %7955 = vdwg.mxu0
    %7956 = vmatpush.bf16.msra.mxu0 %v5573
    %7957 = vmatpush.bf16.msra.mxu0 %v5569
    %7958 = vmatpush.bf16.msra.mxu0 %v5565
    %7959 = vmatpush.bf16.msra.mxu0 %v5561
    %7960 = vmatpush.bf16.msra.mxu0 %v5557
    %7961 = vmatpush.bf16.msra.mxu0 %v5553
    %7962 = vmatpush.bf16.msra.mxu0 %v5549
    %7963 = vmatpush.bf16.msra.mxu0 %v5545
    %7964 = vmatmul.bf16.gmra.mxu0 %v1302
    %v7965 = vpop.f32.mrf.mxu0
    %v7966 = vadd.f32 %v7952, %v7965
    %v7967 = vpop.f32.mrf.mxu0
    %v7968 = vadd.f32 %v7954, %v7967
    %7969 = vdwg.mxu0
    %7970 = vmatpush.bf16.msra.mxu0 %v5605
    %7971 = vmatpush.bf16.msra.mxu0 %v5601
    %7972 = vmatpush.bf16.msra.mxu0 %v5597
    %7973 = vmatpush.bf16.msra.mxu0 %v5593
    %7974 = vmatpush.bf16.msra.mxu0 %v5589
    %7975 = vmatpush.bf16.msra.mxu0 %v5585
    %7976 = vmatpush.bf16.msra.mxu0 %v5581
    %7977 = vmatpush.bf16.msra.mxu0 %v5577
    %7978 = vmatmul.bf16.gmra.mxu0 %v1303
    %v7979 = vpop.f32.mrf.mxu0
    %v7980 = vadd.f32 %v7966, %v7979
    %v7981 = vpop.f32.mrf.mxu0
    %v7982 = vadd.f32 %v7968, %v7981
    %7983 = vdwg.mxu0
    %7984 = vmatpush.bf16.msra.mxu0 %v5637
    %7985 = vmatpush.bf16.msra.mxu0 %v5633
    %7986 = vmatpush.bf16.msra.mxu0 %v5629
    %7987 = vmatpush.bf16.msra.mxu0 %v5625
    %7988 = vmatpush.bf16.msra.mxu0 %v5621
    %7989 = vmatpush.bf16.msra.mxu0 %v5617
    %7990 = vmatpush.bf16.msra.mxu0 %v5613
    %7991 = vmatpush.bf16.msra.mxu0 %v5609
    %7992 = vmatmul.bf16.gmra.mxu0 %v1320
    %v7993 = vpop.f32.mrf.mxu0
    %v7994 = vadd.f32 %v7980, %v7993
    %v7995 = vpop.f32.mrf.mxu0
    %v7996 = vadd.f32 %v7982, %v7995
    %7997 = vdwg.mxu0
    %7998 = vmatpush.bf16.msra.mxu0 %v5669
    %7999 = vmatpush.bf16.msra.mxu0 %v5665
    %8000 = vmatpush.bf16.msra.mxu0 %v5661
    %8001 = vmatpush.bf16.msra.mxu0 %v5657
    %8002 = vmatpush.bf16.msra.mxu0 %v5653
    %8003 = vmatpush.bf16.msra.mxu0 %v5649
    %8004 = vmatpush.bf16.msra.mxu0 %v5645
    %8005 = vmatpush.bf16.msra.mxu0 %v5641
    %8006 = vmatmul.bf16.gmra.mxu0 %v1321
    %v8007 = vpop.f32.mrf.mxu0
    %v8008 = vadd.f32 %v7994, %v8007
    %v8009 = vpop.f32.mrf.mxu0
    %v8010 = vadd.f32 %v7996, %v8009
    %8011 = vdwg.mxu0
    %8012 = vmatpush.bf16.msra.mxu0 %v5701
    %8013 = vmatpush.bf16.msra.mxu0 %v5697
    %8014 = vmatpush.bf16.msra.mxu0 %v5693
    %8015 = vmatpush.bf16.msra.mxu0 %v5689
    %8016 = vmatpush.bf16.msra.mxu0 %v5685
    %8017 = vmatpush.bf16.msra.mxu0 %v5681
    %8018 = vmatpush.bf16.msra.mxu0 %v5677
    %8019 = vmatpush.bf16.msra.mxu0 %v5673
    %8020 = vmatmul.bf16.gmra.mxu0 %v1322
    %v8021 = vpop.f32.mrf.mxu0
    %v8022 = vadd.f32 %v8008, %v8021
    %v8023 = vpop.f32.mrf.mxu0
    %v8024 = vadd.f32 %v8010, %v8023
    %8025 = vdwg.mxu0
    %8026 = vmatpush.bf16.msra.mxu0 %v5733
    %8027 = vmatpush.bf16.msra.mxu0 %v5729
    %8028 = vmatpush.bf16.msra.mxu0 %v5725
    %8029 = vmatpush.bf16.msra.mxu0 %v5721
    %8030 = vmatpush.bf16.msra.mxu0 %v5717
    %8031 = vmatpush.bf16.msra.mxu0 %v5713
    %8032 = vmatpush.bf16.msra.mxu0 %v5709
    %8033 = vmatpush.bf16.msra.mxu0 %v5705
    %8034 = vmatmul.bf16.gmra.mxu0 %v1323
    %v8035 = vpop.f32.mrf.mxu0
    %v8036 = vadd.f32 %v8022, %v8035
    %v8037 = vpop.f32.mrf.mxu0
    %v8038 = vadd.f32 %v8024, %v8037
    %8039 = vdwg.mxu0
    %8040 = vmatpush.bf16.msra.mxu0 %v5765
    %8041 = vmatpush.bf16.msra.mxu0 %v5761
    %8042 = vmatpush.bf16.msra.mxu0 %v5757
    %8043 = vmatpush.bf16.msra.mxu0 %v5753
    %8044 = vmatpush.bf16.msra.mxu0 %v5749
    %8045 = vmatpush.bf16.msra.mxu0 %v5745
    %8046 = vmatpush.bf16.msra.mxu0 %v5741
    %8047 = vmatpush.bf16.msra.mxu0 %v5737
    %8048 = vmatmul.bf16.gmra.mxu0 %v1324
    %v8049 = vpop.f32.mrf.mxu0
    %v8050 = vadd.f32 %v8036, %v8049
    %v8051 = vpop.f32.mrf.mxu0
    %v8052 = vadd.f32 %v8038, %v8051
    %8053 = vdwg.mxu0
    %8054 = vmatpush.bf16.msra.mxu0 %v5797
    %8055 = vmatpush.bf16.msra.mxu0 %v5793
    %8056 = vmatpush.bf16.msra.mxu0 %v5789
    %8057 = vmatpush.bf16.msra.mxu0 %v5785
    %8058 = vmatpush.bf16.msra.mxu0 %v5781
    %8059 = vmatpush.bf16.msra.mxu0 %v5777
    %8060 = vmatpush.bf16.msra.mxu0 %v5773
    %8061 = vmatpush.bf16.msra.mxu0 %v5769
    %8062 = vmatmul.bf16.gmra.mxu0 %v1325
    %v8063 = vpop.f32.mrf.mxu0
    %v8064 = vadd.f32 %v8050, %v8063
    %v8065 = vpop.f32.mrf.mxu0
    %v8066 = vadd.f32 %v8052, %v8065
    %8067 = vdwg.mxu0
    %8068 = vmatpush.bf16.msra.mxu0 %v5829
    %8069 = vmatpush.bf16.msra.mxu0 %v5825
    %8070 = vmatpush.bf16.msra.mxu0 %v5821
    %8071 = vmatpush.bf16.msra.mxu0 %v5817
    %8072 = vmatpush.bf16.msra.mxu0 %v5813
    %8073 = vmatpush.bf16.msra.mxu0 %v5809
    %8074 = vmatpush.bf16.msra.mxu0 %v5805
    %8075 = vmatpush.bf16.msra.mxu0 %v5801
    %8076 = vmatmul.bf16.gmra.mxu0 %v1326
    %v8077 = vpop.f32.mrf.mxu0
    %v8078 = vadd.f32 %v8064, %v8077
    %v8079 = vpop.f32.mrf.mxu0
    %v8080 = vadd.f32 %v8066, %v8079
    %8081 = vdwg.mxu0
    %8082 = vmatpush.bf16.msra.mxu0 %v5861
    %8083 = vmatpush.bf16.msra.mxu0 %v5857
    %8084 = vmatpush.bf16.msra.mxu0 %v5853
    %8085 = vmatpush.bf16.msra.mxu0 %v5849
    %8086 = vmatpush.bf16.msra.mxu0 %v5845
    %8087 = vmatpush.bf16.msra.mxu0 %v5841
    %8088 = vmatpush.bf16.msra.mxu0 %v5837
    %8089 = vmatpush.bf16.msra.mxu0 %v5833
    %8090 = vmatmul.bf16.gmra.mxu0 %v1327
    %v8091 = vpop.f32.mrf.mxu0
    %v8092 = vadd.f32 %v8078, %v8091
    %v8093 = vpop.f32.mrf.mxu0
    %v8094 = vadd.f32 %v8080, %v8093
    %8095 = vdwg.mxu0
    %8096 = vmatpush.bf16.msra.mxu0 %v5893
    %8097 = vmatpush.bf16.msra.mxu0 %v5889
    %8098 = vmatpush.bf16.msra.mxu0 %v5885
    %8099 = vmatpush.bf16.msra.mxu0 %v5881
    %8100 = vmatpush.bf16.msra.mxu0 %v5877
    %8101 = vmatpush.bf16.msra.mxu0 %v5873
    %8102 = vmatpush.bf16.msra.mxu0 %v5869
    %8103 = vmatpush.bf16.msra.mxu0 %v5865
    %8104 = vmatmul.bf16.gmra.mxu0 %v1344
    %v8105 = vpop.f32.mrf.mxu0
    %v8106 = vadd.f32 %v8092, %v8105
    %v8107 = vpop.f32.mrf.mxu0
    %v8108 = vadd.f32 %v8094, %v8107
    %8109 = vdwg.mxu0
    %8110 = vmatpush.bf16.msra.mxu0 %v5925
    %8111 = vmatpush.bf16.msra.mxu0 %v5921
    %8112 = vmatpush.bf16.msra.mxu0 %v5917
    %8113 = vmatpush.bf16.msra.mxu0 %v5913
    %8114 = vmatpush.bf16.msra.mxu0 %v5909
    %8115 = vmatpush.bf16.msra.mxu0 %v5905
    %8116 = vmatpush.bf16.msra.mxu0 %v5901
    %8117 = vmatpush.bf16.msra.mxu0 %v5897
    %8118 = vmatmul.bf16.gmra.mxu0 %v1345
    %v8119 = vpop.f32.mrf.mxu0
    %v8120 = vadd.f32 %v8106, %v8119
    %v8121 = vpop.f32.mrf.mxu0
    %v8122 = vadd.f32 %v8108, %v8121
    %8123 = vdwg.mxu0
    %8124 = vmatpush.bf16.msra.mxu0 %v5957
    %8125 = vmatpush.bf16.msra.mxu0 %v5953
    %8126 = vmatpush.bf16.msra.mxu0 %v5949
    %8127 = vmatpush.bf16.msra.mxu0 %v5945
    %8128 = vmatpush.bf16.msra.mxu0 %v5941
    %8129 = vmatpush.bf16.msra.mxu0 %v5937
    %8130 = vmatpush.bf16.msra.mxu0 %v5933
    %8131 = vmatpush.bf16.msra.mxu0 %v5929
    %8132 = vmatmul.bf16.gmra.mxu0 %v1346
    %v8133 = vpop.f32.mrf.mxu0
    %v8134 = vadd.f32 %v8120, %v8133
    %v8135 = vpop.f32.mrf.mxu0
    %v8136 = vadd.f32 %v8122, %v8135
    %8137 = vdwg.mxu0
    %8138 = vmatpush.bf16.msra.mxu0 %v5989
    %8139 = vmatpush.bf16.msra.mxu0 %v5985
    %8140 = vmatpush.bf16.msra.mxu0 %v5981
    %8141 = vmatpush.bf16.msra.mxu0 %v5977
    %8142 = vmatpush.bf16.msra.mxu0 %v5973
    %8143 = vmatpush.bf16.msra.mxu0 %v5969
    %8144 = vmatpush.bf16.msra.mxu0 %v5965
    %8145 = vmatpush.bf16.msra.mxu0 %v5961
    %8146 = vmatmul.bf16.gmra.mxu0 %v1347
    %v8147 = vpop.f32.mrf.mxu0
    %v8148 = vadd.f32 %v8134, %v8147
    %v8149 = vpop.f32.mrf.mxu0
    %v8150 = vadd.f32 %v8136, %v8149
    %8151 = vdwg.mxu0
    %8152 = vmatpush.bf16.msra.mxu0 %v4870
    %8153 = vmatpush.bf16.msra.mxu0 %v4866
    %8154 = vmatpush.bf16.msra.mxu0 %v4862
    %8155 = vmatpush.bf16.msra.mxu0 %v4858
    %8156 = vmatpush.bf16.msra.mxu0 %v4854
    %8157 = vmatpush.bf16.msra.mxu0 %v4850
    %8158 = vmatpush.bf16.msra.mxu0 %v4846
    %8159 = vmatpush.bf16.msra.mxu0 %v4842
    %8160 = vmatmul.bf16.gmra.mxu0 %v1248
    %v8161 = vpop.f32.mrf.mxu0
    %v8162 = vadd.f32 %v1219, %v8161
    %v8163 = vpop.f32.mrf.mxu0
    %v8164 = vadd.f32 %v1219, %v8163
    %8165 = vdwg.mxu0
    %8166 = vmatpush.bf16.msra.mxu0 %v4902
    %8167 = vmatpush.bf16.msra.mxu0 %v4898
    %8168 = vmatpush.bf16.msra.mxu0 %v4894
    %8169 = vmatpush.bf16.msra.mxu0 %v4890
    %8170 = vmatpush.bf16.msra.mxu0 %v4886
    %8171 = vmatpush.bf16.msra.mxu0 %v4882
    %8172 = vmatpush.bf16.msra.mxu0 %v4878
    %8173 = vmatpush.bf16.msra.mxu0 %v4874
    %8174 = vmatmul.bf16.gmra.mxu0 %v1249
    %v8175 = vpop.f32.mrf.mxu0
    %v8176 = vadd.f32 %v8162, %v8175
    %v8177 = vpop.f32.mrf.mxu0
    %v8178 = vadd.f32 %v8164, %v8177
    %8179 = vdwg.mxu0
    %8180 = vmatpush.bf16.msra.mxu0 %v4934
    %8181 = vmatpush.bf16.msra.mxu0 %v4930
    %8182 = vmatpush.bf16.msra.mxu0 %v4926
    %8183 = vmatpush.bf16.msra.mxu0 %v4922
    %8184 = vmatpush.bf16.msra.mxu0 %v4918
    %8185 = vmatpush.bf16.msra.mxu0 %v4914
    %8186 = vmatpush.bf16.msra.mxu0 %v4910
    %8187 = vmatpush.bf16.msra.mxu0 %v4906
    %8188 = vmatmul.bf16.gmra.mxu0 %v1250
    %v8189 = vpop.f32.mrf.mxu0
    %v8190 = vadd.f32 %v8176, %v8189
    %v8191 = vpop.f32.mrf.mxu0
    %v8192 = vadd.f32 %v8178, %v8191
    %8193 = vdwg.mxu0
    %8194 = vmatpush.bf16.msra.mxu0 %v4966
    %8195 = vmatpush.bf16.msra.mxu0 %v4962
    %8196 = vmatpush.bf16.msra.mxu0 %v4958
    %8197 = vmatpush.bf16.msra.mxu0 %v4954
    %8198 = vmatpush.bf16.msra.mxu0 %v4950
    %8199 = vmatpush.bf16.msra.mxu0 %v4946
    %8200 = vmatpush.bf16.msra.mxu0 %v4942
    %8201 = vmatpush.bf16.msra.mxu0 %v4938
    %8202 = vmatmul.bf16.gmra.mxu0 %v1251
    %v8203 = vpop.f32.mrf.mxu0
    %v8204 = vadd.f32 %v8190, %v8203
    %v8205 = vpop.f32.mrf.mxu0
    %v8206 = vadd.f32 %v8192, %v8205
    %8207 = vdwg.mxu0
    %8208 = vmatpush.bf16.msra.mxu0 %v4998
    %8209 = vmatpush.bf16.msra.mxu0 %v4994
    %8210 = vmatpush.bf16.msra.mxu0 %v4990
    %8211 = vmatpush.bf16.msra.mxu0 %v4986
    %8212 = vmatpush.bf16.msra.mxu0 %v4982
    %8213 = vmatpush.bf16.msra.mxu0 %v4978
    %8214 = vmatpush.bf16.msra.mxu0 %v4974
    %8215 = vmatpush.bf16.msra.mxu0 %v4970
    %8216 = vmatmul.bf16.gmra.mxu0 %v1252
    %v8217 = vpop.f32.mrf.mxu0
    %v8218 = vadd.f32 %v8204, %v8217
    %v8219 = vpop.f32.mrf.mxu0
    %v8220 = vadd.f32 %v8206, %v8219
    %8221 = vdwg.mxu0
    %8222 = vmatpush.bf16.msra.mxu0 %v5030
    %8223 = vmatpush.bf16.msra.mxu0 %v5026
    %8224 = vmatpush.bf16.msra.mxu0 %v5022
    %8225 = vmatpush.bf16.msra.mxu0 %v5018
    %8226 = vmatpush.bf16.msra.mxu0 %v5014
    %8227 = vmatpush.bf16.msra.mxu0 %v5010
    %8228 = vmatpush.bf16.msra.mxu0 %v5006
    %8229 = vmatpush.bf16.msra.mxu0 %v5002
    %8230 = vmatmul.bf16.gmra.mxu0 %v1253
    %v8231 = vpop.f32.mrf.mxu0
    %v8232 = vadd.f32 %v8218, %v8231
    %v8233 = vpop.f32.mrf.mxu0
    %v8234 = vadd.f32 %v8220, %v8233
    %8235 = vdwg.mxu0
    %8236 = vmatpush.bf16.msra.mxu0 %v5062
    %8237 = vmatpush.bf16.msra.mxu0 %v5058
    %8238 = vmatpush.bf16.msra.mxu0 %v5054
    %8239 = vmatpush.bf16.msra.mxu0 %v5050
    %8240 = vmatpush.bf16.msra.mxu0 %v5046
    %8241 = vmatpush.bf16.msra.mxu0 %v5042
    %8242 = vmatpush.bf16.msra.mxu0 %v5038
    %8243 = vmatpush.bf16.msra.mxu0 %v5034
    %8244 = vmatmul.bf16.gmra.mxu0 %v1254
    %v8245 = vpop.f32.mrf.mxu0
    %v8246 = vadd.f32 %v8232, %v8245
    %v8247 = vpop.f32.mrf.mxu0
    %v8248 = vadd.f32 %v8234, %v8247
    %8249 = vdwg.mxu0
    %8250 = vmatpush.bf16.msra.mxu0 %v5094
    %8251 = vmatpush.bf16.msra.mxu0 %v5090
    %8252 = vmatpush.bf16.msra.mxu0 %v5086
    %8253 = vmatpush.bf16.msra.mxu0 %v5082
    %8254 = vmatpush.bf16.msra.mxu0 %v5078
    %8255 = vmatpush.bf16.msra.mxu0 %v5074
    %8256 = vmatpush.bf16.msra.mxu0 %v5070
    %8257 = vmatpush.bf16.msra.mxu0 %v5066
    %8258 = vmatmul.bf16.gmra.mxu0 %v1255
    %v8259 = vpop.f32.mrf.mxu0
    %v8260 = vadd.f32 %v8246, %v8259
    %v8261 = vpop.f32.mrf.mxu0
    %v8262 = vadd.f32 %v8248, %v8261
    %8263 = vdwg.mxu0
    %8264 = vmatpush.bf16.msra.mxu0 %v5126
    %8265 = vmatpush.bf16.msra.mxu0 %v5122
    %8266 = vmatpush.bf16.msra.mxu0 %v5118
    %8267 = vmatpush.bf16.msra.mxu0 %v5114
    %8268 = vmatpush.bf16.msra.mxu0 %v5110
    %8269 = vmatpush.bf16.msra.mxu0 %v5106
    %8270 = vmatpush.bf16.msra.mxu0 %v5102
    %8271 = vmatpush.bf16.msra.mxu0 %v5098
    %8272 = vmatmul.bf16.gmra.mxu0 %v1272
    %v8273 = vpop.f32.mrf.mxu0
    %v8274 = vadd.f32 %v8260, %v8273
    %v8275 = vpop.f32.mrf.mxu0
    %v8276 = vadd.f32 %v8262, %v8275
    %8277 = vdwg.mxu0
    %8278 = vmatpush.bf16.msra.mxu0 %v5158
    %8279 = vmatpush.bf16.msra.mxu0 %v5154
    %8280 = vmatpush.bf16.msra.mxu0 %v5150
    %8281 = vmatpush.bf16.msra.mxu0 %v5146
    %8282 = vmatpush.bf16.msra.mxu0 %v5142
    %8283 = vmatpush.bf16.msra.mxu0 %v5138
    %8284 = vmatpush.bf16.msra.mxu0 %v5134
    %8285 = vmatpush.bf16.msra.mxu0 %v5130
    %8286 = vmatmul.bf16.gmra.mxu0 %v1273
    %v8287 = vpop.f32.mrf.mxu0
    %v8288 = vadd.f32 %v8274, %v8287
    %v8289 = vpop.f32.mrf.mxu0
    %v8290 = vadd.f32 %v8276, %v8289
    %8291 = vdwg.mxu0
    %8292 = vmatpush.bf16.msra.mxu0 %v5190
    %8293 = vmatpush.bf16.msra.mxu0 %v5186
    %8294 = vmatpush.bf16.msra.mxu0 %v5182
    %8295 = vmatpush.bf16.msra.mxu0 %v5178
    %8296 = vmatpush.bf16.msra.mxu0 %v5174
    %8297 = vmatpush.bf16.msra.mxu0 %v5170
    %8298 = vmatpush.bf16.msra.mxu0 %v5166
    %8299 = vmatpush.bf16.msra.mxu0 %v5162
    %8300 = vmatmul.bf16.gmra.mxu0 %v1274
    %v8301 = vpop.f32.mrf.mxu0
    %v8302 = vadd.f32 %v8288, %v8301
    %v8303 = vpop.f32.mrf.mxu0
    %v8304 = vadd.f32 %v8290, %v8303
    %8305 = vdwg.mxu0
    %8306 = vmatpush.bf16.msra.mxu0 %v5222
    %8307 = vmatpush.bf16.msra.mxu0 %v5218
    %8308 = vmatpush.bf16.msra.mxu0 %v5214
    %8309 = vmatpush.bf16.msra.mxu0 %v5210
    %8310 = vmatpush.bf16.msra.mxu0 %v5206
    %8311 = vmatpush.bf16.msra.mxu0 %v5202
    %8312 = vmatpush.bf16.msra.mxu0 %v5198
    %8313 = vmatpush.bf16.msra.mxu0 %v5194
    %8314 = vmatmul.bf16.gmra.mxu0 %v1275
    %v8315 = vpop.f32.mrf.mxu0
    %v8316 = vadd.f32 %v8302, %v8315
    %v8317 = vpop.f32.mrf.mxu0
    %v8318 = vadd.f32 %v8304, %v8317
    %8319 = vdwg.mxu0
    %8320 = vmatpush.bf16.msra.mxu0 %v5254
    %8321 = vmatpush.bf16.msra.mxu0 %v5250
    %8322 = vmatpush.bf16.msra.mxu0 %v5246
    %8323 = vmatpush.bf16.msra.mxu0 %v5242
    %8324 = vmatpush.bf16.msra.mxu0 %v5238
    %8325 = vmatpush.bf16.msra.mxu0 %v5234
    %8326 = vmatpush.bf16.msra.mxu0 %v5230
    %8327 = vmatpush.bf16.msra.mxu0 %v5226
    %8328 = vmatmul.bf16.gmra.mxu0 %v1276
    %v8329 = vpop.f32.mrf.mxu0
    %v8330 = vadd.f32 %v8316, %v8329
    %v8331 = vpop.f32.mrf.mxu0
    %v8332 = vadd.f32 %v8318, %v8331
    %8333 = vdwg.mxu0
    %8334 = vmatpush.bf16.msra.mxu0 %v5286
    %8335 = vmatpush.bf16.msra.mxu0 %v5282
    %8336 = vmatpush.bf16.msra.mxu0 %v5278
    %8337 = vmatpush.bf16.msra.mxu0 %v5274
    %8338 = vmatpush.bf16.msra.mxu0 %v5270
    %8339 = vmatpush.bf16.msra.mxu0 %v5266
    %8340 = vmatpush.bf16.msra.mxu0 %v5262
    %8341 = vmatpush.bf16.msra.mxu0 %v5258
    %8342 = vmatmul.bf16.gmra.mxu0 %v1277
    %v8343 = vpop.f32.mrf.mxu0
    %v8344 = vadd.f32 %v8330, %v8343
    %v8345 = vpop.f32.mrf.mxu0
    %v8346 = vadd.f32 %v8332, %v8345
    %8347 = vdwg.mxu0
    %8348 = vmatpush.bf16.msra.mxu0 %v5318
    %8349 = vmatpush.bf16.msra.mxu0 %v5314
    %8350 = vmatpush.bf16.msra.mxu0 %v5310
    %8351 = vmatpush.bf16.msra.mxu0 %v5306
    %8352 = vmatpush.bf16.msra.mxu0 %v5302
    %8353 = vmatpush.bf16.msra.mxu0 %v5298
    %8354 = vmatpush.bf16.msra.mxu0 %v5294
    %8355 = vmatpush.bf16.msra.mxu0 %v5290
    %8356 = vmatmul.bf16.gmra.mxu0 %v1278
    %v8357 = vpop.f32.mrf.mxu0
    %v8358 = vadd.f32 %v8344, %v8357
    %v8359 = vpop.f32.mrf.mxu0
    %v8360 = vadd.f32 %v8346, %v8359
    %8361 = vdwg.mxu0
    %8362 = vmatpush.bf16.msra.mxu0 %v5350
    %8363 = vmatpush.bf16.msra.mxu0 %v5346
    %8364 = vmatpush.bf16.msra.mxu0 %v5342
    %8365 = vmatpush.bf16.msra.mxu0 %v5338
    %8366 = vmatpush.bf16.msra.mxu0 %v5334
    %8367 = vmatpush.bf16.msra.mxu0 %v5330
    %8368 = vmatpush.bf16.msra.mxu0 %v5326
    %8369 = vmatpush.bf16.msra.mxu0 %v5322
    %8370 = vmatmul.bf16.gmra.mxu0 %v1279
    %v8371 = vpop.f32.mrf.mxu0
    %v8372 = vadd.f32 %v8358, %v8371
    %v8373 = vpop.f32.mrf.mxu0
    %v8374 = vadd.f32 %v8360, %v8373
    %8375 = vdwg.mxu0
    %8376 = vmatpush.bf16.msra.mxu0 %v5382
    %8377 = vmatpush.bf16.msra.mxu0 %v5378
    %8378 = vmatpush.bf16.msra.mxu0 %v5374
    %8379 = vmatpush.bf16.msra.mxu0 %v5370
    %8380 = vmatpush.bf16.msra.mxu0 %v5366
    %8381 = vmatpush.bf16.msra.mxu0 %v5362
    %8382 = vmatpush.bf16.msra.mxu0 %v5358
    %8383 = vmatpush.bf16.msra.mxu0 %v5354
    %8384 = vmatmul.bf16.gmra.mxu0 %v1296
    %v8385 = vpop.f32.mrf.mxu0
    %v8386 = vadd.f32 %v8372, %v8385
    %v8387 = vpop.f32.mrf.mxu0
    %v8388 = vadd.f32 %v8374, %v8387
    %8389 = vdwg.mxu0
    %8390 = vmatpush.bf16.msra.mxu0 %v5414
    %8391 = vmatpush.bf16.msra.mxu0 %v5410
    %8392 = vmatpush.bf16.msra.mxu0 %v5406
    %8393 = vmatpush.bf16.msra.mxu0 %v5402
    %8394 = vmatpush.bf16.msra.mxu0 %v5398
    %8395 = vmatpush.bf16.msra.mxu0 %v5394
    %8396 = vmatpush.bf16.msra.mxu0 %v5390
    %8397 = vmatpush.bf16.msra.mxu0 %v5386
    %8398 = vmatmul.bf16.gmra.mxu0 %v1297
    %v8399 = vpop.f32.mrf.mxu0
    %v8400 = vadd.f32 %v8386, %v8399
    %v8401 = vpop.f32.mrf.mxu0
    %v8402 = vadd.f32 %v8388, %v8401
    %8403 = vdwg.mxu0
    %8404 = vmatpush.bf16.msra.mxu0 %v5446
    %8405 = vmatpush.bf16.msra.mxu0 %v5442
    %8406 = vmatpush.bf16.msra.mxu0 %v5438
    %8407 = vmatpush.bf16.msra.mxu0 %v5434
    %8408 = vmatpush.bf16.msra.mxu0 %v5430
    %8409 = vmatpush.bf16.msra.mxu0 %v5426
    %8410 = vmatpush.bf16.msra.mxu0 %v5422
    %8411 = vmatpush.bf16.msra.mxu0 %v5418
    %8412 = vmatmul.bf16.gmra.mxu0 %v1298
    %v8413 = vpop.f32.mrf.mxu0
    %v8414 = vadd.f32 %v8400, %v8413
    %v8415 = vpop.f32.mrf.mxu0
    %v8416 = vadd.f32 %v8402, %v8415
    %8417 = vdwg.mxu0
    %8418 = vmatpush.bf16.msra.mxu0 %v5478
    %8419 = vmatpush.bf16.msra.mxu0 %v5474
    %8420 = vmatpush.bf16.msra.mxu0 %v5470
    %8421 = vmatpush.bf16.msra.mxu0 %v5466
    %8422 = vmatpush.bf16.msra.mxu0 %v5462
    %8423 = vmatpush.bf16.msra.mxu0 %v5458
    %8424 = vmatpush.bf16.msra.mxu0 %v5454
    %8425 = vmatpush.bf16.msra.mxu0 %v5450
    %8426 = vmatmul.bf16.gmra.mxu0 %v1299
    %v8427 = vpop.f32.mrf.mxu0
    %v8428 = vadd.f32 %v8414, %v8427
    %v8429 = vpop.f32.mrf.mxu0
    %v8430 = vadd.f32 %v8416, %v8429
    %8431 = vdwg.mxu0
    %8432 = vmatpush.bf16.msra.mxu0 %v5510
    %8433 = vmatpush.bf16.msra.mxu0 %v5506
    %8434 = vmatpush.bf16.msra.mxu0 %v5502
    %8435 = vmatpush.bf16.msra.mxu0 %v5498
    %8436 = vmatpush.bf16.msra.mxu0 %v5494
    %8437 = vmatpush.bf16.msra.mxu0 %v5490
    %8438 = vmatpush.bf16.msra.mxu0 %v5486
    %8439 = vmatpush.bf16.msra.mxu0 %v5482
    %8440 = vmatmul.bf16.gmra.mxu0 %v1300
    %v8441 = vpop.f32.mrf.mxu0
    %v8442 = vadd.f32 %v8428, %v8441
    %v8443 = vpop.f32.mrf.mxu0
    %v8444 = vadd.f32 %v8430, %v8443
    %8445 = vdwg.mxu0
    %8446 = vmatpush.bf16.msra.mxu0 %v5542
    %8447 = vmatpush.bf16.msra.mxu0 %v5538
    %8448 = vmatpush.bf16.msra.mxu0 %v5534
    %8449 = vmatpush.bf16.msra.mxu0 %v5530
    %8450 = vmatpush.bf16.msra.mxu0 %v5526
    %8451 = vmatpush.bf16.msra.mxu0 %v5522
    %8452 = vmatpush.bf16.msra.mxu0 %v5518
    %8453 = vmatpush.bf16.msra.mxu0 %v5514
    %8454 = vmatmul.bf16.gmra.mxu0 %v1301
    %v8455 = vpop.f32.mrf.mxu0
    %v8456 = vadd.f32 %v8442, %v8455
    %v8457 = vpop.f32.mrf.mxu0
    %v8458 = vadd.f32 %v8444, %v8457
    %8459 = vdwg.mxu0
    %8460 = vmatpush.bf16.msra.mxu0 %v5574
    %8461 = vmatpush.bf16.msra.mxu0 %v5570
    %8462 = vmatpush.bf16.msra.mxu0 %v5566
    %8463 = vmatpush.bf16.msra.mxu0 %v5562
    %8464 = vmatpush.bf16.msra.mxu0 %v5558
    %8465 = vmatpush.bf16.msra.mxu0 %v5554
    %8466 = vmatpush.bf16.msra.mxu0 %v5550
    %8467 = vmatpush.bf16.msra.mxu0 %v5546
    %8468 = vmatmul.bf16.gmra.mxu0 %v1302
    %v8469 = vpop.f32.mrf.mxu0
    %v8470 = vadd.f32 %v8456, %v8469
    %v8471 = vpop.f32.mrf.mxu0
    %v8472 = vadd.f32 %v8458, %v8471
    %8473 = vdwg.mxu0
    %8474 = vmatpush.bf16.msra.mxu0 %v5606
    %8475 = vmatpush.bf16.msra.mxu0 %v5602
    %8476 = vmatpush.bf16.msra.mxu0 %v5598
    %8477 = vmatpush.bf16.msra.mxu0 %v5594
    %8478 = vmatpush.bf16.msra.mxu0 %v5590
    %8479 = vmatpush.bf16.msra.mxu0 %v5586
    %8480 = vmatpush.bf16.msra.mxu0 %v5582
    %8481 = vmatpush.bf16.msra.mxu0 %v5578
    %8482 = vmatmul.bf16.gmra.mxu0 %v1303
    %v8483 = vpop.f32.mrf.mxu0
    %v8484 = vadd.f32 %v8470, %v8483
    %v8485 = vpop.f32.mrf.mxu0
    %v8486 = vadd.f32 %v8472, %v8485
    %8487 = vdwg.mxu0
    %8488 = vmatpush.bf16.msra.mxu0 %v5638
    %8489 = vmatpush.bf16.msra.mxu0 %v5634
    %8490 = vmatpush.bf16.msra.mxu0 %v5630
    %8491 = vmatpush.bf16.msra.mxu0 %v5626
    %8492 = vmatpush.bf16.msra.mxu0 %v5622
    %8493 = vmatpush.bf16.msra.mxu0 %v5618
    %8494 = vmatpush.bf16.msra.mxu0 %v5614
    %8495 = vmatpush.bf16.msra.mxu0 %v5610
    %8496 = vmatmul.bf16.gmra.mxu0 %v1320
    %v8497 = vpop.f32.mrf.mxu0
    %v8498 = vadd.f32 %v8484, %v8497
    %v8499 = vpop.f32.mrf.mxu0
    %v8500 = vadd.f32 %v8486, %v8499
    %8501 = vdwg.mxu0
    %8502 = vmatpush.bf16.msra.mxu0 %v5670
    %8503 = vmatpush.bf16.msra.mxu0 %v5666
    %8504 = vmatpush.bf16.msra.mxu0 %v5662
    %8505 = vmatpush.bf16.msra.mxu0 %v5658
    %8506 = vmatpush.bf16.msra.mxu0 %v5654
    %8507 = vmatpush.bf16.msra.mxu0 %v5650
    %8508 = vmatpush.bf16.msra.mxu0 %v5646
    %8509 = vmatpush.bf16.msra.mxu0 %v5642
    %8510 = vmatmul.bf16.gmra.mxu0 %v1321
    %v8511 = vpop.f32.mrf.mxu0
    %v8512 = vadd.f32 %v8498, %v8511
    %v8513 = vpop.f32.mrf.mxu0
    %v8514 = vadd.f32 %v8500, %v8513
    %8515 = vdwg.mxu0
    %8516 = vmatpush.bf16.msra.mxu0 %v5702
    %8517 = vmatpush.bf16.msra.mxu0 %v5698
    %8518 = vmatpush.bf16.msra.mxu0 %v5694
    %8519 = vmatpush.bf16.msra.mxu0 %v5690
    %8520 = vmatpush.bf16.msra.mxu0 %v5686
    %8521 = vmatpush.bf16.msra.mxu0 %v5682
    %8522 = vmatpush.bf16.msra.mxu0 %v5678
    %8523 = vmatpush.bf16.msra.mxu0 %v5674
    %8524 = vmatmul.bf16.gmra.mxu0 %v1322
    %v8525 = vpop.f32.mrf.mxu0
    %v8526 = vadd.f32 %v8512, %v8525
    %v8527 = vpop.f32.mrf.mxu0
    %v8528 = vadd.f32 %v8514, %v8527
    %8529 = vdwg.mxu0
    %8530 = vmatpush.bf16.msra.mxu0 %v5734
    %8531 = vmatpush.bf16.msra.mxu0 %v5730
    %8532 = vmatpush.bf16.msra.mxu0 %v5726
    %8533 = vmatpush.bf16.msra.mxu0 %v5722
    %8534 = vmatpush.bf16.msra.mxu0 %v5718
    %8535 = vmatpush.bf16.msra.mxu0 %v5714
    %8536 = vmatpush.bf16.msra.mxu0 %v5710
    %8537 = vmatpush.bf16.msra.mxu0 %v5706
    %8538 = vmatmul.bf16.gmra.mxu0 %v1323
    %v8539 = vpop.f32.mrf.mxu0
    %v8540 = vadd.f32 %v8526, %v8539
    %v8541 = vpop.f32.mrf.mxu0
    %v8542 = vadd.f32 %v8528, %v8541
    %8543 = vdwg.mxu0
    %8544 = vmatpush.bf16.msra.mxu0 %v5766
    %8545 = vmatpush.bf16.msra.mxu0 %v5762
    %8546 = vmatpush.bf16.msra.mxu0 %v5758
    %8547 = vmatpush.bf16.msra.mxu0 %v5754
    %8548 = vmatpush.bf16.msra.mxu0 %v5750
    %8549 = vmatpush.bf16.msra.mxu0 %v5746
    %8550 = vmatpush.bf16.msra.mxu0 %v5742
    %8551 = vmatpush.bf16.msra.mxu0 %v5738
    %8552 = vmatmul.bf16.gmra.mxu0 %v1324
    %v8553 = vpop.f32.mrf.mxu0
    %v8554 = vadd.f32 %v8540, %v8553
    %v8555 = vpop.f32.mrf.mxu0
    %v8556 = vadd.f32 %v8542, %v8555
    %8557 = vdwg.mxu0
    %8558 = vmatpush.bf16.msra.mxu0 %v5798
    %8559 = vmatpush.bf16.msra.mxu0 %v5794
    %8560 = vmatpush.bf16.msra.mxu0 %v5790
    %8561 = vmatpush.bf16.msra.mxu0 %v5786
    %8562 = vmatpush.bf16.msra.mxu0 %v5782
    %8563 = vmatpush.bf16.msra.mxu0 %v5778
    %8564 = vmatpush.bf16.msra.mxu0 %v5774
    %8565 = vmatpush.bf16.msra.mxu0 %v5770
    %8566 = vmatmul.bf16.gmra.mxu0 %v1325
    %v8567 = vpop.f32.mrf.mxu0
    %v8568 = vadd.f32 %v8554, %v8567
    %v8569 = vpop.f32.mrf.mxu0
    %v8570 = vadd.f32 %v8556, %v8569
    %8571 = vdwg.mxu0
    %8572 = vmatpush.bf16.msra.mxu0 %v5830
    %8573 = vmatpush.bf16.msra.mxu0 %v5826
    %8574 = vmatpush.bf16.msra.mxu0 %v5822
    %8575 = vmatpush.bf16.msra.mxu0 %v5818
    %8576 = vmatpush.bf16.msra.mxu0 %v5814
    %8577 = vmatpush.bf16.msra.mxu0 %v5810
    %8578 = vmatpush.bf16.msra.mxu0 %v5806
    %8579 = vmatpush.bf16.msra.mxu0 %v5802
    %8580 = vmatmul.bf16.gmra.mxu0 %v1326
    %v8581 = vpop.f32.mrf.mxu0
    %v8582 = vadd.f32 %v8568, %v8581
    %v8583 = vpop.f32.mrf.mxu0
    %v8584 = vadd.f32 %v8570, %v8583
    %8585 = vdwg.mxu0
    %8586 = vmatpush.bf16.msra.mxu0 %v5862
    %8587 = vmatpush.bf16.msra.mxu0 %v5858
    %8588 = vmatpush.bf16.msra.mxu0 %v5854
    %8589 = vmatpush.bf16.msra.mxu0 %v5850
    %8590 = vmatpush.bf16.msra.mxu0 %v5846
    %8591 = vmatpush.bf16.msra.mxu0 %v5842
    %8592 = vmatpush.bf16.msra.mxu0 %v5838
    %8593 = vmatpush.bf16.msra.mxu0 %v5834
    %8594 = vmatmul.bf16.gmra.mxu0 %v1327
    %v8595 = vpop.f32.mrf.mxu0
    %v8596 = vadd.f32 %v8582, %v8595
    %v8597 = vpop.f32.mrf.mxu0
    %v8598 = vadd.f32 %v8584, %v8597
    %8599 = vdwg.mxu0
    %8600 = vmatpush.bf16.msra.mxu0 %v5894
    %8601 = vmatpush.bf16.msra.mxu0 %v5890
    %8602 = vmatpush.bf16.msra.mxu0 %v5886
    %8603 = vmatpush.bf16.msra.mxu0 %v5882
    %8604 = vmatpush.bf16.msra.mxu0 %v5878
    %8605 = vmatpush.bf16.msra.mxu0 %v5874
    %8606 = vmatpush.bf16.msra.mxu0 %v5870
    %8607 = vmatpush.bf16.msra.mxu0 %v5866
    %8608 = vmatmul.bf16.gmra.mxu0 %v1344
    %v8609 = vpop.f32.mrf.mxu0
    %v8610 = vadd.f32 %v8596, %v8609
    %v8611 = vpop.f32.mrf.mxu0
    %v8612 = vadd.f32 %v8598, %v8611
    %8613 = vdwg.mxu0
    %8614 = vmatpush.bf16.msra.mxu0 %v5926
    %8615 = vmatpush.bf16.msra.mxu0 %v5922
    %8616 = vmatpush.bf16.msra.mxu0 %v5918
    %8617 = vmatpush.bf16.msra.mxu0 %v5914
    %8618 = vmatpush.bf16.msra.mxu0 %v5910
    %8619 = vmatpush.bf16.msra.mxu0 %v5906
    %8620 = vmatpush.bf16.msra.mxu0 %v5902
    %8621 = vmatpush.bf16.msra.mxu0 %v5898
    %8622 = vmatmul.bf16.gmra.mxu0 %v1345
    %v8623 = vpop.f32.mrf.mxu0
    %v8624 = vadd.f32 %v8610, %v8623
    %v8625 = vpop.f32.mrf.mxu0
    %v8626 = vadd.f32 %v8612, %v8625
    %8627 = vdwg.mxu0
    %8628 = vmatpush.bf16.msra.mxu0 %v5958
    %8629 = vmatpush.bf16.msra.mxu0 %v5954
    %8630 = vmatpush.bf16.msra.mxu0 %v5950
    %8631 = vmatpush.bf16.msra.mxu0 %v5946
    %8632 = vmatpush.bf16.msra.mxu0 %v5942
    %8633 = vmatpush.bf16.msra.mxu0 %v5938
    %8634 = vmatpush.bf16.msra.mxu0 %v5934
    %8635 = vmatpush.bf16.msra.mxu0 %v5930
    %8636 = vmatmul.bf16.gmra.mxu0 %v1346
    %v8637 = vpop.f32.mrf.mxu0
    %v8638 = vadd.f32 %v8624, %v8637
    %v8639 = vpop.f32.mrf.mxu0
    %v8640 = vadd.f32 %v8626, %v8639
    %8641 = vdwg.mxu0
    %8642 = vmatpush.bf16.msra.mxu0 %v5990
    %8643 = vmatpush.bf16.msra.mxu0 %v5986
    %8644 = vmatpush.bf16.msra.mxu0 %v5982
    %8645 = vmatpush.bf16.msra.mxu0 %v5978
    %8646 = vmatpush.bf16.msra.mxu0 %v5974
    %8647 = vmatpush.bf16.msra.mxu0 %v5970
    %8648 = vmatpush.bf16.msra.mxu0 %v5966
    %8649 = vmatpush.bf16.msra.mxu0 %v5962
    %8650 = vmatmul.bf16.gmra.mxu0 %v1347
    %v8651 = vpop.f32.mrf.mxu0
    %v8652 = vadd.f32 %v8638, %v8651
    %v8653 = vpop.f32.mrf.mxu0
    %v8654 = vadd.f32 %v8640, %v8653
    %8655 = vdwg.mxu0
    %8656 = vmatpush.bf16.msra.mxu0 %v4871
    %8657 = vmatpush.bf16.msra.mxu0 %v4867
    %8658 = vmatpush.bf16.msra.mxu0 %v4863
    %8659 = vmatpush.bf16.msra.mxu0 %v4859
    %8660 = vmatpush.bf16.msra.mxu0 %v4855
    %8661 = vmatpush.bf16.msra.mxu0 %v4851
    %8662 = vmatpush.bf16.msra.mxu0 %v4847
    %8663 = vmatpush.bf16.msra.mxu0 %v4843
    %8664 = vmatmul.bf16.gmra.mxu0 %v1248
    %v8665 = vpop.f32.mrf.mxu0
    %v8666 = vadd.f32 %v1220, %v8665
    %v8667 = vpop.f32.mrf.mxu0
    %v8668 = vadd.f32 %v1220, %v8667
    %8669 = vdwg.mxu0
    %8670 = vmatpush.bf16.msra.mxu0 %v4903
    %8671 = vmatpush.bf16.msra.mxu0 %v4899
    %8672 = vmatpush.bf16.msra.mxu0 %v4895
    %8673 = vmatpush.bf16.msra.mxu0 %v4891
    %8674 = vmatpush.bf16.msra.mxu0 %v4887
    %8675 = vmatpush.bf16.msra.mxu0 %v4883
    %8676 = vmatpush.bf16.msra.mxu0 %v4879
    %8677 = vmatpush.bf16.msra.mxu0 %v4875
    %8678 = vmatmul.bf16.gmra.mxu0 %v1249
    %v8679 = vpop.f32.mrf.mxu0
    %v8680 = vadd.f32 %v8666, %v8679
    %v8681 = vpop.f32.mrf.mxu0
    %v8682 = vadd.f32 %v8668, %v8681
    %8683 = vdwg.mxu0
    %8684 = vmatpush.bf16.msra.mxu0 %v4935
    %8685 = vmatpush.bf16.msra.mxu0 %v4931
    %8686 = vmatpush.bf16.msra.mxu0 %v4927
    %8687 = vmatpush.bf16.msra.mxu0 %v4923
    %8688 = vmatpush.bf16.msra.mxu0 %v4919
    %8689 = vmatpush.bf16.msra.mxu0 %v4915
    %8690 = vmatpush.bf16.msra.mxu0 %v4911
    %8691 = vmatpush.bf16.msra.mxu0 %v4907
    %8692 = vmatmul.bf16.gmra.mxu0 %v1250
    %v8693 = vpop.f32.mrf.mxu0
    %v8694 = vadd.f32 %v8680, %v8693
    %v8695 = vpop.f32.mrf.mxu0
    %v8696 = vadd.f32 %v8682, %v8695
    %8697 = vdwg.mxu0
    %8698 = vmatpush.bf16.msra.mxu0 %v4967
    %8699 = vmatpush.bf16.msra.mxu0 %v4963
    %8700 = vmatpush.bf16.msra.mxu0 %v4959
    %8701 = vmatpush.bf16.msra.mxu0 %v4955
    %8702 = vmatpush.bf16.msra.mxu0 %v4951
    %8703 = vmatpush.bf16.msra.mxu0 %v4947
    %8704 = vmatpush.bf16.msra.mxu0 %v4943
    %8705 = vmatpush.bf16.msra.mxu0 %v4939
    %8706 = vmatmul.bf16.gmra.mxu0 %v1251
    %v8707 = vpop.f32.mrf.mxu0
    %v8708 = vadd.f32 %v8694, %v8707
    %v8709 = vpop.f32.mrf.mxu0
    %v8710 = vadd.f32 %v8696, %v8709
    %8711 = vdwg.mxu0
    %8712 = vmatpush.bf16.msra.mxu0 %v4999
    %8713 = vmatpush.bf16.msra.mxu0 %v4995
    %8714 = vmatpush.bf16.msra.mxu0 %v4991
    %8715 = vmatpush.bf16.msra.mxu0 %v4987
    %8716 = vmatpush.bf16.msra.mxu0 %v4983
    %8717 = vmatpush.bf16.msra.mxu0 %v4979
    %8718 = vmatpush.bf16.msra.mxu0 %v4975
    %8719 = vmatpush.bf16.msra.mxu0 %v4971
    %8720 = vmatmul.bf16.gmra.mxu0 %v1252
    %v8721 = vpop.f32.mrf.mxu0
    %v8722 = vadd.f32 %v8708, %v8721
    %v8723 = vpop.f32.mrf.mxu0
    %v8724 = vadd.f32 %v8710, %v8723
    %8725 = vdwg.mxu0
    %8726 = vmatpush.bf16.msra.mxu0 %v5031
    %8727 = vmatpush.bf16.msra.mxu0 %v5027
    %8728 = vmatpush.bf16.msra.mxu0 %v5023
    %8729 = vmatpush.bf16.msra.mxu0 %v5019
    %8730 = vmatpush.bf16.msra.mxu0 %v5015
    %8731 = vmatpush.bf16.msra.mxu0 %v5011
    %8732 = vmatpush.bf16.msra.mxu0 %v5007
    %8733 = vmatpush.bf16.msra.mxu0 %v5003
    %8734 = vmatmul.bf16.gmra.mxu0 %v1253
    %v8735 = vpop.f32.mrf.mxu0
    %v8736 = vadd.f32 %v8722, %v8735
    %v8737 = vpop.f32.mrf.mxu0
    %v8738 = vadd.f32 %v8724, %v8737
    %8739 = vdwg.mxu0
    %8740 = vmatpush.bf16.msra.mxu0 %v5063
    %8741 = vmatpush.bf16.msra.mxu0 %v5059
    %8742 = vmatpush.bf16.msra.mxu0 %v5055
    %8743 = vmatpush.bf16.msra.mxu0 %v5051
    %8744 = vmatpush.bf16.msra.mxu0 %v5047
    %8745 = vmatpush.bf16.msra.mxu0 %v5043
    %8746 = vmatpush.bf16.msra.mxu0 %v5039
    %8747 = vmatpush.bf16.msra.mxu0 %v5035
    %8748 = vmatmul.bf16.gmra.mxu0 %v1254
    %v8749 = vpop.f32.mrf.mxu0
    %v8750 = vadd.f32 %v8736, %v8749
    %v8751 = vpop.f32.mrf.mxu0
    %v8752 = vadd.f32 %v8738, %v8751
    %8753 = vdwg.mxu0
    %8754 = vmatpush.bf16.msra.mxu0 %v5095
    %8755 = vmatpush.bf16.msra.mxu0 %v5091
    %8756 = vmatpush.bf16.msra.mxu0 %v5087
    %8757 = vmatpush.bf16.msra.mxu0 %v5083
    %8758 = vmatpush.bf16.msra.mxu0 %v5079
    %8759 = vmatpush.bf16.msra.mxu0 %v5075
    %8760 = vmatpush.bf16.msra.mxu0 %v5071
    %8761 = vmatpush.bf16.msra.mxu0 %v5067
    %8762 = vmatmul.bf16.gmra.mxu0 %v1255
    %v8763 = vpop.f32.mrf.mxu0
    %v8764 = vadd.f32 %v8750, %v8763
    %v8765 = vpop.f32.mrf.mxu0
    %v8766 = vadd.f32 %v8752, %v8765
    %8767 = vdwg.mxu0
    %8768 = vmatpush.bf16.msra.mxu0 %v5127
    %8769 = vmatpush.bf16.msra.mxu0 %v5123
    %8770 = vmatpush.bf16.msra.mxu0 %v5119
    %8771 = vmatpush.bf16.msra.mxu0 %v5115
    %8772 = vmatpush.bf16.msra.mxu0 %v5111
    %8773 = vmatpush.bf16.msra.mxu0 %v5107
    %8774 = vmatpush.bf16.msra.mxu0 %v5103
    %8775 = vmatpush.bf16.msra.mxu0 %v5099
    %8776 = vmatmul.bf16.gmra.mxu0 %v1272
    %v8777 = vpop.f32.mrf.mxu0
    %v8778 = vadd.f32 %v8764, %v8777
    %v8779 = vpop.f32.mrf.mxu0
    %v8780 = vadd.f32 %v8766, %v8779
    %8781 = vdwg.mxu0
    %8782 = vmatpush.bf16.msra.mxu0 %v5159
    %8783 = vmatpush.bf16.msra.mxu0 %v5155
    %8784 = vmatpush.bf16.msra.mxu0 %v5151
    %8785 = vmatpush.bf16.msra.mxu0 %v5147
    %8786 = vmatpush.bf16.msra.mxu0 %v5143
    %8787 = vmatpush.bf16.msra.mxu0 %v5139
    %8788 = vmatpush.bf16.msra.mxu0 %v5135
    %8789 = vmatpush.bf16.msra.mxu0 %v5131
    %8790 = vmatmul.bf16.gmra.mxu0 %v1273
    %v8791 = vpop.f32.mrf.mxu0
    %v8792 = vadd.f32 %v8778, %v8791
    %v8793 = vpop.f32.mrf.mxu0
    %v8794 = vadd.f32 %v8780, %v8793
    %8795 = vdwg.mxu0
    %8796 = vmatpush.bf16.msra.mxu0 %v5191
    %8797 = vmatpush.bf16.msra.mxu0 %v5187
    %8798 = vmatpush.bf16.msra.mxu0 %v5183
    %8799 = vmatpush.bf16.msra.mxu0 %v5179
    %8800 = vmatpush.bf16.msra.mxu0 %v5175
    %8801 = vmatpush.bf16.msra.mxu0 %v5171
    %8802 = vmatpush.bf16.msra.mxu0 %v5167
    %8803 = vmatpush.bf16.msra.mxu0 %v5163
    %8804 = vmatmul.bf16.gmra.mxu0 %v1274
    %v8805 = vpop.f32.mrf.mxu0
    %v8806 = vadd.f32 %v8792, %v8805
    %v8807 = vpop.f32.mrf.mxu0
    %v8808 = vadd.f32 %v8794, %v8807
    %8809 = vdwg.mxu0
    %8810 = vmatpush.bf16.msra.mxu0 %v5223
    %8811 = vmatpush.bf16.msra.mxu0 %v5219
    %8812 = vmatpush.bf16.msra.mxu0 %v5215
    %8813 = vmatpush.bf16.msra.mxu0 %v5211
    %8814 = vmatpush.bf16.msra.mxu0 %v5207
    %8815 = vmatpush.bf16.msra.mxu0 %v5203
    %8816 = vmatpush.bf16.msra.mxu0 %v5199
    %8817 = vmatpush.bf16.msra.mxu0 %v5195
    %8818 = vmatmul.bf16.gmra.mxu0 %v1275
    %v8819 = vpop.f32.mrf.mxu0
    %v8820 = vadd.f32 %v8806, %v8819
    %v8821 = vpop.f32.mrf.mxu0
    %v8822 = vadd.f32 %v8808, %v8821
    %8823 = vdwg.mxu0
    %8824 = vmatpush.bf16.msra.mxu0 %v5255
    %8825 = vmatpush.bf16.msra.mxu0 %v5251
    %8826 = vmatpush.bf16.msra.mxu0 %v5247
    %8827 = vmatpush.bf16.msra.mxu0 %v5243
    %8828 = vmatpush.bf16.msra.mxu0 %v5239
    %8829 = vmatpush.bf16.msra.mxu0 %v5235
    %8830 = vmatpush.bf16.msra.mxu0 %v5231
    %8831 = vmatpush.bf16.msra.mxu0 %v5227
    %8832 = vmatmul.bf16.gmra.mxu0 %v1276
    %v8833 = vpop.f32.mrf.mxu0
    %v8834 = vadd.f32 %v8820, %v8833
    %v8835 = vpop.f32.mrf.mxu0
    %v8836 = vadd.f32 %v8822, %v8835
    %8837 = vdwg.mxu0
    %8838 = vmatpush.bf16.msra.mxu0 %v5287
    %8839 = vmatpush.bf16.msra.mxu0 %v5283
    %8840 = vmatpush.bf16.msra.mxu0 %v5279
    %8841 = vmatpush.bf16.msra.mxu0 %v5275
    %8842 = vmatpush.bf16.msra.mxu0 %v5271
    %8843 = vmatpush.bf16.msra.mxu0 %v5267
    %8844 = vmatpush.bf16.msra.mxu0 %v5263
    %8845 = vmatpush.bf16.msra.mxu0 %v5259
    %8846 = vmatmul.bf16.gmra.mxu0 %v1277
    %v8847 = vpop.f32.mrf.mxu0
    %v8848 = vadd.f32 %v8834, %v8847
    %v8849 = vpop.f32.mrf.mxu0
    %v8850 = vadd.f32 %v8836, %v8849
    %8851 = vdwg.mxu0
    %8852 = vmatpush.bf16.msra.mxu0 %v5319
    %8853 = vmatpush.bf16.msra.mxu0 %v5315
    %8854 = vmatpush.bf16.msra.mxu0 %v5311
    %8855 = vmatpush.bf16.msra.mxu0 %v5307
    %8856 = vmatpush.bf16.msra.mxu0 %v5303
    %8857 = vmatpush.bf16.msra.mxu0 %v5299
    %8858 = vmatpush.bf16.msra.mxu0 %v5295
    %8859 = vmatpush.bf16.msra.mxu0 %v5291
    %8860 = vmatmul.bf16.gmra.mxu0 %v1278
    %v8861 = vpop.f32.mrf.mxu0
    %v8862 = vadd.f32 %v8848, %v8861
    %v8863 = vpop.f32.mrf.mxu0
    %v8864 = vadd.f32 %v8850, %v8863
    %8865 = vdwg.mxu0
    %8866 = vmatpush.bf16.msra.mxu0 %v5351
    %8867 = vmatpush.bf16.msra.mxu0 %v5347
    %8868 = vmatpush.bf16.msra.mxu0 %v5343
    %8869 = vmatpush.bf16.msra.mxu0 %v5339
    %8870 = vmatpush.bf16.msra.mxu0 %v5335
    %8871 = vmatpush.bf16.msra.mxu0 %v5331
    %8872 = vmatpush.bf16.msra.mxu0 %v5327
    %8873 = vmatpush.bf16.msra.mxu0 %v5323
    %8874 = vmatmul.bf16.gmra.mxu0 %v1279
    %v8875 = vpop.f32.mrf.mxu0
    %v8876 = vadd.f32 %v8862, %v8875
    %v8877 = vpop.f32.mrf.mxu0
    %v8878 = vadd.f32 %v8864, %v8877
    %8879 = vdwg.mxu0
    %8880 = vmatpush.bf16.msra.mxu0 %v5383
    %8881 = vmatpush.bf16.msra.mxu0 %v5379
    %8882 = vmatpush.bf16.msra.mxu0 %v5375
    %8883 = vmatpush.bf16.msra.mxu0 %v5371
    %8884 = vmatpush.bf16.msra.mxu0 %v5367
    %8885 = vmatpush.bf16.msra.mxu0 %v5363
    %8886 = vmatpush.bf16.msra.mxu0 %v5359
    %8887 = vmatpush.bf16.msra.mxu0 %v5355
    %8888 = vmatmul.bf16.gmra.mxu0 %v1296
    %v8889 = vpop.f32.mrf.mxu0
    %v8890 = vadd.f32 %v8876, %v8889
    %v8891 = vpop.f32.mrf.mxu0
    %v8892 = vadd.f32 %v8878, %v8891
    %8893 = vdwg.mxu0
    %8894 = vmatpush.bf16.msra.mxu0 %v5415
    %8895 = vmatpush.bf16.msra.mxu0 %v5411
    %8896 = vmatpush.bf16.msra.mxu0 %v5407
    %8897 = vmatpush.bf16.msra.mxu0 %v5403
    %8898 = vmatpush.bf16.msra.mxu0 %v5399
    %8899 = vmatpush.bf16.msra.mxu0 %v5395
    %8900 = vmatpush.bf16.msra.mxu0 %v5391
    %8901 = vmatpush.bf16.msra.mxu0 %v5387
    %8902 = vmatmul.bf16.gmra.mxu0 %v1297
    %v8903 = vpop.f32.mrf.mxu0
    %v8904 = vadd.f32 %v8890, %v8903
    %v8905 = vpop.f32.mrf.mxu0
    %v8906 = vadd.f32 %v8892, %v8905
    %8907 = vdwg.mxu0
    %8908 = vmatpush.bf16.msra.mxu0 %v5447
    %8909 = vmatpush.bf16.msra.mxu0 %v5443
    %8910 = vmatpush.bf16.msra.mxu0 %v5439
    %8911 = vmatpush.bf16.msra.mxu0 %v5435
    %8912 = vmatpush.bf16.msra.mxu0 %v5431
    %8913 = vmatpush.bf16.msra.mxu0 %v5427
    %8914 = vmatpush.bf16.msra.mxu0 %v5423
    %8915 = vmatpush.bf16.msra.mxu0 %v5419
    %8916 = vmatmul.bf16.gmra.mxu0 %v1298
    %v8917 = vpop.f32.mrf.mxu0
    %v8918 = vadd.f32 %v8904, %v8917
    %v8919 = vpop.f32.mrf.mxu0
    %v8920 = vadd.f32 %v8906, %v8919
    %8921 = vdwg.mxu0
    %8922 = vmatpush.bf16.msra.mxu0 %v5479
    %8923 = vmatpush.bf16.msra.mxu0 %v5475
    %8924 = vmatpush.bf16.msra.mxu0 %v5471
    %8925 = vmatpush.bf16.msra.mxu0 %v5467
    %8926 = vmatpush.bf16.msra.mxu0 %v5463
    %8927 = vmatpush.bf16.msra.mxu0 %v5459
    %8928 = vmatpush.bf16.msra.mxu0 %v5455
    %8929 = vmatpush.bf16.msra.mxu0 %v5451
    %8930 = vmatmul.bf16.gmra.mxu0 %v1299
    %v8931 = vpop.f32.mrf.mxu0
    %v8932 = vadd.f32 %v8918, %v8931
    %v8933 = vpop.f32.mrf.mxu0
    %v8934 = vadd.f32 %v8920, %v8933
    %8935 = vdwg.mxu0
    %8936 = vmatpush.bf16.msra.mxu0 %v5511
    %8937 = vmatpush.bf16.msra.mxu0 %v5507
    %8938 = vmatpush.bf16.msra.mxu0 %v5503
    %8939 = vmatpush.bf16.msra.mxu0 %v5499
    %8940 = vmatpush.bf16.msra.mxu0 %v5495
    %8941 = vmatpush.bf16.msra.mxu0 %v5491
    %8942 = vmatpush.bf16.msra.mxu0 %v5487
    %8943 = vmatpush.bf16.msra.mxu0 %v5483
    %8944 = vmatmul.bf16.gmra.mxu0 %v1300
    %v8945 = vpop.f32.mrf.mxu0
    %v8946 = vadd.f32 %v8932, %v8945
    %v8947 = vpop.f32.mrf.mxu0
    %v8948 = vadd.f32 %v8934, %v8947
    %8949 = vdwg.mxu0
    %8950 = vmatpush.bf16.msra.mxu0 %v5543
    %8951 = vmatpush.bf16.msra.mxu0 %v5539
    %8952 = vmatpush.bf16.msra.mxu0 %v5535
    %8953 = vmatpush.bf16.msra.mxu0 %v5531
    %8954 = vmatpush.bf16.msra.mxu0 %v5527
    %8955 = vmatpush.bf16.msra.mxu0 %v5523
    %8956 = vmatpush.bf16.msra.mxu0 %v5519
    %8957 = vmatpush.bf16.msra.mxu0 %v5515
    %8958 = vmatmul.bf16.gmra.mxu0 %v1301
    %v8959 = vpop.f32.mrf.mxu0
    %v8960 = vadd.f32 %v8946, %v8959
    %v8961 = vpop.f32.mrf.mxu0
    %v8962 = vadd.f32 %v8948, %v8961
    %8963 = vdwg.mxu0
    %8964 = vmatpush.bf16.msra.mxu0 %v5575
    %8965 = vmatpush.bf16.msra.mxu0 %v5571
    %8966 = vmatpush.bf16.msra.mxu0 %v5567
    %8967 = vmatpush.bf16.msra.mxu0 %v5563
    %8968 = vmatpush.bf16.msra.mxu0 %v5559
    %8969 = vmatpush.bf16.msra.mxu0 %v5555
    %8970 = vmatpush.bf16.msra.mxu0 %v5551
    %8971 = vmatpush.bf16.msra.mxu0 %v5547
    %8972 = vmatmul.bf16.gmra.mxu0 %v1302
    %v8973 = vpop.f32.mrf.mxu0
    %v8974 = vadd.f32 %v8960, %v8973
    %v8975 = vpop.f32.mrf.mxu0
    %v8976 = vadd.f32 %v8962, %v8975
    %8977 = vdwg.mxu0
    %8978 = vmatpush.bf16.msra.mxu0 %v5607
    %8979 = vmatpush.bf16.msra.mxu0 %v5603
    %8980 = vmatpush.bf16.msra.mxu0 %v5599
    %8981 = vmatpush.bf16.msra.mxu0 %v5595
    %8982 = vmatpush.bf16.msra.mxu0 %v5591
    %8983 = vmatpush.bf16.msra.mxu0 %v5587
    %8984 = vmatpush.bf16.msra.mxu0 %v5583
    %8985 = vmatpush.bf16.msra.mxu0 %v5579
    %8986 = vmatmul.bf16.gmra.mxu0 %v1303
    %v8987 = vpop.f32.mrf.mxu0
    %v8988 = vadd.f32 %v8974, %v8987
    %v8989 = vpop.f32.mrf.mxu0
    %v8990 = vadd.f32 %v8976, %v8989
    %8991 = vdwg.mxu0
    %8992 = vmatpush.bf16.msra.mxu0 %v5639
    %8993 = vmatpush.bf16.msra.mxu0 %v5635
    %8994 = vmatpush.bf16.msra.mxu0 %v5631
    %8995 = vmatpush.bf16.msra.mxu0 %v5627
    %8996 = vmatpush.bf16.msra.mxu0 %v5623
    %8997 = vmatpush.bf16.msra.mxu0 %v5619
    %8998 = vmatpush.bf16.msra.mxu0 %v5615
    %8999 = vmatpush.bf16.msra.mxu0 %v5611
    %9000 = vmatmul.bf16.gmra.mxu0 %v1320
    %v9001 = vpop.f32.mrf.mxu0
    %v9002 = vadd.f32 %v8988, %v9001
    %v9003 = vpop.f32.mrf.mxu0
    %v9004 = vadd.f32 %v8990, %v9003
    %9005 = vdwg.mxu0
    %9006 = vmatpush.bf16.msra.mxu0 %v5671
    %9007 = vmatpush.bf16.msra.mxu0 %v5667
    %9008 = vmatpush.bf16.msra.mxu0 %v5663
    %9009 = vmatpush.bf16.msra.mxu0 %v5659
    %9010 = vmatpush.bf16.msra.mxu0 %v5655
    %9011 = vmatpush.bf16.msra.mxu0 %v5651
    %9012 = vmatpush.bf16.msra.mxu0 %v5647
    %9013 = vmatpush.bf16.msra.mxu0 %v5643
    %9014 = vmatmul.bf16.gmra.mxu0 %v1321
    %v9015 = vpop.f32.mrf.mxu0
    %v9016 = vadd.f32 %v9002, %v9015
    %v9017 = vpop.f32.mrf.mxu0
    %v9018 = vadd.f32 %v9004, %v9017
    %9019 = vdwg.mxu0
    %9020 = vmatpush.bf16.msra.mxu0 %v5703
    %9021 = vmatpush.bf16.msra.mxu0 %v5699
    %9022 = vmatpush.bf16.msra.mxu0 %v5695
    %9023 = vmatpush.bf16.msra.mxu0 %v5691
    %9024 = vmatpush.bf16.msra.mxu0 %v5687
    %9025 = vmatpush.bf16.msra.mxu0 %v5683
    %9026 = vmatpush.bf16.msra.mxu0 %v5679
    %9027 = vmatpush.bf16.msra.mxu0 %v5675
    %9028 = vmatmul.bf16.gmra.mxu0 %v1322
    %v9029 = vpop.f32.mrf.mxu0
    %v9030 = vadd.f32 %v9016, %v9029
    %v9031 = vpop.f32.mrf.mxu0
    %v9032 = vadd.f32 %v9018, %v9031
    %9033 = vdwg.mxu0
    %9034 = vmatpush.bf16.msra.mxu0 %v5735
    %9035 = vmatpush.bf16.msra.mxu0 %v5731
    %9036 = vmatpush.bf16.msra.mxu0 %v5727
    %9037 = vmatpush.bf16.msra.mxu0 %v5723
    %9038 = vmatpush.bf16.msra.mxu0 %v5719
    %9039 = vmatpush.bf16.msra.mxu0 %v5715
    %9040 = vmatpush.bf16.msra.mxu0 %v5711
    %9041 = vmatpush.bf16.msra.mxu0 %v5707
    %9042 = vmatmul.bf16.gmra.mxu0 %v1323
    %v9043 = vpop.f32.mrf.mxu0
    %v9044 = vadd.f32 %v9030, %v9043
    %v9045 = vpop.f32.mrf.mxu0
    %v9046 = vadd.f32 %v9032, %v9045
    %9047 = vdwg.mxu0
    %9048 = vmatpush.bf16.msra.mxu0 %v5767
    %9049 = vmatpush.bf16.msra.mxu0 %v5763
    %9050 = vmatpush.bf16.msra.mxu0 %v5759
    %9051 = vmatpush.bf16.msra.mxu0 %v5755
    %9052 = vmatpush.bf16.msra.mxu0 %v5751
    %9053 = vmatpush.bf16.msra.mxu0 %v5747
    %9054 = vmatpush.bf16.msra.mxu0 %v5743
    %9055 = vmatpush.bf16.msra.mxu0 %v5739
    %9056 = vmatmul.bf16.gmra.mxu0 %v1324
    %v9057 = vpop.f32.mrf.mxu0
    %v9058 = vadd.f32 %v9044, %v9057
    %v9059 = vpop.f32.mrf.mxu0
    %v9060 = vadd.f32 %v9046, %v9059
    %9061 = vdwg.mxu0
    %9062 = vmatpush.bf16.msra.mxu0 %v5799
    %9063 = vmatpush.bf16.msra.mxu0 %v5795
    %9064 = vmatpush.bf16.msra.mxu0 %v5791
    %9065 = vmatpush.bf16.msra.mxu0 %v5787
    %9066 = vmatpush.bf16.msra.mxu0 %v5783
    %9067 = vmatpush.bf16.msra.mxu0 %v5779
    %9068 = vmatpush.bf16.msra.mxu0 %v5775
    %9069 = vmatpush.bf16.msra.mxu0 %v5771
    %9070 = vmatmul.bf16.gmra.mxu0 %v1325
    %v9071 = vpop.f32.mrf.mxu0
    %v9072 = vadd.f32 %v9058, %v9071
    %v9073 = vpop.f32.mrf.mxu0
    %v9074 = vadd.f32 %v9060, %v9073
    %9075 = vdwg.mxu0
    %9076 = vmatpush.bf16.msra.mxu0 %v5831
    %9077 = vmatpush.bf16.msra.mxu0 %v5827
    %9078 = vmatpush.bf16.msra.mxu0 %v5823
    %9079 = vmatpush.bf16.msra.mxu0 %v5819
    %9080 = vmatpush.bf16.msra.mxu0 %v5815
    %9081 = vmatpush.bf16.msra.mxu0 %v5811
    %9082 = vmatpush.bf16.msra.mxu0 %v5807
    %9083 = vmatpush.bf16.msra.mxu0 %v5803
    %9084 = vmatmul.bf16.gmra.mxu0 %v1326
    %v9085 = vpop.f32.mrf.mxu0
    %v9086 = vadd.f32 %v9072, %v9085
    %v9087 = vpop.f32.mrf.mxu0
    %v9088 = vadd.f32 %v9074, %v9087
    %9089 = vdwg.mxu0
    %9090 = vmatpush.bf16.msra.mxu0 %v5863
    %9091 = vmatpush.bf16.msra.mxu0 %v5859
    %9092 = vmatpush.bf16.msra.mxu0 %v5855
    %9093 = vmatpush.bf16.msra.mxu0 %v5851
    %9094 = vmatpush.bf16.msra.mxu0 %v5847
    %9095 = vmatpush.bf16.msra.mxu0 %v5843
    %9096 = vmatpush.bf16.msra.mxu0 %v5839
    %9097 = vmatpush.bf16.msra.mxu0 %v5835
    %9098 = vmatmul.bf16.gmra.mxu0 %v1327
    %v9099 = vpop.f32.mrf.mxu0
    %v9100 = vadd.f32 %v9086, %v9099
    %v9101 = vpop.f32.mrf.mxu0
    %v9102 = vadd.f32 %v9088, %v9101
    %9103 = vdwg.mxu0
    %9104 = vmatpush.bf16.msra.mxu0 %v5895
    %9105 = vmatpush.bf16.msra.mxu0 %v5891
    %9106 = vmatpush.bf16.msra.mxu0 %v5887
    %9107 = vmatpush.bf16.msra.mxu0 %v5883
    %9108 = vmatpush.bf16.msra.mxu0 %v5879
    %9109 = vmatpush.bf16.msra.mxu0 %v5875
    %9110 = vmatpush.bf16.msra.mxu0 %v5871
    %9111 = vmatpush.bf16.msra.mxu0 %v5867
    %9112 = vmatmul.bf16.gmra.mxu0 %v1344
    %v9113 = vpop.f32.mrf.mxu0
    %v9114 = vadd.f32 %v9100, %v9113
    %v9115 = vpop.f32.mrf.mxu0
    %v9116 = vadd.f32 %v9102, %v9115
    %9117 = vdwg.mxu0
    %9118 = vmatpush.bf16.msra.mxu0 %v5927
    %9119 = vmatpush.bf16.msra.mxu0 %v5923
    %9120 = vmatpush.bf16.msra.mxu0 %v5919
    %9121 = vmatpush.bf16.msra.mxu0 %v5915
    %9122 = vmatpush.bf16.msra.mxu0 %v5911
    %9123 = vmatpush.bf16.msra.mxu0 %v5907
    %9124 = vmatpush.bf16.msra.mxu0 %v5903
    %9125 = vmatpush.bf16.msra.mxu0 %v5899
    %9126 = vmatmul.bf16.gmra.mxu0 %v1345
    %v9127 = vpop.f32.mrf.mxu0
    %v9128 = vadd.f32 %v9114, %v9127
    %v9129 = vpop.f32.mrf.mxu0
    %v9130 = vadd.f32 %v9116, %v9129
    %9131 = vdwg.mxu0
    %9132 = vmatpush.bf16.msra.mxu0 %v5959
    %9133 = vmatpush.bf16.msra.mxu0 %v5955
    %9134 = vmatpush.bf16.msra.mxu0 %v5951
    %9135 = vmatpush.bf16.msra.mxu0 %v5947
    %9136 = vmatpush.bf16.msra.mxu0 %v5943
    %9137 = vmatpush.bf16.msra.mxu0 %v5939
    %9138 = vmatpush.bf16.msra.mxu0 %v5935
    %9139 = vmatpush.bf16.msra.mxu0 %v5931
    %9140 = vmatmul.bf16.gmra.mxu0 %v1346
    %v9141 = vpop.f32.mrf.mxu0
    %v9142 = vadd.f32 %v9128, %v9141
    %v9143 = vpop.f32.mrf.mxu0
    %v9144 = vadd.f32 %v9130, %v9143
    %9145 = vdwg.mxu0
    %9146 = vmatpush.bf16.msra.mxu0 %v5991
    %9147 = vmatpush.bf16.msra.mxu0 %v5987
    %9148 = vmatpush.bf16.msra.mxu0 %v5983
    %9149 = vmatpush.bf16.msra.mxu0 %v5979
    %9150 = vmatpush.bf16.msra.mxu0 %v5975
    %9151 = vmatpush.bf16.msra.mxu0 %v5971
    %9152 = vmatpush.bf16.msra.mxu0 %v5967
    %9153 = vmatpush.bf16.msra.mxu0 %v5963
    %9154 = vmatmul.bf16.gmra.mxu0 %v1347
    %v9155 = vpop.f32.mrf.mxu0
    %v9156 = vadd.f32 %v9142, %v9155
    %v9157 = vpop.f32.mrf.mxu0
    %v9158 = vadd.f32 %v9144, %v9157
    %9159 = vdwg.mxu0
    %v9160 = vmax.f32 %v7644, 0.0
    %v9161 = vmax.f32 %v8148, 0.0
    %v9162 = vmax.f32 %v8652, 0.0
    %v9163 = vmax.f32 %v9156, 0.0
    %v9164 = vmax.f32 %v7646, 0.0
    %v9165 = vmax.f32 %v8150, 0.0
    %v9166 = vmax.f32 %v8654, 0.0
    %v9167 = vmax.f32 %v9158, 0.0
    %v9168 = vpack.c.bf16 %v9161, %v9160
    %v9169 = vpack.c.bf16 %v9163, %v9162
    %v9170 = vpack.c.bf16 %v9165, %v9164
    %v9171 = vpack.c.bf16 %v9167, %v9166
    %v9176 = vrot.slane %v9168, 3
    %v9177 = vrot.slane %v9169, 6
    %v9178 = vrot.slane %v9169, 1
    %v9179 = vrot.slane %v9170, 3
    %v9180 = vrot.slane %v9171, 6
    %v9181 = vrot.slane %v9171, 1
    %vm9182 = vcmask 1040384
    %v9185 = vsel %vm9182, %v9168, %v9176
    %vm9186 = vcmask 1042434
    %v9189 = vsel %vm9186, %v9177, %v9178
    %vm9190 = vcmask 1041408
    %v9191 = vsel %vm9190, %v9185, %v9189
    %vm9192 = vcmask 1041409
    %v9193 = vsel %vm9192, %v9168, %v9176
    %vm9194 = vcmask 1043459
    %v9195 = vsel %vm9194, %v9177, %v9178
    %vm9196 = vcmask 1042433
    %v9197 = vsel %vm9196, %v9193, %v9195
    %v9199 = vrot.slane %v9197, 1
    %v9200 = vsel %vm9186, %v9168, %v9176
    %vm9201 = vcmask 1044484
    %v9202 = vsel %vm9201, %v9177, %v9178
    %vm9203 = vcmask 1043458
    %v9204 = vsel %vm9203, %v9200, %v9202
    %v9206 = vrot.slane %v9204, 2
    %v9207 = vsel %vm9194, %v9168, %v9176
    %vm9208 = vcmask 1045509
    %v9209 = vsel %vm9208, %v9177, %v9178
    %vm9210 = vcmask 1044483
    %v9211 = vsel %vm9210, %v9207, %v9209
    %v9213 = vrot.slane %v9211, 3
    %v9216 = vsel %vm9182, %v9170, %v9179
    %v9219 = vsel %vm9186, %v9180, %v9181
    %v9220 = vsel %vm9190, %v9216, %v9219
    %v9221 = vsel %vm9192, %v9170, %v9179
    %v9222 = vsel %vm9194, %v9180, %v9181
    %v9223 = vsel %vm9196, %v9221, %v9222
    %v9225 = vrot.slane %v9223, 1
    %v9226 = vsel %vm9186, %v9170, %v9179
    %v9227 = vsel %vm9201, %v9180, %v9181
    %v9228 = vsel %vm9203, %v9226, %v9227
    %v9230 = vrot.slane %v9228, 2
    %v9231 = vsel %vm9194, %v9170, %v9179
    %v9232 = vsel %vm9208, %v9180, %v9181
    %v9233 = vsel %vm9210, %v9231, %v9232
    %v9235 = vrot.slane %v9233, 3
    %9244 = vst [vmem:[#allocation2] sm:$0xf] %v9191
    %9245 = vst [vmem:[#allocation2 + $0x4] sm:$0xf] %v9199
    %9246 = vst [vmem:[#allocation2 + $0x8] sm:$0xf] %v9206
    %9247 = vst [vmem:[#allocation2 + $0xc] sm:$0xf] %v9213
    %9248 = vst [vmem:[#allocation2 + $0x10] sm:$0xf] %v9220
    %9249 = vst [vmem:[#allocation2 + $0x14] sm:$0xf] %v9225
    %9250 = vst [vmem:[#allocation2 + $0x18] sm:$0xf] %v9230
    %9251 = vst [vmem:[#allocation2 + $0x1c] sm:$0xf] %v9235
    %v9252 = vld [vmem:[%s3] sm:$0xf]
    %v9253 = vld [vmem:[%s3 + $0x4] sm:$0xf]
    %v9254 = vld [vmem:[%s3 + $0x8] sm:$0xf]
    %v9255 = vld [vmem:[%s3 + $0xc] sm:$0xf]
    %v9256 = vld [vmem:[%s3 + $0x10] sm:$0xf]
    %v9257 = vld [vmem:[%s3 + $0x14] sm:$0xf]
    %v9258 = vld [vmem:[%s3 + $0x18] sm:$0xf]
    %v9259 = vld [vmem:[%s3 + $0x1c] sm:$0xf]
    %v9260 = vld [vmem:[%s3 + $0x20] sm:$0xf]
    %v9261 = vld [vmem:[%s3 + $0x24] sm:$0xf]
    %v9262 = vld [vmem:[%s3 + $0x28] sm:$0xf]
    %v9263 = vld [vmem:[%s3 + $0x2c] sm:$0xf]
    %v9264 = vld [vmem:[%s3 + $0x30] sm:$0xf]
    %v9265 = vld [vmem:[%s3 + $0x34] sm:$0xf]
    %v9266 = vld [vmem:[%s3 + $0x38] sm:$0xf]
    %v9267 = vld [vmem:[%s3 + $0x3c] sm:$0xf]
    %v9268 = vld [vmem:[%s3 + $0x40] sm:$0xf]
    %v9269 = vld [vmem:[%s3 + $0x44] sm:$0xf]
    %v9270 = vld [vmem:[%s3 + $0x48] sm:$0xf]
    %v9271 = vld [vmem:[%s3 + $0x4c] sm:$0xf]
    %v9272 = vld [vmem:[%s3 + $0x50] sm:$0xf]
    %v9273 = vld [vmem:[%s3 + $0x54] sm:$0xf]
    %v9274 = vld [vmem:[%s3 + $0x58] sm:$0xf]
    %v9275 = vld [vmem:[%s3 + $0x5c] sm:$0xf]
    %v9276 = vld [vmem:[%s3 + $0x60] sm:$0xf]
    %v9277 = vld [vmem:[%s3 + $0x64] sm:$0xf]
    %v9278 = vld [vmem:[%s3 + $0x68] sm:$0xf]
    %v9279 = vld [vmem:[%s3 + $0x6c] sm:$0xf]
    %v9280 = vld [vmem:[%s3 + $0x70] sm:$0xf]
    %v9281 = vld [vmem:[%s3 + $0x74] sm:$0xf]
    %v9282 = vld [vmem:[%s3 + $0x78] sm:$0xf]
    %v9283 = vld [vmem:[%s3 + $0x7c] sm:$0xf]
    %v9284 = vld [vmem:[%s3 + $0x80] sm:$0xf]
    %v9285 = vld [vmem:[%s3 + $0x84] sm:$0xf]
    %v9286 = vld [vmem:[%s3 + $0x88] sm:$0xf]
    %v9287 = vld [vmem:[%s3 + $0x8c] sm:$0xf]
    %v9288 = vld [vmem:[%s3 + $0x90] sm:$0xf]
    %v9289 = vld [vmem:[%s3 + $0x94] sm:$0xf]
    %v9290 = vld [vmem:[%s3 + $0x98] sm:$0xf]
    %v9291 = vld [vmem:[%s3 + $0x9c] sm:$0xf]
    %v9292 = vld [vmem:[%s3 + $0xa0] sm:$0xf]
    %v9293 = vld [vmem:[%s3 + $0xa4] sm:$0xf]
    %v9294 = vld [vmem:[%s3 + $0xa8] sm:$0xf]
    %v9295 = vld [vmem:[%s3 + $0xac] sm:$0xf]
    %v9296 = vld [vmem:[%s3 + $0xb0] sm:$0xf]
    %v9297 = vld [vmem:[%s3 + $0xb4] sm:$0xf]
    %v9298 = vld [vmem:[%s3 + $0xb8] sm:$0xf]
    %v9299 = vld [vmem:[%s3 + $0xbc] sm:$0xf]
    %v9300 = vld [vmem:[%s3 + $0xc0] sm:$0xf]
    %v9301 = vld [vmem:[%s3 + $0xc4] sm:$0xf]
    %v9302 = vld [vmem:[%s3 + $0xc8] sm:$0xf]
    %v9303 = vld [vmem:[%s3 + $0xcc] sm:$0xf]
    %v9304 = vld [vmem:[%s3 + $0xd0] sm:$0xf]
    %v9305 = vld [vmem:[%s3 + $0xd4] sm:$0xf]
    %v9306 = vld [vmem:[%s3 + $0xd8] sm:$0xf]
    %v9307 = vld [vmem:[%s3 + $0xdc] sm:$0xf]
    %v9308 = vld [vmem:[%s3 + $0xe0] sm:$0xf]
    %v9309 = vld [vmem:[%s3 + $0xe4] sm:$0xf]
    %v9310 = vld [vmem:[%s3 + $0xe8] sm:$0xf]
    %v9311 = vld [vmem:[%s3 + $0xec] sm:$0xf]
    %v9312 = vld [vmem:[%s3 + $0xf0] sm:$0xf]
    %v9313 = vld [vmem:[%s3 + $0xf4] sm:$0xf]
    %v9314 = vld [vmem:[%s3 + $0xf8] sm:$0xf]
    %v9315 = vld [vmem:[%s3 + $0xfc] sm:$0xf]
    %v9316 = vld [vmem:[%s4] sm:$0x1]
    %v9318 = vperm.slane %v9316, 0
    %v9320 = vunpack.c.l.b16 %v9168
    %v9321 = vunpack.c.h.b16 %v9168
    %v9322 = vunpack.c.l.b16 %v9169
    %v9323 = vunpack.c.h.b16 %v9169
    %v9324 = vunpack.c.l.b16 %v9170
    %v9325 = vunpack.c.h.b16 %v9170
    %v9326 = vunpack.c.l.b16 %v9171
    %v9327 = vunpack.c.h.b16 %v9171
    %v9328 = vpack.c.b16 %v9324, %v9320
    %v9329 = vpack.c.b16 %v9325, %v9321
    %v9330 = vpack.c.b16 %v9326, %v9322
    %v9331 = vpack.c.b16 %v9327, %v9323
    %v9400 = vunpack.c.l.b16 %v9252
    %v9401 = vunpack.c.l.b16 %v9253
    %v9402 = vunpack.c.l.b16 %v9254
    %v9403 = vunpack.c.l.b16 %v9255
    %v9404 = vunpack.c.l.b16 %v9256
    %v9405 = vunpack.c.l.b16 %v9257
    %v9406 = vunpack.c.l.b16 %v9258
    %v9407 = vunpack.c.l.b16 %v9259
    %v9408 = vunpack.c.l.b16 %v9260
    %v9409 = vunpack.c.l.b16 %v9261
    %v9410 = vunpack.c.l.b16 %v9262
    %v9411 = vunpack.c.l.b16 %v9263
    %v9412 = vunpack.c.l.b16 %v9264
    %v9413 = vunpack.c.l.b16 %v9265
    %v9414 = vunpack.c.l.b16 %v9266
    %v9415 = vunpack.c.l.b16 %v9267
    %v9416 = vunpack.c.l.b16 %v9268
    %v9417 = vunpack.c.l.b16 %v9269
    %v9418 = vunpack.c.l.b16 %v9270
    %v9419 = vunpack.c.l.b16 %v9271
    %v9420 = vunpack.c.l.b16 %v9272
    %v9421 = vunpack.c.l.b16 %v9273
    %v9422 = vunpack.c.l.b16 %v9274
    %v9423 = vunpack.c.l.b16 %v9275
    %v9424 = vunpack.c.l.b16 %v9276
    %v9425 = vunpack.c.l.b16 %v9277
    %v9426 = vunpack.c.l.b16 %v9278
    %v9427 = vunpack.c.l.b16 %v9279
    %v9428 = vunpack.c.l.b16 %v9280
    %v9429 = vunpack.c.l.b16 %v9281
    %v9430 = vunpack.c.l.b16 %v9282
    %v9431 = vunpack.c.l.b16 %v9283
    %v9432 = vunpack.c.l.b16 %v9284
    %v9433 = vunpack.c.l.b16 %v9285
    %v9434 = vunpack.c.l.b16 %v9286
    %v9435 = vunpack.c.l.b16 %v9287
    %v9436 = vunpack.c.l.b16 %v9288
    %v9437 = vunpack.c.l.b16 %v9289
    %v9438 = vunpack.c.l.b16 %v9290
    %v9439 = vunpack.c.l.b16 %v9291
    %v9440 = vunpack.c.l.b16 %v9292
    %v9441 = vunpack.c.l.b16 %v9293
    %v9442 = vunpack.c.l.b16 %v9294
    %v9443 = vunpack.c.l.b16 %v9295
    %v9444 = vunpack.c.l.b16 %v9296
    %v9445 = vunpack.c.l.b16 %v9297
    %v9446 = vunpack.c.l.b16 %v9298
    %v9447 = vunpack.c.l.b16 %v9299
    %v9448 = vunpack.c.l.b16 %v9300
    %v9449 = vunpack.c.l.b16 %v9301
    %v9450 = vunpack.c.l.b16 %v9302
    %v9451 = vunpack.c.l.b16 %v9303
    %v9452 = vunpack.c.l.b16 %v9304
    %v9453 = vunpack.c.l.b16 %v9305
    %v9454 = vunpack.c.l.b16 %v9306
    %v9455 = vunpack.c.l.b16 %v9307
    %v9456 = vunpack.c.l.b16 %v9308
    %v9457 = vunpack.c.l.b16 %v9309
    %v9458 = vunpack.c.l.b16 %v9310
    %v9459 = vunpack.c.l.b16 %v9311
    %v9460 = vunpack.c.l.b16 %v9312
    %v9461 = vunpack.c.l.b16 %v9313
    %v9462 = vunpack.c.l.b16 %v9314
    %v9463 = vunpack.c.l.b16 %v9315
    %v9464 = vpack.c.b16 %v9401, %v9400
    %v9465 = vpack.c.b16 %v9403, %v9402
    %v9466 = vpack.c.b16 %v9405, %v9404
    %v9467 = vpack.c.b16 %v9407, %v9406
    %v9468 = vpack.c.b16 %v9409, %v9408
    %v9469 = vpack.c.b16 %v9411, %v9410
    %v9470 = vpack.c.b16 %v9413, %v9412
    %v9471 = vpack.c.b16 %v9415, %v9414
    %v9472 = vpack.c.b16 %v9417, %v9416
    %v9473 = vpack.c.b16 %v9419, %v9418
    %v9474 = vpack.c.b16 %v9421, %v9420
    %v9475 = vpack.c.b16 %v9423, %v9422
    %v9476 = vpack.c.b16 %v9425, %v9424
    %v9477 = vpack.c.b16 %v9427, %v9426
    %v9478 = vpack.c.b16 %v9429, %v9428
    %v9479 = vpack.c.b16 %v9431, %v9430
    %v9480 = vpack.c.b16 %v9433, %v9432
    %v9481 = vpack.c.b16 %v9435, %v9434
    %v9482 = vpack.c.b16 %v9437, %v9436
    %v9483 = vpack.c.b16 %v9439, %v9438
    %v9484 = vpack.c.b16 %v9441, %v9440
    %v9485 = vpack.c.b16 %v9443, %v9442
    %v9486 = vpack.c.b16 %v9445, %v9444
    %v9487 = vpack.c.b16 %v9447, %v9446
    %v9488 = vpack.c.b16 %v9449, %v9448
    %v9489 = vpack.c.b16 %v9451, %v9450
    %v9490 = vpack.c.b16 %v9453, %v9452
    %v9491 = vpack.c.b16 %v9455, %v9454
    %v9492 = vpack.c.b16 %v9457, %v9456
    %v9493 = vpack.c.b16 %v9459, %v9458
    %v9494 = vpack.c.b16 %v9461, %v9460
    %v9495 = vpack.c.b16 %v9463, %v9462
    %9528 = vmatpush.bf16.msra.mxu0 %v9471
    %9529 = vmatpush.bf16.msra.mxu0 %v9470
    %9530 = vmatpush.bf16.msra.mxu0 %v9469
    %9531 = vmatpush.bf16.msra.mxu0 %v9468
    %9532 = vmatpush.bf16.msra.mxu0 %v9467
    %9533 = vmatpush.bf16.msra.mxu0 %v9466
    %9534 = vmatpush.bf16.msra.mxu0 %v9465
    %9535 = vmatpush.bf16.msra.mxu0 %v9464
    %9536 = vmatmul.bf16.gmra.mxu0 %v9328
    %v9537 = vpop.f32.mrf.mxu0
    %v9538 = vadd.f32 %v9318, %v9537
    %v9539 = vpop.f32.mrf.mxu0
    %v9540 = vadd.f32 %v9318, %v9539
    %9541 = vdwg.mxu0
    %9542 = vmatpush.bf16.msra.mxu0 %v9479
    %9543 = vmatpush.bf16.msra.mxu0 %v9478
    %9544 = vmatpush.bf16.msra.mxu0 %v9477
    %9545 = vmatpush.bf16.msra.mxu0 %v9476
    %9546 = vmatpush.bf16.msra.mxu0 %v9475
    %9547 = vmatpush.bf16.msra.mxu0 %v9474
    %9548 = vmatpush.bf16.msra.mxu0 %v9473
    %9549 = vmatpush.bf16.msra.mxu0 %v9472
    %9550 = vmatmul.bf16.gmra.mxu0 %v9329
    %v9551 = vpop.f32.mrf.mxu0
    %v9552 = vadd.f32 %v9538, %v9551
    %v9553 = vpop.f32.mrf.mxu0
    %v9554 = vadd.f32 %v9540, %v9553
    %9555 = vdwg.mxu0
    %9556 = vmatpush.bf16.msra.mxu0 %v9487
    %9557 = vmatpush.bf16.msra.mxu0 %v9486
    %9558 = vmatpush.bf16.msra.mxu0 %v9485
    %9559 = vmatpush.bf16.msra.mxu0 %v9484
    %9560 = vmatpush.bf16.msra.mxu0 %v9483
    %9561 = vmatpush.bf16.msra.mxu0 %v9482
    %9562 = vmatpush.bf16.msra.mxu0 %v9481
    %9563 = vmatpush.bf16.msra.mxu0 %v9480
    %9564 = vmatmul.bf16.gmra.mxu0 %v9330
    %v9565 = vpop.f32.mrf.mxu0
    %v9566 = vadd.f32 %v9552, %v9565
    %v9567 = vpop.f32.mrf.mxu0
    %v9568 = vadd.f32 %v9554, %v9567
    %9569 = vdwg.mxu0
    %9570 = vmatpush.bf16.msra.mxu0 %v9495
    %9571 = vmatpush.bf16.msra.mxu0 %v9494
    %9572 = vmatpush.bf16.msra.mxu0 %v9493
    %9573 = vmatpush.bf16.msra.mxu0 %v9492
    %9574 = vmatpush.bf16.msra.mxu0 %v9491
    %9575 = vmatpush.bf16.msra.mxu0 %v9490
    %9576 = vmatpush.bf16.msra.mxu0 %v9489
    %9577 = vmatpush.bf16.msra.mxu0 %v9488
    %9578 = vmatmul.bf16.gmra.mxu0 %v9331
    %v9579 = vpop.f32.mrf.mxu0
    %v9580 = vadd.f32 %v9566, %v9579
    %v9581 = vpop.f32.mrf.mxu0
    %v9582 = vadd.f32 %v9568, %v9581
    %9583 = vdwg.mxu0
    %9584 = vst [vmem:[#allocation4] sm:$0xff] %v9580
    %9585 = vst [vmem:[#allocation4 + $0x8] sm:$0xff] %v9582
    // Predicated region
    $region22: #{model_forward.7} parent=1 // pred_check
      _
    $region23: #{model_forward.7} parent=1 // pred_check_branch
      %9587 = sbr.rel (0) target = $region25
    $region24: #{model_forward.7} parent=1 // pred_region
      %9589 = vsyncadd [#allocation3], 448
      %s9590 = sshll.u32 [#allocation2], 4
      %s9591 = int_to_ptr.vmem [resolvable:$true] %s9590
      %s9592 = sshll.u32 %s5, 4
      %s9593 = int_to_ptr.hbm [resolvable:$true] %s9592
      %9598 = dma.vmem_to_hbm [thread:$0]  %s9591, 64, %s9593, [#allocation3], 64, 64, 4
    $region25: #{model_forward.7} parent=1 // pred_fallthru
      _
    // Predicated region
    $region26: #{model_forward.7} parent=1 // pred_check
      _
    $region27: #{model_forward.7} parent=1 // pred_check_branch
      %9600 = sbr.rel (0) target = $region29
    $region28: #{model_forward.7} parent=1 // pred_region
      // Predicated region
      $region30: #{model_forward.7} parent=28 // pred_check
        _
      $region31: #{model_forward.7} parent=28 // pred_check_branch
        %9602 = sbr.rel (0) target = $region33
      $region32: #{model_forward.7} parent=28 // pred_region
        // Predicated region
        $region34: #{model_forward.7} parent=32 // pred_check
          _
        $region35: #{model_forward.7} parent=32 // pred_check_branch
          %9604 = sbr.rel target = $region37
        $region36: #{model_forward.7} parent=32 // pred_region
          // Predicated region
          $region49: #{model_forward.7} parent=36 // pred_check
            _
          $region50: #{model_forward.7} parent=36 // pred_check_branch
            %9620 = sbr.rel (0) target = $region52
          $region51: #{model_forward.7} parent=36 // pred_region
            %s9622 = ssub.s32 4, 1
            loop: start=0, step=1, limit=1
            $region53: #{model_forward.7} parent=51 // loop_pre_header
              _
            $region54: #{model_forward.7} parent=51 // loop_header
              %s9624 = sphi 0, %s9628
              %p9625 = scmp.ge.s32.totalorder %s9624, 1
              %s9629 = sphi [#allocation4], [#allocation4]
              %s9630 = sphi %s6, %s6
            $region55: #{model_forward.7} parent=51 // loop_header_branch
              %9627 = sbr.rel (%p9625) target = $region59
            $region56: #{model_forward.7} parent=51 // loop_body
              %v9631 = vld [vmem:[%s9629] sm:%s9622]
              %9632 = vst [vmem:[%s9630] sm:%s9622] %v9631
            $region57: #{model_forward.7} parent=51 // loop_footer
              %s9628 = sadd.s32 1, %s9624
            $region58: #{model_forward.7} parent=51 // loop_footer_branch
              %9623 = sbr.rel target = $region54
            $region59: #{model_forward.7} parent=51 // loop_exit
              _
          $region52: #{model_forward.7} parent=36 // pred_fallthru
            _
        $region37: #{model_forward.7} parent=32 // pred_fallthru
          _
        // Predicated region
        $region38: #{model_forward.7} parent=32 // pred_check
          _
        $region39: #{model_forward.7} parent=32 // pred_check_branch
          %9606 = sbr.rel (0) target = $region41
        $region40: #{model_forward.7} parent=32 // pred_region
          %s9608 = ssub.s32 4, 1
          loop: start=0, step=1, limit=1
          $region42: #{model_forward.7} parent=40 // loop_pre_header
            _
          $region43: #{model_forward.7} parent=40 // loop_header
            %s9610 = sphi 0, %s9614
            %p9611 = scmp.ge.s32.totalorder %s9610, 1
            %s9615 = sphi [#allocation4], [#allocation4]
            %s9616 = sphi %s6, %s6
          $region44: #{model_forward.7} parent=40 // loop_header_branch
            %9613 = sbr.rel (%p9611) target = $region48
          $region45: #{model_forward.7} parent=40 // loop_body
            %v9617 = vld [vmem:[%s9615] sm:%s9608]
            %9618 = vst [vmem:[%s9616] sm:%s9608] %v9617
          $region46: #{model_forward.7} parent=40 // loop_footer
            %s9614 = sadd.s32 1, %s9610
          $region47: #{model_forward.7} parent=40 // loop_footer_branch
            %9609 = sbr.rel target = $region43
          $region48: #{model_forward.7} parent=40 // loop_exit
            _
        $region41: #{model_forward.7} parent=32 // pred_fallthru
          _
      $region33: #{model_forward.7} parent=28 // pred_fallthru
        _
      %9633 = vnop
    $region29: #{model_forward.7} parent=1 // pred_fallthru
      _
    // Predicated region
    $region60: #{model_forward.7} parent=1 // pred_check
      _
    $region61: #{model_forward.7} parent=1 // pred_check_branch
      %9635 = sbr.rel (0) target = $region63
    $region62: #{model_forward.7} parent=1 // pred_region
      %9637 = dma.done [#allocation3], 512
    $region63: #{model_forward.7} parent=1 // pred_fallthru
      _
    // Predicated region
    $region64: #{model_forward.7} parent=1 // pred_check
      _
    $region65: #{model_forward.7} parent=1 // pred_check_branch
      %9639 = sbr.rel (0) target = $region67
    $region66: #{model_forward.7} parent=1 // pred_region
      _
    $region67: #{model_forward.7} parent=1 // pred_fallthru
      _
    %9640 = vsyncpa [#allocation3], 1

</llo_original>
